<compile_context>
chip_gen: v6e
topology: v6e:2x2x1
jax: 0.10.0
libtpu: 0.0.40
codegen_flags: <defaults>
</compile_context>

<pallas_src>
import functools

import jax
import jax.numpy as jnp
from jax.experimental import pallas as pl
from jax.experimental.pallas import tpu as pltpu

INPUT_SIZE = 1024
HIDDEN = 256
DENSE1 = 64
LN_EPS = 1e-5
LANE = 128


def _row_tile(n, cap=512):
    # Multiples of 16 so bf16 blocks keep clean (16, 128) sublane tiling.
    for t in (512, 256, 128, 64, 32, 16):
        if t <= cap and n % t == 0:
            return t
    # TODO(synk): pad irregular row counts to a tile multiple instead of
    # emitting one full-extent block (only matters for large, odd B*T).
    return n


def _t_chunk(t_total, cap=64):
    for t in (64, 32, 16):
        if t <= cap and t_total % t == 0:
            return t
    return t_total  # full-extent block along time (always layout-legal)


# ----------------------------------------------------------------------------
# 1) Input projection: gates_x = x @ Wx, one row-tiled bf16 MXU matmul over all
#    B*T rows (batch-major flat; no transpose). Output stored in bf16; the bias
#    add is deferred to the recurrence kernel (done there in f32).
# ----------------------------------------------------------------------------
def input_proj_kernel(x_ref, wx_ref, gx_ref):
    gx_ref[...] = jnp.dot(
        x_ref[...], wx_ref[...], preferred_element_type=jnp.float32
    ).astype(gx_ref.dtype)


def run_input_proj(x_flat, wx):
    # x_flat: (B*T, IN) bf16, wx: (IN, 4H) bf16  ->  (B*T, 4H) bf16
    rows, in_dim = x_flat.shape
    four_h = wx.shape[1]
    tile_r = _row_tile(rows, 512)
    return pl.pallas_call(
        input_proj_kernel,
        out_shape=jax.ShapeDtypeStruct((rows, four_h), jnp.bfloat16),
        grid=(rows // tile_r,),
        in_specs=[
            pl.BlockSpec((tile_r, in_dim), lambda i: (i, 0)),
            pl.BlockSpec((in_dim, four_h), lambda i: (0, 0)),  # resident weight
        ],
        out_specs=pl.BlockSpec((tile_r, four_h), lambda i: (i, 0)),
        compiler_params=pltpu.CompilerParams(
            dimension_semantics=("parallel",)),
    )(x_flat, wx)


# ----------------------------------------------------------------------------
# 2) Fused LSTM recurrence + head. Batch-major (B, t_chunk, 4H) gate blocks,
#    chunk of timesteps per grid step (trace-time unrolled); h/c carries live
#    in VMEM scratch. The head epilogue runs per step while h is still in VMEM
#    so hidden states never hit HBM. Gate order follows PyTorch: [i, f, g, o].
# ----------------------------------------------------------------------------
def lstm_head_kernel(gx_ref, wh_ref, b_ref, g1_ref, be1_ref, w1_ref, b1_ref,
                     g2_ref, be2_ref, w2_ref, b2_ref, o_ref,
                     h_scr, c_scr, *, t_chunk, hidden):
    @pl.when(pl.program_id(0) == 0)
    def _init():
        h_scr[...] = jnp.zeros_like(h_scr)
        c_scr[...] = jnp.zeros_like(c_scr)

    H = hidden

    def layer_norm(v, gamma, beta):
        mu = jnp.mean(v, axis=-1, keepdims=True)
        var = jnp.mean((v - mu) ** 2, axis=-1, keepdims=True)
        return (v - mu) * jax.lax.rsqrt(var + LN_EPS) * gamma + beta

    # Hoisted loads (kept out of the unrolled step loop).
    wh = wh_ref[...]
    bias = b_ref[...]                      # (1, 4H) f32
    g1, be1 = g1_ref[...], be1_ref[...]
    w1, b1 = w1_ref[...], b1_ref[...]
    g2, be2 = g2_ref[...], be2_ref[...]
    w2, b2 = w2_ref[...], b2_ref[...]

    h = h_scr[...]
    c = c_scr[...]
    # Trace-time unrolled chunk loop; only the small (B, H) @ (H, 4H) recurrent
    # matmul is inherently serial.
    for s in range(t_chunk):
        gates = (gx_ref[:, s, :].astype(jnp.float32) + bias
                 + jnp.dot(h.astype(jnp.bfloat16), wh,
                           preferred_element_type=jnp.float32))
        i_g = jax.nn.sigmoid(gates[:, 0 * H:1 * H])
        f_g = jax.nn.sigmoid(gates[:, 1 * H:2 * H])
        g_g = jnp.tanh(gates[:, 2 * H:3 * H])
        o_g = jax.nn.sigmoid(gates[:, 3 * H:4 * H])
        c = f_g * c + i_g * g_g
        h = o_g * jnp.tanh(c)

        # Head epilogue while h is still in VMEM.
        # TODO(synk): nn.Dropout(0.2) is identity here (inference semantics).
        z = layer_norm(h, g1, be1)
        z = jnp.dot(z.astype(jnp.bfloat16), w1,
                    preferred_element_type=jnp.float32) + b1
        z = jnp.maximum(layer_norm(z, g2, be2), 0.0)
        z = jnp.dot(z.astype(jnp.bfloat16), w2,
                    preferred_element_type=jnp.float32) + b2
        o_ref[:, s, :] = z

    h_scr[...] = h
    c_scr[...] = c


def run_lstm_head(gates_x, wh, b, g1, be1, w1, b1, g2, be2, w2p, b2p):
    # gates_x: (B, T, 4H) bf16 batch-major; wh: (H, 4H) bf16; params f32/bf16.
    B, T, four_h = gates_x.shape
    H = four_h // 4
    d1 = w1.shape[1]
    c_pad = w2p.shape[1]
    t_chunk = _t_chunk(T)
    kernel = functools.partial(lstm_head_kernel, t_chunk=t_chunk, hidden=H)
    const = lambda t: (0, 0)   # resident operands: fetched once, stay in VMEM
    return pl.pallas_call(
        kernel,
        out_shape=jax.ShapeDtypeStruct((B, T, c_pad), jnp.float32),
        grid=(T // t_chunk,),
        in_specs=[
            pl.BlockSpec((B, t_chunk, four_h), lambda t: (0, t, 0)),
            pl.BlockSpec((H, four_h), const),    # Wh
            pl.BlockSpec((1, four_h), const),    # LSTM bias (f32)
            pl.BlockSpec((1, H), const),         # norm1 gamma
            pl.BlockSpec((1, H), const),         # norm1 beta
            pl.BlockSpec((H, d1), const),        # dense1 W
            pl.BlockSpec((1, d1), const),        # dense1 b
            pl.BlockSpec((1, d1), const),        # norm2 gamma
            pl.BlockSpec((1, d1), const),        # norm2 beta
            pl.BlockSpec((d1, c_pad), const),    # dense2 W (class-padded)
            pl.BlockSpec((1, c_pad), const),     # dense2 b (class-padded)
        ],
        out_specs=pl.BlockSpec((B, t_chunk, c_pad), lambda t: (0, t, 0)),
        scratch_shapes=[
            pltpu.VMEM((B, H), jnp.float32),     # h carry
            pltpu.VMEM((B, H), jnp.float32),     # c carry
        ],
        compiler_params=pltpu.CompilerParams(
            dimension_semantics=("arbitrary",)),  # recurrence: sequential
    )(gates_x, wh, b, g1, be1, w1, b1, g2, be2, w2p, b2p)


# ----------------------------------------------------------------------------
# Full forward pass (batch-major end to end; no HBM transposes).
# ----------------------------------------------------------------------------
@jax.jit
def sequence_model(x, params):
    wx, wh, b, g1, be1, w1, b1, g2, be2, w2, b2 = params
    B, T, in_dim = x.shape
    num_classes = w2.shape[1]
    c_pad = ((num_classes + LANE - 1) // LANE) * LANE

    # bf16 weights for the MXU (f32 accumulation inside the kernels).
    wx_bf = wx.astype(jnp.bfloat16)
    wh_bf = wh.astype(jnp.bfloat16)
    w1_bf = w1.astype(jnp.bfloat16)
    # Lane-dense head output: zero-pad classes to a multiple of 128.
    w2_bf = jnp.pad(w2, ((0, 0), (0, c_pad - num_classes))).astype(jnp.bfloat16)
    b2_p = jnp.pad(b2, ((0, 0), (0, c_pad - num_classes)))

    # Batch-major throughout: only free (contiguous) reshapes, no transposes.
    x_flat = x.astype(jnp.bfloat16).reshape(B * T, in_dim)
    gates_x = run_input_proj(x_flat, wx_bf).reshape(B, T, 4 * HIDDEN)  # bf16

    out_pad = run_lstm_head(gates_x, wh_bf, b, g1, be1, w1_bf, b1,
                            g2, be2, w2_bf, b2_p)           # (B, T, c_pad)
    return out_pad[:, :, :num_classes]                      # (B, T, C)


# ----------------------------------------------------------------------------
# References for correctness checking.
# ----------------------------------------------------------------------------
def _ln(v, gamma, beta):
    mu = v.mean(-1, keepdims=True)
    var = ((v - mu) ** 2).mean(-1, keepdims=True)
    return (v - mu) * jax.lax.rsqrt(var + LN_EPS) * gamma + beta


def reference_f32(x, params):
    """Pure-f32 reference, faithful to the PyTorch module."""
    wx, wh, b, g1, be1, w1, b1, g2, be2, w2, b2 = params
    B, T, _ = x.shape
    H = HIDDEN

    def step(carry, xt):
        h, c = carry
        gates = xt @ wx + h @ wh + b
        i_g = jax.nn.sigmoid(gates[:, :H])
        f_g = jax.nn.sigmoid(gates[:, H:2 * H])
        g_g = jnp.tanh(gates[:, 2 * H:3 * H])
        o_g = jax.nn.sigmoid(gates[:, 3 * H:])
        c = f_g * c + i_g * g_g
        h = o_g * jnp.tanh(c)
        return (h, c), h

    init = (jnp.zeros((B, H), jnp.float32), jnp.zeros((B, H), jnp.float32))
    _, ys = jax.lax.scan(step, init, jnp.transpose(x, (1, 0, 2)))
    hs = ys.reshape(T * B, H)
    z = _ln(hs, g1, be1)
    z = z @ w1 + b1
    z = jnp.maximum(_ln(z, g2, be2), 0.0)
    z = z @ w2 + b2
    return jnp.transpose(z.reshape(T, B, -1), (1, 0, 2))


def reference_matched(x, params):
    """Same math as the kernels (bf16 operands / bf16 gx, f32 accumulation)."""
    wx, wh, b, g1, be1, w1, b1, g2, be2, w2, b2 = params
    B, T, _ = x.shape
    H = HIDDEN
    bf = jnp.bfloat16
    wx_bf, wh_bf, w1_bf, w2_bf = (w.astype(bf) for w in (wx, wh, w1, w2))

    x_flat = x.astype(bf).reshape(B * T, -1)
    gx = jnp.dot(x_flat, wx_bf, preferred_element_type=jnp.float32).astype(bf)
    gx = gx.reshape(B, T, 4 * H)

    def step(carry, gx_t):
        h, c = carry
        gates = (gx_t.astype(jnp.float32) + b
                 + jnp.dot(h.astype(bf), wh_bf,
                           preferred_element_type=jnp.float32))
        i_g = jax.nn.sigmoid(gates[:, :H])
        f_g = jax.nn.sigmoid(gates[:, H:2 * H])
        g_g = jnp.tanh(gates[:, 2 * H:3 * H])
        o_g = jax.nn.sigmoid(gates[:, 3 * H:])
        c = f_g * c + i_g * g_g
        h = o_g * jnp.tanh(c)
        return (h, c), h

    init = (jnp.zeros((B, H), jnp.float32), jnp.zeros((B, H), jnp.float32))
    _, ys = jax.lax.scan(step, init, jnp.transpose(gx, (1, 0, 2)))
    hs = ys.reshape(T * B, H)
    z = _ln(hs, g1, be1)
    z = jnp.dot(z.astype(bf), w1_bf, preferred_element_type=jnp.float32) + b1
    z = jnp.maximum(_ln(z, g2, be2), 0.0)
    z = jnp.dot(z.astype(bf), w2_bf, preferred_element_type=jnp.float32) + b2
    return jnp.transpose(z.reshape(T, B, -1), (1, 0, 2))


def init_params(key, num_classes):
    ks = jax.random.split(key, 10)
    k_lstm = 1.0 / jnp.sqrt(HIDDEN)
    u = lambda k, shape, bound: jax.random.uniform(
        k, shape, jnp.float32, -bound, bound)

    # LSTM: weight_ih (4H, IN), weight_hh (4H, H), biases summed into one (4H,)
    w_ih = u(ks[0], (4 * HIDDEN, INPUT_SIZE), k_lstm)
    w_hh = u(ks[1], (4 * HIDDEN, HIDDEN), k_lstm)
    b_ih = u(ks[2], (4 * HIDDEN,), k_lstm)
    b_hh = u(ks[3], (4 * HIDDEN,), k_lstm)
    wx = w_ih.T                              # (IN, 4H)
    wh = w_hh.T                              # (H, 4H)
    b = (b_ih + b_hh).reshape(1, 4 * HIDDEN)

    g1 = jnp.ones((1, HIDDEN), jnp.float32)
    be1 = jnp.zeros((1, HIDDEN), jnp.float32)
    k1 = 1.0 / jnp.sqrt(HIDDEN)
    w1 = u(ks[4], (HIDDEN, DENSE1), k1)
    b1 = u(ks[5], (1, DENSE1), k1)
    g2 = jnp.ones((1, DENSE1), jnp.float32)
    be2 = jnp.zeros((1, DENSE1), jnp.float32)
    k2 = 1.0 / jnp.sqrt(DENSE1)
    w2 = u(ks[6], (DENSE1, num_classes), k2)
    b2 = u(ks[7], (1, num_classes), k2)

    return (wx, wh, b, g1, be1, w1, b1, g2, be2, w2, b2)


if __name__ == "__main__":
    B, T, NUM_CLASSES = 2, 8, 10
    key = jax.random.PRNGKey(0)
    k_x, k_p = jax.random.split(key)
    x = jax.random.normal(k_x, (B, T, INPUT_SIZE), jnp.float32)
    params = init_params(k_p, NUM_CLASSES)

    out = jax.block_until_ready(sequence_model(x, params))
    assert out.shape == (B, T, NUM_CLASSES), out.shape

    # Tight check: kernel logic vs a dtype-matched JAX reference.
    ref_m = jax.block_until_ready(reference_matched(x, params))
    err_m = float(jnp.max(jnp.abs(out - ref_m)))
    assert err_m < 5e-3, f"mismatch vs dtype-matched reference: {err_m}"

    # Looser check: bf16-weight matmuls vs the pure-f32 PyTorch-faithful path.
    ref_f = jax.block_until_ready(reference_f32(x, params))
    err_f = float(jnp.max(jnp.abs(out - ref_f)))
    assert err_f < 0.25, f"mismatch vs f32 reference: {err_f}"

    print("KERNEL_OK")
</pallas_src>

<mosaic_0001>
module attributes {stable_mosaic.version = 11 : i64} {
  func.func @input_proj_kernel(%arg0: i32, %arg1: memref<16x1024xbf16, #tpu.memory_space<vmem>>, %arg2: memref<1024x1024xbf16, #tpu.memory_space<vmem>>, %arg3: memref<16x1024xbf16, #tpu.memory_space<vmem>>) attributes {dimension_semantics = [#tpu.dimension_semantics<parallel>], iteration_bounds = array<i64: 1>, scalar_prefetch = 0 : i64, scratch_operands = 0 : i64, tpu.core_type = #tpu.core_type<tc>, window_params = [{transform_indices = @transform_0, window_bounds = array<i64: 16, 1024>}, {pipeline_mode = #tpu.pipeline_mode<synchronous>, transform_indices = @transform_1, window_bounds = array<i64: 1024, 1024>}, {transform_indices = @transform_2, window_bounds = array<i64: 16, 1024>}]} {
    %c0 = arith.constant 0 : index
    %c0_0 = arith.constant 0 : index
    %0 = vector.load %arg1[%c0, %c0_0] : memref<16x1024xbf16, #tpu.memory_space<vmem>>, vector<16x1024xbf16>
    %c0_1 = arith.constant 0 : index
    %c0_2 = arith.constant 0 : index
    %1 = vector.load %arg2[%c0_1, %c0_2] : memref<1024x1024xbf16, #tpu.memory_space<vmem>>, vector<1024x1024xbf16>
    %cst = arith.constant dense<0.000000e+00> : vector<16x1024xf32>
    %2 = tpu.matmul %0, %1, %cst {dimension_numbers = #tpu.dot_dimension_numbers<[1], [0], [0], [1], [0, 0, 1, 1], [], []>} : vector<16x1024xbf16>, vector<1024x1024xbf16>, vector<16x1024xf32> -> vector<16x1024xf32>
    %3 = arith.truncf %2 : vector<16x1024xf32> to vector<16x1024xbf16>
    %c0_3 = arith.constant 0 : index
    %c0_4 = arith.constant 0 : index
    %4 = vector.load %arg3[%c0_3, %c0_4] : memref<16x1024xbf16, #tpu.memory_space<vmem>>, vector<16x1024xbf16>
    tpu.vector_store %arg3[%c0_3, %c0_4], %3 {strides = array<i32>} : memref<16x1024xbf16, #tpu.memory_space<vmem>>, vector<16x1024xbf16>,
    return
  }
  func.func @transform_0(%arg0: i32) -> (i32, i32) {
    %c0_i32 = arith.constant 0 : i32
    %c0_i32_0 = arith.constant 0 : i32
    return %arg0, %c0_i32 : i32, i32
  }
  func.func @transform_1(%arg0: i32) -> (i32, i32) {
    %c0_i32 = arith.constant 0 : i32
    %c0_i32_0 = arith.constant 0 : i32
    %c0_i32_1 = arith.constant 0 : i32
    return %c0_i32, %c0_i32_0 : i32, i32
  }
  func.func @transform_2(%arg0: i32) -> (i32, i32) {
    %c0_i32 = arith.constant 0 : i32
    %c0_i32_0 = arith.constant 0 : i32
    return %arg0, %c0_i32 : i32, i32
  }
}

module attributes {stable_mosaic.version = 11 : i64} {
  func.func @lstm_head_kernel(%arg0: i32, %arg1: memref<2x8x1024xbf16, #tpu.memory_space<vmem>>, %arg2: memref<256x1024xbf16, #tpu.memory_space<vmem>>, %arg3: memref<1x1024xf32, #tpu.memory_space<vmem>>, %arg4: memref<1x256xf32, #tpu.memory_space<vmem>>, %arg5: memref<1x256xf32, #tpu.memory_space<vmem>>, %arg6: memref<256x64xbf16, #tpu.memory_space<vmem>>, %arg7: memref<1x64xf32, #tpu.memory_space<vmem>>, %arg8: memref<1x64xf32, #tpu.memory_space<vmem>>, %arg9: memref<1x64xf32, #tpu.memory_space<vmem>>, %arg10: memref<64x128xbf16, #tpu.memory_space<vmem>>, %arg11: memref<1x128xf32, #tpu.memory_space<vmem>>, %arg12: memref<2x8x128xf32, #tpu.memory_space<vmem>>, %arg13: memref<2x256xf32, #tpu.memory_space<vmem>>, %arg14: memref<2x256xf32, #tpu.memory_space<vmem>>) attributes {dimension_semantics = [#tpu.dimension_semantics<arbitrary>], iteration_bounds = array<i64: 1>, scalar_prefetch = 0 : i64, scratch_operands = 2 : i64, tpu.core_type = #tpu.core_type<tc>, window_params = [{transform_indices = @transform_0, window_bounds = array<i64: 2, 8, 1024>}, {pipeline_mode = #tpu.pipeline_mode<synchronous>, transform_indices = @transform_1, window_bounds = array<i64: 256, 1024>}, {pipeline_mode = #tpu.pipeline_mode<synchronous>, transform_indices = @transform_2, window_bounds = array<i64: 1, 1024>}, {pipeline_mode = #tpu.pipeline_mode<synchronous>, transform_indices = @transform_3, window_bounds = array<i64: 1, 256>}, {pipeline_mode = #tpu.pipeline_mode<synchronous>, transform_indices = @transform_4, window_bounds = array<i64: 1, 256>}, {pipeline_mode = #tpu.pipeline_mode<synchronous>, transform_indices = @transform_5, window_bounds = array<i64: 256, 64>}, {pipeline_mode = #tpu.pipeline_mode<synchronous>, transform_indices = @transform_6, window_bounds = array<i64: 1, 64>}, {pipeline_mode = #tpu.pipeline_mode<synchronous>, transform_indices = @transform_7, window_bounds = array<i64: 1, 64>}, {pipeline_mode = #tpu.pipeline_mode<synchronous>, transform_indices = @transform_8, window_bounds = array<i64: 1, 64>}, {pipeline_mode = #tpu.pipeline_mode<synchronous>, transform_indices = @transform_9, window_bounds = array<i64: 64, 128>}, {pipeline_mode = #tpu.pipeline_mode<synchronous>, transform_indices = @transform_10, window_bounds = array<i64: 1, 128>}, {transform_indices = @transform_11, window_bounds = array<i64: 2, 8, 128>}]} {
    %c0_i32 = arith.constant 0 : i32
    %0 = arith.cmpi eq, %arg0, %c0_i32 : i32
    %1 = arith.extui %0 : i1 to i32
    %c0_i32_0 = arith.constant 0 : i32
    %2 = arith.cmpi ne, %1, %c0_i32_0 : i32
    scf.if %2 {
      %cst_204 = arith.constant 0.000000e+00 : f32
      %737 = vector.broadcast %cst_204 : f32 to vector<2x256xf32>
      %c0_205 = arith.constant 0 : index
      %c0_206 = arith.constant 0 : index
      %738 = vector.load %arg13[%c0_205, %c0_206] : memref<2x256xf32, #tpu.memory_space<vmem>>, vector<2x256xf32>
      tpu.vector_store %arg13[%c0_205, %c0_206], %737 {strides = array<i32>} : memref<2x256xf32, #tpu.memory_space<vmem>>, vector<2x256xf32>,
      %cst_207 = arith.constant 0.000000e+00 : f32
      %739 = vector.broadcast %cst_207 : f32 to vector<2x256xf32>
      %c0_208 = arith.constant 0 : index
      %c0_209 = arith.constant 0 : index
      %740 = vector.load %arg14[%c0_208, %c0_209] : memref<2x256xf32, #tpu.memory_space<vmem>>, vector<2x256xf32>
      tpu.vector_store %arg14[%c0_208, %c0_209], %739 {strides = array<i32>} : memref<2x256xf32, #tpu.memory_space<vmem>>, vector<2x256xf32>,
    } else {
    }
    %c0 = arith.constant 0 : index
    %c0_1 = arith.constant 0 : index
    %3 = vector.load %arg2[%c0, %c0_1] : memref<256x1024xbf16, #tpu.memory_space<vmem>>, vector<256x1024xbf16>
    %c0_2 = arith.constant 0 : index
    %c0_3 = arith.constant 0 : index
    %4 = vector.load %arg3[%c0_2, %c0_3] : memref<1x1024xf32, #tpu.memory_space<vmem>>, vector<1x1024xf32>
    %c0_4 = arith.constant 0 : index
    %c0_5 = arith.constant 0 : index
    %5 = vector.load %arg4[%c0_4, %c0_5] : memref<1x256xf32, #tpu.memory_space<vmem>>, vector<1x256xf32>
    %c0_6 = arith.constant 0 : index
    %c0_7 = arith.constant 0 : index
    %6 = vector.load %arg5[%c0_6, %c0_7] : memref<1x256xf32, #tpu.memory_space<vmem>>, vector<1x256xf32>
    %c0_8 = arith.constant 0 : index
    %c0_9 = arith.constant 0 : index
    %7 = vector.load %arg6[%c0_8, %c0_9] : memref<256x64xbf16, #tpu.memory_space<vmem>>, vector<256x64xbf16>
    %c0_10 = arith.constant 0 : index
    %c0_11 = arith.constant 0 : index
    %8 = vector.load %arg7[%c0_10, %c0_11] : memref<1x64xf32, #tpu.memory_space<vmem>>, vector<1x64xf32>
    %c0_12 = arith.constant 0 : index
    %c0_13 = arith.constant 0 : index
    %9 = vector.load %arg8[%c0_12, %c0_13] : memref<1x64xf32, #tpu.memory_space<vmem>>, vector<1x64xf32>
    %c0_14 = arith.constant 0 : index
    %c0_15 = arith.constant 0 : index
    %10 = vector.load %arg9[%c0_14, %c0_15] : memref<1x64xf32, #tpu.memory_space<vmem>>, vector<1x64xf32>
    %c0_16 = arith.constant 0 : index
    %c0_17 = arith.constant 0 : index
    %11 = vector.load %arg10[%c0_16, %c0_17] : memref<64x128xbf16, #tpu.memory_space<vmem>>, vector<64x128xbf16>
    %c0_18 = arith.constant 0 : index
    %c0_19 = arith.constant 0 : index
    %12 = vector.load %arg11[%c0_18, %c0_19] : memref<1x128xf32, #tpu.memory_space<vmem>>, vector<1x128xf32>
    %c0_20 = arith.constant 0 : index
    %c0_21 = arith.constant 0 : index
    %13 = vector.load %arg13[%c0_20, %c0_21] : memref<2x256xf32, #tpu.memory_space<vmem>>, vector<2x256xf32>
    %c0_22 = arith.constant 0 : index
    %c0_23 = arith.constant 0 : index
    %14 = vector.load %arg14[%c0_22, %c0_23] : memref<2x256xf32, #tpu.memory_space<vmem>>, vector<2x256xf32>
    %c0_24 = arith.constant 0 : index
    %c0_25 = arith.constant 0 : index
    %c0_26 = arith.constant 0 : index
    %15 = vector.load %arg1[%c0_24, %c0_25, %c0_26] : memref<2x8x1024xbf16, #tpu.memory_space<vmem>>, vector<2x1x1024xbf16>
    %16 = vector.shape_cast %15 : vector<2x1x1024xbf16> to vector<2x1024xbf16>
    %17 = arith.extf %16 : vector<2x1024xbf16> to vector<2x1024xf32>
    %18 = vector.broadcast %4 : vector<1x1024xf32> to vector<2x1024xf32>
    %19 = arith.addf %17, %18 : vector<2x1024xf32>
    %20 = arith.truncf %13 : vector<2x256xf32> to vector<2x256xbf16>
    %cst = arith.constant dense<0.000000e+00> : vector<2x1024xf32>
    %21 = tpu.matmul %20, %3, %cst {dimension_numbers = #tpu.dot_dimension_numbers<[1], [0], [0], [1], [0, 0, 1, 1], [], []>} : vector<2x256xbf16>, vector<256x1024xbf16>, vector<2x1024xf32> -> vector<2x1024xf32>
    %22 = arith.addf %19, %21 : vector<2x1024xf32>
    %23 = vector.extract_strided_slice %22 {offsets = [0, 0], sizes = [2, 256], strides = [1, 1]} : vector<2x1024xf32> to vector<2x256xf32>
    %24 = arith.negf %23 : vector<2x256xf32>
    %25 = math.exp %24 : vector<2x256xf32>
    %cst_27 = arith.constant 1.000000e+00 : f32
    %26 = vector.broadcast %cst_27 : f32 to vector<2x256xf32>
    %27 = arith.addf %26, %25 : vector<2x256xf32>
    %28 = arith.divf %26, %27 : vector<2x256xf32>
    %29 = vector.extract_strided_slice %22 {offsets = [0, 256], sizes = [2, 256], strides = [1, 1]} : vector<2x1024xf32> to vector<2x256xf32>
    %30 = arith.negf %29 : vector<2x256xf32>
    %31 = math.exp %30 : vector<2x256xf32>
    %cst_28 = arith.constant 1.000000e+00 : f32
    %32 = vector.broadcast %cst_28 : f32 to vector<2x256xf32>
    %33 = arith.addf %32, %31 : vector<2x256xf32>
    %34 = arith.divf %32, %33 : vector<2x256xf32>
    %35 = vector.extract_strided_slice %22 {offsets = [0, 512], sizes = [2, 256], strides = [1, 1]} : vector<2x1024xf32> to vector<2x256xf32>
    %36 = math.tanh %35 : vector<2x256xf32>
    %37 = vector.extract_strided_slice %22 {offsets = [0, 768], sizes = [2, 256], strides = [1, 1]} : vector<2x1024xf32> to vector<2x256xf32>
    %38 = arith.negf %37 : vector<2x256xf32>
    %39 = math.exp %38 : vector<2x256xf32>
    %cst_29 = arith.constant 1.000000e+00 : f32
    %40 = vector.broadcast %cst_29 : f32 to vector<2x256xf32>
    %41 = arith.addf %40, %39 : vector<2x256xf32>
    %42 = arith.divf %40, %41 : vector<2x256xf32>
    %43 = arith.mulf %34, %14 : vector<2x256xf32>
    %44 = arith.mulf %28, %36 : vector<2x256xf32>
    %45 = arith.addf %43, %44 : vector<2x256xf32>
    %46 = math.tanh %45 : vector<2x256xf32>
    %47 = arith.mulf %42, %46 : vector<2x256xf32>
    %cst_30 = arith.constant dense<0.000000e+00> : vector<2xf32>
    %48 = vector.multi_reduction <add>, %47, %cst_30 [1] : vector<2x256xf32> to vector<2xf32>
    %49 = vector.shape_cast %48 : vector<2xf32> to vector<2x1xf32>
    %cst_31 = arith.constant 2.560000e+02 : f32
    %50 = vector.broadcast %cst_31 : f32 to vector<2x1xf32>
    %51 = arith.divf %49, %50 : vector<2x1xf32>
    %52 = vector.broadcast %51 : vector<2x1xf32> to vector<2x256xf32>
    %53 = arith.subf %47, %52 : vector<2x256xf32>
    %54 = arith.mulf %53, %53 : vector<2x256xf32>
    %cst_32 = arith.constant dense<0.000000e+00> : vector<2xf32>
    %55 = vector.multi_reduction <add>, %54, %cst_32 [1] : vector<2x256xf32> to vector<2xf32>
    %56 = vector.shape_cast %55 : vector<2xf32> to vector<2x1xf32>
    %cst_33 = arith.constant 2.560000e+02 : f32
    %57 = vector.broadcast %cst_33 : f32 to vector<2x1xf32>
    %58 = arith.divf %56, %57 : vector<2x1xf32>
    %59 = vector.broadcast %51 : vector<2x1xf32> to vector<2x256xf32>
    %60 = arith.subf %47, %59 : vector<2x256xf32>
    %cst_34 = arith.constant 9.99999974E-6 : f32
    %61 = vector.broadcast %cst_34 : f32 to vector<2x1xf32>
    %62 = arith.addf %58, %61 : vector<2x1xf32>
    %63 = math.rsqrt %62 : vector<2x1xf32>
    %64 = vector.broadcast %63 : vector<2x1xf32> to vector<2x256xf32>
    %65 = arith.mulf %60, %64 : vector<2x256xf32>
    %66 = vector.broadcast %5 : vector<1x256xf32> to vector<2x256xf32>
    %67 = arith.mulf %65, %66 : vector<2x256xf32>
    %68 = vector.broadcast %6 : vector<1x256xf32> to vector<2x256xf32>
    %69 = arith.addf %67, %68 : vector<2x256xf32>
    %70 = arith.truncf %69 : vector<2x256xf32> to vector<2x256xbf16>
    %cst_35 = arith.constant dense<0.000000e+00> : vector<2x64xf32>
    %71 = tpu.matmul %70, %7, %cst_35 {dimension_numbers = #tpu.dot_dimension_numbers<[1], [0], [0], [1], [0, 0, 1, 1], [], []>} : vector<2x256xbf16>, vector<256x64xbf16>, vector<2x64xf32> -> vector<2x64xf32>
    %72 = vector.broadcast %8 : vector<1x64xf32> to vector<2x64xf32>
    %73 = arith.addf %71, %72 : vector<2x64xf32>
    %cst_36 = arith.constant dense<0.000000e+00> : vector<2xf32>
    %74 = vector.multi_reduction <add>, %73, %cst_36 [1] : vector<2x64xf32> to vector<2xf32>
    %75 = vector.shape_cast %74 : vector<2xf32> to vector<2x1xf32>
    %cst_37 = arith.constant 6.400000e+01 : f32
    %76 = vector.broadcast %cst_37 : f32 to vector<2x1xf32>
    %77 = arith.divf %75, %76 : vector<2x1xf32>
    %78 = vector.broadcast %77 : vector<2x1xf32> to vector<2x64xf32>
    %79 = arith.subf %73, %78 : vector<2x64xf32>
    %80 = arith.mulf %79, %79 : vector<2x64xf32>
    %cst_38 = arith.constant dense<0.000000e+00> : vector<2xf32>
    %81 = vector.multi_reduction <add>, %80, %cst_38 [1] : vector<2x64xf32> to vector<2xf32>
    %82 = vector.shape_cast %81 : vector<2xf32> to vector<2x1xf32>
    %cst_39 = arith.constant 6.400000e+01 : f32
    %83 = vector.broadcast %cst_39 : f32 to vector<2x1xf32>
    %84 = arith.divf %82, %83 : vector<2x1xf32>
    %85 = vector.broadcast %77 : vector<2x1xf32> to vector<2x64xf32>
    %86 = arith.subf %73, %85 : vector<2x64xf32>
    %cst_40 = arith.constant 9.99999974E-6 : f32
    %87 = vector.broadcast %cst_40 : f32 to vector<2x1xf32>
    %88 = arith.addf %84, %87 : vector<2x1xf32>
    %89 = math.rsqrt %88 : vector<2x1xf32>
    %90 = vector.broadcast %89 : vector<2x1xf32> to vector<2x64xf32>
    %91 = arith.mulf %86, %90 : vector<2x64xf32>
    %92 = vector.broadcast %9 : vector<1x64xf32> to vector<2x64xf32>
    %93 = arith.mulf %91, %92 : vector<2x64xf32>
    %94 = vector.broadcast %10 : vector<1x64xf32> to vector<2x64xf32>
    %95 = arith.addf %93, %94 : vector<2x64xf32>
    %cst_41 = arith.constant 0.000000e+00 : f32
    %96 = vector.broadcast %cst_41 : f32 to vector<2x64xf32>
    %97 = arith.maximumf %95, %96 : vector<2x64xf32>
    %98 = arith.truncf %97 : vector<2x64xf32> to vector<2x64xbf16>
    %cst_42 = arith.constant dense<0.000000e+00> : vector<2x128xf32>
    %99 = tpu.matmul %98, %11, %cst_42 {dimension_numbers = #tpu.dot_dimension_numbers<[1], [0], [0], [1], [0, 0, 1, 1], [], []>} : vector<2x64xbf16>, vector<64x128xbf16>, vector<2x128xf32> -> vector<2x128xf32>
    %100 = vector.broadcast %12 : vector<1x128xf32> to vector<2x128xf32>
    %101 = arith.addf %99, %100 : vector<2x128xf32>
    %c0_43 = arith.constant 0 : index
    %c0_44 = arith.constant 0 : index
    %c0_45 = arith.constant 0 : index
    %102 = vector.load %arg12[%c0_43, %c0_44, %c0_45] : memref<2x8x128xf32, #tpu.memory_space<vmem>>, vector<2x1x128xf32>
    %103 = vector.shape_cast %102 : vector<2x1x128xf32> to vector<2x128xf32>
    %104 = vector.shape_cast %101 : vector<2x128xf32> to vector<2x1x128xf32>
    tpu.vector_store %arg12[%c0_43, %c0_44, %c0_45], %104 {strides = array<i32>} : memref<2x8x128xf32, #tpu.memory_space<vmem>>, vector<2x1x128xf32>,
    %c0_46 = arith.constant 0 : index
    %c1 = arith.constant 1 : index
    %c0_47 = arith.constant 0 : index
    %105 = vector.load %arg1[%c0_46, %c1, %c0_47] : memref<2x8x1024xbf16, #tpu.memory_space<vmem>>, vector<2x1x1024xbf16>
    %106 = vector.shape_cast %105 : vector<2x1x1024xbf16> to vector<2x1024xbf16>
    %107 = arith.extf %106 : vector<2x1024xbf16> to vector<2x1024xf32>
    %108 = vector.broadcast %4 : vector<1x1024xf32> to vector<2x1024xf32>
    %109 = arith.addf %107, %108 : vector<2x1024xf32>
    %110 = arith.truncf %47 : vector<2x256xf32> to vector<2x256xbf16>
    %cst_48 = arith.constant dense<0.000000e+00> : vector<2x1024xf32>
    %111 = tpu.matmul %110, %3, %cst_48 {dimension_numbers = #tpu.dot_dimension_numbers<[1], [0], [0], [1], [0, 0, 1, 1], [], []>} : vector<2x256xbf16>, vector<256x1024xbf16>, vector<2x1024xf32> -> vector<2x1024xf32>
    %112 = arith.addf %109, %111 : vector<2x1024xf32>
    %113 = vector.extract_strided_slice %112 {offsets = [0, 0], sizes = [2, 256], strides = [1, 1]} : vector<2x1024xf32> to vector<2x256xf32>
    %114 = arith.negf %113 : vector<2x256xf32>
    %115 = math.exp %114 : vector<2x256xf32>
    %cst_49 = arith.constant 1.000000e+00 : f32
    %116 = vector.broadcast %cst_49 : f32 to vector<2x256xf32>
    %117 = arith.addf %116, %115 : vector<2x256xf32>
    %118 = arith.divf %116, %117 : vector<2x256xf32>
    %119 = vector.extract_strided_slice %112 {offsets = [0, 256], sizes = [2, 256], strides = [1, 1]} : vector<2x1024xf32> to vector<2x256xf32>
    %120 = arith.negf %119 : vector<2x256xf32>
    %121 = math.exp %120 : vector<2x256xf32>
    %cst_50 = arith.constant 1.000000e+00 : f32
    %122 = vector.broadcast %cst_50 : f32 to vector<2x256xf32>
    %123 = arith.addf %122, %121 : vector<2x256xf32>
    %124 = arith.divf %122, %123 : vector<2x256xf32>
    %125 = vector.extract_strided_slice %112 {offsets = [0, 512], sizes = [2, 256], strides = [1, 1]} : vector<2x1024xf32> to vector<2x256xf32>
    %126 = math.tanh %125 : vector<2x256xf32>
    %127 = vector.extract_strided_slice %112 {offsets = [0, 768], sizes = [2, 256], strides = [1, 1]} : vector<2x1024xf32> to vector<2x256xf32>
    %128 = arith.negf %127 : vector<2x256xf32>
    %129 = math.exp %128 : vector<2x256xf32>
    %cst_51 = arith.constant 1.000000e+00 : f32
    %130 = vector.broadcast %cst_51 : f32 to vector<2x256xf32>
    %131 = arith.addf %130, %129 : vector<2x256xf32>
    %132 = arith.divf %130, %131 : vector<2x256xf32>
    %133 = arith.mulf %124, %45 : vector<2x256xf32>
    %134 = arith.mulf %118, %126 : vector<2x256xf32>
    %135 = arith.addf %133, %134 : vector<2x256xf32>
    %136 = math.tanh %135 : vector<2x256xf32>
    %137 = arith.mulf %132, %136 : vector<2x256xf32>
    %cst_52 = arith.constant dense<0.000000e+00> : vector<2xf32>
    %138 = vector.multi_reduction <add>, %137, %cst_52 [1] : vector<2x256xf32> to vector<2xf32>
    %139 = vector.shape_cast %138 : vector<2xf32> to vector<2x1xf32>
    %cst_53 = arith.constant 2.560000e+02 : f32
    %140 = vector.broadcast %cst_53 : f32 to vector<2x1xf32>
    %141 = arith.divf %139, %140 : vector<2x1xf32>
    %142 = vector.broadcast %141 : vector<2x1xf32> to vector<2x256xf32>
    %143 = arith.subf %137, %142 : vector<2x256xf32>
    %144 = arith.mulf %143, %143 : vector<2x256xf32>
    %cst_54 = arith.constant dense<0.000000e+00> : vector<2xf32>
    %145 = vector.multi_reduction <add>, %144, %cst_54 [1] : vector<2x256xf32> to vector<2xf32>
    %146 = vector.shape_cast %145 : vector<2xf32> to vector<2x1xf32>
    %cst_55 = arith.constant 2.560000e+02 : f32
    %147 = vector.broadcast %cst_55 : f32 to vector<2x1xf32>
    %148 = arith.divf %146, %147 : vector<2x1xf32>
    %149 = vector.broadcast %141 : vector<2x1xf32> to vector<2x256xf32>
    %150 = arith.subf %137, %149 : vector<2x256xf32>
    %cst_56 = arith.constant 9.99999974E-6 : f32
    %151 = vector.broadcast %cst_56 : f32 to vector<2x1xf32>
    %152 = arith.addf %148, %151 : vector<2x1xf32>
    %153 = math.rsqrt %152 : vector<2x1xf32>
    %154 = vector.broadcast %153 : vector<2x1xf32> to vector<2x256xf32>
    %155 = arith.mulf %150, %154 : vector<2x256xf32>
    %156 = vector.broadcast %5 : vector<1x256xf32> to vector<2x256xf32>
    %157 = arith.mulf %155, %156 : vector<2x256xf32>
    %158 = vector.broadcast %6 : vector<1x256xf32> to vector<2x256xf32>
    %159 = arith.addf %157, %158 : vector<2x256xf32>
    %160 = arith.truncf %159 : vector<2x256xf32> to vector<2x256xbf16>
    %cst_57 = arith.constant dense<0.000000e+00> : vector<2x64xf32>
    %161 = tpu.matmul %160, %7, %cst_57 {dimension_numbers = #tpu.dot_dimension_numbers<[1], [0], [0], [1], [0, 0, 1, 1], [], []>} : vector<2x256xbf16>, vector<256x64xbf16>, vector<2x64xf32> -> vector<2x64xf32>
    %162 = vector.broadcast %8 : vector<1x64xf32> to vector<2x64xf32>
    %163 = arith.addf %161, %162 : vector<2x64xf32>
    %cst_58 = arith.constant dense<0.000000e+00> : vector<2xf32>
    %164 = vector.multi_reduction <add>, %163, %cst_58 [1] : vector<2x64xf32> to vector<2xf32>
    %165 = vector.shape_cast %164 : vector<2xf32> to vector<2x1xf32>
    %cst_59 = arith.constant 6.400000e+01 : f32
    %166 = vector.broadcast %cst_59 : f32 to vector<2x1xf32>
    %167 = arith.divf %165, %166 : vector<2x1xf32>
    %168 = vector.broadcast %167 : vector<2x1xf32> to vector<2x64xf32>
    %169 = arith.subf %163, %168 : vector<2x64xf32>
    %170 = arith.mulf %169, %169 : vector<2x64xf32>
    %cst_60 = arith.constant dense<0.000000e+00> : vector<2xf32>
    %171 = vector.multi_reduction <add>, %170, %cst_60 [1] : vector<2x64xf32> to vector<2xf32>
    %172 = vector.shape_cast %171 : vector<2xf32> to vector<2x1xf32>
    %cst_61 = arith.constant 6.400000e+01 : f32
    %173 = vector.broadcast %cst_61 : f32 to vector<2x1xf32>
    %174 = arith.divf %172, %173 : vector<2x1xf32>
    %175 = vector.broadcast %167 : vector<2x1xf32> to vector<2x64xf32>
    %176 = arith.subf %163, %175 : vector<2x64xf32>
    %cst_62 = arith.constant 9.99999974E-6 : f32
    %177 = vector.broadcast %cst_62 : f32 to vector<2x1xf32>
    %178 = arith.addf %174, %177 : vector<2x1xf32>
    %179 = math.rsqrt %178 : vector<2x1xf32>
    %180 = vector.broadcast %179 : vector<2x1xf32> to vector<2x64xf32>
    %181 = arith.mulf %176, %180 : vector<2x64xf32>
    %182 = vector.broadcast %9 : vector<1x64xf32> to vector<2x64xf32>
    %183 = arith.mulf %181, %182 : vector<2x64xf32>
    %184 = vector.broadcast %10 : vector<1x64xf32> to vector<2x64xf32>
    %185 = arith.addf %183, %184 : vector<2x64xf32>
    %cst_63 = arith.constant 0.000000e+00 : f32
    %186 = vector.broadcast %cst_63 : f32 to vector<2x64xf32>
    %187 = arith.maximumf %185, %186 : vector<2x64xf32>
    %188 = arith.truncf %187 : vector<2x64xf32> to vector<2x64xbf16>
    %cst_64 = arith.constant dense<0.000000e+00> : vector<2x128xf32>
    %189 = tpu.matmul %188, %11, %cst_64 {dimension_numbers = #tpu.dot_dimension_numbers<[1], [0], [0], [1], [0, 0, 1, 1], [], []>} : vector<2x64xbf16>, vector<64x128xbf16>, vector<2x128xf32> -> vector<2x128xf32>
    %190 = vector.broadcast %12 : vector<1x128xf32> to vector<2x128xf32>
    %191 = arith.addf %189, %190 : vector<2x128xf32>
    %c0_65 = arith.constant 0 : index
    %c1_66 = arith.constant 1 : index
    %c0_67 = arith.constant 0 : index
    %192 = vector.load %arg12[%c0_65, %c1_66, %c0_67] : memref<2x8x128xf32, #tpu.memory_space<vmem>>, vector<2x1x128xf32>
    %193 = vector.shape_cast %192 : vector<2x1x128xf32> to vector<2x128xf32>
    %194 = vector.shape_cast %191 : vector<2x128xf32> to vector<2x1x128xf32>
    tpu.vector_store %arg12[%c0_65, %c1_66, %c0_67], %194 {strides = array<i32>} : memref<2x8x128xf32, #tpu.memory_space<vmem>>, vector<2x1x128xf32>,
    %c0_68 = arith.constant 0 : index
    %c2 = arith.constant 2 : index
    %c0_69 = arith.constant 0 : index
    %195 = vector.load %arg1[%c0_68, %c2, %c0_69] : memref<2x8x1024xbf16, #tpu.memory_space<vmem>>, vector<2x1x1024xbf16>
    %196 = vector.shape_cast %195 : vector<2x1x1024xbf16> to vector<2x1024xbf16>
    %197 = arith.extf %196 : vector<2x1024xbf16> to vector<2x1024xf32>
    %198 = vector.broadcast %4 : vector<1x1024xf32> to vector<2x1024xf32>
    %199 = arith.addf %197, %198 : vector<2x1024xf32>
    %200 = arith.truncf %137 : vector<2x256xf32> to vector<2x256xbf16>
    %cst_70 = arith.constant dense<0.000000e+00> : vector<2x1024xf32>
    %201 = tpu.matmul %200, %3, %cst_70 {dimension_numbers = #tpu.dot_dimension_numbers<[1], [0], [0], [1], [0, 0, 1, 1], [], []>} : vector<2x256xbf16>, vector<256x1024xbf16>, vector<2x1024xf32> -> vector<2x1024xf32>
    %202 = arith.addf %199, %201 : vector<2x1024xf32>
    %203 = vector.extract_strided_slice %202 {offsets = [0, 0], sizes = [2, 256], strides = [1, 1]} : vector<2x1024xf32> to vector<2x256xf32>
    %204 = arith.negf %203 : vector<2x256xf32>
    %205 = math.exp %204 : vector<2x256xf32>
    %cst_71 = arith.constant 1.000000e+00 : f32
    %206 = vector.broadcast %cst_71 : f32 to vector<2x256xf32>
    %207 = arith.addf %206, %205 : vector<2x256xf32>
    %208 = arith.divf %206, %207 : vector<2x256xf32>
    %209 = vector.extract_strided_slice %202 {offsets = [0, 256], sizes = [2, 256], strides = [1, 1]} : vector<2x1024xf32> to vector<2x256xf32>
    %210 = arith.negf %209 : vector<2x256xf32>
    %211 = math.exp %210 : vector<2x256xf32>
    %cst_72 = arith.constant 1.000000e+00 : f32
    %212 = vector.broadcast %cst_72 : f32 to vector<2x256xf32>
    %213 = arith.addf %212, %211 : vector<2x256xf32>
    %214 = arith.divf %212, %213 : vector<2x256xf32>
    %215 = vector.extract_strided_slice %202 {offsets = [0, 512], sizes = [2, 256], strides = [1, 1]} : vector<2x1024xf32> to vector<2x256xf32>
    %216 = math.tanh %215 : vector<2x256xf32>
    %217 = vector.extract_strided_slice %202 {offsets = [0, 768], sizes = [2, 256], strides = [1, 1]} : vector<2x1024xf32> to vector<2x256xf32>
    %218 = arith.negf %217 : vector<2x256xf32>
    %219 = math.exp %218 : vector<2x256xf32>
    %cst_73 = arith.constant 1.000000e+00 : f32
    %220 = vector.broadcast %cst_73 : f32 to vector<2x256xf32>
    %221 = arith.addf %220, %219 : vector<2x256xf32>
    %222 = arith.divf %220, %221 : vector<2x256xf32>
    %223 = arith.mulf %214, %135 : vector<2x256xf32>
    %224 = arith.mulf %208, %216 : vector<2x256xf32>
    %225 = arith.addf %223, %224 : vector<2x256xf32>
    %226 = math.tanh %225 : vector<2x256xf32>
    %227 = arith.mulf %222, %226 : vector<2x256xf32>
    %cst_74 = arith.constant dense<0.000000e+00> : vector<2xf32>
    %228 = vector.multi_reduction <add>, %227, %cst_74 [1] : vector<2x256xf32> to vector<2xf32>
    %229 = vector.shape_cast %228 : vector<2xf32> to vector<2x1xf32>
    %cst_75 = arith.constant 2.560000e+02 : f32
    %230 = vector.broadcast %cst_75 : f32 to vector<2x1xf32>
    %231 = arith.divf %229, %230 : vector<2x1xf32>
    %232 = vector.broadcast %231 : vector<2x1xf32> to vector<2x256xf32>
    %233 = arith.subf %227, %232 : vector<2x256xf32>
    %234 = arith.mulf %233, %233 : vector<2x256xf32>
    %cst_76 = arith.constant dense<0.000000e+00> : vector<2xf32>
    %235 = vector.multi_reduction <add>, %234, %cst_76 [1] : vector<2x256xf32> to vector<2xf32>
    %236 = vector.shape_cast %235 : vector<2xf32> to vector<2x1xf32>
    %cst_77 = arith.constant 2.560000e+02 : f32
    %237 = vector.broadcast %cst_77 : f32 to vector<2x1xf32>
    %238 = arith.divf %236, %237 : vector<2x1xf32>
    %239 = vector.broadcast %231 : vector<2x1xf32> to vector<2x256xf32>
    %240 = arith.subf %227, %239 : vector<2x256xf32>
    %cst_78 = arith.constant 9.99999974E-6 : f32
    %241 = vector.broadcast %cst_78 : f32 to vector<2x1xf32>
    %242 = arith.addf %238, %241 : vector<2x1xf32>
    %243 = math.rsqrt %242 : vector<2x1xf32>
    %244 = vector.broadcast %243 : vector<2x1xf32> to vector<2x256xf32>
    %245 = arith.mulf %240, %244 : vector<2x256xf32>
    %246 = vector.broadcast %5 : vector<1x256xf32> to vector<2x256xf32>
    %247 = arith.mulf %245, %246 : vector<2x256xf32>
    %248 = vector.broadcast %6 : vector<1x256xf32> to vector<2x256xf32>
    %249 = arith.addf %247, %248 : vector<2x256xf32>
    %250 = arith.truncf %249 : vector<2x256xf32> to vector<2x256xbf16>
    %cst_79 = arith.constant dense<0.000000e+00> : vector<2x64xf32>
    %251 = tpu.matmul %250, %7, %cst_79 {dimension_numbers = #tpu.dot_dimension_numbers<[1], [0], [0], [1], [0, 0, 1, 1], [], []>} : vector<2x256xbf16>, vector<256x64xbf16>, vector<2x64xf32> -> vector<2x64xf32>
    %252 = vector.broadcast %8 : vector<1x64xf32> to vector<2x64xf32>
    %253 = arith.addf %251, %252 : vector<2x64xf32>
    %cst_80 = arith.constant dense<0.000000e+00> : vector<2xf32>
    %254 = vector.multi_reduction <add>, %253, %cst_80 [1] : vector<2x64xf32> to vector<2xf32>
    %255 = vector.shape_cast %254 : vector<2xf32> to vector<2x1xf32>
    %cst_81 = arith.constant 6.400000e+01 : f32
    %256 = vector.broadcast %cst_81 : f32 to vector<2x1xf32>
    %257 = arith.divf %255, %256 : vector<2x1xf32>
    %258 = vector.broadcast %257 : vector<2x1xf32> to vector<2x64xf32>
    %259 = arith.subf %253, %258 : vector<2x64xf32>
    %260 = arith.mulf %259, %259 : vector<2x64xf32>
    %cst_82 = arith.constant dense<0.000000e+00> : vector<2xf32>
    %261 = vector.multi_reduction <add>, %260, %cst_82 [1] : vector<2x64xf32> to vector<2xf32>
    %262 = vector.shape_cast %261 : vector<2xf32> to vector<2x1xf32>
    %cst_83 = arith.constant 6.400000e+01 : f32
    %263 = vector.broadcast %cst_83 : f32 to vector<2x1xf32>
    %264 = arith.divf %262, %263 : vector<2x1xf32>
    %265 = vector.broadcast %257 : vector<2x1xf32> to vector<2x64xf32>
    %266 = arith.subf %253, %265 : vector<2x64xf32>
    %cst_84 = arith.constant 9.99999974E-6 : f32
    %267 = vector.broadcast %cst_84 : f32 to vector<2x1xf32>
    %268 = arith.addf %264, %267 : vector<2x1xf32>
    %269 = math.rsqrt %268 : vector<2x1xf32>
    %270 = vector.broadcast %269 : vector<2x1xf32> to vector<2x64xf32>
    %271 = arith.mulf %266, %270 : vector<2x64xf32>
    %272 = vector.broadcast %9 : vector<1x64xf32> to vector<2x64xf32>
    %273 = arith.mulf %271, %272 : vector<2x64xf32>
    %274 = vector.broadcast %10 : vector<1x64xf32> to vector<2x64xf32>
    %275 = arith.addf %273, %274 : vector<2x64xf32>
    %cst_85 = arith.constant 0.000000e+00 : f32
    %276 = vector.broadcast %cst_85 : f32 to vector<2x64xf32>
    %277 = arith.maximumf %275, %276 : vector<2x64xf32>
    %278 = arith.truncf %277 : vector<2x64xf32> to vector<2x64xbf16>
    %cst_86 = arith.constant dense<0.000000e+00> : vector<2x128xf32>
    %279 = tpu.matmul %278, %11, %cst_86 {dimension_numbers = #tpu.dot_dimension_numbers<[1], [0], [0], [1], [0, 0, 1, 1], [], []>} : vector<2x64xbf16>, vector<64x128xbf16>, vector<2x128xf32> -> vector<2x128xf32>
    %280 = vector.broadcast %12 : vector<1x128xf32> to vector<2x128xf32>
    %281 = arith.addf %279, %280 : vector<2x128xf32>
    %c0_87 = arith.constant 0 : index
    %c2_88 = arith.constant 2 : index
    %c0_89 = arith.constant 0 : index
    %282 = vector.load %arg12[%c0_87, %c2_88, %c0_89] : memref<2x8x128xf32, #tpu.memory_space<vmem>>, vector<2x1x128xf32>
    %283 = vector.shape_cast %282 : vector<2x1x128xf32> to vector<2x128xf32>
    %284 = vector.shape_cast %281 : vector<2x128xf32> to vector<2x1x128xf32>
    tpu.vector_store %arg12[%c0_87, %c2_88, %c0_89], %284 {strides = array<i32>} : memref<2x8x128xf32, #tpu.memory_space<vmem>>, vector<2x1x128xf32>,
    %c0_90 = arith.constant 0 : index
    %c3 = arith.constant 3 : index
    %c0_91 = arith.constant 0 : index
    %285 = vector.load %arg1[%c0_90, %c3, %c0_91] : memref<2x8x1024xbf16, #tpu.memory_space<vmem>>, vector<2x1x1024xbf16>
    %286 = vector.shape_cast %285 : vector<2x1x1024xbf16> to vector<2x1024xbf16>
    %287 = arith.extf %286 : vector<2x1024xbf16> to vector<2x1024xf32>
    %288 = vector.broadcast %4 : vector<1x1024xf32> to vector<2x1024xf32>
    %289 = arith.addf %287, %288 : vector<2x1024xf32>
    %290 = arith.truncf %227 : vector<2x256xf32> to vector<2x256xbf16>
    %cst_92 = arith.constant dense<0.000000e+00> : vector<2x1024xf32>
    %291 = tpu.matmul %290, %3, %cst_92 {dimension_numbers = #tpu.dot_dimension_numbers<[1], [0], [0], [1], [0, 0, 1, 1], [], []>} : vector<2x256xbf16>, vector<256x1024xbf16>, vector<2x1024xf32> -> vector<2x1024xf32>
    %292 = arith.addf %289, %291 : vector<2x1024xf32>
    %293 = vector.extract_strided_slice %292 {offsets = [0, 0], sizes = [2, 256], strides = [1, 1]} : vector<2x1024xf32> to vector<2x256xf32>
    %294 = arith.negf %293 : vector<2x256xf32>
    %295 = math.exp %294 : vector<2x256xf32>
    %cst_93 = arith.constant 1.000000e+00 : f32
    %296 = vector.broadcast %cst_93 : f32 to vector<2x256xf32>
    %297 = arith.addf %296, %295 : vector<2x256xf32>
    %298 = arith.divf %296, %297 : vector<2x256xf32>
    %299 = vector.extract_strided_slice %292 {offsets = [0, 256], sizes = [2, 256], strides = [1, 1]} : vector<2x1024xf32> to vector<2x256xf32>
    %300 = arith.negf %299 : vector<2x256xf32>
    %301 = math.exp %300 : vector<2x256xf32>
    %cst_94 = arith.constant 1.000000e+00 : f32
    %302 = vector.broadcast %cst_94 : f32 to vector<2x256xf32>
    %303 = arith.addf %302, %301 : vector<2x256xf32>
    %304 = arith.divf %302, %303 : vector<2x256xf32>
    %305 = vector.extract_strided_slice %292 {offsets = [0, 512], sizes = [2, 256], strides = [1, 1]} : vector<2x1024xf32> to vector<2x256xf32>
    %306 = math.tanh %305 : vector<2x256xf32>
    %307 = vector.extract_strided_slice %292 {offsets = [0, 768], sizes = [2, 256], strides = [1, 1]} : vector<2x1024xf32> to vector<2x256xf32>
    %308 = arith.negf %307 : vector<2x256xf32>
    %309 = math.exp %308 : vector<2x256xf32>
    %cst_95 = arith.constant 1.000000e+00 : f32
    %310 = vector.broadcast %cst_95 : f32 to vector<2x256xf32>
    %311 = arith.addf %310, %309 : vector<2x256xf32>
    %312 = arith.divf %310, %311 : vector<2x256xf32>
    %313 = arith.mulf %304, %225 : vector<2x256xf32>
    %314 = arith.mulf %298, %306 : vector<2x256xf32>
    %315 = arith.addf %313, %314 : vector<2x256xf32>
    %316 = math.tanh %315 : vector<2x256xf32>
    %317 = arith.mulf %312, %316 : vector<2x256xf32>
    %cst_96 = arith.constant dense<0.000000e+00> : vector<2xf32>
    %318 = vector.multi_reduction <add>, %317, %cst_96 [1] : vector<2x256xf32> to vector<2xf32>
    %319 = vector.shape_cast %318 : vector<2xf32> to vector<2x1xf32>
    %cst_97 = arith.constant 2.560000e+02 : f32
    %320 = vector.broadcast %cst_97 : f32 to vector<2x1xf32>
    %321 = arith.divf %319, %320 : vector<2x1xf32>
    %322 = vector.broadcast %321 : vector<2x1xf32> to vector<2x256xf32>
    %323 = arith.subf %317, %322 : vector<2x256xf32>
    %324 = arith.mulf %323, %323 : vector<2x256xf32>
    %cst_98 = arith.constant dense<0.000000e+00> : vector<2xf32>
    %325 = vector.multi_reduction <add>, %324, %cst_98 [1] : vector<2x256xf32> to vector<2xf32>
    %326 = vector.shape_cast %325 : vector<2xf32> to vector<2x1xf32>
    %cst_99 = arith.constant 2.560000e+02 : f32
    %327 = vector.broadcast %cst_99 : f32 to vector<2x1xf32>
    %328 = arith.divf %326, %327 : vector<2x1xf32>
    %329 = vector.broadcast %321 : vector<2x1xf32> to vector<2x256xf32>
    %330 = arith.subf %317, %329 : vector<2x256xf32>
    %cst_100 = arith.constant 9.99999974E-6 : f32
    %331 = vector.broadcast %cst_100 : f32 to vector<2x1xf32>
    %332 = arith.addf %328, %331 : vector<2x1xf32>
    %333 = math.rsqrt %332 : vector<2x1xf32>
    %334 = vector.broadcast %333 : vector<2x1xf32> to vector<2x256xf32>
    %335 = arith.mulf %330, %334 : vector<2x256xf32>
    %336 = vector.broadcast %5 : vector<1x256xf32> to vector<2x256xf32>
    %337 = arith.mulf %335, %336 : vector<2x256xf32>
    %338 = vector.broadcast %6 : vector<1x256xf32> to vector<2x256xf32>
    %339 = arith.addf %337, %338 : vector<2x256xf32>
    %340 = arith.truncf %339 : vector<2x256xf32> to vector<2x256xbf16>
    %cst_101 = arith.constant dense<0.000000e+00> : vector<2x64xf32>
    %341 = tpu.matmul %340, %7, %cst_101 {dimension_numbers = #tpu.dot_dimension_numbers<[1], [0], [0], [1], [0, 0, 1, 1], [], []>} : vector<2x256xbf16>, vector<256x64xbf16>, vector<2x64xf32> -> vector<2x64xf32>
    %342 = vector.broadcast %8 : vector<1x64xf32> to vector<2x64xf32>
    %343 = arith.addf %341, %342 : vector<2x64xf32>
    %cst_102 = arith.constant dense<0.000000e+00> : vector<2xf32>
    %344 = vector.multi_reduction <add>, %343, %cst_102 [1] : vector<2x64xf32> to vector<2xf32>
    %345 = vector.shape_cast %344 : vector<2xf32> to vector<2x1xf32>
    %cst_103 = arith.constant 6.400000e+01 : f32
    %346 = vector.broadcast %cst_103 : f32 to vector<2x1xf32>
    %347 = arith.divf %345, %346 : vector<2x1xf32>
    %348 = vector.broadcast %347 : vector<2x1xf32> to vector<2x64xf32>
    %349 = arith.subf %343, %348 : vector<2x64xf32>
    %350 = arith.mulf %349, %349 : vector<2x64xf32>
    %cst_104 = arith.constant dense<0.000000e+00> : vector<2xf32>
    %351 = vector.multi_reduction <add>, %350, %cst_104 [1] : vector<2x64xf32> to vector<2xf32>
    %352 = vector.shape_cast %351 : vector<2xf32> to vector<2x1xf32>
    %cst_105 = arith.constant 6.400000e+01 : f32
    %353 = vector.broadcast %cst_105 : f32 to vector<2x1xf32>
    %354 = arith.divf %352, %353 : vector<2x1xf32>
    %355 = vector.broadcast %347 : vector<2x1xf32> to vector<2x64xf32>
    %356 = arith.subf %343, %355 : vector<2x64xf32>
    %cst_106 = arith.constant 9.99999974E-6 : f32
    %357 = vector.broadcast %cst_106 : f32 to vector<2x1xf32>
    %358 = arith.addf %354, %357 : vector<2x1xf32>
    %359 = math.rsqrt %358 : vector<2x1xf32>
    %360 = vector.broadcast %359 : vector<2x1xf32> to vector<2x64xf32>
    %361 = arith.mulf %356, %360 : vector<2x64xf32>
    %362 = vector.broadcast %9 : vector<1x64xf32> to vector<2x64xf32>
    %363 = arith.mulf %361, %362 : vector<2x64xf32>
    %364 = vector.broadcast %10 : vector<1x64xf32> to vector<2x64xf32>
    %365 = arith.addf %363, %364 : vector<2x64xf32>
    %cst_107 = arith.constant 0.000000e+00 : f32
    %366 = vector.broadcast %cst_107 : f32 to vector<2x64xf32>
    %367 = arith.maximumf %365, %366 : vector<2x64xf32>
    %368 = arith.truncf %367 : vector<2x64xf32> to vector<2x64xbf16>
    %cst_108 = arith.constant dense<0.000000e+00> : vector<2x128xf32>
    %369 = tpu.matmul %368, %11, %cst_108 {dimension_numbers = #tpu.dot_dimension_numbers<[1], [0], [0], [1], [0, 0, 1, 1], [], []>} : vector<2x64xbf16>, vector<64x128xbf16>, vector<2x128xf32> -> vector<2x128xf32>
    %370 = vector.broadcast %12 : vector<1x128xf32> to vector<2x128xf32>
    %371 = arith.addf %369, %370 : vector<2x128xf32>
    %c0_109 = arith.constant 0 : index
    %c3_110 = arith.constant 3 : index
    %c0_111 = arith.constant 0 : index
    %372 = vector.load %arg12[%c0_109, %c3_110, %c0_111] : memref<2x8x128xf32, #tpu.memory_space<vmem>>, vector<2x1x128xf32>
    %373 = vector.shape_cast %372 : vector<2x1x128xf32> to vector<2x128xf32>
    %374 = vector.shape_cast %371 : vector<2x128xf32> to vector<2x1x128xf32>
    tpu.vector_store %arg12[%c0_109, %c3_110, %c0_111], %374 {strides = array<i32>} : memref<2x8x128xf32, #tpu.memory_space<vmem>>, vector<2x1x128xf32>,
    %c0_112 = arith.constant 0 : index
    %c4 = arith.constant 4 : index
    %c0_113 = arith.constant 0 : index
    %375 = vector.load %arg1[%c0_112, %c4, %c0_113] : memref<2x8x1024xbf16, #tpu.memory_space<vmem>>, vector<2x1x1024xbf16>
    %376 = vector.shape_cast %375 : vector<2x1x1024xbf16> to vector<2x1024xbf16>
    %377 = arith.extf %376 : vector<2x1024xbf16> to vector<2x1024xf32>
    %378 = vector.broadcast %4 : vector<1x1024xf32> to vector<2x1024xf32>
    %379 = arith.addf %377, %378 : vector<2x1024xf32>
    %380 = arith.truncf %317 : vector<2x256xf32> to vector<2x256xbf16>
    %cst_114 = arith.constant dense<0.000000e+00> : vector<2x1024xf32>
    %381 = tpu.matmul %380, %3, %cst_114 {dimension_numbers = #tpu.dot_dimension_numbers<[1], [0], [0], [1], [0, 0, 1, 1], [], []>} : vector<2x256xbf16>, vector<256x1024xbf16>, vector<2x1024xf32> -> vector<2x1024xf32>
    %382 = arith.addf %379, %381 : vector<2x1024xf32>
    %383 = vector.extract_strided_slice %382 {offsets = [0, 0], sizes = [2, 256], strides = [1, 1]} : vector<2x1024xf32> to vector<2x256xf32>
    %384 = arith.negf %383 : vector<2x256xf32>
    %385 = math.exp %384 : vector<2x256xf32>
    %cst_115 = arith.constant 1.000000e+00 : f32
    %386 = vector.broadcast %cst_115 : f32 to vector<2x256xf32>
    %387 = arith.addf %386, %385 : vector<2x256xf32>
    %388 = arith.divf %386, %387 : vector<2x256xf32>
    %389 = vector.extract_strided_slice %382 {offsets = [0, 256], sizes = [2, 256], strides = [1, 1]} : vector<2x1024xf32> to vector<2x256xf32>
    %390 = arith.negf %389 : vector<2x256xf32>
    %391 = math.exp %390 : vector<2x256xf32>
    %cst_116 = arith.constant 1.000000e+00 : f32
    %392 = vector.broadcast %cst_116 : f32 to vector<2x256xf32>
    %393 = arith.addf %392, %391 : vector<2x256xf32>
    %394 = arith.divf %392, %393 : vector<2x256xf32>
    %395 = vector.extract_strided_slice %382 {offsets = [0, 512], sizes = [2, 256], strides = [1, 1]} : vector<2x1024xf32> to vector<2x256xf32>
    %396 = math.tanh %395 : vector<2x256xf32>
    %397 = vector.extract_strided_slice %382 {offsets = [0, 768], sizes = [2, 256], strides = [1, 1]} : vector<2x1024xf32> to vector<2x256xf32>
    %398 = arith.negf %397 : vector<2x256xf32>
    %399 = math.exp %398 : vector<2x256xf32>
    %cst_117 = arith.constant 1.000000e+00 : f32
    %400 = vector.broadcast %cst_117 : f32 to vector<2x256xf32>
    %401 = arith.addf %400, %399 : vector<2x256xf32>
    %402 = arith.divf %400, %401 : vector<2x256xf32>
    %403 = arith.mulf %394, %315 : vector<2x256xf32>
    %404 = arith.mulf %388, %396 : vector<2x256xf32>
    %405 = arith.addf %403, %404 : vector<2x256xf32>
    %406 = math.tanh %405 : vector<2x256xf32>
    %407 = arith.mulf %402, %406 : vector<2x256xf32>
    %cst_118 = arith.constant dense<0.000000e+00> : vector<2xf32>
    %408 = vector.multi_reduction <add>, %407, %cst_118 [1] : vector<2x256xf32> to vector<2xf32>
    %409 = vector.shape_cast %408 : vector<2xf32> to vector<2x1xf32>
    %cst_119 = arith.constant 2.560000e+02 : f32
    %410 = vector.broadcast %cst_119 : f32 to vector<2x1xf32>
    %411 = arith.divf %409, %410 : vector<2x1xf32>
    %412 = vector.broadcast %411 : vector<2x1xf32> to vector<2x256xf32>
    %413 = arith.subf %407, %412 : vector<2x256xf32>
    %414 = arith.mulf %413, %413 : vector<2x256xf32>
    %cst_120 = arith.constant dense<0.000000e+00> : vector<2xf32>
    %415 = vector.multi_reduction <add>, %414, %cst_120 [1] : vector<2x256xf32> to vector<2xf32>
    %416 = vector.shape_cast %415 : vector<2xf32> to vector<2x1xf32>
    %cst_121 = arith.constant 2.560000e+02 : f32
    %417 = vector.broadcast %cst_121 : f32 to vector<2x1xf32>
    %418 = arith.divf %416, %417 : vector<2x1xf32>
    %419 = vector.broadcast %411 : vector<2x1xf32> to vector<2x256xf32>
    %420 = arith.subf %407, %419 : vector<2x256xf32>
    %cst_122 = arith.constant 9.99999974E-6 : f32
    %421 = vector.broadcast %cst_122 : f32 to vector<2x1xf32>
    %422 = arith.addf %418, %421 : vector<2x1xf32>
    %423 = math.rsqrt %422 : vector<2x1xf32>
    %424 = vector.broadcast %423 : vector<2x1xf32> to vector<2x256xf32>
    %425 = arith.mulf %420, %424 : vector<2x256xf32>
    %426 = vector.broadcast %5 : vector<1x256xf32> to vector<2x256xf32>
    %427 = arith.mulf %425, %426 : vector<2x256xf32>
    %428 = vector.broadcast %6 : vector<1x256xf32> to vector<2x256xf32>
    %429 = arith.addf %427, %428 : vector<2x256xf32>
    %430 = arith.truncf %429 : vector<2x256xf32> to vector<2x256xbf16>
    %cst_123 = arith.constant dense<0.000000e+00> : vector<2x64xf32>
    %431 = tpu.matmul %430, %7, %cst_123 {dimension_numbers = #tpu.dot_dimension_numbers<[1], [0], [0], [1], [0, 0, 1, 1], [], []>} : vector<2x256xbf16>, vector<256x64xbf16>, vector<2x64xf32> -> vector<2x64xf32>
    %432 = vector.broadcast %8 : vector<1x64xf32> to vector<2x64xf32>
    %433 = arith.addf %431, %432 : vector<2x64xf32>
    %cst_124 = arith.constant dense<0.000000e+00> : vector<2xf32>
    %434 = vector.multi_reduction <add>, %433, %cst_124 [1] : vector<2x64xf32> to vector<2xf32>
    %435 = vector.shape_cast %434 : vector<2xf32> to vector<2x1xf32>
    %cst_125 = arith.constant 6.400000e+01 : f32
    %436 = vector.broadcast %cst_125 : f32 to vector<2x1xf32>
    %437 = arith.divf %435, %436 : vector<2x1xf32>
    %438 = vector.broadcast %437 : vector<2x1xf32> to vector<2x64xf32>
    %439 = arith.subf %433, %438 : vector<2x64xf32>
    %440 = arith.mulf %439, %439 : vector<2x64xf32>
    %cst_126 = arith.constant dense<0.000000e+00> : vector<2xf32>
    %441 = vector.multi_reduction <add>, %440, %cst_126 [1] : vector<2x64xf32> to vector<2xf32>
    %442 = vector.shape_cast %441 : vector<2xf32> to vector<2x1xf32>
    %cst_127 = arith.constant 6.400000e+01 : f32
    %443 = vector.broadcast %cst_127 : f32 to vector<2x1xf32>
    %444 = arith.divf %442, %443 : vector<2x1xf32>
    %445 = vector.broadcast %437 : vector<2x1xf32> to vector<2x64xf32>
    %446 = arith.subf %433, %445 : vector<2x64xf32>
    %cst_128 = arith.constant 9.99999974E-6 : f32
    %447 = vector.broadcast %cst_128 : f32 to vector<2x1xf32>
    %448 = arith.addf %444, %447 : vector<2x1xf32>
    %449 = math.rsqrt %448 : vector<2x1xf32>
    %450 = vector.broadcast %449 : vector<2x1xf32> to vector<2x64xf32>
    %451 = arith.mulf %446, %450 : vector<2x64xf32>
    %452 = vector.broadcast %9 : vector<1x64xf32> to vector<2x64xf32>
    %453 = arith.mulf %451, %452 : vector<2x64xf32>
    %454 = vector.broadcast %10 : vector<1x64xf32> to vector<2x64xf32>
    %455 = arith.addf %453, %454 : vector<2x64xf32>
    %cst_129 = arith.constant 0.000000e+00 : f32
    %456 = vector.broadcast %cst_129 : f32 to vector<2x64xf32>
    %457 = arith.maximumf %455, %456 : vector<2x64xf32>
    %458 = arith.truncf %457 : vector<2x64xf32> to vector<2x64xbf16>
    %cst_130 = arith.constant dense<0.000000e+00> : vector<2x128xf32>
    %459 = tpu.matmul %458, %11, %cst_130 {dimension_numbers = #tpu.dot_dimension_numbers<[1], [0], [0], [1], [0, 0, 1, 1], [], []>} : vector<2x64xbf16>, vector<64x128xbf16>, vector<2x128xf32> -> vector<2x128xf32>
    %460 = vector.broadcast %12 : vector<1x128xf32> to vector<2x128xf32>
    %461 = arith.addf %459, %460 : vector<2x128xf32>
    %c0_131 = arith.constant 0 : index
    %c4_132 = arith.constant 4 : index
    %c0_133 = arith.constant 0 : index
    %462 = vector.load %arg12[%c0_131, %c4_132, %c0_133] : memref<2x8x128xf32, #tpu.memory_space<vmem>>, vector<2x1x128xf32>
    %463 = vector.shape_cast %462 : vector<2x1x128xf32> to vector<2x128xf32>
    %464 = vector.shape_cast %461 : vector<2x128xf32> to vector<2x1x128xf32>
    tpu.vector_store %arg12[%c0_131, %c4_132, %c0_133], %464 {strides = array<i32>} : memref<2x8x128xf32, #tpu.memory_space<vmem>>, vector<2x1x128xf32>,
    %c0_134 = arith.constant 0 : index
    %c5 = arith.constant 5 : index
    %c0_135 = arith.constant 0 : index
    %465 = vector.load %arg1[%c0_134, %c5, %c0_135] : memref<2x8x1024xbf16, #tpu.memory_space<vmem>>, vector<2x1x1024xbf16>
    %466 = vector.shape_cast %465 : vector<2x1x1024xbf16> to vector<2x1024xbf16>
    %467 = arith.extf %466 : vector<2x1024xbf16> to vector<2x1024xf32>
    %468 = vector.broadcast %4 : vector<1x1024xf32> to vector<2x1024xf32>
    %469 = arith.addf %467, %468 : vector<2x1024xf32>
    %470 = arith.truncf %407 : vector<2x256xf32> to vector<2x256xbf16>
    %cst_136 = arith.constant dense<0.000000e+00> : vector<2x1024xf32>
    %471 = tpu.matmul %470, %3, %cst_136 {dimension_numbers = #tpu.dot_dimension_numbers<[1], [0], [0], [1], [0, 0, 1, 1], [], []>} : vector<2x256xbf16>, vector<256x1024xbf16>, vector<2x1024xf32> -> vector<2x1024xf32>
    %472 = arith.addf %469, %471 : vector<2x1024xf32>
    %473 = vector.extract_strided_slice %472 {offsets = [0, 0], sizes = [2, 256], strides = [1, 1]} : vector<2x1024xf32> to vector<2x256xf32>
    %474 = arith.negf %473 : vector<2x256xf32>
    %475 = math.exp %474 : vector<2x256xf32>
    %cst_137 = arith.constant 1.000000e+00 : f32
    %476 = vector.broadcast %cst_137 : f32 to vector<2x256xf32>
    %477 = arith.addf %476, %475 : vector<2x256xf32>
    %478 = arith.divf %476, %477 : vector<2x256xf32>
    %479 = vector.extract_strided_slice %472 {offsets = [0, 256], sizes = [2, 256], strides = [1, 1]} : vector<2x1024xf32> to vector<2x256xf32>
    %480 = arith.negf %479 : vector<2x256xf32>
    %481 = math.exp %480 : vector<2x256xf32>
    %cst_138 = arith.constant 1.000000e+00 : f32
    %482 = vector.broadcast %cst_138 : f32 to vector<2x256xf32>
    %483 = arith.addf %482, %481 : vector<2x256xf32>
    %484 = arith.divf %482, %483 : vector<2x256xf32>
    %485 = vector.extract_strided_slice %472 {offsets = [0, 512], sizes = [2, 256], strides = [1, 1]} : vector<2x1024xf32> to vector<2x256xf32>
    %486 = math.tanh %485 : vector<2x256xf32>
    %487 = vector.extract_strided_slice %472 {offsets = [0, 768], sizes = [2, 256], strides = [1, 1]} : vector<2x1024xf32> to vector<2x256xf32>
    %488 = arith.negf %487 : vector<2x256xf32>
    %489 = math.exp %488 : vector<2x256xf32>
    %cst_139 = arith.constant 1.000000e+00 : f32
    %490 = vector.broadcast %cst_139 : f32 to vector<2x256xf32>
    %491 = arith.addf %490, %489 : vector<2x256xf32>
    %492 = arith.divf %490, %491 : vector<2x256xf32>
    %493 = arith.mulf %484, %405 : vector<2x256xf32>
    %494 = arith.mulf %478, %486 : vector<2x256xf32>
    %495 = arith.addf %493, %494 : vector<2x256xf32>
    %496 = math.tanh %495 : vector<2x256xf32>
    %497 = arith.mulf %492, %496 : vector<2x256xf32>
    %cst_140 = arith.constant dense<0.000000e+00> : vector<2xf32>
    %498 = vector.multi_reduction <add>, %497, %cst_140 [1] : vector<2x256xf32> to vector<2xf32>
    %499 = vector.shape_cast %498 : vector<2xf32> to vector<2x1xf32>
    %cst_141 = arith.constant 2.560000e+02 : f32
    %500 = vector.broadcast %cst_141 : f32 to vector<2x1xf32>
    %501 = arith.divf %499, %500 : vector<2x1xf32>
    %502 = vector.broadcast %501 : vector<2x1xf32> to vector<2x256xf32>
    %503 = arith.subf %497, %502 : vector<2x256xf32>
    %504 = arith.mulf %503, %503 : vector<2x256xf32>
    %cst_142 = arith.constant dense<0.000000e+00> : vector<2xf32>
    %505 = vector.multi_reduction <add>, %504, %cst_142 [1] : vector<2x256xf32> to vector<2xf32>
    %506 = vector.shape_cast %505 : vector<2xf32> to vector<2x1xf32>
    %cst_143 = arith.constant 2.560000e+02 : f32
    %507 = vector.broadcast %cst_143 : f32 to vector<2x1xf32>
    %508 = arith.divf %506, %507 : vector<2x1xf32>
    %509 = vector.broadcast %501 : vector<2x1xf32> to vector<2x256xf32>
    %510 = arith.subf %497, %509 : vector<2x256xf32>
    %cst_144 = arith.constant 9.99999974E-6 : f32
    %511 = vector.broadcast %cst_144 : f32 to vector<2x1xf32>
    %512 = arith.addf %508, %511 : vector<2x1xf32>
    %513 = math.rsqrt %512 : vector<2x1xf32>
    %514 = vector.broadcast %513 : vector<2x1xf32> to vector<2x256xf32>
    %515 = arith.mulf %510, %514 : vector<2x256xf32>
    %516 = vector.broadcast %5 : vector<1x256xf32> to vector<2x256xf32>
    %517 = arith.mulf %515, %516 : vector<2x256xf32>
    %518 = vector.broadcast %6 : vector<1x256xf32> to vector<2x256xf32>
    %519 = arith.addf %517, %518 : vector<2x256xf32>
    %520 = arith.truncf %519 : vector<2x256xf32> to vector<2x256xbf16>
    %cst_145 = arith.constant dense<0.000000e+00> : vector<2x64xf32>
    %521 = tpu.matmul %520, %7, %cst_145 {dimension_numbers = #tpu.dot_dimension_numbers<[1], [0], [0], [1], [0, 0, 1, 1], [], []>} : vector<2x256xbf16>, vector<256x64xbf16>, vector<2x64xf32> -> vector<2x64xf32>
    %522 = vector.broadcast %8 : vector<1x64xf32> to vector<2x64xf32>
    %523 = arith.addf %521, %522 : vector<2x64xf32>
    %cst_146 = arith.constant dense<0.000000e+00> : vector<2xf32>
    %524 = vector.multi_reduction <add>, %523, %cst_146 [1] : vector<2x64xf32> to vector<2xf32>
    %525 = vector.shape_cast %524 : vector<2xf32> to vector<2x1xf32>
    %cst_147 = arith.constant 6.400000e+01 : f32
    %526 = vector.broadcast %cst_147 : f32 to vector<2x1xf32>
    %527 = arith.divf %525, %526 : vector<2x1xf32>
    %528 = vector.broadcast %527 : vector<2x1xf32> to vector<2x64xf32>
    %529 = arith.subf %523, %528 : vector<2x64xf32>
    %530 = arith.mulf %529, %529 : vector<2x64xf32>
    %cst_148 = arith.constant dense<0.000000e+00> : vector<2xf32>
    %531 = vector.multi_reduction <add>, %530, %cst_148 [1] : vector<2x64xf32> to vector<2xf32>
    %532 = vector.shape_cast %531 : vector<2xf32> to vector<2x1xf32>
    %cst_149 = arith.constant 6.400000e+01 : f32
    %533 = vector.broadcast %cst_149 : f32 to vector<2x1xf32>
    %534 = arith.divf %532, %533 : vector<2x1xf32>
    %535 = vector.broadcast %527 : vector<2x1xf32> to vector<2x64xf32>
    %536 = arith.subf %523, %535 : vector<2x64xf32>
    %cst_150 = arith.constant 9.99999974E-6 : f32
    %537 = vector.broadcast %cst_150 : f32 to vector<2x1xf32>
    %538 = arith.addf %534, %537 : vector<2x1xf32>
    %539 = math.rsqrt %538 : vector<2x1xf32>
    %540 = vector.broadcast %539 : vector<2x1xf32> to vector<2x64xf32>
    %541 = arith.mulf %536, %540 : vector<2x64xf32>
    %542 = vector.broadcast %9 : vector<1x64xf32> to vector<2x64xf32>
    %543 = arith.mulf %541, %542 : vector<2x64xf32>
    %544 = vector.broadcast %10 : vector<1x64xf32> to vector<2x64xf32>
    %545 = arith.addf %543, %544 : vector<2x64xf32>
    %cst_151 = arith.constant 0.000000e+00 : f32
    %546 = vector.broadcast %cst_151 : f32 to vector<2x64xf32>
    %547 = arith.maximumf %545, %546 : vector<2x64xf32>
    %548 = arith.truncf %547 : vector<2x64xf32> to vector<2x64xbf16>
    %cst_152 = arith.constant dense<0.000000e+00> : vector<2x128xf32>
    %549 = tpu.matmul %548, %11, %cst_152 {dimension_numbers = #tpu.dot_dimension_numbers<[1], [0], [0], [1], [0, 0, 1, 1], [], []>} : vector<2x64xbf16>, vector<64x128xbf16>, vector<2x128xf32> -> vector<2x128xf32>
    %550 = vector.broadcast %12 : vector<1x128xf32> to vector<2x128xf32>
    %551 = arith.addf %549, %550 : vector<2x128xf32>
    %c0_153 = arith.constant 0 : index
    %c5_154 = arith.constant 5 : index
    %c0_155 = arith.constant 0 : index
    %552 = vector.load %arg12[%c0_153, %c5_154, %c0_155] : memref<2x8x128xf32, #tpu.memory_space<vmem>>, vector<2x1x128xf32>
    %553 = vector.shape_cast %552 : vector<2x1x128xf32> to vector<2x128xf32>
    %554 = vector.shape_cast %551 : vector<2x128xf32> to vector<2x1x128xf32>
    tpu.vector_store %arg12[%c0_153, %c5_154, %c0_155], %554 {strides = array<i32>} : memref<2x8x128xf32, #tpu.memory_space<vmem>>, vector<2x1x128xf32>,
    %c0_156 = arith.constant 0 : index
    %c6 = arith.constant 6 : index
    %c0_157 = arith.constant 0 : index
    %555 = vector.load %arg1[%c0_156, %c6, %c0_157] : memref<2x8x1024xbf16, #tpu.memory_space<vmem>>, vector<2x1x1024xbf16>
    %556 = vector.shape_cast %555 : vector<2x1x1024xbf16> to vector<2x1024xbf16>
    %557 = arith.extf %556 : vector<2x1024xbf16> to vector<2x1024xf32>
    %558 = vector.broadcast %4 : vector<1x1024xf32> to vector<2x1024xf32>
    %559 = arith.addf %557, %558 : vector<2x1024xf32>
    %560 = arith.truncf %497 : vector<2x256xf32> to vector<2x256xbf16>
    %cst_158 = arith.constant dense<0.000000e+00> : vector<2x1024xf32>
    %561 = tpu.matmul %560, %3, %cst_158 {dimension_numbers = #tpu.dot_dimension_numbers<[1], [0], [0], [1], [0, 0, 1, 1], [], []>} : vector<2x256xbf16>, vector<256x1024xbf16>, vector<2x1024xf32> -> vector<2x1024xf32>
    %562 = arith.addf %559, %561 : vector<2x1024xf32>
    %563 = vector.extract_strided_slice %562 {offsets = [0, 0], sizes = [2, 256], strides = [1, 1]} : vector<2x1024xf32> to vector<2x256xf32>
    %564 = arith.negf %563 : vector<2x256xf32>
    %565 = math.exp %564 : vector<2x256xf32>
    %cst_159 = arith.constant 1.000000e+00 : f32
    %566 = vector.broadcast %cst_159 : f32 to vector<2x256xf32>
    %567 = arith.addf %566, %565 : vector<2x256xf32>
    %568 = arith.divf %566, %567 : vector<2x256xf32>
    %569 = vector.extract_strided_slice %562 {offsets = [0, 256], sizes = [2, 256], strides = [1, 1]} : vector<2x1024xf32> to vector<2x256xf32>
    %570 = arith.negf %569 : vector<2x256xf32>
    %571 = math.exp %570 : vector<2x256xf32>
    %cst_160 = arith.constant 1.000000e+00 : f32
    %572 = vector.broadcast %cst_160 : f32 to vector<2x256xf32>
    %573 = arith.addf %572, %571 : vector<2x256xf32>
    %574 = arith.divf %572, %573 : vector<2x256xf32>
    %575 = vector.extract_strided_slice %562 {offsets = [0, 512], sizes = [2, 256], strides = [1, 1]} : vector<2x1024xf32> to vector<2x256xf32>
    %576 = math.tanh %575 : vector<2x256xf32>
    %577 = vector.extract_strided_slice %562 {offsets = [0, 768], sizes = [2, 256], strides = [1, 1]} : vector<2x1024xf32> to vector<2x256xf32>
    %578 = arith.negf %577 : vector<2x256xf32>
    %579 = math.exp %578 : vector<2x256xf32>
    %cst_161 = arith.constant 1.000000e+00 : f32
    %580 = vector.broadcast %cst_161 : f32 to vector<2x256xf32>
    %581 = arith.addf %580, %579 : vector<2x256xf32>
    %582 = arith.divf %580, %581 : vector<2x256xf32>
    %583 = arith.mulf %574, %495 : vector<2x256xf32>
    %584 = arith.mulf %568, %576 : vector<2x256xf32>
    %585 = arith.addf %583, %584 : vector<2x256xf32>
    %586 = math.tanh %585 : vector<2x256xf32>
    %587 = arith.mulf %582, %586 : vector<2x256xf32>
    %cst_162 = arith.constant dense<0.000000e+00> : vector<2xf32>
    %588 = vector.multi_reduction <add>, %587, %cst_162 [1] : vector<2x256xf32> to vector<2xf32>
    %589 = vector.shape_cast %588 : vector<2xf32> to vector<2x1xf32>
    %cst_163 = arith.constant 2.560000e+02 : f32
    %590 = vector.broadcast %cst_163 : f32 to vector<2x1xf32>
    %591 = arith.divf %589, %590 : vector<2x1xf32>
    %592 = vector.broadcast %591 : vector<2x1xf32> to vector<2x256xf32>
    %593 = arith.subf %587, %592 : vector<2x256xf32>
    %594 = arith.mulf %593, %593 : vector<2x256xf32>
    %cst_164 = arith.constant dense<0.000000e+00> : vector<2xf32>
    %595 = vector.multi_reduction <add>, %594, %cst_164 [1] : vector<2x256xf32> to vector<2xf32>
    %596 = vector.shape_cast %595 : vector<2xf32> to vector<2x1xf32>
    %cst_165 = arith.constant 2.560000e+02 : f32
    %597 = vector.broadcast %cst_165 : f32 to vector<2x1xf32>
    %598 = arith.divf %596, %597 : vector<2x1xf32>
    %599 = vector.broadcast %591 : vector<2x1xf32> to vector<2x256xf32>
    %600 = arith.subf %587, %599 : vector<2x256xf32>
    %cst_166 = arith.constant 9.99999974E-6 : f32
    %601 = vector.broadcast %cst_166 : f32 to vector<2x1xf32>
    %602 = arith.addf %598, %601 : vector<2x1xf32>
    %603 = math.rsqrt %602 : vector<2x1xf32>
    %604 = vector.broadcast %603 : vector<2x1xf32> to vector<2x256xf32>
    %605 = arith.mulf %600, %604 : vector<2x256xf32>
    %606 = vector.broadcast %5 : vector<1x256xf32> to vector<2x256xf32>
    %607 = arith.mulf %605, %606 : vector<2x256xf32>
    %608 = vector.broadcast %6 : vector<1x256xf32> to vector<2x256xf32>
    %609 = arith.addf %607, %608 : vector<2x256xf32>
    %610 = arith.truncf %609 : vector<2x256xf32> to vector<2x256xbf16>
    %cst_167 = arith.constant dense<0.000000e+00> : vector<2x64xf32>
    %611 = tpu.matmul %610, %7, %cst_167 {dimension_numbers = #tpu.dot_dimension_numbers<[1], [0], [0], [1], [0, 0, 1, 1], [], []>} : vector<2x256xbf16>, vector<256x64xbf16>, vector<2x64xf32> -> vector<2x64xf32>
    %612 = vector.broadcast %8 : vector<1x64xf32> to vector<2x64xf32>
    %613 = arith.addf %611, %612 : vector<2x64xf32>
    %cst_168 = arith.constant dense<0.000000e+00> : vector<2xf32>
    %614 = vector.multi_reduction <add>, %613, %cst_168 [1] : vector<2x64xf32> to vector<2xf32>
    %615 = vector.shape_cast %614 : vector<2xf32> to vector<2x1xf32>
    %cst_169 = arith.constant 6.400000e+01 : f32
    %616 = vector.broadcast %cst_169 : f32 to vector<2x1xf32>
    %617 = arith.divf %615, %616 : vector<2x1xf32>
    %618 = vector.broadcast %617 : vector<2x1xf32> to vector<2x64xf32>
    %619 = arith.subf %613, %618 : vector<2x64xf32>
    %620 = arith.mulf %619, %619 : vector<2x64xf32>
    %cst_170 = arith.constant dense<0.000000e+00> : vector<2xf32>
    %621 = vector.multi_reduction <add>, %620, %cst_170 [1] : vector<2x64xf32> to vector<2xf32>
    %622 = vector.shape_cast %621 : vector<2xf32> to vector<2x1xf32>
    %cst_171 = arith.constant 6.400000e+01 : f32
    %623 = vector.broadcast %cst_171 : f32 to vector<2x1xf32>
    %624 = arith.divf %622, %623 : vector<2x1xf32>
    %625 = vector.broadcast %617 : vector<2x1xf32> to vector<2x64xf32>
    %626 = arith.subf %613, %625 : vector<2x64xf32>
    %cst_172 = arith.constant 9.99999974E-6 : f32
    %627 = vector.broadcast %cst_172 : f32 to vector<2x1xf32>
    %628 = arith.addf %624, %627 : vector<2x1xf32>
    %629 = math.rsqrt %628 : vector<2x1xf32>
    %630 = vector.broadcast %629 : vector<2x1xf32> to vector<2x64xf32>
    %631 = arith.mulf %626, %630 : vector<2x64xf32>
    %632 = vector.broadcast %9 : vector<1x64xf32> to vector<2x64xf32>
    %633 = arith.mulf %631, %632 : vector<2x64xf32>
    %634 = vector.broadcast %10 : vector<1x64xf32> to vector<2x64xf32>
    %635 = arith.addf %633, %634 : vector<2x64xf32>
    %cst_173 = arith.constant 0.000000e+00 : f32
    %636 = vector.broadcast %cst_173 : f32 to vector<2x64xf32>
    %637 = arith.maximumf %635, %636 : vector<2x64xf32>
    %638 = arith.truncf %637 : vector<2x64xf32> to vector<2x64xbf16>
    %cst_174 = arith.constant dense<0.000000e+00> : vector<2x128xf32>
    %639 = tpu.matmul %638, %11, %cst_174 {dimension_numbers = #tpu.dot_dimension_numbers<[1], [0], [0], [1], [0, 0, 1, 1], [], []>} : vector<2x64xbf16>, vector<64x128xbf16>, vector<2x128xf32> -> vector<2x128xf32>
    %640 = vector.broadcast %12 : vector<1x128xf32> to vector<2x128xf32>
    %641 = arith.addf %639, %640 : vector<2x128xf32>
    %c0_175 = arith.constant 0 : index
    %c6_176 = arith.constant 6 : index
    %c0_177 = arith.constant 0 : index
    %642 = vector.load %arg12[%c0_175, %c6_176, %c0_177] : memref<2x8x128xf32, #tpu.memory_space<vmem>>, vector<2x1x128xf32>
    %643 = vector.shape_cast %642 : vector<2x1x128xf32> to vector<2x128xf32>
    %644 = vector.shape_cast %641 : vector<2x128xf32> to vector<2x1x128xf32>
    tpu.vector_store %arg12[%c0_175, %c6_176, %c0_177], %644 {strides = array<i32>} : memref<2x8x128xf32, #tpu.memory_space<vmem>>, vector<2x1x128xf32>,
    %c0_178 = arith.constant 0 : index
    %c7 = arith.constant 7 : index
    %c0_179 = arith.constant 0 : index
    %645 = vector.load %arg1[%c0_178, %c7, %c0_179] : memref<2x8x1024xbf16, #tpu.memory_space<vmem>>, vector<2x1x1024xbf16>
    %646 = vector.shape_cast %645 : vector<2x1x1024xbf16> to vector<2x1024xbf16>
    %647 = arith.extf %646 : vector<2x1024xbf16> to vector<2x1024xf32>
    %648 = vector.broadcast %4 : vector<1x1024xf32> to vector<2x1024xf32>
    %649 = arith.addf %647, %648 : vector<2x1024xf32>
    %650 = arith.truncf %587 : vector<2x256xf32> to vector<2x256xbf16>
    %cst_180 = arith.constant dense<0.000000e+00> : vector<2x1024xf32>
    %651 = tpu.matmul %650, %3, %cst_180 {dimension_numbers = #tpu.dot_dimension_numbers<[1], [0], [0], [1], [0, 0, 1, 1], [], []>} : vector<2x256xbf16>, vector<256x1024xbf16>, vector<2x1024xf32> -> vector<2x1024xf32>
    %652 = arith.addf %649, %651 : vector<2x1024xf32>
    %653 = vector.extract_strided_slice %652 {offsets = [0, 0], sizes = [2, 256], strides = [1, 1]} : vector<2x1024xf32> to vector<2x256xf32>
    %654 = arith.negf %653 : vector<2x256xf32>
    %655 = math.exp %654 : vector<2x256xf32>
    %cst_181 = arith.constant 1.000000e+00 : f32
    %656 = vector.broadcast %cst_181 : f32 to vector<2x256xf32>
    %657 = arith.addf %656, %655 : vector<2x256xf32>
    %658 = arith.divf %656, %657 : vector<2x256xf32>
    %659 = vector.extract_strided_slice %652 {offsets = [0, 256], sizes = [2, 256], strides = [1, 1]} : vector<2x1024xf32> to vector<2x256xf32>
    %660 = arith.negf %659 : vector<2x256xf32>
    %661 = math.exp %660 : vector<2x256xf32>
    %cst_182 = arith.constant 1.000000e+00 : f32
    %662 = vector.broadcast %cst_182 : f32 to vector<2x256xf32>
    %663 = arith.addf %662, %661 : vector<2x256xf32>
    %664 = arith.divf %662, %663 : vector<2x256xf32>
    %665 = vector.extract_strided_slice %652 {offsets = [0, 512], sizes = [2, 256], strides = [1, 1]} : vector<2x1024xf32> to vector<2x256xf32>
    %666 = math.tanh %665 : vector<2x256xf32>
    %667 = vector.extract_strided_slice %652 {offsets = [0, 768], sizes = [2, 256], strides = [1, 1]} : vector<2x1024xf32> to vector<2x256xf32>
    %668 = arith.negf %667 : vector<2x256xf32>
    %669 = math.exp %668 : vector<2x256xf32>
    %cst_183 = arith.constant 1.000000e+00 : f32
    %670 = vector.broadcast %cst_183 : f32 to vector<2x256xf32>
    %671 = arith.addf %670, %669 : vector<2x256xf32>
    %672 = arith.divf %670, %671 : vector<2x256xf32>
    %673 = arith.mulf %664, %585 : vector<2x256xf32>
    %674 = arith.mulf %658, %666 : vector<2x256xf32>
    %675 = arith.addf %673, %674 : vector<2x256xf32>
    %676 = math.tanh %675 : vector<2x256xf32>
    %677 = arith.mulf %672, %676 : vector<2x256xf32>
    %cst_184 = arith.constant dense<0.000000e+00> : vector<2xf32>
    %678 = vector.multi_reduction <add>, %677, %cst_184 [1] : vector<2x256xf32> to vector<2xf32>
    %679 = vector.shape_cast %678 : vector<2xf32> to vector<2x1xf32>
    %cst_185 = arith.constant 2.560000e+02 : f32
    %680 = vector.broadcast %cst_185 : f32 to vector<2x1xf32>
    %681 = arith.divf %679, %680 : vector<2x1xf32>
    %682 = vector.broadcast %681 : vector<2x1xf32> to vector<2x256xf32>
    %683 = arith.subf %677, %682 : vector<2x256xf32>
    %684 = arith.mulf %683, %683 : vector<2x256xf32>
    %cst_186 = arith.constant dense<0.000000e+00> : vector<2xf32>
    %685 = vector.multi_reduction <add>, %684, %cst_186 [1] : vector<2x256xf32> to vector<2xf32>
    %686 = vector.shape_cast %685 : vector<2xf32> to vector<2x1xf32>
    %cst_187 = arith.constant 2.560000e+02 : f32
    %687 = vector.broadcast %cst_187 : f32 to vector<2x1xf32>
    %688 = arith.divf %686, %687 : vector<2x1xf32>
    %689 = vector.broadcast %681 : vector<2x1xf32> to vector<2x256xf32>
    %690 = arith.subf %677, %689 : vector<2x256xf32>
    %cst_188 = arith.constant 9.99999974E-6 : f32
    %691 = vector.broadcast %cst_188 : f32 to vector<2x1xf32>
    %692 = arith.addf %688, %691 : vector<2x1xf32>
    %693 = math.rsqrt %692 : vector<2x1xf32>
    %694 = vector.broadcast %693 : vector<2x1xf32> to vector<2x256xf32>
    %695 = arith.mulf %690, %694 : vector<2x256xf32>
    %696 = vector.broadcast %5 : vector<1x256xf32> to vector<2x256xf32>
    %697 = arith.mulf %695, %696 : vector<2x256xf32>
    %698 = vector.broadcast %6 : vector<1x256xf32> to vector<2x256xf32>
    %699 = arith.addf %697, %698 : vector<2x256xf32>
    %700 = arith.truncf %699 : vector<2x256xf32> to vector<2x256xbf16>
    %cst_189 = arith.constant dense<0.000000e+00> : vector<2x64xf32>
    %701 = tpu.matmul %700, %7, %cst_189 {dimension_numbers = #tpu.dot_dimension_numbers<[1], [0], [0], [1], [0, 0, 1, 1], [], []>} : vector<2x256xbf16>, vector<256x64xbf16>, vector<2x64xf32> -> vector<2x64xf32>
    %702 = vector.broadcast %8 : vector<1x64xf32> to vector<2x64xf32>
    %703 = arith.addf %701, %702 : vector<2x64xf32>
    %cst_190 = arith.constant dense<0.000000e+00> : vector<2xf32>
    %704 = vector.multi_reduction <add>, %703, %cst_190 [1] : vector<2x64xf32> to vector<2xf32>
    %705 = vector.shape_cast %704 : vector<2xf32> to vector<2x1xf32>
    %cst_191 = arith.constant 6.400000e+01 : f32
    %706 = vector.broadcast %cst_191 : f32 to vector<2x1xf32>
    %707 = arith.divf %705, %706 : vector<2x1xf32>
    %708 = vector.broadcast %707 : vector<2x1xf32> to vector<2x64xf32>
    %709 = arith.subf %703, %708 : vector<2x64xf32>
    %710 = arith.mulf %709, %709 : vector<2x64xf32>
    %cst_192 = arith.constant dense<0.000000e+00> : vector<2xf32>
    %711 = vector.multi_reduction <add>, %710, %cst_192 [1] : vector<2x64xf32> to vector<2xf32>
    %712 = vector.shape_cast %711 : vector<2xf32> to vector<2x1xf32>
    %cst_193 = arith.constant 6.400000e+01 : f32
    %713 = vector.broadcast %cst_193 : f32 to vector<2x1xf32>
    %714 = arith.divf %712, %713 : vector<2x1xf32>
    %715 = vector.broadcast %707 : vector<2x1xf32> to vector<2x64xf32>
    %716 = arith.subf %703, %715 : vector<2x64xf32>
    %cst_194 = arith.constant 9.99999974E-6 : f32
    %717 = vector.broadcast %cst_194 : f32 to vector<2x1xf32>
    %718 = arith.addf %714, %717 : vector<2x1xf32>
    %719 = math.rsqrt %718 : vector<2x1xf32>
    %720 = vector.broadcast %719 : vector<2x1xf32> to vector<2x64xf32>
    %721 = arith.mulf %716, %720 : vector<2x64xf32>
    %722 = vector.broadcast %9 : vector<1x64xf32> to vector<2x64xf32>
    %723 = arith.mulf %721, %722 : vector<2x64xf32>
    %724 = vector.broadcast %10 : vector<1x64xf32> to vector<2x64xf32>
    %725 = arith.addf %723, %724 : vector<2x64xf32>
    %cst_195 = arith.constant 0.000000e+00 : f32
    %726 = vector.broadcast %cst_195 : f32 to vector<2x64xf32>
    %727 = arith.maximumf %725, %726 : vector<2x64xf32>
    %728 = arith.truncf %727 : vector<2x64xf32> to vector<2x64xbf16>
    %cst_196 = arith.constant dense<0.000000e+00> : vector<2x128xf32>
    %729 = tpu.matmul %728, %11, %cst_196 {dimension_numbers = #tpu.dot_dimension_numbers<[1], [0], [0], [1], [0, 0, 1, 1], [], []>} : vector<2x64xbf16>, vector<64x128xbf16>, vector<2x128xf32> -> vector<2x128xf32>
    %730 = vector.broadcast %12 : vector<1x128xf32> to vector<2x128xf32>
    %731 = arith.addf %729, %730 : vector<2x128xf32>
    %c0_197 = arith.constant 0 : index
    %c7_198 = arith.constant 7 : index
    %c0_199 = arith.constant 0 : index
    %732 = vector.load %arg12[%c0_197, %c7_198, %c0_199] : memref<2x8x128xf32, #tpu.memory_space<vmem>>, vector<2x1x128xf32>
    %733 = vector.shape_cast %732 : vector<2x1x128xf32> to vector<2x128xf32>
    %734 = vector.shape_cast %731 : vector<2x128xf32> to vector<2x1x128xf32>
    tpu.vector_store %arg12[%c0_197, %c7_198, %c0_199], %734 {strides = array<i32>} : memref<2x8x128xf32, #tpu.memory_space<vmem>>, vector<2x1x128xf32>,
    %c0_200 = arith.constant 0 : index
    %c0_201 = arith.constant 0 : index
    %735 = vector.load %arg13[%c0_200, %c0_201] : memref<2x256xf32, #tpu.memory_space<vmem>>, vector<2x256xf32>
    tpu.vector_store %arg13[%c0_200, %c0_201], %677 {strides = array<i32>} : memref<2x256xf32, #tpu.memory_space<vmem>>, vector<2x256xf32>,
    %c0_202 = arith.constant 0 : index
    %c0_203 = arith.constant 0 : index
    %736 = vector.load %arg14[%c0_202, %c0_203] : memref<2x256xf32, #tpu.memory_space<vmem>>, vector<2x256xf32>
    tpu.vector_store %arg14[%c0_202, %c0_203], %675 {strides = array<i32>} : memref<2x256xf32, #tpu.memory_space<vmem>>, vector<2x256xf32>,
    return
  }
  func.func @transform_0(%arg0: i32) -> (i32, i32, i32) {
    %c0_i32 = arith.constant 0 : i32
    %c0_i32_0 = arith.constant 0 : i32
    %c0_i32_1 = arith.constant 0 : i32
    return %c0_i32, %arg0, %c0_i32_0 : i32, i32, i32
  }
  func.func @transform_1(%arg0: i32) -> (i32, i32) {
    %c0_i32 = arith.constant 0 : i32
    %c0_i32_0 = arith.constant 0 : i32
    %c0_i32_1 = arith.constant 0 : i32
    return %c0_i32, %c0_i32_0 : i32, i32
  }
  func.func @transform_2(%arg0: i32) -> (i32, i32) {
    %c0_i32 = arith.constant 0 : i32
    %c0_i32_0 = arith.constant 0 : i32
    %c0_i32_1 = arith.constant 0 : i32
    return %c0_i32, %c0_i32_0 : i32, i32
  }
  func.func @transform_3(%arg0: i32) -> (i32, i32) {
    %c0_i32 = arith.constant 0 : i32
    %c0_i32_0 = arith.constant 0 : i32
    %c0_i32_1 = arith.constant 0 : i32
    return %c0_i32, %c0_i32_0 : i32, i32
  }
  func.func @transform_4(%arg0: i32) -> (i32, i32) {
    %c0_i32 = arith.constant 0 : i32
    %c0_i32_0 = arith.constant 0 : i32
    %c0_i32_1 = arith.constant 0 : i32
    return %c0_i32, %c0_i32_0 : i32, i32
  }
  func.func @transform_5(%arg0: i32) -> (i32, i32) {
    %c0_i32 = arith.constant 0 : i32
    %c0_i32_0 = arith.constant 0 : i32
    %c0_i32_1 = arith.constant 0 : i32
    return %c0_i32, %c0_i32_0 : i32, i32
  }
  func.func @transform_6(%arg0: i32) -> (i32, i32) {
    %c0_i32 = arith.constant 0 : i32
    %c0_i32_0 = arith.constant 0 : i32
    %c0_i32_1 = arith.constant 0 : i32
    return %c0_i32, %c0_i32_0 : i32, i32
  }
  func.func @transform_7(%arg0: i32) -> (i32, i32) {
    %c0_i32 = arith.constant 0 : i32
    %c0_i32_0 = arith.constant 0 : i32
    %c0_i32_1 = arith.constant 0 : i32
    return %c0_i32, %c0_i32_0 : i32, i32
  }
  func.func @transform_8(%arg0: i32) -> (i32, i32) {
    %c0_i32 = arith.constant 0 : i32
    %c0_i32_0 = arith.constant 0 : i32
    %c0_i32_1 = arith.constant 0 : i32
    return %c0_i32, %c0_i32_0 : i32, i32
  }
  func.func @transform_9(%arg0: i32) -> (i32, i32) {
    %c0_i32 = arith.constant 0 : i32
    %c0_i32_0 = arith.constant 0 : i32
    %c0_i32_1 = arith.constant 0 : i32
    return %c0_i32, %c0_i32_0 : i32, i32
  }
  func.func @transform_10(%arg0: i32) -> (i32, i32) {
    %c0_i32 = arith.constant 0 : i32
    %c0_i32_0 = arith.constant 0 : i32
    %c0_i32_1 = arith.constant 0 : i32
    return %c0_i32, %c0_i32_0 : i32, i32
  }
  func.func @transform_11(%arg0: i32) -> (i32, i32, i32) {
    %c0_i32 = arith.constant 0 : i32
    %c0_i32_0 = arith.constant 0 : i32
    %c0_i32_1 = arith.constant 0 : i32
    return %c0_i32, %arg0, %c0_i32_0 : i32, i32, i32
  }
}

</mosaic_0001>

<llo_original>
// kernel: sequence_model.2
$region0: #{sequence_model.2}
  #allocation0 [shape = 'u32[]', space=smem, size = 0x4, offset = 0x4, fixed_abs, tag = 'smem constant byte address 0x4 - core index']
  #allocation1 [shape = 'u32[144,128]{1,0:T(1,128)}', space=vmem, size = 0x12000, scoped, tag = 'internal scratch']
  %s0 = inlined_call_operand.vmem [shape: bf16[16,1024], index: 0, kind: input, shape index: {}]
  %s1 = inlined_call_operand.vmem [shape: bf16[1024,1024], index: 1, kind: input, shape index: {}]
  %s2 = inlined_call_operand.vmem [shape: bf16[16,1024], index: 2, kind: output, shape index: {}]
  %s3 = sld [smem:[#allocation0]]
  $region18: #{sequence_model.2} parent=0
    _
  %s5 = ssub.s32 1, %s3
  %s6 = scalar_select 0, %s5, %s3
  // Predicated region
  $region2: #{sequence_model.2} parent=0 // pred_check
    _
  $region3: #{sequence_model.2} parent=0 // pred_check_branch
    %8 = sbr.rel (0) target = $region5
  $region4: #{sequence_model.2} parent=0 // pred_region
    _
  $region5: #{sequence_model.2} parent=0 // pred_fallthru
    _
  // Predicated region
  $region6: #{sequence_model.2} parent=0 // pred_check
    _
  $region7: #{sequence_model.2} parent=0 // pred_check_branch
    %10 = sbr.rel (0) target = $region9
  $region8: #{sequence_model.2} parent=0 // pred_region
    _
  $region9: #{sequence_model.2} parent=0 // pred_fallthru
    _
  %v11 = vld [vmem:[%s0] sm:$0xff]
  %v12 = vld [vmem:[%s0 + $0x8] sm:$0xff]
  %v13 = vld [vmem:[%s0 + $0x10] sm:$0xff]
  %v14 = vld [vmem:[%s0 + $0x18] sm:$0xff]
  %v15 = vld [vmem:[%s0 + $0x20] sm:$0xff]
  %v16 = vld [vmem:[%s0 + $0x28] sm:$0xff]
  %v17 = vld [vmem:[%s0 + $0x30] sm:$0xff]
  %v18 = vld [vmem:[%s0 + $0x38] sm:$0xff]
  %v19 = vld [vmem:[%s1] sm:$0xff]
  %v20 = vld [vmem:[%s1 + $0x8] sm:$0xff]
  %v21 = vld [vmem:[%s1 + $0x10] sm:$0xff]
  %v22 = vld [vmem:[%s1 + $0x18] sm:$0xff]
  %v23 = vld [vmem:[%s1 + $0x20] sm:$0xff]
  %v24 = vld [vmem:[%s1 + $0x28] sm:$0xff]
  %v25 = vld [vmem:[%s1 + $0x30] sm:$0xff]
  %v26 = vld [vmem:[%s1 + $0x38] sm:$0xff]
  %v27 = vld [vmem:[%s1 + $0x40] sm:$0xff]
  %v28 = vld [vmem:[%s1 + $0x48] sm:$0xff]
  %v29 = vld [vmem:[%s1 + $0x50] sm:$0xff]
  %v30 = vld [vmem:[%s1 + $0x58] sm:$0xff]
  %v31 = vld [vmem:[%s1 + $0x60] sm:$0xff]
  %v32 = vld [vmem:[%s1 + $0x68] sm:$0xff]
  %v33 = vld [vmem:[%s1 + $0x70] sm:$0xff]
  %v34 = vld [vmem:[%s1 + $0x78] sm:$0xff]
  %v35 = vld [vmem:[%s1 + $0x80] sm:$0xff]
  %v36 = vld [vmem:[%s1 + $0x88] sm:$0xff]
  %v37 = vld [vmem:[%s1 + $0x90] sm:$0xff]
  %v38 = vld [vmem:[%s1 + $0x98] sm:$0xff]
  %v39 = vld [vmem:[%s1 + $0xa0] sm:$0xff]
  %v40 = vld [vmem:[%s1 + $0xa8] sm:$0xff]
  %v41 = vld [vmem:[%s1 + $0xb0] sm:$0xff]
  %v42 = vld [vmem:[%s1 + $0xb8] sm:$0xff]
  %v43 = vld [vmem:[%s1 + $0xc0] sm:$0xff]
  %v44 = vld [vmem:[%s1 + $0xc8] sm:$0xff]
  %v45 = vld [vmem:[%s1 + $0xd0] sm:$0xff]
  %v46 = vld [vmem:[%s1 + $0xd8] sm:$0xff]
  %v47 = vld [vmem:[%s1 + $0xe0] sm:$0xff]
  %v48 = vld [vmem:[%s1 + $0xe8] sm:$0xff]
  %v49 = vld [vmem:[%s1 + $0xf0] sm:$0xff]
  %v50 = vld [vmem:[%s1 + $0xf8] sm:$0xff]
  %v51 = vld [vmem:[%s1 + $0x100] sm:$0xff]
  %v52 = vld [vmem:[%s1 + $0x108] sm:$0xff]
  %v53 = vld [vmem:[%s1 + $0x110] sm:$0xff]
  %v54 = vld [vmem:[%s1 + $0x118] sm:$0xff]
  %v55 = vld [vmem:[%s1 + $0x120] sm:$0xff]
  %v56 = vld [vmem:[%s1 + $0x128] sm:$0xff]
  %v57 = vld [vmem:[%s1 + $0x130] sm:$0xff]
  %v58 = vld [vmem:[%s1 + $0x138] sm:$0xff]
  %v59 = vld [vmem:[%s1 + $0x140] sm:$0xff]
  %v60 = vld [vmem:[%s1 + $0x148] sm:$0xff]
  %v61 = vld [vmem:[%s1 + $0x150] sm:$0xff]
  %v62 = vld [vmem:[%s1 + $0x158] sm:$0xff]
  %v63 = vld [vmem:[%s1 + $0x160] sm:$0xff]
  %v64 = vld [vmem:[%s1 + $0x168] sm:$0xff]
  %v65 = vld [vmem:[%s1 + $0x170] sm:$0xff]
  %v66 = vld [vmem:[%s1 + $0x178] sm:$0xff]
  %v67 = vld [vmem:[%s1 + $0x180] sm:$0xff]
  %v68 = vld [vmem:[%s1 + $0x188] sm:$0xff]
  %v69 = vld [vmem:[%s1 + $0x190] sm:$0xff]
  %v70 = vld [vmem:[%s1 + $0x198] sm:$0xff]
  %v71 = vld [vmem:[%s1 + $0x1a0] sm:$0xff]
  %v72 = vld [vmem:[%s1 + $0x1a8] sm:$0xff]
  %v73 = vld [vmem:[%s1 + $0x1b0] sm:$0xff]
  %v74 = vld [vmem:[%s1 + $0x1b8] sm:$0xff]
  %v75 = vld [vmem:[%s1 + $0x1c0] sm:$0xff]
  %v76 = vld [vmem:[%s1 + $0x1c8] sm:$0xff]
  %v77 = vld [vmem:[%s1 + $0x1d0] sm:$0xff]
  %v78 = vld [vmem:[%s1 + $0x1d8] sm:$0xff]
  %v79 = vld [vmem:[%s1 + $0x1e0] sm:$0xff]
  %v80 = vld [vmem:[%s1 + $0x1e8] sm:$0xff]
  %v81 = vld [vmem:[%s1 + $0x1f0] sm:$0xff]
  %v82 = vld [vmem:[%s1 + $0x1f8] sm:$0xff]
  %v83 = vld [vmem:[%s1 + $0x200] sm:$0xff]
  %v84 = vld [vmem:[%s1 + $0x208] sm:$0xff]
  %v85 = vld [vmem:[%s1 + $0x210] sm:$0xff]
  %v86 = vld [vmem:[%s1 + $0x218] sm:$0xff]
  %v87 = vld [vmem:[%s1 + $0x220] sm:$0xff]
  %v88 = vld [vmem:[%s1 + $0x228] sm:$0xff]
  %v89 = vld [vmem:[%s1 + $0x230] sm:$0xff]
  %v90 = vld [vmem:[%s1 + $0x238] sm:$0xff]
  %v91 = vld [vmem:[%s1 + $0x240] sm:$0xff]
  %v92 = vld [vmem:[%s1 + $0x248] sm:$0xff]
  %v93 = vld [vmem:[%s1 + $0x250] sm:$0xff]
  %v94 = vld [vmem:[%s1 + $0x258] sm:$0xff]
  %v95 = vld [vmem:[%s1 + $0x260] sm:$0xff]
  %v96 = vld [vmem:[%s1 + $0x268] sm:$0xff]
  %v97 = vld [vmem:[%s1 + $0x270] sm:$0xff]
  %v98 = vld [vmem:[%s1 + $0x278] sm:$0xff]
  %v99 = vld [vmem:[%s1 + $0x280] sm:$0xff]
  %v100 = vld [vmem:[%s1 + $0x288] sm:$0xff]
  %v101 = vld [vmem:[%s1 + $0x290] sm:$0xff]
  %v102 = vld [vmem:[%s1 + $0x298] sm:$0xff]
  %v103 = vld [vmem:[%s1 + $0x2a0] sm:$0xff]
  %v104 = vld [vmem:[%s1 + $0x2a8] sm:$0xff]
  %v105 = vld [vmem:[%s1 + $0x2b0] sm:$0xff]
  %v106 = vld [vmem:[%s1 + $0x2b8] sm:$0xff]
  %v107 = vld [vmem:[%s1 + $0x2c0] sm:$0xff]
  %v108 = vld [vmem:[%s1 + $0x2c8] sm:$0xff]
  %v109 = vld [vmem:[%s1 + $0x2d0] sm:$0xff]
  %v110 = vld [vmem:[%s1 + $0x2d8] sm:$0xff]
  %v111 = vld [vmem:[%s1 + $0x2e0] sm:$0xff]
  %v112 = vld [vmem:[%s1 + $0x2e8] sm:$0xff]
  %v113 = vld [vmem:[%s1 + $0x2f0] sm:$0xff]
  %v114 = vld [vmem:[%s1 + $0x2f8] sm:$0xff]
  %v115 = vld [vmem:[%s1 + $0x300] sm:$0xff]
  %v116 = vld [vmem:[%s1 + $0x308] sm:$0xff]
  %v117 = vld [vmem:[%s1 + $0x310] sm:$0xff]
  %v118 = vld [vmem:[%s1 + $0x318] sm:$0xff]
  %v119 = vld [vmem:[%s1 + $0x320] sm:$0xff]
  %v120 = vld [vmem:[%s1 + $0x328] sm:$0xff]
  %v121 = vld [vmem:[%s1 + $0x330] sm:$0xff]
  %v122 = vld [vmem:[%s1 + $0x338] sm:$0xff]
  %v123 = vld [vmem:[%s1 + $0x340] sm:$0xff]
  %v124 = vld [vmem:[%s1 + $0x348] sm:$0xff]
  %v125 = vld [vmem:[%s1 + $0x350] sm:$0xff]
  %v126 = vld [vmem:[%s1 + $0x358] sm:$0xff]
  %v127 = vld [vmem:[%s1 + $0x360] sm:$0xff]
  %v128 = vld [vmem:[%s1 + $0x368] sm:$0xff]
  %v129 = vld [vmem:[%s1 + $0x370] sm:$0xff]
  %v130 = vld [vmem:[%s1 + $0x378] sm:$0xff]
  %v131 = vld [vmem:[%s1 + $0x380] sm:$0xff]
  %v132 = vld [vmem:[%s1 + $0x388] sm:$0xff]
  %v133 = vld [vmem:[%s1 + $0x390] sm:$0xff]
  %v134 = vld [vmem:[%s1 + $0x398] sm:$0xff]
  %v135 = vld [vmem:[%s1 + $0x3a0] sm:$0xff]
  %v136 = vld [vmem:[%s1 + $0x3a8] sm:$0xff]
  %v137 = vld [vmem:[%s1 + $0x3b0] sm:$0xff]
  %v138 = vld [vmem:[%s1 + $0x3b8] sm:$0xff]
  %v139 = vld [vmem:[%s1 + $0x3c0] sm:$0xff]
  %v140 = vld [vmem:[%s1 + $0x3c8] sm:$0xff]
  %v141 = vld [vmem:[%s1 + $0x3d0] sm:$0xff]
  %v142 = vld [vmem:[%s1 + $0x3d8] sm:$0xff]
  %v143 = vld [vmem:[%s1 + $0x3e0] sm:$0xff]
  %v144 = vld [vmem:[%s1 + $0x3e8] sm:$0xff]
  %v145 = vld [vmem:[%s1 + $0x3f0] sm:$0xff]
  %v146 = vld [vmem:[%s1 + $0x3f8] sm:$0xff]
  %v147 = vld [vmem:[%s1 + $0x400] sm:$0xff]
  %v148 = vld [vmem:[%s1 + $0x408] sm:$0xff]
  %v149 = vld [vmem:[%s1 + $0x410] sm:$0xff]
  %v150 = vld [vmem:[%s1 + $0x418] sm:$0xff]
  %v151 = vld [vmem:[%s1 + $0x420] sm:$0xff]
  %v152 = vld [vmem:[%s1 + $0x428] sm:$0xff]
  %v153 = vld [vmem:[%s1 + $0x430] sm:$0xff]
  %v154 = vld [vmem:[%s1 + $0x438] sm:$0xff]
  %v155 = vld [vmem:[%s1 + $0x440] sm:$0xff]
  %v156 = vld [vmem:[%s1 + $0x448] sm:$0xff]
  %v157 = vld [vmem:[%s1 + $0x450] sm:$0xff]
  %v158 = vld [vmem:[%s1 + $0x458] sm:$0xff]
  %v159 = vld [vmem:[%s1 + $0x460] sm:$0xff]
  %v160 = vld [vmem:[%s1 + $0x468] sm:$0xff]
  %v161 = vld [vmem:[%s1 + $0x470] sm:$0xff]
  %v162 = vld [vmem:[%s1 + $0x478] sm:$0xff]
  %v163 = vld [vmem:[%s1 + $0x480] sm:$0xff]
  %v164 = vld [vmem:[%s1 + $0x488] sm:$0xff]
  %v165 = vld [vmem:[%s1 + $0x490] sm:$0xff]
  %v166 = vld [vmem:[%s1 + $0x498] sm:$0xff]
  %v167 = vld [vmem:[%s1 + $0x4a0] sm:$0xff]
  %v168 = vld [vmem:[%s1 + $0x4a8] sm:$0xff]
  %v169 = vld [vmem:[%s1 + $0x4b0] sm:$0xff]
  %v170 = vld [vmem:[%s1 + $0x4b8] sm:$0xff]
  %v171 = vld [vmem:[%s1 + $0x4c0] sm:$0xff]
  %v172 = vld [vmem:[%s1 + $0x4c8] sm:$0xff]
  %v173 = vld [vmem:[%s1 + $0x4d0] sm:$0xff]
  %v174 = vld [vmem:[%s1 + $0x4d8] sm:$0xff]
  %v175 = vld [vmem:[%s1 + $0x4e0] sm:$0xff]
  %v176 = vld [vmem:[%s1 + $0x4e8] sm:$0xff]
  %v177 = vld [vmem:[%s1 + $0x4f0] sm:$0xff]
  %v178 = vld [vmem:[%s1 + $0x4f8] sm:$0xff]
  %v179 = vld [vmem:[%s1 + $0x500] sm:$0xff]
  %v180 = vld [vmem:[%s1 + $0x508] sm:$0xff]
  %v181 = vld [vmem:[%s1 + $0x510] sm:$0xff]
  %v182 = vld [vmem:[%s1 + $0x518] sm:$0xff]
  %v183 = vld [vmem:[%s1 + $0x520] sm:$0xff]
  %v184 = vld [vmem:[%s1 + $0x528] sm:$0xff]
  %v185 = vld [vmem:[%s1 + $0x530] sm:$0xff]
  %v186 = vld [vmem:[%s1 + $0x538] sm:$0xff]
  %v187 = vld [vmem:[%s1 + $0x540] sm:$0xff]
  %v188 = vld [vmem:[%s1 + $0x548] sm:$0xff]
  %v189 = vld [vmem:[%s1 + $0x550] sm:$0xff]
  %v190 = vld [vmem:[%s1 + $0x558] sm:$0xff]
  %v191 = vld [vmem:[%s1 + $0x560] sm:$0xff]
  %v192 = vld [vmem:[%s1 + $0x568] sm:$0xff]
  %v193 = vld [vmem:[%s1 + $0x570] sm:$0xff]
  %v194 = vld [vmem:[%s1 + $0x578] sm:$0xff]
  %v195 = vld [vmem:[%s1 + $0x580] sm:$0xff]
  %v196 = vld [vmem:[%s1 + $0x588] sm:$0xff]
  %v197 = vld [vmem:[%s1 + $0x590] sm:$0xff]
  %v198 = vld [vmem:[%s1 + $0x598] sm:$0xff]
  %v199 = vld [vmem:[%s1 + $0x5a0] sm:$0xff]
  %v200 = vld [vmem:[%s1 + $0x5a8] sm:$0xff]
  %v201 = vld [vmem:[%s1 + $0x5b0] sm:$0xff]
  %v202 = vld [vmem:[%s1 + $0x5b8] sm:$0xff]
  %v203 = vld [vmem:[%s1 + $0x5c0] sm:$0xff]
  %v204 = vld [vmem:[%s1 + $0x5c8] sm:$0xff]
  %v205 = vld [vmem:[%s1 + $0x5d0] sm:$0xff]
  %v206 = vld [vmem:[%s1 + $0x5d8] sm:$0xff]
  %v207 = vld [vmem:[%s1 + $0x5e0] sm:$0xff]
  %v208 = vld [vmem:[%s1 + $0x5e8] sm:$0xff]
  %v209 = vld [vmem:[%s1 + $0x5f0] sm:$0xff]
  %v210 = vld [vmem:[%s1 + $0x5f8] sm:$0xff]
  %v211 = vld [vmem:[%s1 + $0x600] sm:$0xff]
  %v212 = vld [vmem:[%s1 + $0x608] sm:$0xff]
  %v213 = vld [vmem:[%s1 + $0x610] sm:$0xff]
  %v214 = vld [vmem:[%s1 + $0x618] sm:$0xff]
  %v215 = vld [vmem:[%s1 + $0x620] sm:$0xff]
  %v216 = vld [vmem:[%s1 + $0x628] sm:$0xff]
  %v217 = vld [vmem:[%s1 + $0x630] sm:$0xff]
  %v218 = vld [vmem:[%s1 + $0x638] sm:$0xff]
  %v219 = vld [vmem:[%s1 + $0x640] sm:$0xff]
  %v220 = vld [vmem:[%s1 + $0x648] sm:$0xff]
  %v221 = vld [vmem:[%s1 + $0x650] sm:$0xff]
  %v222 = vld [vmem:[%s1 + $0x658] sm:$0xff]
  %v223 = vld [vmem:[%s1 + $0x660] sm:$0xff]
  %v224 = vld [vmem:[%s1 + $0x668] sm:$0xff]
  %v225 = vld [vmem:[%s1 + $0x670] sm:$0xff]
  %v226 = vld [vmem:[%s1 + $0x678] sm:$0xff]
  %v227 = vld [vmem:[%s1 + $0x680] sm:$0xff]
  %v228 = vld [vmem:[%s1 + $0x688] sm:$0xff]
  %v229 = vld [vmem:[%s1 + $0x690] sm:$0xff]
  %v230 = vld [vmem:[%s1 + $0x698] sm:$0xff]
  %v231 = vld [vmem:[%s1 + $0x6a0] sm:$0xff]
  %v232 = vld [vmem:[%s1 + $0x6a8] sm:$0xff]
  %v233 = vld [vmem:[%s1 + $0x6b0] sm:$0xff]
  %v234 = vld [vmem:[%s1 + $0x6b8] sm:$0xff]
  %v235 = vld [vmem:[%s1 + $0x6c0] sm:$0xff]
  %v236 = vld [vmem:[%s1 + $0x6c8] sm:$0xff]
  %v237 = vld [vmem:[%s1 + $0x6d0] sm:$0xff]
  %v238 = vld [vmem:[%s1 + $0x6d8] sm:$0xff]
  %v239 = vld [vmem:[%s1 + $0x6e0] sm:$0xff]
  %v240 = vld [vmem:[%s1 + $0x6e8] sm:$0xff]
  %v241 = vld [vmem:[%s1 + $0x6f0] sm:$0xff]
  %v242 = vld [vmem:[%s1 + $0x6f8] sm:$0xff]
  %v243 = vld [vmem:[%s1 + $0x700] sm:$0xff]
  %v244 = vld [vmem:[%s1 + $0x708] sm:$0xff]
  %v245 = vld [vmem:[%s1 + $0x710] sm:$0xff]
  %v246 = vld [vmem:[%s1 + $0x718] sm:$0xff]
  %v247 = vld [vmem:[%s1 + $0x720] sm:$0xff]
  %v248 = vld [vmem:[%s1 + $0x728] sm:$0xff]
  %v249 = vld [vmem:[%s1 + $0x730] sm:$0xff]
  %v250 = vld [vmem:[%s1 + $0x738] sm:$0xff]
  %v251 = vld [vmem:[%s1 + $0x740] sm:$0xff]
  %v252 = vld [vmem:[%s1 + $0x748] sm:$0xff]
  %v253 = vld [vmem:[%s1 + $0x750] sm:$0xff]
  %v254 = vld [vmem:[%s1 + $0x758] sm:$0xff]
  %v255 = vld [vmem:[%s1 + $0x760] sm:$0xff]
  %v256 = vld [vmem:[%s1 + $0x768] sm:$0xff]
  %v257 = vld [vmem:[%s1 + $0x770] sm:$0xff]
  %v258 = vld [vmem:[%s1 + $0x778] sm:$0xff]
  %v259 = vld [vmem:[%s1 + $0x780] sm:$0xff]
  %v260 = vld [vmem:[%s1 + $0x788] sm:$0xff]
  %v261 = vld [vmem:[%s1 + $0x790] sm:$0xff]
  %v262 = vld [vmem:[%s1 + $0x798] sm:$0xff]
  %v263 = vld [vmem:[%s1 + $0x7a0] sm:$0xff]
  %v264 = vld [vmem:[%s1 + $0x7a8] sm:$0xff]
  %v265 = vld [vmem:[%s1 + $0x7b0] sm:$0xff]
  %v266 = vld [vmem:[%s1 + $0x7b8] sm:$0xff]
  %v267 = vld [vmem:[%s1 + $0x7c0] sm:$0xff]
  %v268 = vld [vmem:[%s1 + $0x7c8] sm:$0xff]
  %v269 = vld [vmem:[%s1 + $0x7d0] sm:$0xff]
  %v270 = vld [vmem:[%s1 + $0x7d8] sm:$0xff]
  %v271 = vld [vmem:[%s1 + $0x7e0] sm:$0xff]
  %v272 = vld [vmem:[%s1 + $0x7e8] sm:$0xff]
  %v273 = vld [vmem:[%s1 + $0x7f0] sm:$0xff]
  %v274 = vld [vmem:[%s1 + $0x7f8] sm:$0xff]
  %v275 = vld [vmem:[%s1 + $0x800] sm:$0xff]
  %v276 = vld [vmem:[%s1 + $0x808] sm:$0xff]
  %v277 = vld [vmem:[%s1 + $0x810] sm:$0xff]
  %v278 = vld [vmem:[%s1 + $0x818] sm:$0xff]
  %v279 = vld [vmem:[%s1 + $0x820] sm:$0xff]
  %v280 = vld [vmem:[%s1 + $0x828] sm:$0xff]
  %v281 = vld [vmem:[%s1 + $0x830] sm:$0xff]
  %v282 = vld [vmem:[%s1 + $0x838] sm:$0xff]
  %v283 = vld [vmem:[%s1 + $0x840] sm:$0xff]
  %v284 = vld [vmem:[%s1 + $0x848] sm:$0xff]
  %v285 = vld [vmem:[%s1 + $0x850] sm:$0xff]
  %v286 = vld [vmem:[%s1 + $0x858] sm:$0xff]
  %v287 = vld [vmem:[%s1 + $0x860] sm:$0xff]
  %v288 = vld [vmem:[%s1 + $0x868] sm:$0xff]
  %v289 = vld [vmem:[%s1 + $0x870] sm:$0xff]
  %v290 = vld [vmem:[%s1 + $0x878] sm:$0xff]
  %v291 = vld [vmem:[%s1 + $0x880] sm:$0xff]
  %v292 = vld [vmem:[%s1 + $0x888] sm:$0xff]
  %v293 = vld [vmem:[%s1 + $0x890] sm:$0xff]
  %v294 = vld [vmem:[%s1 + $0x898] sm:$0xff]
  %v295 = vld [vmem:[%s1 + $0x8a0] sm:$0xff]
  %v296 = vld [vmem:[%s1 + $0x8a8] sm:$0xff]
  %v297 = vld [vmem:[%s1 + $0x8b0] sm:$0xff]
  %v298 = vld [vmem:[%s1 + $0x8b8] sm:$0xff]
  %v299 = vld [vmem:[%s1 + $0x8c0] sm:$0xff]
  %v300 = vld [vmem:[%s1 + $0x8c8] sm:$0xff]
  %v301 = vld [vmem:[%s1 + $0x8d0] sm:$0xff]
  %v302 = vld [vmem:[%s1 + $0x8d8] sm:$0xff]
  %v303 = vld [vmem:[%s1 + $0x8e0] sm:$0xff]
  %v304 = vld [vmem:[%s1 + $0x8e8] sm:$0xff]
  %v305 = vld [vmem:[%s1 + $0x8f0] sm:$0xff]
  %v306 = vld [vmem:[%s1 + $0x8f8] sm:$0xff]
  %v307 = vld [vmem:[%s1 + $0x900] sm:$0xff]
  %v308 = vld [vmem:[%s1 + $0x908] sm:$0xff]
  %v309 = vld [vmem:[%s1 + $0x910] sm:$0xff]
  %v310 = vld [vmem:[%s1 + $0x918] sm:$0xff]
  %v311 = vld [vmem:[%s1 + $0x920] sm:$0xff]
  %v312 = vld [vmem:[%s1 + $0x928] sm:$0xff]
  %v313 = vld [vmem:[%s1 + $0x930] sm:$0xff]
  %v314 = vld [vmem:[%s1 + $0x938] sm:$0xff]
  %v315 = vld [vmem:[%s1 + $0x940] sm:$0xff]
  %v316 = vld [vmem:[%s1 + $0x948] sm:$0xff]
  %v317 = vld [vmem:[%s1 + $0x950] sm:$0xff]
  %v318 = vld [vmem:[%s1 + $0x958] sm:$0xff]
  %v319 = vld [vmem:[%s1 + $0x960] sm:$0xff]
  %v320 = vld [vmem:[%s1 + $0x968] sm:$0xff]
  %v321 = vld [vmem:[%s1 + $0x970] sm:$0xff]
  %v322 = vld [vmem:[%s1 + $0x978] sm:$0xff]
  %v323 = vld [vmem:[%s1 + $0x980] sm:$0xff]
  %v324 = vld [vmem:[%s1 + $0x988] sm:$0xff]
  %v325 = vld [vmem:[%s1 + $0x990] sm:$0xff]
  %v326 = vld [vmem:[%s1 + $0x998] sm:$0xff]
  %v327 = vld [vmem:[%s1 + $0x9a0] sm:$0xff]
  %v328 = vld [vmem:[%s1 + $0x9a8] sm:$0xff]
  %v329 = vld [vmem:[%s1 + $0x9b0] sm:$0xff]
  %v330 = vld [vmem:[%s1 + $0x9b8] sm:$0xff]
  %v331 = vld [vmem:[%s1 + $0x9c0] sm:$0xff]
  %v332 = vld [vmem:[%s1 + $0x9c8] sm:$0xff]
  %v333 = vld [vmem:[%s1 + $0x9d0] sm:$0xff]
  %v334 = vld [vmem:[%s1 + $0x9d8] sm:$0xff]
  %v335 = vld [vmem:[%s1 + $0x9e0] sm:$0xff]
  %v336 = vld [vmem:[%s1 + $0x9e8] sm:$0xff]
  %v337 = vld [vmem:[%s1 + $0x9f0] sm:$0xff]
  %v338 = vld [vmem:[%s1 + $0x9f8] sm:$0xff]
  %v339 = vld [vmem:[%s1 + $0xa00] sm:$0xff]
  %v340 = vld [vmem:[%s1 + $0xa08] sm:$0xff]
  %v341 = vld [vmem:[%s1 + $0xa10] sm:$0xff]
  %v342 = vld [vmem:[%s1 + $0xa18] sm:$0xff]
  %v343 = vld [vmem:[%s1 + $0xa20] sm:$0xff]
  %v344 = vld [vmem:[%s1 + $0xa28] sm:$0xff]
  %v345 = vld [vmem:[%s1 + $0xa30] sm:$0xff]
  %v346 = vld [vmem:[%s1 + $0xa38] sm:$0xff]
  %v347 = vld [vmem:[%s1 + $0xa40] sm:$0xff]
  %v348 = vld [vmem:[%s1 + $0xa48] sm:$0xff]
  %v349 = vld [vmem:[%s1 + $0xa50] sm:$0xff]
  %v350 = vld [vmem:[%s1 + $0xa58] sm:$0xff]
  %v351 = vld [vmem:[%s1 + $0xa60] sm:$0xff]
  %v352 = vld [vmem:[%s1 + $0xa68] sm:$0xff]
  %v353 = vld [vmem:[%s1 + $0xa70] sm:$0xff]
  %v354 = vld [vmem:[%s1 + $0xa78] sm:$0xff]
  %v355 = vld [vmem:[%s1 + $0xa80] sm:$0xff]
  %v356 = vld [vmem:[%s1 + $0xa88] sm:$0xff]
  %v357 = vld [vmem:[%s1 + $0xa90] sm:$0xff]
  %v358 = vld [vmem:[%s1 + $0xa98] sm:$0xff]
  %v359 = vld [vmem:[%s1 + $0xaa0] sm:$0xff]
  %v360 = vld [vmem:[%s1 + $0xaa8] sm:$0xff]
  %v361 = vld [vmem:[%s1 + $0xab0] sm:$0xff]
  %v362 = vld [vmem:[%s1 + $0xab8] sm:$0xff]
  %v363 = vld [vmem:[%s1 + $0xac0] sm:$0xff]
  %v364 = vld [vmem:[%s1 + $0xac8] sm:$0xff]
  %v365 = vld [vmem:[%s1 + $0xad0] sm:$0xff]
  %v366 = vld [vmem:[%s1 + $0xad8] sm:$0xff]
  %v367 = vld [vmem:[%s1 + $0xae0] sm:$0xff]
  %v368 = vld [vmem:[%s1 + $0xae8] sm:$0xff]
  %v369 = vld [vmem:[%s1 + $0xaf0] sm:$0xff]
  %v370 = vld [vmem:[%s1 + $0xaf8] sm:$0xff]
  %v371 = vld [vmem:[%s1 + $0xb00] sm:$0xff]
  %v372 = vld [vmem:[%s1 + $0xb08] sm:$0xff]
  %v373 = vld [vmem:[%s1 + $0xb10] sm:$0xff]
  %v374 = vld [vmem:[%s1 + $0xb18] sm:$0xff]
  %v375 = vld [vmem:[%s1 + $0xb20] sm:$0xff]
  %v376 = vld [vmem:[%s1 + $0xb28] sm:$0xff]
  %v377 = vld [vmem:[%s1 + $0xb30] sm:$0xff]
  %v378 = vld [vmem:[%s1 + $0xb38] sm:$0xff]
  %v379 = vld [vmem:[%s1 + $0xb40] sm:$0xff]
  %v380 = vld [vmem:[%s1 + $0xb48] sm:$0xff]
  %v381 = vld [vmem:[%s1 + $0xb50] sm:$0xff]
  %v382 = vld [vmem:[%s1 + $0xb58] sm:$0xff]
  %v383 = vld [vmem:[%s1 + $0xb60] sm:$0xff]
  %v384 = vld [vmem:[%s1 + $0xb68] sm:$0xff]
  %v385 = vld [vmem:[%s1 + $0xb70] sm:$0xff]
  %v386 = vld [vmem:[%s1 + $0xb78] sm:$0xff]
  %v387 = vld [vmem:[%s1 + $0xb80] sm:$0xff]
  %v388 = vld [vmem:[%s1 + $0xb88] sm:$0xff]
  %v389 = vld [vmem:[%s1 + $0xb90] sm:$0xff]
  %v390 = vld [vmem:[%s1 + $0xb98] sm:$0xff]
  %v391 = vld [vmem:[%s1 + $0xba0] sm:$0xff]
  %v392 = vld [vmem:[%s1 + $0xba8] sm:$0xff]
  %v393 = vld [vmem:[%s1 + $0xbb0] sm:$0xff]
  %v394 = vld [vmem:[%s1 + $0xbb8] sm:$0xff]
  %v395 = vld [vmem:[%s1 + $0xbc0] sm:$0xff]
  %v396 = vld [vmem:[%s1 + $0xbc8] sm:$0xff]
  %v397 = vld [vmem:[%s1 + $0xbd0] sm:$0xff]
  %v398 = vld [vmem:[%s1 + $0xbd8] sm:$0xff]
  %v399 = vld [vmem:[%s1 + $0xbe0] sm:$0xff]
  %v400 = vld [vmem:[%s1 + $0xbe8] sm:$0xff]
  %v401 = vld [vmem:[%s1 + $0xbf0] sm:$0xff]
  %v402 = vld [vmem:[%s1 + $0xbf8] sm:$0xff]
  %v403 = vld [vmem:[%s1 + $0xc00] sm:$0xff]
  %v404 = vld [vmem:[%s1 + $0xc08] sm:$0xff]
  %v405 = vld [vmem:[%s1 + $0xc10] sm:$0xff]
  %v406 = vld [vmem:[%s1 + $0xc18] sm:$0xff]
  %v407 = vld [vmem:[%s1 + $0xc20] sm:$0xff]
  %v408 = vld [vmem:[%s1 + $0xc28] sm:$0xff]
  %v409 = vld [vmem:[%s1 + $0xc30] sm:$0xff]
  %v410 = vld [vmem:[%s1 + $0xc38] sm:$0xff]
  %v411 = vld [vmem:[%s1 + $0xc40] sm:$0xff]
  %v412 = vld [vmem:[%s1 + $0xc48] sm:$0xff]
  %v413 = vld [vmem:[%s1 + $0xc50] sm:$0xff]
  %v414 = vld [vmem:[%s1 + $0xc58] sm:$0xff]
  %v415 = vld [vmem:[%s1 + $0xc60] sm:$0xff]
  %v416 = vld [vmem:[%s1 + $0xc68] sm:$0xff]
  %v417 = vld [vmem:[%s1 + $0xc70] sm:$0xff]
  %v418 = vld [vmem:[%s1 + $0xc78] sm:$0xff]
  %v419 = vld [vmem:[%s1 + $0xc80] sm:$0xff]
  %v420 = vld [vmem:[%s1 + $0xc88] sm:$0xff]
  %v421 = vld [vmem:[%s1 + $0xc90] sm:$0xff]
  %v422 = vld [vmem:[%s1 + $0xc98] sm:$0xff]
  %v423 = vld [vmem:[%s1 + $0xca0] sm:$0xff]
  %v424 = vld [vmem:[%s1 + $0xca8] sm:$0xff]
  %v425 = vld [vmem:[%s1 + $0xcb0] sm:$0xff]
  %v426 = vld [vmem:[%s1 + $0xcb8] sm:$0xff]
  %v427 = vld [vmem:[%s1 + $0xcc0] sm:$0xff]
  %v428 = vld [vmem:[%s1 + $0xcc8] sm:$0xff]
  %v429 = vld [vmem:[%s1 + $0xcd0] sm:$0xff]
  %v430 = vld [vmem:[%s1 + $0xcd8] sm:$0xff]
  %v431 = vld [vmem:[%s1 + $0xce0] sm:$0xff]
  %v432 = vld [vmem:[%s1 + $0xce8] sm:$0xff]
  %v433 = vld [vmem:[%s1 + $0xcf0] sm:$0xff]
  %v434 = vld [vmem:[%s1 + $0xcf8] sm:$0xff]
  %v435 = vld [vmem:[%s1 + $0xd00] sm:$0xff]
  %v436 = vld [vmem:[%s1 + $0xd08] sm:$0xff]
  %v437 = vld [vmem:[%s1 + $0xd10] sm:$0xff]
  %v438 = vld [vmem:[%s1 + $0xd18] sm:$0xff]
  %v439 = vld [vmem:[%s1 + $0xd20] sm:$0xff]
  %v440 = vld [vmem:[%s1 + $0xd28] sm:$0xff]
  %v441 = vld [vmem:[%s1 + $0xd30] sm:$0xff]
  %v442 = vld [vmem:[%s1 + $0xd38] sm:$0xff]
  %v443 = vld [vmem:[%s1 + $0xd40] sm:$0xff]
  %v444 = vld [vmem:[%s1 + $0xd48] sm:$0xff]
  %v445 = vld [vmem:[%s1 + $0xd50] sm:$0xff]
  %v446 = vld [vmem:[%s1 + $0xd58] sm:$0xff]
  %v447 = vld [vmem:[%s1 + $0xd60] sm:$0xff]
  %v448 = vld [vmem:[%s1 + $0xd68] sm:$0xff]
  %v449 = vld [vmem:[%s1 + $0xd70] sm:$0xff]
  %v450 = vld [vmem:[%s1 + $0xd78] sm:$0xff]
  %v451 = vld [vmem:[%s1 + $0xd80] sm:$0xff]
  %v452 = vld [vmem:[%s1 + $0xd88] sm:$0xff]
  %v453 = vld [vmem:[%s1 + $0xd90] sm:$0xff]
  %v454 = vld [vmem:[%s1 + $0xd98] sm:$0xff]
  %v455 = vld [vmem:[%s1 + $0xda0] sm:$0xff]
  %v456 = vld [vmem:[%s1 + $0xda8] sm:$0xff]
  %v457 = vld [vmem:[%s1 + $0xdb0] sm:$0xff]
  %v458 = vld [vmem:[%s1 + $0xdb8] sm:$0xff]
  %v459 = vld [vmem:[%s1 + $0xdc0] sm:$0xff]
  %v460 = vld [vmem:[%s1 + $0xdc8] sm:$0xff]
  %v461 = vld [vmem:[%s1 + $0xdd0] sm:$0xff]
  %v462 = vld [vmem:[%s1 + $0xdd8] sm:$0xff]
  %v463 = vld [vmem:[%s1 + $0xde0] sm:$0xff]
  %v464 = vld [vmem:[%s1 + $0xde8] sm:$0xff]
  %v465 = vld [vmem:[%s1 + $0xdf0] sm:$0xff]
  %v466 = vld [vmem:[%s1 + $0xdf8] sm:$0xff]
  %v467 = vld [vmem:[%s1 + $0xe00] sm:$0xff]
  %v468 = vld [vmem:[%s1 + $0xe08] sm:$0xff]
  %v469 = vld [vmem:[%s1 + $0xe10] sm:$0xff]
  %v470 = vld [vmem:[%s1 + $0xe18] sm:$0xff]
  %v471 = vld [vmem:[%s1 + $0xe20] sm:$0xff]
  %v472 = vld [vmem:[%s1 + $0xe28] sm:$0xff]
  %v473 = vld [vmem:[%s1 + $0xe30] sm:$0xff]
  %v474 = vld [vmem:[%s1 + $0xe38] sm:$0xff]
  %v475 = vld [vmem:[%s1 + $0xe40] sm:$0xff]
  %v476 = vld [vmem:[%s1 + $0xe48] sm:$0xff]
  %v477 = vld [vmem:[%s1 + $0xe50] sm:$0xff]
  %v478 = vld [vmem:[%s1 + $0xe58] sm:$0xff]
  %v479 = vld [vmem:[%s1 + $0xe60] sm:$0xff]
  %v480 = vld [vmem:[%s1 + $0xe68] sm:$0xff]
  %v481 = vld [vmem:[%s1 + $0xe70] sm:$0xff]
  %v482 = vld [vmem:[%s1 + $0xe78] sm:$0xff]
  %v483 = vld [vmem:[%s1 + $0xe80] sm:$0xff]
  %v484 = vld [vmem:[%s1 + $0xe88] sm:$0xff]
  %v485 = vld [vmem:[%s1 + $0xe90] sm:$0xff]
  %v486 = vld [vmem:[%s1 + $0xe98] sm:$0xff]
  %v487 = vld [vmem:[%s1 + $0xea0] sm:$0xff]
  %v488 = vld [vmem:[%s1 + $0xea8] sm:$0xff]
  %v489 = vld [vmem:[%s1 + $0xeb0] sm:$0xff]
  %v490 = vld [vmem:[%s1 + $0xeb8] sm:$0xff]
  %v491 = vld [vmem:[%s1 + $0xec0] sm:$0xff]
  %v492 = vld [vmem:[%s1 + $0xec8] sm:$0xff]
  %v493 = vld [vmem:[%s1 + $0xed0] sm:$0xff]
  %v494 = vld [vmem:[%s1 + $0xed8] sm:$0xff]
  %v495 = vld [vmem:[%s1 + $0xee0] sm:$0xff]
  %v496 = vld [vmem:[%s1 + $0xee8] sm:$0xff]
  %v497 = vld [vmem:[%s1 + $0xef0] sm:$0xff]
  %v498 = vld [vmem:[%s1 + $0xef8] sm:$0xff]
  %v499 = vld [vmem:[%s1 + $0xf00] sm:$0xff]
  %v500 = vld [vmem:[%s1 + $0xf08] sm:$0xff]
  %v501 = vld [vmem:[%s1 + $0xf10] sm:$0xff]
  %v502 = vld [vmem:[%s1 + $0xf18] sm:$0xff]
  %v503 = vld [vmem:[%s1 + $0xf20] sm:$0xff]
  %v504 = vld [vmem:[%s1 + $0xf28] sm:$0xff]
  %v505 = vld [vmem:[%s1 + $0xf30] sm:$0xff]
  %v506 = vld [vmem:[%s1 + $0xf38] sm:$0xff]
  %v507 = vld [vmem:[%s1 + $0xf40] sm:$0xff]
  %v508 = vld [vmem:[%s1 + $0xf48] sm:$0xff]
  %v509 = vld [vmem:[%s1 + $0xf50] sm:$0xff]
  %v510 = vld [vmem:[%s1 + $0xf58] sm:$0xff]
  %v511 = vld [vmem:[%s1 + $0xf60] sm:$0xff]
  %v512 = vld [vmem:[%s1 + $0xf68] sm:$0xff]
  %v513 = vld [vmem:[%s1 + $0xf70] sm:$0xff]
  %v514 = vld [vmem:[%s1 + $0xf78] sm:$0xff]
  %v515 = vld [vmem:[%s1 + $0xf80] sm:$0xff]
  %v516 = vld [vmem:[%s1 + $0xf88] sm:$0xff]
  %v517 = vld [vmem:[%s1 + $0xf90] sm:$0xff]
  %v518 = vld [vmem:[%s1 + $0xf98] sm:$0xff]
  %v519 = vld [vmem:[%s1 + $0xfa0] sm:$0xff]
  %v520 = vld [vmem:[%s1 + $0xfa8] sm:$0xff]
  %v521 = vld [vmem:[%s1 + $0xfb0] sm:$0xff]
  %v522 = vld [vmem:[%s1 + $0xfb8] sm:$0xff]
  %v523 = vld [vmem:[%s1 + $0xfc0] sm:$0xff]
  %v524 = vld [vmem:[%s1 + $0xfc8] sm:$0xff]
  %v525 = vld [vmem:[%s1 + $0xfd0] sm:$0xff]
  %v526 = vld [vmem:[%s1 + $0xfd8] sm:$0xff]
  %v527 = vld [vmem:[%s1 + $0xfe0] sm:$0xff]
  %v528 = vld [vmem:[%s1 + $0xfe8] sm:$0xff]
  %v529 = vld [vmem:[%s1 + $0xff0] sm:$0xff]
  %v530 = vld [vmem:[%s1 + $0xff8] sm:$0xff]
  %v539 = vunpack.c.l.b16 %v11
  %v540 = vunpack.c.h.b16 %v11
  %v541 = vunpack.c.l.b16 %v12
  %v542 = vunpack.c.h.b16 %v12
  %v543 = vunpack.c.l.b16 %v13
  %v544 = vunpack.c.h.b16 %v13
  %v545 = vunpack.c.l.b16 %v14
  %v546 = vunpack.c.h.b16 %v14
  %v547 = vunpack.c.l.b16 %v15
  %v548 = vunpack.c.h.b16 %v15
  %v549 = vunpack.c.l.b16 %v16
  %v550 = vunpack.c.h.b16 %v16
  %v551 = vunpack.c.l.b16 %v17
  %v552 = vunpack.c.h.b16 %v17
  %v553 = vunpack.c.l.b16 %v18
  %v554 = vunpack.c.h.b16 %v18
  %v555 = vpack.c.b16 %v547, %v539
  %v556 = vpack.c.b16 %v548, %v540
  %v557 = vpack.c.b16 %v549, %v541
  %v558 = vpack.c.b16 %v550, %v542
  %v559 = vpack.c.b16 %v551, %v543
  %v560 = vpack.c.b16 %v552, %v544
  %v561 = vpack.c.b16 %v553, %v545
  %v562 = vpack.c.b16 %v554, %v546
  %v1083 = vunpack.c.l.b16 %v19
  %v1084 = vunpack.c.h.b16 %v19
  %v1085 = vunpack.c.l.b16 %v20
  %v1086 = vunpack.c.h.b16 %v20
  %v1087 = vunpack.c.l.b16 %v21
  %v1088 = vunpack.c.h.b16 %v21
  %v1089 = vunpack.c.l.b16 %v22
  %v1090 = vunpack.c.h.b16 %v22
  %v1091 = vunpack.c.l.b16 %v23
  %v1092 = vunpack.c.h.b16 %v23
  %v1093 = vunpack.c.l.b16 %v24
  %v1094 = vunpack.c.h.b16 %v24
  %v1095 = vunpack.c.l.b16 %v25
  %v1096 = vunpack.c.h.b16 %v25
  %v1097 = vunpack.c.l.b16 %v26
  %v1098 = vunpack.c.h.b16 %v26
  %v1099 = vunpack.c.l.b16 %v27
  %v1100 = vunpack.c.h.b16 %v27
  %v1101 = vunpack.c.l.b16 %v28
  %v1102 = vunpack.c.h.b16 %v28
  %v1103 = vunpack.c.l.b16 %v29
  %v1104 = vunpack.c.h.b16 %v29
  %v1105 = vunpack.c.l.b16 %v30
  %v1106 = vunpack.c.h.b16 %v30
  %v1107 = vunpack.c.l.b16 %v31
  %v1108 = vunpack.c.h.b16 %v31
  %v1109 = vunpack.c.l.b16 %v32
  %v1110 = vunpack.c.h.b16 %v32
  %v1111 = vunpack.c.l.b16 %v33
  %v1112 = vunpack.c.h.b16 %v33
  %v1113 = vunpack.c.l.b16 %v34
  %v1114 = vunpack.c.h.b16 %v34
  %v1115 = vunpack.c.l.b16 %v35
  %v1116 = vunpack.c.h.b16 %v35
  %v1117 = vunpack.c.l.b16 %v36
  %v1118 = vunpack.c.h.b16 %v36
  %v1119 = vunpack.c.l.b16 %v37
  %v1120 = vunpack.c.h.b16 %v37
  %v1121 = vunpack.c.l.b16 %v38
  %v1122 = vunpack.c.h.b16 %v38
  %v1123 = vunpack.c.l.b16 %v39
  %v1124 = vunpack.c.h.b16 %v39
  %v1125 = vunpack.c.l.b16 %v40
  %v1126 = vunpack.c.h.b16 %v40
  %v1127 = vunpack.c.l.b16 %v41
  %v1128 = vunpack.c.h.b16 %v41
  %v1129 = vunpack.c.l.b16 %v42
  %v1130 = vunpack.c.h.b16 %v42
  %v1131 = vunpack.c.l.b16 %v43
  %v1132 = vunpack.c.h.b16 %v43
  %v1133 = vunpack.c.l.b16 %v44
  %v1134 = vunpack.c.h.b16 %v44
  %v1135 = vunpack.c.l.b16 %v45
  %v1136 = vunpack.c.h.b16 %v45
  %v1137 = vunpack.c.l.b16 %v46
  %v1138 = vunpack.c.h.b16 %v46
  %v1139 = vunpack.c.l.b16 %v47
  %v1140 = vunpack.c.h.b16 %v47
  %v1141 = vunpack.c.l.b16 %v48
  %v1142 = vunpack.c.h.b16 %v48
  %v1143 = vunpack.c.l.b16 %v49
  %v1144 = vunpack.c.h.b16 %v49
  %v1145 = vunpack.c.l.b16 %v50
  %v1146 = vunpack.c.h.b16 %v50
  %v1147 = vunpack.c.l.b16 %v51
  %v1148 = vunpack.c.h.b16 %v51
  %v1149 = vunpack.c.l.b16 %v52
  %v1150 = vunpack.c.h.b16 %v52
  %v1151 = vunpack.c.l.b16 %v53
  %v1152 = vunpack.c.h.b16 %v53
  %v1153 = vunpack.c.l.b16 %v54
  %v1154 = vunpack.c.h.b16 %v54
  %v1155 = vunpack.c.l.b16 %v55
  %v1156 = vunpack.c.h.b16 %v55
  %v1157 = vunpack.c.l.b16 %v56
  %v1158 = vunpack.c.h.b16 %v56
  %v1159 = vunpack.c.l.b16 %v57
  %v1160 = vunpack.c.h.b16 %v57
  %v1161 = vunpack.c.l.b16 %v58
  %v1162 = vunpack.c.h.b16 %v58
  %v1163 = vunpack.c.l.b16 %v59
  %v1164 = vunpack.c.h.b16 %v59
  %v1165 = vunpack.c.l.b16 %v60
  %v1166 = vunpack.c.h.b16 %v60
  %v1167 = vunpack.c.l.b16 %v61
  %v1168 = vunpack.c.h.b16 %v61
  %v1169 = vunpack.c.l.b16 %v62
  %v1170 = vunpack.c.h.b16 %v62
  %v1171 = vunpack.c.l.b16 %v63
  %v1172 = vunpack.c.h.b16 %v63
  %v1173 = vunpack.c.l.b16 %v64
  %v1174 = vunpack.c.h.b16 %v64
  %v1175 = vunpack.c.l.b16 %v65
  %v1176 = vunpack.c.h.b16 %v65
  %v1177 = vunpack.c.l.b16 %v66
  %v1178 = vunpack.c.h.b16 %v66
  %v1179 = vunpack.c.l.b16 %v67
  %v1180 = vunpack.c.h.b16 %v67
  %v1181 = vunpack.c.l.b16 %v68
  %v1182 = vunpack.c.h.b16 %v68
  %v1183 = vunpack.c.l.b16 %v69
  %v1184 = vunpack.c.h.b16 %v69
  %v1185 = vunpack.c.l.b16 %v70
  %v1186 = vunpack.c.h.b16 %v70
  %v1187 = vunpack.c.l.b16 %v71
  %v1188 = vunpack.c.h.b16 %v71
  %v1189 = vunpack.c.l.b16 %v72
  %v1190 = vunpack.c.h.b16 %v72
  %v1191 = vunpack.c.l.b16 %v73
  %v1192 = vunpack.c.h.b16 %v73
  %v1193 = vunpack.c.l.b16 %v74
  %v1194 = vunpack.c.h.b16 %v74
  %v1195 = vunpack.c.l.b16 %v75
  %v1196 = vunpack.c.h.b16 %v75
  %v1197 = vunpack.c.l.b16 %v76
  %v1198 = vunpack.c.h.b16 %v76
  %v1199 = vunpack.c.l.b16 %v77
  %v1200 = vunpack.c.h.b16 %v77
  %v1201 = vunpack.c.l.b16 %v78
  %v1202 = vunpack.c.h.b16 %v78
  %v1203 = vunpack.c.l.b16 %v79
  %v1204 = vunpack.c.h.b16 %v79
  %v1205 = vunpack.c.l.b16 %v80
  %v1206 = vunpack.c.h.b16 %v80
  %v1207 = vunpack.c.l.b16 %v81
  %v1208 = vunpack.c.h.b16 %v81
  %v1209 = vunpack.c.l.b16 %v82
  %v1210 = vunpack.c.h.b16 %v82
  %v1211 = vunpack.c.l.b16 %v83
  %v1212 = vunpack.c.h.b16 %v83
  %v1213 = vunpack.c.l.b16 %v84
  %v1214 = vunpack.c.h.b16 %v84
  %v1215 = vunpack.c.l.b16 %v85
  %v1216 = vunpack.c.h.b16 %v85
  %v1217 = vunpack.c.l.b16 %v86
  %v1218 = vunpack.c.h.b16 %v86
  %v1219 = vunpack.c.l.b16 %v87
  %v1220 = vunpack.c.h.b16 %v87
  %v1221 = vunpack.c.l.b16 %v88
  %v1222 = vunpack.c.h.b16 %v88
  %v1223 = vunpack.c.l.b16 %v89
  %v1224 = vunpack.c.h.b16 %v89
  %v1225 = vunpack.c.l.b16 %v90
  %v1226 = vunpack.c.h.b16 %v90
  %v1227 = vunpack.c.l.b16 %v91
  %v1228 = vunpack.c.h.b16 %v91
  %v1229 = vunpack.c.l.b16 %v92
  %v1230 = vunpack.c.h.b16 %v92
  %v1231 = vunpack.c.l.b16 %v93
  %v1232 = vunpack.c.h.b16 %v93
  %v1233 = vunpack.c.l.b16 %v94
  %v1234 = vunpack.c.h.b16 %v94
  %v1235 = vunpack.c.l.b16 %v95
  %v1236 = vunpack.c.h.b16 %v95
  %v1237 = vunpack.c.l.b16 %v96
  %v1238 = vunpack.c.h.b16 %v96
  %v1239 = vunpack.c.l.b16 %v97
  %v1240 = vunpack.c.h.b16 %v97
  %v1241 = vunpack.c.l.b16 %v98
  %v1242 = vunpack.c.h.b16 %v98
  %v1243 = vunpack.c.l.b16 %v99
  %v1244 = vunpack.c.h.b16 %v99
  %v1245 = vunpack.c.l.b16 %v100
  %v1246 = vunpack.c.h.b16 %v100
  %v1247 = vunpack.c.l.b16 %v101
  %v1248 = vunpack.c.h.b16 %v101
  %v1249 = vunpack.c.l.b16 %v102
  %v1250 = vunpack.c.h.b16 %v102
  %v1251 = vunpack.c.l.b16 %v103
  %v1252 = vunpack.c.h.b16 %v103
  %v1253 = vunpack.c.l.b16 %v104
  %v1254 = vunpack.c.h.b16 %v104
  %v1255 = vunpack.c.l.b16 %v105
  %v1256 = vunpack.c.h.b16 %v105
  %v1257 = vunpack.c.l.b16 %v106
  %v1258 = vunpack.c.h.b16 %v106
  %v1259 = vunpack.c.l.b16 %v107
  %v1260 = vunpack.c.h.b16 %v107
  %v1261 = vunpack.c.l.b16 %v108
  %v1262 = vunpack.c.h.b16 %v108
  %v1263 = vunpack.c.l.b16 %v109
  %v1264 = vunpack.c.h.b16 %v109
  %v1265 = vunpack.c.l.b16 %v110
  %v1266 = vunpack.c.h.b16 %v110
  %v1267 = vunpack.c.l.b16 %v111
  %v1268 = vunpack.c.h.b16 %v111
  %v1269 = vunpack.c.l.b16 %v112
  %v1270 = vunpack.c.h.b16 %v112
  %v1271 = vunpack.c.l.b16 %v113
  %v1272 = vunpack.c.h.b16 %v113
  %v1273 = vunpack.c.l.b16 %v114
  %v1274 = vunpack.c.h.b16 %v114
  %v1275 = vunpack.c.l.b16 %v115
  %v1276 = vunpack.c.h.b16 %v115
  %v1277 = vunpack.c.l.b16 %v116
  %v1278 = vunpack.c.h.b16 %v116
  %v1279 = vunpack.c.l.b16 %v117
  %v1280 = vunpack.c.h.b16 %v117
  %v1281 = vunpack.c.l.b16 %v118
  %v1282 = vunpack.c.h.b16 %v118
  %v1283 = vunpack.c.l.b16 %v119
  %v1284 = vunpack.c.h.b16 %v119
  %v1285 = vunpack.c.l.b16 %v120
  %v1286 = vunpack.c.h.b16 %v120
  %v1287 = vunpack.c.l.b16 %v121
  %v1288 = vunpack.c.h.b16 %v121
  %v1289 = vunpack.c.l.b16 %v122
  %v1290 = vunpack.c.h.b16 %v122
  %v1291 = vunpack.c.l.b16 %v123
  %v1292 = vunpack.c.h.b16 %v123
  %v1293 = vunpack.c.l.b16 %v124
  %v1294 = vunpack.c.h.b16 %v124
  %v1295 = vunpack.c.l.b16 %v125
  %v1296 = vunpack.c.h.b16 %v125
  %v1297 = vunpack.c.l.b16 %v126
  %v1298 = vunpack.c.h.b16 %v126
  %v1299 = vunpack.c.l.b16 %v127
  %v1300 = vunpack.c.h.b16 %v127
  %v1301 = vunpack.c.l.b16 %v128
  %v1302 = vunpack.c.h.b16 %v128
  %v1303 = vunpack.c.l.b16 %v129
  %v1304 = vunpack.c.h.b16 %v129
  %v1305 = vunpack.c.l.b16 %v130
  %v1306 = vunpack.c.h.b16 %v130
  %v1307 = vunpack.c.l.b16 %v131
  %v1308 = vunpack.c.h.b16 %v131
  %v1309 = vunpack.c.l.b16 %v132
  %v1310 = vunpack.c.h.b16 %v132
  %v1311 = vunpack.c.l.b16 %v133
  %v1312 = vunpack.c.h.b16 %v133
  %v1313 = vunpack.c.l.b16 %v134
  %v1314 = vunpack.c.h.b16 %v134
  %v1315 = vunpack.c.l.b16 %v135
  %v1316 = vunpack.c.h.b16 %v135
  %v1317 = vunpack.c.l.b16 %v136
  %v1318 = vunpack.c.h.b16 %v136
  %v1319 = vunpack.c.l.b16 %v137
  %v1320 = vunpack.c.h.b16 %v137
  %v1321 = vunpack.c.l.b16 %v138
  %v1322 = vunpack.c.h.b16 %v138
  %v1323 = vunpack.c.l.b16 %v139
  %v1324 = vunpack.c.h.b16 %v139
  %v1325 = vunpack.c.l.b16 %v140
  %v1326 = vunpack.c.h.b16 %v140
  %v1327 = vunpack.c.l.b16 %v141
  %v1328 = vunpack.c.h.b16 %v141
  %v1329 = vunpack.c.l.b16 %v142
  %v1330 = vunpack.c.h.b16 %v142
  %v1331 = vunpack.c.l.b16 %v143
  %v1332 = vunpack.c.h.b16 %v143
  %v1333 = vunpack.c.l.b16 %v144
  %v1334 = vunpack.c.h.b16 %v144
  %v1335 = vunpack.c.l.b16 %v145
  %v1336 = vunpack.c.h.b16 %v145
  %v1337 = vunpack.c.l.b16 %v146
  %v1338 = vunpack.c.h.b16 %v146
  %v1339 = vunpack.c.l.b16 %v147
  %v1340 = vunpack.c.h.b16 %v147
  %v1341 = vunpack.c.l.b16 %v148
  %v1342 = vunpack.c.h.b16 %v148
  %v1343 = vunpack.c.l.b16 %v149
  %v1344 = vunpack.c.h.b16 %v149
  %v1345 = vunpack.c.l.b16 %v150
  %v1346 = vunpack.c.h.b16 %v150
  %v1347 = vunpack.c.l.b16 %v151
  %v1348 = vunpack.c.h.b16 %v151
  %v1349 = vunpack.c.l.b16 %v152
  %v1350 = vunpack.c.h.b16 %v152
  %v1351 = vunpack.c.l.b16 %v153
  %v1352 = vunpack.c.h.b16 %v153
  %v1353 = vunpack.c.l.b16 %v154
  %v1354 = vunpack.c.h.b16 %v154
  %v1355 = vunpack.c.l.b16 %v155
  %v1356 = vunpack.c.h.b16 %v155
  %v1357 = vunpack.c.l.b16 %v156
  %v1358 = vunpack.c.h.b16 %v156
  %v1359 = vunpack.c.l.b16 %v157
  %v1360 = vunpack.c.h.b16 %v157
  %v1361 = vunpack.c.l.b16 %v158
  %v1362 = vunpack.c.h.b16 %v158
  %v1363 = vunpack.c.l.b16 %v159
  %v1364 = vunpack.c.h.b16 %v159
  %v1365 = vunpack.c.l.b16 %v160
  %v1366 = vunpack.c.h.b16 %v160
  %v1367 = vunpack.c.l.b16 %v161
  %v1368 = vunpack.c.h.b16 %v161
  %v1369 = vunpack.c.l.b16 %v162
  %v1370 = vunpack.c.h.b16 %v162
  %v1371 = vunpack.c.l.b16 %v163
  %v1372 = vunpack.c.h.b16 %v163
  %v1373 = vunpack.c.l.b16 %v164
  %v1374 = vunpack.c.h.b16 %v164
  %v1375 = vunpack.c.l.b16 %v165
  %v1376 = vunpack.c.h.b16 %v165
  %v1377 = vunpack.c.l.b16 %v166
  %v1378 = vunpack.c.h.b16 %v166
  %v1379 = vunpack.c.l.b16 %v167
  %v1380 = vunpack.c.h.b16 %v167
  %v1381 = vunpack.c.l.b16 %v168
  %v1382 = vunpack.c.h.b16 %v168
  %v1383 = vunpack.c.l.b16 %v169
  %v1384 = vunpack.c.h.b16 %v169
  %v1385 = vunpack.c.l.b16 %v170
  %v1386 = vunpack.c.h.b16 %v170
  %v1387 = vunpack.c.l.b16 %v171
  %v1388 = vunpack.c.h.b16 %v171
  %v1389 = vunpack.c.l.b16 %v172
  %v1390 = vunpack.c.h.b16 %v172
  %v1391 = vunpack.c.l.b16 %v173
  %v1392 = vunpack.c.h.b16 %v173
  %v1393 = vunpack.c.l.b16 %v174
  %v1394 = vunpack.c.h.b16 %v174
  %v1395 = vunpack.c.l.b16 %v175
  %v1396 = vunpack.c.h.b16 %v175
  %v1397 = vunpack.c.l.b16 %v176
  %v1398 = vunpack.c.h.b16 %v176
  %v1399 = vunpack.c.l.b16 %v177
  %v1400 = vunpack.c.h.b16 %v177
  %v1401 = vunpack.c.l.b16 %v178
  %v1402 = vunpack.c.h.b16 %v178
  %v1403 = vunpack.c.l.b16 %v179
  %v1404 = vunpack.c.h.b16 %v179
  %v1405 = vunpack.c.l.b16 %v180
  %v1406 = vunpack.c.h.b16 %v180
  %v1407 = vunpack.c.l.b16 %v181
  %v1408 = vunpack.c.h.b16 %v181
  %v1409 = vunpack.c.l.b16 %v182
  %v1410 = vunpack.c.h.b16 %v182
  %v1411 = vunpack.c.l.b16 %v183
  %v1412 = vunpack.c.h.b16 %v183
  %v1413 = vunpack.c.l.b16 %v184
  %v1414 = vunpack.c.h.b16 %v184
  %v1415 = vunpack.c.l.b16 %v185
  %v1416 = vunpack.c.h.b16 %v185
  %v1417 = vunpack.c.l.b16 %v186
  %v1418 = vunpack.c.h.b16 %v186
  %v1419 = vunpack.c.l.b16 %v187
  %v1420 = vunpack.c.h.b16 %v187
  %v1421 = vunpack.c.l.b16 %v188
  %v1422 = vunpack.c.h.b16 %v188
  %v1423 = vunpack.c.l.b16 %v189
  %v1424 = vunpack.c.h.b16 %v189
  %v1425 = vunpack.c.l.b16 %v190
  %v1426 = vunpack.c.h.b16 %v190
  %v1427 = vunpack.c.l.b16 %v191
  %v1428 = vunpack.c.h.b16 %v191
  %v1429 = vunpack.c.l.b16 %v192
  %v1430 = vunpack.c.h.b16 %v192
  %v1431 = vunpack.c.l.b16 %v193
  %v1432 = vunpack.c.h.b16 %v193
  %v1433 = vunpack.c.l.b16 %v194
  %v1434 = vunpack.c.h.b16 %v194
  %v1435 = vunpack.c.l.b16 %v195
  %v1436 = vunpack.c.h.b16 %v195
  %v1437 = vunpack.c.l.b16 %v196
  %v1438 = vunpack.c.h.b16 %v196
  %v1439 = vunpack.c.l.b16 %v197
  %v1440 = vunpack.c.h.b16 %v197
  %v1441 = vunpack.c.l.b16 %v198
  %v1442 = vunpack.c.h.b16 %v198
  %v1443 = vunpack.c.l.b16 %v199
  %v1444 = vunpack.c.h.b16 %v199
  %v1445 = vunpack.c.l.b16 %v200
  %v1446 = vunpack.c.h.b16 %v200
  %v1447 = vunpack.c.l.b16 %v201
  %v1448 = vunpack.c.h.b16 %v201
  %v1449 = vunpack.c.l.b16 %v202
  %v1450 = vunpack.c.h.b16 %v202
  %v1451 = vunpack.c.l.b16 %v203
  %v1452 = vunpack.c.h.b16 %v203
  %v1453 = vunpack.c.l.b16 %v204
  %v1454 = vunpack.c.h.b16 %v204
  %v1455 = vunpack.c.l.b16 %v205
  %v1456 = vunpack.c.h.b16 %v205
  %v1457 = vunpack.c.l.b16 %v206
  %v1458 = vunpack.c.h.b16 %v206
  %v1459 = vunpack.c.l.b16 %v207
  %v1460 = vunpack.c.h.b16 %v207
  %v1461 = vunpack.c.l.b16 %v208
  %v1462 = vunpack.c.h.b16 %v208
  %v1463 = vunpack.c.l.b16 %v209
  %v1464 = vunpack.c.h.b16 %v209
  %v1465 = vunpack.c.l.b16 %v210
  %v1466 = vunpack.c.h.b16 %v210
  %v1467 = vunpack.c.l.b16 %v211
  %v1468 = vunpack.c.h.b16 %v211
  %v1469 = vunpack.c.l.b16 %v212
  %v1470 = vunpack.c.h.b16 %v212
  %v1471 = vunpack.c.l.b16 %v213
  %v1472 = vunpack.c.h.b16 %v213
  %v1473 = vunpack.c.l.b16 %v214
  %v1474 = vunpack.c.h.b16 %v214
  %v1475 = vunpack.c.l.b16 %v215
  %v1476 = vunpack.c.h.b16 %v215
  %v1477 = vunpack.c.l.b16 %v216
  %v1478 = vunpack.c.h.b16 %v216
  %v1479 = vunpack.c.l.b16 %v217
  %v1480 = vunpack.c.h.b16 %v217
  %v1481 = vunpack.c.l.b16 %v218
  %v1482 = vunpack.c.h.b16 %v218
  %v1483 = vunpack.c.l.b16 %v219
  %v1484 = vunpack.c.h.b16 %v219
  %v1485 = vunpack.c.l.b16 %v220
  %v1486 = vunpack.c.h.b16 %v220
  %v1487 = vunpack.c.l.b16 %v221
  %v1488 = vunpack.c.h.b16 %v221
  %v1489 = vunpack.c.l.b16 %v222
  %v1490 = vunpack.c.h.b16 %v222
  %v1491 = vunpack.c.l.b16 %v223
  %v1492 = vunpack.c.h.b16 %v223
  %v1493 = vunpack.c.l.b16 %v224
  %v1494 = vunpack.c.h.b16 %v224
  %v1495 = vunpack.c.l.b16 %v225
  %v1496 = vunpack.c.h.b16 %v225
  %v1497 = vunpack.c.l.b16 %v226
  %v1498 = vunpack.c.h.b16 %v226
  %v1499 = vunpack.c.l.b16 %v227
  %v1500 = vunpack.c.h.b16 %v227
  %v1501 = vunpack.c.l.b16 %v228
  %v1502 = vunpack.c.h.b16 %v228
  %v1503 = vunpack.c.l.b16 %v229
  %v1504 = vunpack.c.h.b16 %v229
  %v1505 = vunpack.c.l.b16 %v230
  %v1506 = vunpack.c.h.b16 %v230
  %v1507 = vunpack.c.l.b16 %v231
  %v1508 = vunpack.c.h.b16 %v231
  %v1509 = vunpack.c.l.b16 %v232
  %v1510 = vunpack.c.h.b16 %v232
  %v1511 = vunpack.c.l.b16 %v233
  %v1512 = vunpack.c.h.b16 %v233
  %v1513 = vunpack.c.l.b16 %v234
  %v1514 = vunpack.c.h.b16 %v234
  %v1515 = vunpack.c.l.b16 %v235
  %v1516 = vunpack.c.h.b16 %v235
  %v1517 = vunpack.c.l.b16 %v236
  %v1518 = vunpack.c.h.b16 %v236
  %v1519 = vunpack.c.l.b16 %v237
  %v1520 = vunpack.c.h.b16 %v237
  %v1521 = vunpack.c.l.b16 %v238
  %v1522 = vunpack.c.h.b16 %v238
  %v1523 = vunpack.c.l.b16 %v239
  %v1524 = vunpack.c.h.b16 %v239
  %v1525 = vunpack.c.l.b16 %v240
  %v1526 = vunpack.c.h.b16 %v240
  %v1527 = vunpack.c.l.b16 %v241
  %v1528 = vunpack.c.h.b16 %v241
  %v1529 = vunpack.c.l.b16 %v242
  %v1530 = vunpack.c.h.b16 %v242
  %v1531 = vunpack.c.l.b16 %v243
  %v1532 = vunpack.c.h.b16 %v243
  %v1533 = vunpack.c.l.b16 %v244
  %v1534 = vunpack.c.h.b16 %v244
  %v1535 = vunpack.c.l.b16 %v245
  %v1536 = vunpack.c.h.b16 %v245
  %v1537 = vunpack.c.l.b16 %v246
  %v1538 = vunpack.c.h.b16 %v246
  %v1539 = vunpack.c.l.b16 %v247
  %v1540 = vunpack.c.h.b16 %v247
  %v1541 = vunpack.c.l.b16 %v248
  %v1542 = vunpack.c.h.b16 %v248
  %v1543 = vunpack.c.l.b16 %v249
  %v1544 = vunpack.c.h.b16 %v249
  %v1545 = vunpack.c.l.b16 %v250
  %v1546 = vunpack.c.h.b16 %v250
  %v1547 = vunpack.c.l.b16 %v251
  %v1548 = vunpack.c.h.b16 %v251
  %v1549 = vunpack.c.l.b16 %v252
  %v1550 = vunpack.c.h.b16 %v252
  %v1551 = vunpack.c.l.b16 %v253
  %v1552 = vunpack.c.h.b16 %v253
  %v1553 = vunpack.c.l.b16 %v254
  %v1554 = vunpack.c.h.b16 %v254
  %v1555 = vunpack.c.l.b16 %v255
  %v1556 = vunpack.c.h.b16 %v255
  %v1557 = vunpack.c.l.b16 %v256
  %v1558 = vunpack.c.h.b16 %v256
  %v1559 = vunpack.c.l.b16 %v257
  %v1560 = vunpack.c.h.b16 %v257
  %v1561 = vunpack.c.l.b16 %v258
  %v1562 = vunpack.c.h.b16 %v258
  %v1563 = vunpack.c.l.b16 %v259
  %v1564 = vunpack.c.h.b16 %v259
  %v1565 = vunpack.c.l.b16 %v260
  %v1566 = vunpack.c.h.b16 %v260
  %v1567 = vunpack.c.l.b16 %v261
  %v1568 = vunpack.c.h.b16 %v261
  %v1569 = vunpack.c.l.b16 %v262
  %v1570 = vunpack.c.h.b16 %v262
  %v1571 = vunpack.c.l.b16 %v263
  %v1572 = vunpack.c.h.b16 %v263
  %v1573 = vunpack.c.l.b16 %v264
  %v1574 = vunpack.c.h.b16 %v264
  %v1575 = vunpack.c.l.b16 %v265
  %v1576 = vunpack.c.h.b16 %v265
  %v1577 = vunpack.c.l.b16 %v266
  %v1578 = vunpack.c.h.b16 %v266
  %v1579 = vunpack.c.l.b16 %v267
  %v1580 = vunpack.c.h.b16 %v267
  %v1581 = vunpack.c.l.b16 %v268
  %v1582 = vunpack.c.h.b16 %v268
  %v1583 = vunpack.c.l.b16 %v269
  %v1584 = vunpack.c.h.b16 %v269
  %v1585 = vunpack.c.l.b16 %v270
  %v1586 = vunpack.c.h.b16 %v270
  %v1587 = vunpack.c.l.b16 %v271
  %v1588 = vunpack.c.h.b16 %v271
  %v1589 = vunpack.c.l.b16 %v272
  %v1590 = vunpack.c.h.b16 %v272
  %v1591 = vunpack.c.l.b16 %v273
  %v1592 = vunpack.c.h.b16 %v273
  %v1593 = vunpack.c.l.b16 %v274
  %v1594 = vunpack.c.h.b16 %v274
  %v1595 = vunpack.c.l.b16 %v275
  %v1596 = vunpack.c.h.b16 %v275
  %v1597 = vunpack.c.l.b16 %v276
  %v1598 = vunpack.c.h.b16 %v276
  %v1599 = vunpack.c.l.b16 %v277
  %v1600 = vunpack.c.h.b16 %v277
  %v1601 = vunpack.c.l.b16 %v278
  %v1602 = vunpack.c.h.b16 %v278
  %v1603 = vunpack.c.l.b16 %v279
  %v1604 = vunpack.c.h.b16 %v279
  %v1605 = vunpack.c.l.b16 %v280
  %v1606 = vunpack.c.h.b16 %v280
  %v1607 = vunpack.c.l.b16 %v281
  %v1608 = vunpack.c.h.b16 %v281
  %v1609 = vunpack.c.l.b16 %v282
  %v1610 = vunpack.c.h.b16 %v282
  %v1611 = vunpack.c.l.b16 %v283
  %v1612 = vunpack.c.h.b16 %v283
  %v1613 = vunpack.c.l.b16 %v284
  %v1614 = vunpack.c.h.b16 %v284
  %v1615 = vunpack.c.l.b16 %v285
  %v1616 = vunpack.c.h.b16 %v285
  %v1617 = vunpack.c.l.b16 %v286
  %v1618 = vunpack.c.h.b16 %v286
  %v1619 = vunpack.c.l.b16 %v287
  %v1620 = vunpack.c.h.b16 %v287
  %v1621 = vunpack.c.l.b16 %v288
  %v1622 = vunpack.c.h.b16 %v288
  %v1623 = vunpack.c.l.b16 %v289
  %v1624 = vunpack.c.h.b16 %v289
  %v1625 = vunpack.c.l.b16 %v290
  %v1626 = vunpack.c.h.b16 %v290
  %v1627 = vunpack.c.l.b16 %v291
  %v1628 = vunpack.c.h.b16 %v291
  %v1629 = vunpack.c.l.b16 %v292
  %v1630 = vunpack.c.h.b16 %v292
  %v1631 = vunpack.c.l.b16 %v293
  %v1632 = vunpack.c.h.b16 %v293
  %v1633 = vunpack.c.l.b16 %v294
  %v1634 = vunpack.c.h.b16 %v294
  %v1635 = vunpack.c.l.b16 %v295
  %v1636 = vunpack.c.h.b16 %v295
  %v1637 = vunpack.c.l.b16 %v296
  %v1638 = vunpack.c.h.b16 %v296
  %v1639 = vunpack.c.l.b16 %v297
  %v1640 = vunpack.c.h.b16 %v297
  %v1641 = vunpack.c.l.b16 %v298
  %v1642 = vunpack.c.h.b16 %v298
  %v1643 = vunpack.c.l.b16 %v299
  %v1644 = vunpack.c.h.b16 %v299
  %v1645 = vunpack.c.l.b16 %v300
  %v1646 = vunpack.c.h.b16 %v300
  %v1647 = vunpack.c.l.b16 %v301
  %v1648 = vunpack.c.h.b16 %v301
  %v1649 = vunpack.c.l.b16 %v302
  %v1650 = vunpack.c.h.b16 %v302
  %v1651 = vunpack.c.l.b16 %v303
  %v1652 = vunpack.c.h.b16 %v303
  %v1653 = vunpack.c.l.b16 %v304
  %v1654 = vunpack.c.h.b16 %v304
  %v1655 = vunpack.c.l.b16 %v305
  %v1656 = vunpack.c.h.b16 %v305
  %v1657 = vunpack.c.l.b16 %v306
  %v1658 = vunpack.c.h.b16 %v306
  %v1659 = vunpack.c.l.b16 %v307
  %v1660 = vunpack.c.h.b16 %v307
  %v1661 = vunpack.c.l.b16 %v308
  %v1662 = vunpack.c.h.b16 %v308
  %v1663 = vunpack.c.l.b16 %v309
  %v1664 = vunpack.c.h.b16 %v309
  %v1665 = vunpack.c.l.b16 %v310
  %v1666 = vunpack.c.h.b16 %v310
  %v1667 = vunpack.c.l.b16 %v311
  %v1668 = vunpack.c.h.b16 %v311
  %v1669 = vunpack.c.l.b16 %v312
  %v1670 = vunpack.c.h.b16 %v312
  %v1671 = vunpack.c.l.b16 %v313
  %v1672 = vunpack.c.h.b16 %v313
  %v1673 = vunpack.c.l.b16 %v314
  %v1674 = vunpack.c.h.b16 %v314
  %v1675 = vunpack.c.l.b16 %v315
  %v1676 = vunpack.c.h.b16 %v315
  %v1677 = vunpack.c.l.b16 %v316
  %v1678 = vunpack.c.h.b16 %v316
  %v1679 = vunpack.c.l.b16 %v317
  %v1680 = vunpack.c.h.b16 %v317
  %v1681 = vunpack.c.l.b16 %v318
  %v1682 = vunpack.c.h.b16 %v318
  %v1683 = vunpack.c.l.b16 %v319
  %v1684 = vunpack.c.h.b16 %v319
  %v1685 = vunpack.c.l.b16 %v320
  %v1686 = vunpack.c.h.b16 %v320
  %v1687 = vunpack.c.l.b16 %v321
  %v1688 = vunpack.c.h.b16 %v321
  %v1689 = vunpack.c.l.b16 %v322
  %v1690 = vunpack.c.h.b16 %v322
  %v1691 = vunpack.c.l.b16 %v323
  %v1692 = vunpack.c.h.b16 %v323
  %v1693 = vunpack.c.l.b16 %v324
  %v1694 = vunpack.c.h.b16 %v324
  %v1695 = vunpack.c.l.b16 %v325
  %v1696 = vunpack.c.h.b16 %v325
  %v1697 = vunpack.c.l.b16 %v326
  %v1698 = vunpack.c.h.b16 %v326
  %v1699 = vunpack.c.l.b16 %v327
  %v1700 = vunpack.c.h.b16 %v327
  %v1701 = vunpack.c.l.b16 %v328
  %v1702 = vunpack.c.h.b16 %v328
  %v1703 = vunpack.c.l.b16 %v329
  %v1704 = vunpack.c.h.b16 %v329
  %v1705 = vunpack.c.l.b16 %v330
  %v1706 = vunpack.c.h.b16 %v330
  %v1707 = vunpack.c.l.b16 %v331
  %v1708 = vunpack.c.h.b16 %v331
  %v1709 = vunpack.c.l.b16 %v332
  %v1710 = vunpack.c.h.b16 %v332
  %v1711 = vunpack.c.l.b16 %v333
  %v1712 = vunpack.c.h.b16 %v333
  %v1713 = vunpack.c.l.b16 %v334
  %v1714 = vunpack.c.h.b16 %v334
  %v1715 = vunpack.c.l.b16 %v335
  %v1716 = vunpack.c.h.b16 %v335
  %v1717 = vunpack.c.l.b16 %v336
  %v1718 = vunpack.c.h.b16 %v336
  %v1719 = vunpack.c.l.b16 %v337
  %v1720 = vunpack.c.h.b16 %v337
  %v1721 = vunpack.c.l.b16 %v338
  %v1722 = vunpack.c.h.b16 %v338
  %v1723 = vunpack.c.l.b16 %v339
  %v1724 = vunpack.c.h.b16 %v339
  %v1725 = vunpack.c.l.b16 %v340
  %v1726 = vunpack.c.h.b16 %v340
  %v1727 = vunpack.c.l.b16 %v341
  %v1728 = vunpack.c.h.b16 %v341
  %v1729 = vunpack.c.l.b16 %v342
  %v1730 = vunpack.c.h.b16 %v342
  %v1731 = vunpack.c.l.b16 %v343
  %v1732 = vunpack.c.h.b16 %v343
  %v1733 = vunpack.c.l.b16 %v344
  %v1734 = vunpack.c.h.b16 %v344
  %v1735 = vunpack.c.l.b16 %v345
  %v1736 = vunpack.c.h.b16 %v345
  %v1737 = vunpack.c.l.b16 %v346
  %v1738 = vunpack.c.h.b16 %v346
  %v1739 = vunpack.c.l.b16 %v347
  %v1740 = vunpack.c.h.b16 %v347
  %v1741 = vunpack.c.l.b16 %v348
  %v1742 = vunpack.c.h.b16 %v348
  %v1743 = vunpack.c.l.b16 %v349
  %v1744 = vunpack.c.h.b16 %v349
  %v1745 = vunpack.c.l.b16 %v350
  %v1746 = vunpack.c.h.b16 %v350
  %v1747 = vunpack.c.l.b16 %v351
  %v1748 = vunpack.c.h.b16 %v351
  %v1749 = vunpack.c.l.b16 %v352
  %v1750 = vunpack.c.h.b16 %v352
  %v1751 = vunpack.c.l.b16 %v353
  %v1752 = vunpack.c.h.b16 %v353
  %v1753 = vunpack.c.l.b16 %v354
  %v1754 = vunpack.c.h.b16 %v354
  %v1755 = vunpack.c.l.b16 %v355
  %v1756 = vunpack.c.h.b16 %v355
  %v1757 = vunpack.c.l.b16 %v356
  %v1758 = vunpack.c.h.b16 %v356
  %v1759 = vunpack.c.l.b16 %v357
  %v1760 = vunpack.c.h.b16 %v357
  %v1761 = vunpack.c.l.b16 %v358
  %v1762 = vunpack.c.h.b16 %v358
  %v1763 = vunpack.c.l.b16 %v359
  %v1764 = vunpack.c.h.b16 %v359
  %v1765 = vunpack.c.l.b16 %v360
  %v1766 = vunpack.c.h.b16 %v360
  %v1767 = vunpack.c.l.b16 %v361
  %v1768 = vunpack.c.h.b16 %v361
  %v1769 = vunpack.c.l.b16 %v362
  %v1770 = vunpack.c.h.b16 %v362
  %v1771 = vunpack.c.l.b16 %v363
  %v1772 = vunpack.c.h.b16 %v363
  %v1773 = vunpack.c.l.b16 %v364
  %v1774 = vunpack.c.h.b16 %v364
  %v1775 = vunpack.c.l.b16 %v365
  %v1776 = vunpack.c.h.b16 %v365
  %v1777 = vunpack.c.l.b16 %v366
  %v1778 = vunpack.c.h.b16 %v366
  %v1779 = vunpack.c.l.b16 %v367
  %v1780 = vunpack.c.h.b16 %v367
  %v1781 = vunpack.c.l.b16 %v368
  %v1782 = vunpack.c.h.b16 %v368
  %v1783 = vunpack.c.l.b16 %v369
  %v1784 = vunpack.c.h.b16 %v369
  %v1785 = vunpack.c.l.b16 %v370
  %v1786 = vunpack.c.h.b16 %v370
  %v1787 = vunpack.c.l.b16 %v371
  %v1788 = vunpack.c.h.b16 %v371
  %v1789 = vunpack.c.l.b16 %v372
  %v1790 = vunpack.c.h.b16 %v372
  %v1791 = vunpack.c.l.b16 %v373
  %v1792 = vunpack.c.h.b16 %v373
  %v1793 = vunpack.c.l.b16 %v374
  %v1794 = vunpack.c.h.b16 %v374
  %v1795 = vunpack.c.l.b16 %v375
  %v1796 = vunpack.c.h.b16 %v375
  %v1797 = vunpack.c.l.b16 %v376
  %v1798 = vunpack.c.h.b16 %v376
  %v1799 = vunpack.c.l.b16 %v377
  %v1800 = vunpack.c.h.b16 %v377
  %v1801 = vunpack.c.l.b16 %v378
  %v1802 = vunpack.c.h.b16 %v378
  %v1803 = vunpack.c.l.b16 %v379
  %v1804 = vunpack.c.h.b16 %v379
  %v1805 = vunpack.c.l.b16 %v380
  %v1806 = vunpack.c.h.b16 %v380
  %v1807 = vunpack.c.l.b16 %v381
  %v1808 = vunpack.c.h.b16 %v381
  %v1809 = vunpack.c.l.b16 %v382
  %v1810 = vunpack.c.h.b16 %v382
  %v1811 = vunpack.c.l.b16 %v383
  %v1812 = vunpack.c.h.b16 %v383
  %v1813 = vunpack.c.l.b16 %v384
  %v1814 = vunpack.c.h.b16 %v384
  %v1815 = vunpack.c.l.b16 %v385
  %v1816 = vunpack.c.h.b16 %v385
  %v1817 = vunpack.c.l.b16 %v386
  %v1818 = vunpack.c.h.b16 %v386
  %v1819 = vunpack.c.l.b16 %v387
  %v1820 = vunpack.c.h.b16 %v387
  %v1821 = vunpack.c.l.b16 %v388
  %v1822 = vunpack.c.h.b16 %v388
  %v1823 = vunpack.c.l.b16 %v389
  %v1824 = vunpack.c.h.b16 %v389
  %v1825 = vunpack.c.l.b16 %v390
  %v1826 = vunpack.c.h.b16 %v390
  %v1827 = vunpack.c.l.b16 %v391
  %v1828 = vunpack.c.h.b16 %v391
  %v1829 = vunpack.c.l.b16 %v392
  %v1830 = vunpack.c.h.b16 %v392
  %v1831 = vunpack.c.l.b16 %v393
  %v1832 = vunpack.c.h.b16 %v393
  %v1833 = vunpack.c.l.b16 %v394
  %v1834 = vunpack.c.h.b16 %v394
  %v1835 = vunpack.c.l.b16 %v395
  %v1836 = vunpack.c.h.b16 %v395
  %v1837 = vunpack.c.l.b16 %v396
  %v1838 = vunpack.c.h.b16 %v396
  %v1839 = vunpack.c.l.b16 %v397
  %v1840 = vunpack.c.h.b16 %v397
  %v1841 = vunpack.c.l.b16 %v398
  %v1842 = vunpack.c.h.b16 %v398
  %v1843 = vunpack.c.l.b16 %v399
  %v1844 = vunpack.c.h.b16 %v399
  %v1845 = vunpack.c.l.b16 %v400
  %v1846 = vunpack.c.h.b16 %v400
  %v1847 = vunpack.c.l.b16 %v401
  %v1848 = vunpack.c.h.b16 %v401
  %v1849 = vunpack.c.l.b16 %v402
  %v1850 = vunpack.c.h.b16 %v402
  %v1851 = vunpack.c.l.b16 %v403
  %v1852 = vunpack.c.h.b16 %v403
  %v1853 = vunpack.c.l.b16 %v404
  %v1854 = vunpack.c.h.b16 %v404
  %v1855 = vunpack.c.l.b16 %v405
  %v1856 = vunpack.c.h.b16 %v405
  %v1857 = vunpack.c.l.b16 %v406
  %v1858 = vunpack.c.h.b16 %v406
  %v1859 = vunpack.c.l.b16 %v407
  %v1860 = vunpack.c.h.b16 %v407
  %v1861 = vunpack.c.l.b16 %v408
  %v1862 = vunpack.c.h.b16 %v408
  %v1863 = vunpack.c.l.b16 %v409
  %v1864 = vunpack.c.h.b16 %v409
  %v1865 = vunpack.c.l.b16 %v410
  %v1866 = vunpack.c.h.b16 %v410
  %v1867 = vunpack.c.l.b16 %v411
  %v1868 = vunpack.c.h.b16 %v411
  %v1869 = vunpack.c.l.b16 %v412
  %v1870 = vunpack.c.h.b16 %v412
  %v1871 = vunpack.c.l.b16 %v413
  %v1872 = vunpack.c.h.b16 %v413
  %v1873 = vunpack.c.l.b16 %v414
  %v1874 = vunpack.c.h.b16 %v414
  %v1875 = vunpack.c.l.b16 %v415
  %v1876 = vunpack.c.h.b16 %v415
  %v1877 = vunpack.c.l.b16 %v416
  %v1878 = vunpack.c.h.b16 %v416
  %v1879 = vunpack.c.l.b16 %v417
  %v1880 = vunpack.c.h.b16 %v417
  %v1881 = vunpack.c.l.b16 %v418
  %v1882 = vunpack.c.h.b16 %v418
  %v1883 = vunpack.c.l.b16 %v419
  %v1884 = vunpack.c.h.b16 %v419
  %v1885 = vunpack.c.l.b16 %v420
  %v1886 = vunpack.c.h.b16 %v420
  %v1887 = vunpack.c.l.b16 %v421
  %v1888 = vunpack.c.h.b16 %v421
  %v1889 = vunpack.c.l.b16 %v422
  %v1890 = vunpack.c.h.b16 %v422
  %v1891 = vunpack.c.l.b16 %v423
  %v1892 = vunpack.c.h.b16 %v423
  %v1893 = vunpack.c.l.b16 %v424
  %v1894 = vunpack.c.h.b16 %v424
  %v1895 = vunpack.c.l.b16 %v425
  %v1896 = vunpack.c.h.b16 %v425
  %v1897 = vunpack.c.l.b16 %v426
  %v1898 = vunpack.c.h.b16 %v426
  %v1899 = vunpack.c.l.b16 %v427
  %v1900 = vunpack.c.h.b16 %v427
  %v1901 = vunpack.c.l.b16 %v428
  %v1902 = vunpack.c.h.b16 %v428
  %v1903 = vunpack.c.l.b16 %v429
  %v1904 = vunpack.c.h.b16 %v429
  %v1905 = vunpack.c.l.b16 %v430
  %v1906 = vunpack.c.h.b16 %v430
  %v1907 = vunpack.c.l.b16 %v431
  %v1908 = vunpack.c.h.b16 %v431
  %v1909 = vunpack.c.l.b16 %v432
  %v1910 = vunpack.c.h.b16 %v432
  %v1911 = vunpack.c.l.b16 %v433
  %v1912 = vunpack.c.h.b16 %v433
  %v1913 = vunpack.c.l.b16 %v434
  %v1914 = vunpack.c.h.b16 %v434
  %v1915 = vunpack.c.l.b16 %v435
  %v1916 = vunpack.c.h.b16 %v435
  %v1917 = vunpack.c.l.b16 %v436
  %v1918 = vunpack.c.h.b16 %v436
  %v1919 = vunpack.c.l.b16 %v437
  %v1920 = vunpack.c.h.b16 %v437
  %v1921 = vunpack.c.l.b16 %v438
  %v1922 = vunpack.c.h.b16 %v438
  %v1923 = vunpack.c.l.b16 %v439
  %v1924 = vunpack.c.h.b16 %v439
  %v1925 = vunpack.c.l.b16 %v440
  %v1926 = vunpack.c.h.b16 %v440
  %v1927 = vunpack.c.l.b16 %v441
  %v1928 = vunpack.c.h.b16 %v441
  %v1929 = vunpack.c.l.b16 %v442
  %v1930 = vunpack.c.h.b16 %v442
  %v1931 = vunpack.c.l.b16 %v443
  %v1932 = vunpack.c.h.b16 %v443
  %v1933 = vunpack.c.l.b16 %v444
  %v1934 = vunpack.c.h.b16 %v444
  %v1935 = vunpack.c.l.b16 %v445
  %v1936 = vunpack.c.h.b16 %v445
  %v1937 = vunpack.c.l.b16 %v446
  %v1938 = vunpack.c.h.b16 %v446
  %v1939 = vunpack.c.l.b16 %v447
  %v1940 = vunpack.c.h.b16 %v447
  %v1941 = vunpack.c.l.b16 %v448
  %v1942 = vunpack.c.h.b16 %v448
  %v1943 = vunpack.c.l.b16 %v449
  %v1944 = vunpack.c.h.b16 %v449
  %v1945 = vunpack.c.l.b16 %v450
  %v1946 = vunpack.c.h.b16 %v450
  %v1947 = vunpack.c.l.b16 %v451
  %v1948 = vunpack.c.h.b16 %v451
  %v1949 = vunpack.c.l.b16 %v452
  %v1950 = vunpack.c.h.b16 %v452
  %v1951 = vunpack.c.l.b16 %v453
  %v1952 = vunpack.c.h.b16 %v453
  %v1953 = vunpack.c.l.b16 %v454
  %v1954 = vunpack.c.h.b16 %v454
  %v1955 = vunpack.c.l.b16 %v455
  %v1956 = vunpack.c.h.b16 %v455
  %v1957 = vunpack.c.l.b16 %v456
  %v1958 = vunpack.c.h.b16 %v456
  %v1959 = vunpack.c.l.b16 %v457
  %v1960 = vunpack.c.h.b16 %v457
  %v1961 = vunpack.c.l.b16 %v458
  %v1962 = vunpack.c.h.b16 %v458
  %v1963 = vunpack.c.l.b16 %v459
  %v1964 = vunpack.c.h.b16 %v459
  %v1965 = vunpack.c.l.b16 %v460
  %v1966 = vunpack.c.h.b16 %v460
  %v1967 = vunpack.c.l.b16 %v461
  %v1968 = vunpack.c.h.b16 %v461
  %v1969 = vunpack.c.l.b16 %v462
  %v1970 = vunpack.c.h.b16 %v462
  %v1971 = vunpack.c.l.b16 %v463
  %v1972 = vunpack.c.h.b16 %v463
  %v1973 = vunpack.c.l.b16 %v464
  %v1974 = vunpack.c.h.b16 %v464
  %v1975 = vunpack.c.l.b16 %v465
  %v1976 = vunpack.c.h.b16 %v465
  %v1977 = vunpack.c.l.b16 %v466
  %v1978 = vunpack.c.h.b16 %v466
  %v1979 = vunpack.c.l.b16 %v467
  %v1980 = vunpack.c.h.b16 %v467
  %v1981 = vunpack.c.l.b16 %v468
  %v1982 = vunpack.c.h.b16 %v468
  %v1983 = vunpack.c.l.b16 %v469
  %v1984 = vunpack.c.h.b16 %v469
  %v1985 = vunpack.c.l.b16 %v470
  %v1986 = vunpack.c.h.b16 %v470
  %v1987 = vunpack.c.l.b16 %v471
  %v1988 = vunpack.c.h.b16 %v471
  %v1989 = vunpack.c.l.b16 %v472
  %v1990 = vunpack.c.h.b16 %v472
  %v1991 = vunpack.c.l.b16 %v473
  %v1992 = vunpack.c.h.b16 %v473
  %v1993 = vunpack.c.l.b16 %v474
  %v1994 = vunpack.c.h.b16 %v474
  %v1995 = vunpack.c.l.b16 %v475
  %v1996 = vunpack.c.h.b16 %v475
  %v1997 = vunpack.c.l.b16 %v476
  %v1998 = vunpack.c.h.b16 %v476
  %v1999 = vunpack.c.l.b16 %v477
  %v2000 = vunpack.c.h.b16 %v477
  %v2001 = vunpack.c.l.b16 %v478
  %v2002 = vunpack.c.h.b16 %v478
  %v2003 = vunpack.c.l.b16 %v479
  %v2004 = vunpack.c.h.b16 %v479
  %v2005 = vunpack.c.l.b16 %v480
  %v2006 = vunpack.c.h.b16 %v480
  %v2007 = vunpack.c.l.b16 %v481
  %v2008 = vunpack.c.h.b16 %v481
  %v2009 = vunpack.c.l.b16 %v482
  %v2010 = vunpack.c.h.b16 %v482
  %v2011 = vunpack.c.l.b16 %v483
  %v2012 = vunpack.c.h.b16 %v483
  %v2013 = vunpack.c.l.b16 %v484
  %v2014 = vunpack.c.h.b16 %v484
  %v2015 = vunpack.c.l.b16 %v485
  %v2016 = vunpack.c.h.b16 %v485
  %v2017 = vunpack.c.l.b16 %v486
  %v2018 = vunpack.c.h.b16 %v486
  %v2019 = vunpack.c.l.b16 %v487
  %v2020 = vunpack.c.h.b16 %v487
  %v2021 = vunpack.c.l.b16 %v488
  %v2022 = vunpack.c.h.b16 %v488
  %v2023 = vunpack.c.l.b16 %v489
  %v2024 = vunpack.c.h.b16 %v489
  %v2025 = vunpack.c.l.b16 %v490
  %v2026 = vunpack.c.h.b16 %v490
  %v2027 = vunpack.c.l.b16 %v491
  %v2028 = vunpack.c.h.b16 %v491
  %v2029 = vunpack.c.l.b16 %v492
  %v2030 = vunpack.c.h.b16 %v492
  %v2031 = vunpack.c.l.b16 %v493
  %v2032 = vunpack.c.h.b16 %v493
  %v2033 = vunpack.c.l.b16 %v494
  %v2034 = vunpack.c.h.b16 %v494
  %v2035 = vunpack.c.l.b16 %v495
  %v2036 = vunpack.c.h.b16 %v495
  %v2037 = vunpack.c.l.b16 %v496
  %v2038 = vunpack.c.h.b16 %v496
  %v2039 = vunpack.c.l.b16 %v497
  %v2040 = vunpack.c.h.b16 %v497
  %v2041 = vunpack.c.l.b16 %v498
  %v2042 = vunpack.c.h.b16 %v498
  %v2043 = vunpack.c.l.b16 %v499
  %v2044 = vunpack.c.h.b16 %v499
  %v2045 = vunpack.c.l.b16 %v500
  %v2046 = vunpack.c.h.b16 %v500
  %v2047 = vunpack.c.l.b16 %v501
  %v2048 = vunpack.c.h.b16 %v501
  %v2049 = vunpack.c.l.b16 %v502
  %v2050 = vunpack.c.h.b16 %v502
  %v2051 = vunpack.c.l.b16 %v503
  %v2052 = vunpack.c.h.b16 %v503
  %v2053 = vunpack.c.l.b16 %v504
  %v2054 = vunpack.c.h.b16 %v504
  %v2055 = vunpack.c.l.b16 %v505
  %v2056 = vunpack.c.h.b16 %v505
  %v2057 = vunpack.c.l.b16 %v506
  %v2058 = vunpack.c.h.b16 %v506
  %v2059 = vunpack.c.l.b16 %v507
  %v2060 = vunpack.c.h.b16 %v507
  %v2061 = vunpack.c.l.b16 %v508
  %v2062 = vunpack.c.h.b16 %v508
  %v2063 = vunpack.c.l.b16 %v509
  %v2064 = vunpack.c.h.b16 %v509
  %v2065 = vunpack.c.l.b16 %v510
  %v2066 = vunpack.c.h.b16 %v510
  %v2067 = vunpack.c.l.b16 %v511
  %v2068 = vunpack.c.h.b16 %v511
  %v2069 = vunpack.c.l.b16 %v512
  %v2070 = vunpack.c.h.b16 %v512
  %v2071 = vunpack.c.l.b16 %v513
  %v2072 = vunpack.c.h.b16 %v513
  %v2073 = vunpack.c.l.b16 %v514
  %v2074 = vunpack.c.h.b16 %v514
  %v2075 = vunpack.c.l.b16 %v515
  %v2076 = vunpack.c.h.b16 %v515
  %v2077 = vunpack.c.l.b16 %v516
  %v2078 = vunpack.c.h.b16 %v516
  %v2079 = vunpack.c.l.b16 %v517
  %v2080 = vunpack.c.h.b16 %v517
  %v2081 = vunpack.c.l.b16 %v518
  %v2082 = vunpack.c.h.b16 %v518
  %v2083 = vunpack.c.l.b16 %v519
  %v2084 = vunpack.c.h.b16 %v519
  %v2085 = vunpack.c.l.b16 %v520
  %v2086 = vunpack.c.h.b16 %v520
  %v2087 = vunpack.c.l.b16 %v521
  %v2088 = vunpack.c.h.b16 %v521
  %v2089 = vunpack.c.l.b16 %v522
  %v2090 = vunpack.c.h.b16 %v522
  %v2091 = vunpack.c.l.b16 %v523
  %v2092 = vunpack.c.h.b16 %v523
  %v2093 = vunpack.c.l.b16 %v524
  %v2094 = vunpack.c.h.b16 %v524
  %v2095 = vunpack.c.l.b16 %v525
  %v2096 = vunpack.c.h.b16 %v525
  %v2097 = vunpack.c.l.b16 %v526
  %v2098 = vunpack.c.h.b16 %v526
  %v2099 = vunpack.c.l.b16 %v527
  %v2100 = vunpack.c.h.b16 %v527
  %v2101 = vunpack.c.l.b16 %v528
  %v2102 = vunpack.c.h.b16 %v528
  %v2103 = vunpack.c.l.b16 %v529
  %v2104 = vunpack.c.h.b16 %v529
  %v2105 = vunpack.c.l.b16 %v530
  %v2106 = vunpack.c.h.b16 %v530
  %v2107 = vpack.c.b16 %v1091, %v1083
  %v2108 = vpack.c.b16 %v1092, %v1084
  %v2109 = vpack.c.b16 %v1093, %v1085
  %v2110 = vpack.c.b16 %v1094, %v1086
  %v2111 = vpack.c.b16 %v1095, %v1087
  %v2112 = vpack.c.b16 %v1096, %v1088
  %v2113 = vpack.c.b16 %v1097, %v1089
  %v2114 = vpack.c.b16 %v1098, %v1090
  %v2115 = vpack.c.b16 %v1107, %v1099
  %v2116 = vpack.c.b16 %v1108, %v1100
  %v2117 = vpack.c.b16 %v1109, %v1101
  %v2118 = vpack.c.b16 %v1110, %v1102
  %v2119 = vpack.c.b16 %v1111, %v1103
  %v2120 = vpack.c.b16 %v1112, %v1104
  %v2121 = vpack.c.b16 %v1113, %v1105
  %v2122 = vpack.c.b16 %v1114, %v1106
  %v2123 = vpack.c.b16 %v1123, %v1115
  %v2124 = vpack.c.b16 %v1124, %v1116
  %v2125 = vpack.c.b16 %v1125, %v1117
  %v2126 = vpack.c.b16 %v1126, %v1118
  %v2127 = vpack.c.b16 %v1127, %v1119
  %v2128 = vpack.c.b16 %v1128, %v1120
  %v2129 = vpack.c.b16 %v1129, %v1121
  %v2130 = vpack.c.b16 %v1130, %v1122
  %v2131 = vpack.c.b16 %v1139, %v1131
  %v2132 = vpack.c.b16 %v1140, %v1132
  %v2133 = vpack.c.b16 %v1141, %v1133
  %v2134 = vpack.c.b16 %v1142, %v1134
  %v2135 = vpack.c.b16 %v1143, %v1135
  %v2136 = vpack.c.b16 %v1144, %v1136
  %v2137 = vpack.c.b16 %v1145, %v1137
  %v2138 = vpack.c.b16 %v1146, %v1138
  %v2139 = vpack.c.b16 %v1155, %v1147
  %v2140 = vpack.c.b16 %v1156, %v1148
  %v2141 = vpack.c.b16 %v1157, %v1149
  %v2142 = vpack.c.b16 %v1158, %v1150
  %v2143 = vpack.c.b16 %v1159, %v1151
  %v2144 = vpack.c.b16 %v1160, %v1152
  %v2145 = vpack.c.b16 %v1161, %v1153
  %v2146 = vpack.c.b16 %v1162, %v1154
  %v2147 = vpack.c.b16 %v1171, %v1163
  %v2148 = vpack.c.b16 %v1172, %v1164
  %v2149 = vpack.c.b16 %v1173, %v1165
  %v2150 = vpack.c.b16 %v1174, %v1166
  %v2151 = vpack.c.b16 %v1175, %v1167
  %v2152 = vpack.c.b16 %v1176, %v1168
  %v2153 = vpack.c.b16 %v1177, %v1169
  %v2154 = vpack.c.b16 %v1178, %v1170
  %v2155 = vpack.c.b16 %v1187, %v1179
  %v2156 = vpack.c.b16 %v1188, %v1180
  %v2157 = vpack.c.b16 %v1189, %v1181
  %v2158 = vpack.c.b16 %v1190, %v1182
  %v2159 = vpack.c.b16 %v1191, %v1183
  %v2160 = vpack.c.b16 %v1192, %v1184
  %v2161 = vpack.c.b16 %v1193, %v1185
  %v2162 = vpack.c.b16 %v1194, %v1186
  %v2163 = vpack.c.b16 %v1203, %v1195
  %v2164 = vpack.c.b16 %v1204, %v1196
  %v2165 = vpack.c.b16 %v1205, %v1197
  %v2166 = vpack.c.b16 %v1206, %v1198
  %v2167 = vpack.c.b16 %v1207, %v1199
  %v2168 = vpack.c.b16 %v1208, %v1200
  %v2169 = vpack.c.b16 %v1209, %v1201
  %v2170 = vpack.c.b16 %v1210, %v1202
  %v2171 = vpack.c.b16 %v1219, %v1211
  %v2172 = vpack.c.b16 %v1220, %v1212
  %v2173 = vpack.c.b16 %v1221, %v1213
  %v2174 = vpack.c.b16 %v1222, %v1214
  %v2175 = vpack.c.b16 %v1223, %v1215
  %v2176 = vpack.c.b16 %v1224, %v1216
  %v2177 = vpack.c.b16 %v1225, %v1217
  %v2178 = vpack.c.b16 %v1226, %v1218
  %v2179 = vpack.c.b16 %v1235, %v1227
  %v2180 = vpack.c.b16 %v1236, %v1228
  %v2181 = vpack.c.b16 %v1237, %v1229
  %v2182 = vpack.c.b16 %v1238, %v1230
  %v2183 = vpack.c.b16 %v1239, %v1231
  %v2184 = vpack.c.b16 %v1240, %v1232
  %v2185 = vpack.c.b16 %v1241, %v1233
  %v2186 = vpack.c.b16 %v1242, %v1234
  %v2187 = vpack.c.b16 %v1251, %v1243
  %v2188 = vpack.c.b16 %v1252, %v1244
  %v2189 = vpack.c.b16 %v1253, %v1245
  %v2190 = vpack.c.b16 %v1254, %v1246
  %v2191 = vpack.c.b16 %v1255, %v1247
  %v2192 = vpack.c.b16 %v1256, %v1248
  %v2193 = vpack.c.b16 %v1257, %v1249
  %v2194 = vpack.c.b16 %v1258, %v1250
  %v2195 = vpack.c.b16 %v1267, %v1259
  %v2196 = vpack.c.b16 %v1268, %v1260
  %v2197 = vpack.c.b16 %v1269, %v1261
  %v2198 = vpack.c.b16 %v1270, %v1262
  %v2199 = vpack.c.b16 %v1271, %v1263
  %v2200 = vpack.c.b16 %v1272, %v1264
  %v2201 = vpack.c.b16 %v1273, %v1265
  %v2202 = vpack.c.b16 %v1274, %v1266
  %v2203 = vpack.c.b16 %v1283, %v1275
  %v2204 = vpack.c.b16 %v1284, %v1276
  %v2205 = vpack.c.b16 %v1285, %v1277
  %v2206 = vpack.c.b16 %v1286, %v1278
  %v2207 = vpack.c.b16 %v1287, %v1279
  %v2208 = vpack.c.b16 %v1288, %v1280
  %v2209 = vpack.c.b16 %v1289, %v1281
  %v2210 = vpack.c.b16 %v1290, %v1282
  %v2211 = vpack.c.b16 %v1299, %v1291
  %v2212 = vpack.c.b16 %v1300, %v1292
  %v2213 = vpack.c.b16 %v1301, %v1293
  %v2214 = vpack.c.b16 %v1302, %v1294
  %v2215 = vpack.c.b16 %v1303, %v1295
  %v2216 = vpack.c.b16 %v1304, %v1296
  %v2217 = vpack.c.b16 %v1305, %v1297
  %v2218 = vpack.c.b16 %v1306, %v1298
  %v2219 = vpack.c.b16 %v1315, %v1307
  %v2220 = vpack.c.b16 %v1316, %v1308
  %v2221 = vpack.c.b16 %v1317, %v1309
  %v2222 = vpack.c.b16 %v1318, %v1310
  %v2223 = vpack.c.b16 %v1319, %v1311
  %v2224 = vpack.c.b16 %v1320, %v1312
  %v2225 = vpack.c.b16 %v1321, %v1313
  %v2226 = vpack.c.b16 %v1322, %v1314
  %v2227 = vpack.c.b16 %v1331, %v1323
  %v2228 = vpack.c.b16 %v1332, %v1324
  %v2229 = vpack.c.b16 %v1333, %v1325
  %v2230 = vpack.c.b16 %v1334, %v1326
  %v2231 = vpack.c.b16 %v1335, %v1327
  %v2232 = vpack.c.b16 %v1336, %v1328
  %v2233 = vpack.c.b16 %v1337, %v1329
  %v2234 = vpack.c.b16 %v1338, %v1330
  %v2235 = vpack.c.b16 %v1347, %v1339
  %v2236 = vpack.c.b16 %v1348, %v1340
  %v2237 = vpack.c.b16 %v1349, %v1341
  %v2238 = vpack.c.b16 %v1350, %v1342
  %v2239 = vpack.c.b16 %v1351, %v1343
  %v2240 = vpack.c.b16 %v1352, %v1344
  %v2241 = vpack.c.b16 %v1353, %v1345
  %v2242 = vpack.c.b16 %v1354, %v1346
  %v2243 = vpack.c.b16 %v1363, %v1355
  %v2244 = vpack.c.b16 %v1364, %v1356
  %v2245 = vpack.c.b16 %v1365, %v1357
  %v2246 = vpack.c.b16 %v1366, %v1358
  %v2247 = vpack.c.b16 %v1367, %v1359
  %v2248 = vpack.c.b16 %v1368, %v1360
  %v2249 = vpack.c.b16 %v1369, %v1361
  %v2250 = vpack.c.b16 %v1370, %v1362
  %v2251 = vpack.c.b16 %v1379, %v1371
  %v2252 = vpack.c.b16 %v1380, %v1372
  %v2253 = vpack.c.b16 %v1381, %v1373
  %v2254 = vpack.c.b16 %v1382, %v1374
  %v2255 = vpack.c.b16 %v1383, %v1375
  %v2256 = vpack.c.b16 %v1384, %v1376
  %v2257 = vpack.c.b16 %v1385, %v1377
  %v2258 = vpack.c.b16 %v1386, %v1378
  %v2259 = vpack.c.b16 %v1395, %v1387
  %v2260 = vpack.c.b16 %v1396, %v1388
  %v2261 = vpack.c.b16 %v1397, %v1389
  %v2262 = vpack.c.b16 %v1398, %v1390
  %v2263 = vpack.c.b16 %v1399, %v1391
  %v2264 = vpack.c.b16 %v1400, %v1392
  %v2265 = vpack.c.b16 %v1401, %v1393
  %v2266 = vpack.c.b16 %v1402, %v1394
  %v2267 = vpack.c.b16 %v1411, %v1403
  %v2268 = vpack.c.b16 %v1412, %v1404
  %v2269 = vpack.c.b16 %v1413, %v1405
  %v2270 = vpack.c.b16 %v1414, %v1406
  %v2271 = vpack.c.b16 %v1415, %v1407
  %v2272 = vpack.c.b16 %v1416, %v1408
  %v2273 = vpack.c.b16 %v1417, %v1409
  %v2274 = vpack.c.b16 %v1418, %v1410
  %v2275 = vpack.c.b16 %v1427, %v1419
  %v2276 = vpack.c.b16 %v1428, %v1420
  %v2277 = vpack.c.b16 %v1429, %v1421
  %v2278 = vpack.c.b16 %v1430, %v1422
  %v2279 = vpack.c.b16 %v1431, %v1423
  %v2280 = vpack.c.b16 %v1432, %v1424
  %v2281 = vpack.c.b16 %v1433, %v1425
  %v2282 = vpack.c.b16 %v1434, %v1426
  %v2283 = vpack.c.b16 %v1443, %v1435
  %v2284 = vpack.c.b16 %v1444, %v1436
  %v2285 = vpack.c.b16 %v1445, %v1437
  %v2286 = vpack.c.b16 %v1446, %v1438
  %v2287 = vpack.c.b16 %v1447, %v1439
  %v2288 = vpack.c.b16 %v1448, %v1440
  %v2289 = vpack.c.b16 %v1449, %v1441
  %v2290 = vpack.c.b16 %v1450, %v1442
  %v2291 = vpack.c.b16 %v1459, %v1451
  %v2292 = vpack.c.b16 %v1460, %v1452
  %v2293 = vpack.c.b16 %v1461, %v1453
  %v2294 = vpack.c.b16 %v1462, %v1454
  %v2295 = vpack.c.b16 %v1463, %v1455
  %v2296 = vpack.c.b16 %v1464, %v1456
  %v2297 = vpack.c.b16 %v1465, %v1457
  %v2298 = vpack.c.b16 %v1466, %v1458
  %v2299 = vpack.c.b16 %v1475, %v1467
  %v2300 = vpack.c.b16 %v1476, %v1468
  %v2301 = vpack.c.b16 %v1477, %v1469
  %v2302 = vpack.c.b16 %v1478, %v1470
  %v2303 = vpack.c.b16 %v1479, %v1471
  %v2304 = vpack.c.b16 %v1480, %v1472
  %v2305 = vpack.c.b16 %v1481, %v1473
  %v2306 = vpack.c.b16 %v1482, %v1474
  %v2307 = vpack.c.b16 %v1491, %v1483
  %v2308 = vpack.c.b16 %v1492, %v1484
  %v2309 = vpack.c.b16 %v1493, %v1485
  %v2310 = vpack.c.b16 %v1494, %v1486
  %v2311 = vpack.c.b16 %v1495, %v1487
  %v2312 = vpack.c.b16 %v1496, %v1488
  %v2313 = vpack.c.b16 %v1497, %v1489
  %v2314 = vpack.c.b16 %v1498, %v1490
  %v2315 = vpack.c.b16 %v1507, %v1499
  %v2316 = vpack.c.b16 %v1508, %v1500
  %v2317 = vpack.c.b16 %v1509, %v1501
  %v2318 = vpack.c.b16 %v1510, %v1502
  %v2319 = vpack.c.b16 %v1511, %v1503
  %v2320 = vpack.c.b16 %v1512, %v1504
  %v2321 = vpack.c.b16 %v1513, %v1505
  %v2322 = vpack.c.b16 %v1514, %v1506
  %v2323 = vpack.c.b16 %v1523, %v1515
  %v2324 = vpack.c.b16 %v1524, %v1516
  %v2325 = vpack.c.b16 %v1525, %v1517
  %v2326 = vpack.c.b16 %v1526, %v1518
  %v2327 = vpack.c.b16 %v1527, %v1519
  %v2328 = vpack.c.b16 %v1528, %v1520
  %v2329 = vpack.c.b16 %v1529, %v1521
  %v2330 = vpack.c.b16 %v1530, %v1522
  %v2331 = vpack.c.b16 %v1539, %v1531
  %v2332 = vpack.c.b16 %v1540, %v1532
  %v2333 = vpack.c.b16 %v1541, %v1533
  %v2334 = vpack.c.b16 %v1542, %v1534
  %v2335 = vpack.c.b16 %v1543, %v1535
  %v2336 = vpack.c.b16 %v1544, %v1536
  %v2337 = vpack.c.b16 %v1545, %v1537
  %v2338 = vpack.c.b16 %v1546, %v1538
  %v2339 = vpack.c.b16 %v1555, %v1547
  %v2340 = vpack.c.b16 %v1556, %v1548
  %v2341 = vpack.c.b16 %v1557, %v1549
  %v2342 = vpack.c.b16 %v1558, %v1550
  %v2343 = vpack.c.b16 %v1559, %v1551
  %v2344 = vpack.c.b16 %v1560, %v1552
  %v2345 = vpack.c.b16 %v1561, %v1553
  %v2346 = vpack.c.b16 %v1562, %v1554
  %v2347 = vpack.c.b16 %v1571, %v1563
  %v2348 = vpack.c.b16 %v1572, %v1564
  %v2349 = vpack.c.b16 %v1573, %v1565
  %v2350 = vpack.c.b16 %v1574, %v1566
  %v2351 = vpack.c.b16 %v1575, %v1567
  %v2352 = vpack.c.b16 %v1576, %v1568
  %v2353 = vpack.c.b16 %v1577, %v1569
  %v2354 = vpack.c.b16 %v1578, %v1570
  %v2355 = vpack.c.b16 %v1587, %v1579
  %v2356 = vpack.c.b16 %v1588, %v1580
  %v2357 = vpack.c.b16 %v1589, %v1581
  %v2358 = vpack.c.b16 %v1590, %v1582
  %v2359 = vpack.c.b16 %v1591, %v1583
  %v2360 = vpack.c.b16 %v1592, %v1584
  %v2361 = vpack.c.b16 %v1593, %v1585
  %v2362 = vpack.c.b16 %v1594, %v1586
  %v2363 = vpack.c.b16 %v1603, %v1595
  %v2364 = vpack.c.b16 %v1604, %v1596
  %v2365 = vpack.c.b16 %v1605, %v1597
  %v2366 = vpack.c.b16 %v1606, %v1598
  %v2367 = vpack.c.b16 %v1607, %v1599
  %v2368 = vpack.c.b16 %v1608, %v1600
  %v2369 = vpack.c.b16 %v1609, %v1601
  %v2370 = vpack.c.b16 %v1610, %v1602
  %v2371 = vpack.c.b16 %v1619, %v1611
  %v2372 = vpack.c.b16 %v1620, %v1612
  %v2373 = vpack.c.b16 %v1621, %v1613
  %v2374 = vpack.c.b16 %v1622, %v1614
  %v2375 = vpack.c.b16 %v1623, %v1615
  %v2376 = vpack.c.b16 %v1624, %v1616
  %v2377 = vpack.c.b16 %v1625, %v1617
  %v2378 = vpack.c.b16 %v1626, %v1618
  %v2379 = vpack.c.b16 %v1635, %v1627
  %v2380 = vpack.c.b16 %v1636, %v1628
  %v2381 = vpack.c.b16 %v1637, %v1629
  %v2382 = vpack.c.b16 %v1638, %v1630
  %v2383 = vpack.c.b16 %v1639, %v1631
  %v2384 = vpack.c.b16 %v1640, %v1632
  %v2385 = vpack.c.b16 %v1641, %v1633
  %v2386 = vpack.c.b16 %v1642, %v1634
  %v2387 = vpack.c.b16 %v1651, %v1643
  %v2388 = vpack.c.b16 %v1652, %v1644
  %v2389 = vpack.c.b16 %v1653, %v1645
  %v2390 = vpack.c.b16 %v1654, %v1646
  %v2391 = vpack.c.b16 %v1655, %v1647
  %v2392 = vpack.c.b16 %v1656, %v1648
  %v2393 = vpack.c.b16 %v1657, %v1649
  %v2394 = vpack.c.b16 %v1658, %v1650
  %v2395 = vpack.c.b16 %v1667, %v1659
  %v2396 = vpack.c.b16 %v1668, %v1660
  %v2397 = vpack.c.b16 %v1669, %v1661
  %v2398 = vpack.c.b16 %v1670, %v1662
  %v2399 = vpack.c.b16 %v1671, %v1663
  %v2400 = vpack.c.b16 %v1672, %v1664
  %v2401 = vpack.c.b16 %v1673, %v1665
  %v2402 = vpack.c.b16 %v1674, %v1666
  %v2403 = vpack.c.b16 %v1683, %v1675
  %v2404 = vpack.c.b16 %v1684, %v1676
  %v2405 = vpack.c.b16 %v1685, %v1677
  %v2406 = vpack.c.b16 %v1686, %v1678
  %v2407 = vpack.c.b16 %v1687, %v1679
  %v2408 = vpack.c.b16 %v1688, %v1680
  %v2409 = vpack.c.b16 %v1689, %v1681
  %v2410 = vpack.c.b16 %v1690, %v1682
  %v2411 = vpack.c.b16 %v1699, %v1691
  %v2412 = vpack.c.b16 %v1700, %v1692
  %v2413 = vpack.c.b16 %v1701, %v1693
  %v2414 = vpack.c.b16 %v1702, %v1694
  %v2415 = vpack.c.b16 %v1703, %v1695
  %v2416 = vpack.c.b16 %v1704, %v1696
  %v2417 = vpack.c.b16 %v1705, %v1697
  %v2418 = vpack.c.b16 %v1706, %v1698
  %v2419 = vpack.c.b16 %v1715, %v1707
  %v2420 = vpack.c.b16 %v1716, %v1708
  %v2421 = vpack.c.b16 %v1717, %v1709
  %v2422 = vpack.c.b16 %v1718, %v1710
  %v2423 = vpack.c.b16 %v1719, %v1711
  %v2424 = vpack.c.b16 %v1720, %v1712
  %v2425 = vpack.c.b16 %v1721, %v1713
  %v2426 = vpack.c.b16 %v1722, %v1714
  %v2427 = vpack.c.b16 %v1731, %v1723
  %v2428 = vpack.c.b16 %v1732, %v1724
  %v2429 = vpack.c.b16 %v1733, %v1725
  %v2430 = vpack.c.b16 %v1734, %v1726
  %v2431 = vpack.c.b16 %v1735, %v1727
  %v2432 = vpack.c.b16 %v1736, %v1728
  %v2433 = vpack.c.b16 %v1737, %v1729
  %v2434 = vpack.c.b16 %v1738, %v1730
  %v2435 = vpack.c.b16 %v1747, %v1739
  %v2436 = vpack.c.b16 %v1748, %v1740
  %v2437 = vpack.c.b16 %v1749, %v1741
  %v2438 = vpack.c.b16 %v1750, %v1742
  %v2439 = vpack.c.b16 %v1751, %v1743
  %v2440 = vpack.c.b16 %v1752, %v1744
  %v2441 = vpack.c.b16 %v1753, %v1745
  %v2442 = vpack.c.b16 %v1754, %v1746
  %v2443 = vpack.c.b16 %v1763, %v1755
  %v2444 = vpack.c.b16 %v1764, %v1756
  %v2445 = vpack.c.b16 %v1765, %v1757
  %v2446 = vpack.c.b16 %v1766, %v1758
  %v2447 = vpack.c.b16 %v1767, %v1759
  %v2448 = vpack.c.b16 %v1768, %v1760
  %v2449 = vpack.c.b16 %v1769, %v1761
  %v2450 = vpack.c.b16 %v1770, %v1762
  %v2451 = vpack.c.b16 %v1779, %v1771
  %v2452 = vpack.c.b16 %v1780, %v1772
  %v2453 = vpack.c.b16 %v1781, %v1773
  %v2454 = vpack.c.b16 %v1782, %v1774
  %v2455 = vpack.c.b16 %v1783, %v1775
  %v2456 = vpack.c.b16 %v1784, %v1776
  %v2457 = vpack.c.b16 %v1785, %v1777
  %v2458 = vpack.c.b16 %v1786, %v1778
  %v2459 = vpack.c.b16 %v1795, %v1787
  %v2460 = vpack.c.b16 %v1796, %v1788
  %v2461 = vpack.c.b16 %v1797, %v1789
  %v2462 = vpack.c.b16 %v1798, %v1790
  %v2463 = vpack.c.b16 %v1799, %v1791
  %v2464 = vpack.c.b16 %v1800, %v1792
  %v2465 = vpack.c.b16 %v1801, %v1793
  %v2466 = vpack.c.b16 %v1802, %v1794
  %v2467 = vpack.c.b16 %v1811, %v1803
  %v2468 = vpack.c.b16 %v1812, %v1804
  %v2469 = vpack.c.b16 %v1813, %v1805
  %v2470 = vpack.c.b16 %v1814, %v1806
  %v2471 = vpack.c.b16 %v1815, %v1807
  %v2472 = vpack.c.b16 %v1816, %v1808
  %v2473 = vpack.c.b16 %v1817, %v1809
  %v2474 = vpack.c.b16 %v1818, %v1810
  %v2475 = vpack.c.b16 %v1827, %v1819
  %v2476 = vpack.c.b16 %v1828, %v1820
  %v2477 = vpack.c.b16 %v1829, %v1821
  %v2478 = vpack.c.b16 %v1830, %v1822
  %v2479 = vpack.c.b16 %v1831, %v1823
  %v2480 = vpack.c.b16 %v1832, %v1824
  %v2481 = vpack.c.b16 %v1833, %v1825
  %v2482 = vpack.c.b16 %v1834, %v1826
  %v2483 = vpack.c.b16 %v1843, %v1835
  %v2484 = vpack.c.b16 %v1844, %v1836
  %v2485 = vpack.c.b16 %v1845, %v1837
  %v2486 = vpack.c.b16 %v1846, %v1838
  %v2487 = vpack.c.b16 %v1847, %v1839
  %v2488 = vpack.c.b16 %v1848, %v1840
  %v2489 = vpack.c.b16 %v1849, %v1841
  %v2490 = vpack.c.b16 %v1850, %v1842
  %v2491 = vpack.c.b16 %v1859, %v1851
  %v2492 = vpack.c.b16 %v1860, %v1852
  %v2493 = vpack.c.b16 %v1861, %v1853
  %v2494 = vpack.c.b16 %v1862, %v1854
  %v2495 = vpack.c.b16 %v1863, %v1855
  %v2496 = vpack.c.b16 %v1864, %v1856
  %v2497 = vpack.c.b16 %v1865, %v1857
  %v2498 = vpack.c.b16 %v1866, %v1858
  %v2499 = vpack.c.b16 %v1875, %v1867
  %v2500 = vpack.c.b16 %v1876, %v1868
  %v2501 = vpack.c.b16 %v1877, %v1869
  %v2502 = vpack.c.b16 %v1878, %v1870
  %v2503 = vpack.c.b16 %v1879, %v1871
  %v2504 = vpack.c.b16 %v1880, %v1872
  %v2505 = vpack.c.b16 %v1881, %v1873
  %v2506 = vpack.c.b16 %v1882, %v1874
  %v2507 = vpack.c.b16 %v1891, %v1883
  %v2508 = vpack.c.b16 %v1892, %v1884
  %v2509 = vpack.c.b16 %v1893, %v1885
  %v2510 = vpack.c.b16 %v1894, %v1886
  %v2511 = vpack.c.b16 %v1895, %v1887
  %v2512 = vpack.c.b16 %v1896, %v1888
  %v2513 = vpack.c.b16 %v1897, %v1889
  %v2514 = vpack.c.b16 %v1898, %v1890
  %v2515 = vpack.c.b16 %v1907, %v1899
  %v2516 = vpack.c.b16 %v1908, %v1900
  %v2517 = vpack.c.b16 %v1909, %v1901
  %v2518 = vpack.c.b16 %v1910, %v1902
  %v2519 = vpack.c.b16 %v1911, %v1903
  %v2520 = vpack.c.b16 %v1912, %v1904
  %v2521 = vpack.c.b16 %v1913, %v1905
  %v2522 = vpack.c.b16 %v1914, %v1906
  %v2523 = vpack.c.b16 %v1923, %v1915
  %v2524 = vpack.c.b16 %v1924, %v1916
  %v2525 = vpack.c.b16 %v1925, %v1917
  %v2526 = vpack.c.b16 %v1926, %v1918
  %v2527 = vpack.c.b16 %v1927, %v1919
  %v2528 = vpack.c.b16 %v1928, %v1920
  %v2529 = vpack.c.b16 %v1929, %v1921
  %v2530 = vpack.c.b16 %v1930, %v1922
  %v2531 = vpack.c.b16 %v1939, %v1931
  %v2532 = vpack.c.b16 %v1940, %v1932
  %v2533 = vpack.c.b16 %v1941, %v1933
  %v2534 = vpack.c.b16 %v1942, %v1934
  %v2535 = vpack.c.b16 %v1943, %v1935
  %v2536 = vpack.c.b16 %v1944, %v1936
  %v2537 = vpack.c.b16 %v1945, %v1937
  %v2538 = vpack.c.b16 %v1946, %v1938
  %v2539 = vpack.c.b16 %v1955, %v1947
  %v2540 = vpack.c.b16 %v1956, %v1948
  %v2541 = vpack.c.b16 %v1957, %v1949
  %v2542 = vpack.c.b16 %v1958, %v1950
  %v2543 = vpack.c.b16 %v1959, %v1951
  %v2544 = vpack.c.b16 %v1960, %v1952
  %v2545 = vpack.c.b16 %v1961, %v1953
  %v2546 = vpack.c.b16 %v1962, %v1954
  %v2547 = vpack.c.b16 %v1971, %v1963
  %v2548 = vpack.c.b16 %v1972, %v1964
  %v2549 = vpack.c.b16 %v1973, %v1965
  %v2550 = vpack.c.b16 %v1974, %v1966
  %v2551 = vpack.c.b16 %v1975, %v1967
  %v2552 = vpack.c.b16 %v1976, %v1968
  %v2553 = vpack.c.b16 %v1977, %v1969
  %v2554 = vpack.c.b16 %v1978, %v1970
  %v2555 = vpack.c.b16 %v1987, %v1979
  %v2556 = vpack.c.b16 %v1988, %v1980
  %v2557 = vpack.c.b16 %v1989, %v1981
  %v2558 = vpack.c.b16 %v1990, %v1982
  %v2559 = vpack.c.b16 %v1991, %v1983
  %v2560 = vpack.c.b16 %v1992, %v1984
  %v2561 = vpack.c.b16 %v1993, %v1985
  %v2562 = vpack.c.b16 %v1994, %v1986
  %v2563 = vpack.c.b16 %v2003, %v1995
  %v2564 = vpack.c.b16 %v2004, %v1996
  %v2565 = vpack.c.b16 %v2005, %v1997
  %v2566 = vpack.c.b16 %v2006, %v1998
  %v2567 = vpack.c.b16 %v2007, %v1999
  %v2568 = vpack.c.b16 %v2008, %v2000
  %v2569 = vpack.c.b16 %v2009, %v2001
  %v2570 = vpack.c.b16 %v2010, %v2002
  %v2571 = vpack.c.b16 %v2019, %v2011
  %v2572 = vpack.c.b16 %v2020, %v2012
  %v2573 = vpack.c.b16 %v2021, %v2013
  %v2574 = vpack.c.b16 %v2022, %v2014
  %v2575 = vpack.c.b16 %v2023, %v2015
  %v2576 = vpack.c.b16 %v2024, %v2016
  %v2577 = vpack.c.b16 %v2025, %v2017
  %v2578 = vpack.c.b16 %v2026, %v2018
  %v2579 = vpack.c.b16 %v2035, %v2027
  %v2580 = vpack.c.b16 %v2036, %v2028
  %v2581 = vpack.c.b16 %v2037, %v2029
  %v2582 = vpack.c.b16 %v2038, %v2030
  %v2583 = vpack.c.b16 %v2039, %v2031
  %v2584 = vpack.c.b16 %v2040, %v2032
  %v2585 = vpack.c.b16 %v2041, %v2033
  %v2586 = vpack.c.b16 %v2042, %v2034
  %v2587 = vpack.c.b16 %v2051, %v2043
  %v2588 = vpack.c.b16 %v2052, %v2044
  %v2589 = vpack.c.b16 %v2053, %v2045
  %v2590 = vpack.c.b16 %v2054, %v2046
  %v2591 = vpack.c.b16 %v2055, %v2047
  %v2592 = vpack.c.b16 %v2056, %v2048
  %v2593 = vpack.c.b16 %v2057, %v2049
  %v2594 = vpack.c.b16 %v2058, %v2050
  %v2595 = vpack.c.b16 %v2067, %v2059
  %v2596 = vpack.c.b16 %v2068, %v2060
  %v2597 = vpack.c.b16 %v2069, %v2061
  %v2598 = vpack.c.b16 %v2070, %v2062
  %v2599 = vpack.c.b16 %v2071, %v2063
  %v2600 = vpack.c.b16 %v2072, %v2064
  %v2601 = vpack.c.b16 %v2073, %v2065
  %v2602 = vpack.c.b16 %v2074, %v2066
  %v2603 = vpack.c.b16 %v2083, %v2075
  %v2604 = vpack.c.b16 %v2084, %v2076
  %v2605 = vpack.c.b16 %v2085, %v2077
  %v2606 = vpack.c.b16 %v2086, %v2078
  %v2607 = vpack.c.b16 %v2087, %v2079
  %v2608 = vpack.c.b16 %v2088, %v2080
  %v2609 = vpack.c.b16 %v2089, %v2081
  %v2610 = vpack.c.b16 %v2090, %v2082
  %v2611 = vpack.c.b16 %v2099, %v2091
  %v2612 = vpack.c.b16 %v2100, %v2092
  %v2613 = vpack.c.b16 %v2101, %v2093
  %v2614 = vpack.c.b16 %v2102, %v2094
  %v2615 = vpack.c.b16 %v2103, %v2095
  %v2616 = vpack.c.b16 %v2104, %v2096
  %v2617 = vpack.c.b16 %v2105, %v2097
  %v2618 = vpack.c.b16 %v2106, %v2098
  %3131 = vmatprep.subr.bf16.mxu0 %v2164
  %3132 = vmatpush1.bf16.msra.mxu0 %v2163
  %3133 = vmatprep.subr.bf16.mxu0 %v2156
  %3134 = vmatpush1.bf16.msra.mxu0 %v2155
  %3135 = vmatprep.subr.bf16.mxu0 %v2148
  %3136 = vmatpush1.bf16.msra.mxu0 %v2147
  %3137 = vmatprep.subr.bf16.mxu0 %v2140
  %3138 = vmatpush1.bf16.msra.mxu0 %v2139
  %3139 = vmatprep.subr.bf16.mxu0 %v2132
  %3140 = vmatpush1.bf16.msra.mxu0 %v2131
  %3141 = vmatprep.subr.bf16.mxu0 %v2124
  %3142 = vmatpush1.bf16.msra.mxu0 %v2123
  %3143 = vmatprep.subr.bf16.mxu0 %v2116
  %3144 = vmatpush1.bf16.msra.mxu0 %v2115
  %3145 = vmatprep.subr.bf16.mxu0 %v2108
  %3146 = vmatpush1.bf16.msra.mxu0 %v2107
  %3147 = vmatprep.subr.bf16.mxu0 %v2228
  %3148 = vmatpush2.bf16.msra.mxu0 %v2227
  %3149 = vmatprep.subr.bf16.mxu0 %v2220
  %3150 = vmatpush2.bf16.msra.mxu0 %v2219
  %3151 = vmatprep.subr.bf16.mxu0 %v2212
  %3152 = vmatpush2.bf16.msra.mxu0 %v2211
  %3153 = vmatprep.subr.bf16.mxu0 %v2204
  %3154 = vmatpush2.bf16.msra.mxu0 %v2203
  %3155 = vmatprep.subr.bf16.mxu0 %v2196
  %3156 = vmatpush2.bf16.msra.mxu0 %v2195
  %3157 = vmatprep.subr.bf16.mxu0 %v2188
  %3158 = vmatpush2.bf16.msra.mxu0 %v2187
  %3159 = vmatprep.subr.bf16.mxu0 %v2180
  %3160 = vmatpush2.bf16.msra.mxu0 %v2179
  %3161 = vmatprep.subr.bf16.mxu0 %v2172
  %3162 = vmatpush2.bf16.msra.mxu0 %v2171
  %3163 = vmatprep.mubr.bf16.mxu0 %v556
  %3164 = vmatmul.mubr.bf16.gmra.mxu0 %v555
  %v3165 = vpop.f32.mrf.mxu0
  %v3166 = vadd.f32 0.0, %v3165
  %v3167 = vpop.f32.mrf.mxu0
  %v3168 = vadd.f32 0.0, %v3167
  %v3169 = vpop.f32.mrf.mxu0
  %v3170 = vadd.f32 0.0, %v3169
  %v3171 = vpop.f32.mrf.mxu0
  %v3172 = vadd.f32 0.0, %v3171
  %3173 = vdwg.mxu0
  %3174 = vmatprep.subr.bf16.mxu0 %v2292
  %3175 = vmatpush1.bf16.msra.mxu0 %v2291
  %3176 = vmatprep.subr.bf16.mxu0 %v2284
  %3177 = vmatpush1.bf16.msra.mxu0 %v2283
  %3178 = vmatprep.subr.bf16.mxu0 %v2276
  %3179 = vmatpush1.bf16.msra.mxu0 %v2275
  %3180 = vmatprep.subr.bf16.mxu0 %v2268
  %3181 = vmatpush1.bf16.msra.mxu0 %v2267
  %3182 = vmatprep.subr.bf16.mxu0 %v2260
  %3183 = vmatpush1.bf16.msra.mxu0 %v2259
  %3184 = vmatprep.subr.bf16.mxu0 %v2252
  %3185 = vmatpush1.bf16.msra.mxu0 %v2251
  %3186 = vmatprep.subr.bf16.mxu0 %v2244
  %3187 = vmatpush1.bf16.msra.mxu0 %v2243
  %3188 = vmatprep.subr.bf16.mxu0 %v2236
  %3189 = vmatpush1.bf16.msra.mxu0 %v2235
  %3190 = vmatprep.subr.bf16.mxu0 %v2356
  %3191 = vmatpush2.bf16.msra.mxu0 %v2355
  %3192 = vmatprep.subr.bf16.mxu0 %v2348
  %3193 = vmatpush2.bf16.msra.mxu0 %v2347
  %3194 = vmatprep.subr.bf16.mxu0 %v2340
  %3195 = vmatpush2.bf16.msra.mxu0 %v2339
  %3196 = vmatprep.subr.bf16.mxu0 %v2332
  %3197 = vmatpush2.bf16.msra.mxu0 %v2331
  %3198 = vmatprep.subr.bf16.mxu0 %v2324
  %3199 = vmatpush2.bf16.msra.mxu0 %v2323
  %3200 = vmatprep.subr.bf16.mxu0 %v2316
  %3201 = vmatpush2.bf16.msra.mxu0 %v2315
  %3202 = vmatprep.subr.bf16.mxu0 %v2308
  %3203 = vmatpush2.bf16.msra.mxu0 %v2307
  %3204 = vmatprep.subr.bf16.mxu0 %v2300
  %3205 = vmatpush2.bf16.msra.mxu0 %v2299
  %3206 = vmatprep.mubr.bf16.mxu0 %v558
  %3207 = vmatmul.mubr.bf16.gmra.mxu0 %v557
  %v3208 = vpop.f32.mrf.mxu0
  %v3209 = vadd.f32 %v3166, %v3208
  %v3210 = vpop.f32.mrf.mxu0
  %v3211 = vadd.f32 %v3168, %v3210
  %v3212 = vpop.f32.mrf.mxu0
  %v3213 = vadd.f32 %v3170, %v3212
  %v3214 = vpop.f32.mrf.mxu0
  %v3215 = vadd.f32 %v3172, %v3214
  %3216 = vdwg.mxu0
  %3217 = vmatprep.subr.bf16.mxu0 %v2420
  %3218 = vmatpush1.bf16.msra.mxu0 %v2419
  %3219 = vmatprep.subr.bf16.mxu0 %v2412
  %3220 = vmatpush1.bf16.msra.mxu0 %v2411
  %3221 = vmatprep.subr.bf16.mxu0 %v2404
  %3222 = vmatpush1.bf16.msra.mxu0 %v2403
  %3223 = vmatprep.subr.bf16.mxu0 %v2396
  %3224 = vmatpush1.bf16.msra.mxu0 %v2395
  %3225 = vmatprep.subr.bf16.mxu0 %v2388
  %3226 = vmatpush1.bf16.msra.mxu0 %v2387
  %3227 = vmatprep.subr.bf16.mxu0 %v2380
  %3228 = vmatpush1.bf16.msra.mxu0 %v2379
  %3229 = vmatprep.subr.bf16.mxu0 %v2372
  %3230 = vmatpush1.bf16.msra.mxu0 %v2371
  %3231 = vmatprep.subr.bf16.mxu0 %v2364
  %3232 = vmatpush1.bf16.msra.mxu0 %v2363
  %3233 = vmatprep.subr.bf16.mxu0 %v2484
  %3234 = vmatpush2.bf16.msra.mxu0 %v2483
  %3235 = vmatprep.subr.bf16.mxu0 %v2476
  %3236 = vmatpush2.bf16.msra.mxu0 %v2475
  %3237 = vmatprep.subr.bf16.mxu0 %v2468
  %3238 = vmatpush2.bf16.msra.mxu0 %v2467
  %3239 = vmatprep.subr.bf16.mxu0 %v2460
  %3240 = vmatpush2.bf16.msra.mxu0 %v2459
  %3241 = vmatprep.subr.bf16.mxu0 %v2452
  %3242 = vmatpush2.bf16.msra.mxu0 %v2451
  %3243 = vmatprep.subr.bf16.mxu0 %v2444
  %3244 = vmatpush2.bf16.msra.mxu0 %v2443
  %3245 = vmatprep.subr.bf16.mxu0 %v2436
  %3246 = vmatpush2.bf16.msra.mxu0 %v2435
  %3247 = vmatprep.subr.bf16.mxu0 %v2428
  %3248 = vmatpush2.bf16.msra.mxu0 %v2427
  %3249 = vmatprep.mubr.bf16.mxu0 %v560
  %3250 = vmatmul.mubr.bf16.gmra.mxu0 %v559
  %v3251 = vpop.f32.mrf.mxu0
  %v3252 = vadd.f32 %v3209, %v3251
  %v3253 = vpop.f32.mrf.mxu0
  %v3254 = vadd.f32 %v3211, %v3253
  %v3255 = vpop.f32.mrf.mxu0
  %v3256 = vadd.f32 %v3213, %v3255
  %v3257 = vpop.f32.mrf.mxu0
  %v3258 = vadd.f32 %v3215, %v3257
  %3259 = vdwg.mxu0
  %3260 = vmatprep.subr.bf16.mxu0 %v2548
  %3261 = vmatpush1.bf16.msra.mxu0 %v2547
  %3262 = vmatprep.subr.bf16.mxu0 %v2540
  %3263 = vmatpush1.bf16.msra.mxu0 %v2539
  %3264 = vmatprep.subr.bf16.mxu0 %v2532
  %3265 = vmatpush1.bf16.msra.mxu0 %v2531
  %3266 = vmatprep.subr.bf16.mxu0 %v2524
  %3267 = vmatpush1.bf16.msra.mxu0 %v2523
  %3268 = vmatprep.subr.bf16.mxu0 %v2516
  %3269 = vmatpush1.bf16.msra.mxu0 %v2515
  %3270 = vmatprep.subr.bf16.mxu0 %v2508
  %3271 = vmatpush1.bf16.msra.mxu0 %v2507
  %3272 = vmatprep.subr.bf16.mxu0 %v2500
  %3273 = vmatpush1.bf16.msra.mxu0 %v2499
  %3274 = vmatprep.subr.bf16.mxu0 %v2492
  %3275 = vmatpush1.bf16.msra.mxu0 %v2491
  %3276 = vmatprep.subr.bf16.mxu0 %v2612
  %3277 = vmatpush2.bf16.msra.mxu0 %v2611
  %3278 = vmatprep.subr.bf16.mxu0 %v2604
  %3279 = vmatpush2.bf16.msra.mxu0 %v2603
  %3280 = vmatprep.subr.bf16.mxu0 %v2596
  %3281 = vmatpush2.bf16.msra.mxu0 %v2595
  %3282 = vmatprep.subr.bf16.mxu0 %v2588
  %3283 = vmatpush2.bf16.msra.mxu0 %v2587
  %3284 = vmatprep.subr.bf16.mxu0 %v2580
  %3285 = vmatpush2.bf16.msra.mxu0 %v2579
  %3286 = vmatprep.subr.bf16.mxu0 %v2572
  %3287 = vmatpush2.bf16.msra.mxu0 %v2571
  %3288 = vmatprep.subr.bf16.mxu0 %v2564
  %3289 = vmatpush2.bf16.msra.mxu0 %v2563
  %3290 = vmatprep.subr.bf16.mxu0 %v2556
  %3291 = vmatpush2.bf16.msra.mxu0 %v2555
  %3292 = vmatprep.mubr.bf16.mxu0 %v562
  %3293 = vmatmul.mubr.bf16.gmra.mxu0 %v561
  %v3294 = vpop.f32.mrf.mxu0
  %v3295 = vadd.f32 %v3252, %v3294
  %v3296 = vpop.f32.mrf.mxu0
  %v3297 = vadd.f32 %v3254, %v3296
  %v3298 = vpop.f32.mrf.mxu0
  %v3299 = vadd.f32 %v3256, %v3298
  %v3300 = vpop.f32.mrf.mxu0
  %v3301 = vadd.f32 %v3258, %v3300
  %3302 = vdwg.mxu0
  %3303 = vmatprep.subr.bf16.mxu0 %v2166
  %3304 = vmatpush1.bf16.msra.mxu0 %v2165
  %3305 = vmatprep.subr.bf16.mxu0 %v2158
  %3306 = vmatpush1.bf16.msra.mxu0 %v2157
  %3307 = vmatprep.subr.bf16.mxu0 %v2150
  %3308 = vmatpush1.bf16.msra.mxu0 %v2149
  %3309 = vmatprep.subr.bf16.mxu0 %v2142
  %3310 = vmatpush1.bf16.msra.mxu0 %v2141
  %3311 = vmatprep.subr.bf16.mxu0 %v2134
  %3312 = vmatpush1.bf16.msra.mxu0 %v2133
  %3313 = vmatprep.subr.bf16.mxu0 %v2126
  %3314 = vmatpush1.bf16.msra.mxu0 %v2125
  %3315 = vmatprep.subr.bf16.mxu0 %v2118
  %3316 = vmatpush1.bf16.msra.mxu0 %v2117
  %3317 = vmatprep.subr.bf16.mxu0 %v2110
  %3318 = vmatpush1.bf16.msra.mxu0 %v2109
  %3319 = vmatprep.subr.bf16.mxu0 %v2230
  %3320 = vmatpush2.bf16.msra.mxu0 %v2229
  %3321 = vmatprep.subr.bf16.mxu0 %v2222
  %3322 = vmatpush2.bf16.msra.mxu0 %v2221
  %3323 = vmatprep.subr.bf16.mxu0 %v2214
  %3324 = vmatpush2.bf16.msra.mxu0 %v2213
  %3325 = vmatprep.subr.bf16.mxu0 %v2206
  %3326 = vmatpush2.bf16.msra.mxu0 %v2205
  %3327 = vmatprep.subr.bf16.mxu0 %v2198
  %3328 = vmatpush2.bf16.msra.mxu0 %v2197
  %3329 = vmatprep.subr.bf16.mxu0 %v2190
  %3330 = vmatpush2.bf16.msra.mxu0 %v2189
  %3331 = vmatprep.subr.bf16.mxu0 %v2182
  %3332 = vmatpush2.bf16.msra.mxu0 %v2181
  %3333 = vmatprep.subr.bf16.mxu0 %v2174
  %3334 = vmatpush2.bf16.msra.mxu0 %v2173
  %3335 = vmatprep.mubr.bf16.mxu0 %v556
  %3336 = vmatmul.mubr.bf16.gmra.mxu0 %v555
  %v3337 = vpop.f32.mrf.mxu0
  %v3338 = vadd.f32 0.0, %v3337
  %v3339 = vpop.f32.mrf.mxu0
  %v3340 = vadd.f32 0.0, %v3339
  %v3341 = vpop.f32.mrf.mxu0
  %v3342 = vadd.f32 0.0, %v3341
  %v3343 = vpop.f32.mrf.mxu0
  %v3344 = vadd.f32 0.0, %v3343
  %3345 = vdwg.mxu0
  %3346 = vmatprep.subr.bf16.mxu0 %v2294
  %3347 = vmatpush1.bf16.msra.mxu0 %v2293
  %3348 = vmatprep.subr.bf16.mxu0 %v2286
  %3349 = vmatpush1.bf16.msra.mxu0 %v2285
  %3350 = vmatprep.subr.bf16.mxu0 %v2278
  %3351 = vmatpush1.bf16.msra.mxu0 %v2277
  %3352 = vmatprep.subr.bf16.mxu0 %v2270
  %3353 = vmatpush1.bf16.msra.mxu0 %v2269
  %3354 = vmatprep.subr.bf16.mxu0 %v2262
  %3355 = vmatpush1.bf16.msra.mxu0 %v2261
  %3356 = vmatprep.subr.bf16.mxu0 %v2254
  %3357 = vmatpush1.bf16.msra.mxu0 %v2253
  %3358 = vmatprep.subr.bf16.mxu0 %v2246
  %3359 = vmatpush1.bf16.msra.mxu0 %v2245
  %3360 = vmatprep.subr.bf16.mxu0 %v2238
  %3361 = vmatpush1.bf16.msra.mxu0 %v2237
  %3362 = vmatprep.subr.bf16.mxu0 %v2358
  %3363 = vmatpush2.bf16.msra.mxu0 %v2357
  %3364 = vmatprep.subr.bf16.mxu0 %v2350
  %3365 = vmatpush2.bf16.msra.mxu0 %v2349
  %3366 = vmatprep.subr.bf16.mxu0 %v2342
  %3367 = vmatpush2.bf16.msra.mxu0 %v2341
  %3368 = vmatprep.subr.bf16.mxu0 %v2334
  %3369 = vmatpush2.bf16.msra.mxu0 %v2333
  %3370 = vmatprep.subr.bf16.mxu0 %v2326
  %3371 = vmatpush2.bf16.msra.mxu0 %v2325
  %3372 = vmatprep.subr.bf16.mxu0 %v2318
  %3373 = vmatpush2.bf16.msra.mxu0 %v2317
  %3374 = vmatprep.subr.bf16.mxu0 %v2310
  %3375 = vmatpush2.bf16.msra.mxu0 %v2309
  %3376 = vmatprep.subr.bf16.mxu0 %v2302
  %3377 = vmatpush2.bf16.msra.mxu0 %v2301
  %3378 = vmatprep.mubr.bf16.mxu0 %v558
  %3379 = vmatmul.mubr.bf16.gmra.mxu0 %v557
  %v3380 = vpop.f32.mrf.mxu0
  %v3381 = vadd.f32 %v3338, %v3380
  %v3382 = vpop.f32.mrf.mxu0
  %v3383 = vadd.f32 %v3340, %v3382
  %v3384 = vpop.f32.mrf.mxu0
  %v3385 = vadd.f32 %v3342, %v3384
  %v3386 = vpop.f32.mrf.mxu0
  %v3387 = vadd.f32 %v3344, %v3386
  %3388 = vdwg.mxu0
  %3389 = vmatprep.subr.bf16.mxu0 %v2422
  %3390 = vmatpush1.bf16.msra.mxu0 %v2421
  %3391 = vmatprep.subr.bf16.mxu0 %v2414
  %3392 = vmatpush1.bf16.msra.mxu0 %v2413
  %3393 = vmatprep.subr.bf16.mxu0 %v2406
  %3394 = vmatpush1.bf16.msra.mxu0 %v2405
  %3395 = vmatprep.subr.bf16.mxu0 %v2398
  %3396 = vmatpush1.bf16.msra.mxu0 %v2397
  %3397 = vmatprep.subr.bf16.mxu0 %v2390
  %3398 = vmatpush1.bf16.msra.mxu0 %v2389
  %3399 = vmatprep.subr.bf16.mxu0 %v2382
  %3400 = vmatpush1.bf16.msra.mxu0 %v2381
  %3401 = vmatprep.subr.bf16.mxu0 %v2374
  %3402 = vmatpush1.bf16.msra.mxu0 %v2373
  %3403 = vmatprep.subr.bf16.mxu0 %v2366
  %3404 = vmatpush1.bf16.msra.mxu0 %v2365
  %3405 = vmatprep.subr.bf16.mxu0 %v2486
  %3406 = vmatpush2.bf16.msra.mxu0 %v2485
  %3407 = vmatprep.subr.bf16.mxu0 %v2478
  %3408 = vmatpush2.bf16.msra.mxu0 %v2477
  %3409 = vmatprep.subr.bf16.mxu0 %v2470
  %3410 = vmatpush2.bf16.msra.mxu0 %v2469
  %3411 = vmatprep.subr.bf16.mxu0 %v2462
  %3412 = vmatpush2.bf16.msra.mxu0 %v2461
  %3413 = vmatprep.subr.bf16.mxu0 %v2454
  %3414 = vmatpush2.bf16.msra.mxu0 %v2453
  %3415 = vmatprep.subr.bf16.mxu0 %v2446
  %3416 = vmatpush2.bf16.msra.mxu0 %v2445
  %3417 = vmatprep.subr.bf16.mxu0 %v2438
  %3418 = vmatpush2.bf16.msra.mxu0 %v2437
  %3419 = vmatprep.subr.bf16.mxu0 %v2430
  %3420 = vmatpush2.bf16.msra.mxu0 %v2429
  %3421 = vmatprep.mubr.bf16.mxu0 %v560
  %3422 = vmatmul.mubr.bf16.gmra.mxu0 %v559
  %v3423 = vpop.f32.mrf.mxu0
  %v3424 = vadd.f32 %v3381, %v3423
  %v3425 = vpop.f32.mrf.mxu0
  %v3426 = vadd.f32 %v3383, %v3425
  %v3427 = vpop.f32.mrf.mxu0
  %v3428 = vadd.f32 %v3385, %v3427
  %v3429 = vpop.f32.mrf.mxu0
  %v3430 = vadd.f32 %v3387, %v3429
  %3431 = vdwg.mxu0
  %3432 = vmatprep.subr.bf16.mxu0 %v2550
  %3433 = vmatpush1.bf16.msra.mxu0 %v2549
  %3434 = vmatprep.subr.bf16.mxu0 %v2542
  %3435 = vmatpush1.bf16.msra.mxu0 %v2541
  %3436 = vmatprep.subr.bf16.mxu0 %v2534
  %3437 = vmatpush1.bf16.msra.mxu0 %v2533
  %3438 = vmatprep.subr.bf16.mxu0 %v2526
  %3439 = vmatpush1.bf16.msra.mxu0 %v2525
  %3440 = vmatprep.subr.bf16.mxu0 %v2518
  %3441 = vmatpush1.bf16.msra.mxu0 %v2517
  %3442 = vmatprep.subr.bf16.mxu0 %v2510
  %3443 = vmatpush1.bf16.msra.mxu0 %v2509
  %3444 = vmatprep.subr.bf16.mxu0 %v2502
  %3445 = vmatpush1.bf16.msra.mxu0 %v2501
  %3446 = vmatprep.subr.bf16.mxu0 %v2494
  %3447 = vmatpush1.bf16.msra.mxu0 %v2493
  %3448 = vmatprep.subr.bf16.mxu0 %v2614
  %3449 = vmatpush2.bf16.msra.mxu0 %v2613
  %3450 = vmatprep.subr.bf16.mxu0 %v2606
  %3451 = vmatpush2.bf16.msra.mxu0 %v2605
  %3452 = vmatprep.subr.bf16.mxu0 %v2598
  %3453 = vmatpush2.bf16.msra.mxu0 %v2597
  %3454 = vmatprep.subr.bf16.mxu0 %v2590
  %3455 = vmatpush2.bf16.msra.mxu0 %v2589
  %3456 = vmatprep.subr.bf16.mxu0 %v2582
  %3457 = vmatpush2.bf16.msra.mxu0 %v2581
  %3458 = vmatprep.subr.bf16.mxu0 %v2574
  %3459 = vmatpush2.bf16.msra.mxu0 %v2573
  %3460 = vmatprep.subr.bf16.mxu0 %v2566
  %3461 = vmatpush2.bf16.msra.mxu0 %v2565
  %3462 = vmatprep.subr.bf16.mxu0 %v2558
  %3463 = vmatpush2.bf16.msra.mxu0 %v2557
  %3464 = vmatprep.mubr.bf16.mxu0 %v562
  %3465 = vmatmul.mubr.bf16.gmra.mxu0 %v561
  %v3466 = vpop.f32.mrf.mxu0
  %v3467 = vadd.f32 %v3424, %v3466
  %v3468 = vpop.f32.mrf.mxu0
  %v3469 = vadd.f32 %v3426, %v3468
  %v3470 = vpop.f32.mrf.mxu0
  %v3471 = vadd.f32 %v3428, %v3470
  %v3472 = vpop.f32.mrf.mxu0
  %v3473 = vadd.f32 %v3430, %v3472
  %3474 = vdwg.mxu0
  %3475 = vmatprep.subr.bf16.mxu0 %v2168
  %3476 = vmatpush1.bf16.msra.mxu0 %v2167
  %3477 = vmatprep.subr.bf16.mxu0 %v2160
  %3478 = vmatpush1.bf16.msra.mxu0 %v2159
  %3479 = vmatprep.subr.bf16.mxu0 %v2152
  %3480 = vmatpush1.bf16.msra.mxu0 %v2151
  %3481 = vmatprep.subr.bf16.mxu0 %v2144
  %3482 = vmatpush1.bf16.msra.mxu0 %v2143
  %3483 = vmatprep.subr.bf16.mxu0 %v2136
  %3484 = vmatpush1.bf16.msra.mxu0 %v2135
  %3485 = vmatprep.subr.bf16.mxu0 %v2128
  %3486 = vmatpush1.bf16.msra.mxu0 %v2127
  %3487 = vmatprep.subr.bf16.mxu0 %v2120
  %3488 = vmatpush1.bf16.msra.mxu0 %v2119
  %3489 = vmatprep.subr.bf16.mxu0 %v2112
  %3490 = vmatpush1.bf16.msra.mxu0 %v2111
  %3491 = vmatprep.subr.bf16.mxu0 %v2232
  %3492 = vmatpush2.bf16.msra.mxu0 %v2231
  %3493 = vmatprep.subr.bf16.mxu0 %v2224
  %3494 = vmatpush2.bf16.msra.mxu0 %v2223
  %3495 = vmatprep.subr.bf16.mxu0 %v2216
  %3496 = vmatpush2.bf16.msra.mxu0 %v2215
  %3497 = vmatprep.subr.bf16.mxu0 %v2208
  %3498 = vmatpush2.bf16.msra.mxu0 %v2207
  %3499 = vmatprep.subr.bf16.mxu0 %v2200
  %3500 = vmatpush2.bf16.msra.mxu0 %v2199
  %3501 = vmatprep.subr.bf16.mxu0 %v2192
  %3502 = vmatpush2.bf16.msra.mxu0 %v2191
  %3503 = vmatprep.subr.bf16.mxu0 %v2184
  %3504 = vmatpush2.bf16.msra.mxu0 %v2183
  %3505 = vmatprep.subr.bf16.mxu0 %v2176
  %3506 = vmatpush2.bf16.msra.mxu0 %v2175
  %3507 = vmatprep.mubr.bf16.mxu0 %v556
  %3508 = vmatmul.mubr.bf16.gmra.mxu0 %v555
  %v3509 = vpop.f32.mrf.mxu0
  %v3510 = vadd.f32 0.0, %v3509
  %v3511 = vpop.f32.mrf.mxu0
  %v3512 = vadd.f32 0.0, %v3511
  %v3513 = vpop.f32.mrf.mxu0
  %v3514 = vadd.f32 0.0, %v3513
  %v3515 = vpop.f32.mrf.mxu0
  %v3516 = vadd.f32 0.0, %v3515
  %3517 = vdwg.mxu0
  %3518 = vmatprep.subr.bf16.mxu0 %v2296
  %3519 = vmatpush1.bf16.msra.mxu0 %v2295
  %3520 = vmatprep.subr.bf16.mxu0 %v2288
  %3521 = vmatpush1.bf16.msra.mxu0 %v2287
  %3522 = vmatprep.subr.bf16.mxu0 %v2280
  %3523 = vmatpush1.bf16.msra.mxu0 %v2279
  %3524 = vmatprep.subr.bf16.mxu0 %v2272
  %3525 = vmatpush1.bf16.msra.mxu0 %v2271
  %3526 = vmatprep.subr.bf16.mxu0 %v2264
  %3527 = vmatpush1.bf16.msra.mxu0 %v2263
  %3528 = vmatprep.subr.bf16.mxu0 %v2256
  %3529 = vmatpush1.bf16.msra.mxu0 %v2255
  %3530 = vmatprep.subr.bf16.mxu0 %v2248
  %3531 = vmatpush1.bf16.msra.mxu0 %v2247
  %3532 = vmatprep.subr.bf16.mxu0 %v2240
  %3533 = vmatpush1.bf16.msra.mxu0 %v2239
  %3534 = vmatprep.subr.bf16.mxu0 %v2360
  %3535 = vmatpush2.bf16.msra.mxu0 %v2359
  %3536 = vmatprep.subr.bf16.mxu0 %v2352
  %3537 = vmatpush2.bf16.msra.mxu0 %v2351
  %3538 = vmatprep.subr.bf16.mxu0 %v2344
  %3539 = vmatpush2.bf16.msra.mxu0 %v2343
  %3540 = vmatprep.subr.bf16.mxu0 %v2336
  %3541 = vmatpush2.bf16.msra.mxu0 %v2335
  %3542 = vmatprep.subr.bf16.mxu0 %v2328
  %3543 = vmatpush2.bf16.msra.mxu0 %v2327
  %3544 = vmatprep.subr.bf16.mxu0 %v2320
  %3545 = vmatpush2.bf16.msra.mxu0 %v2319
  %3546 = vmatprep.subr.bf16.mxu0 %v2312
  %3547 = vmatpush2.bf16.msra.mxu0 %v2311
  %3548 = vmatprep.subr.bf16.mxu0 %v2304
  %3549 = vmatpush2.bf16.msra.mxu0 %v2303
  %3550 = vmatprep.mubr.bf16.mxu0 %v558
  %3551 = vmatmul.mubr.bf16.gmra.mxu0 %v557
  %v3552 = vpop.f32.mrf.mxu0
  %v3553 = vadd.f32 %v3510, %v3552
  %v3554 = vpop.f32.mrf.mxu0
  %v3555 = vadd.f32 %v3512, %v3554
  %v3556 = vpop.f32.mrf.mxu0
  %v3557 = vadd.f32 %v3514, %v3556
  %v3558 = vpop.f32.mrf.mxu0
  %v3559 = vadd.f32 %v3516, %v3558
  %3560 = vdwg.mxu0
  %3561 = vmatprep.subr.bf16.mxu0 %v2424
  %3562 = vmatpush1.bf16.msra.mxu0 %v2423
  %3563 = vmatprep.subr.bf16.mxu0 %v2416
  %3564 = vmatpush1.bf16.msra.mxu0 %v2415
  %3565 = vmatprep.subr.bf16.mxu0 %v2408
  %3566 = vmatpush1.bf16.msra.mxu0 %v2407
  %3567 = vmatprep.subr.bf16.mxu0 %v2400
  %3568 = vmatpush1.bf16.msra.mxu0 %v2399
  %3569 = vmatprep.subr.bf16.mxu0 %v2392
  %3570 = vmatpush1.bf16.msra.mxu0 %v2391
  %3571 = vmatprep.subr.bf16.mxu0 %v2384
  %3572 = vmatpush1.bf16.msra.mxu0 %v2383
  %3573 = vmatprep.subr.bf16.mxu0 %v2376
  %3574 = vmatpush1.bf16.msra.mxu0 %v2375
  %3575 = vmatprep.subr.bf16.mxu0 %v2368
  %3576 = vmatpush1.bf16.msra.mxu0 %v2367
  %3577 = vmatprep.subr.bf16.mxu0 %v2488
  %3578 = vmatpush2.bf16.msra.mxu0 %v2487
  %3579 = vmatprep.subr.bf16.mxu0 %v2480
  %3580 = vmatpush2.bf16.msra.mxu0 %v2479
  %3581 = vmatprep.subr.bf16.mxu0 %v2472
  %3582 = vmatpush2.bf16.msra.mxu0 %v2471
  %3583 = vmatprep.subr.bf16.mxu0 %v2464
  %3584 = vmatpush2.bf16.msra.mxu0 %v2463
  %3585 = vmatprep.subr.bf16.mxu0 %v2456
  %3586 = vmatpush2.bf16.msra.mxu0 %v2455
  %3587 = vmatprep.subr.bf16.mxu0 %v2448
  %3588 = vmatpush2.bf16.msra.mxu0 %v2447
  %3589 = vmatprep.subr.bf16.mxu0 %v2440
  %3590 = vmatpush2.bf16.msra.mxu0 %v2439
  %3591 = vmatprep.subr.bf16.mxu0 %v2432
  %3592 = vmatpush2.bf16.msra.mxu0 %v2431
  %3593 = vmatprep.mubr.bf16.mxu0 %v560
  %3594 = vmatmul.mubr.bf16.gmra.mxu0 %v559
  %v3595 = vpop.f32.mrf.mxu0
  %v3596 = vadd.f32 %v3553, %v3595
  %v3597 = vpop.f32.mrf.mxu0
  %v3598 = vadd.f32 %v3555, %v3597
  %v3599 = vpop.f32.mrf.mxu0
  %v3600 = vadd.f32 %v3557, %v3599
  %v3601 = vpop.f32.mrf.mxu0
  %v3602 = vadd.f32 %v3559, %v3601
  %3603 = vdwg.mxu0
  %3604 = vmatprep.subr.bf16.mxu0 %v2552
  %3605 = vmatpush1.bf16.msra.mxu0 %v2551
  %3606 = vmatprep.subr.bf16.mxu0 %v2544
  %3607 = vmatpush1.bf16.msra.mxu0 %v2543
  %3608 = vmatprep.subr.bf16.mxu0 %v2536
  %3609 = vmatpush1.bf16.msra.mxu0 %v2535
  %3610 = vmatprep.subr.bf16.mxu0 %v2528
  %3611 = vmatpush1.bf16.msra.mxu0 %v2527
  %3612 = vmatprep.subr.bf16.mxu0 %v2520
  %3613 = vmatpush1.bf16.msra.mxu0 %v2519
  %3614 = vmatprep.subr.bf16.mxu0 %v2512
  %3615 = vmatpush1.bf16.msra.mxu0 %v2511
  %3616 = vmatprep.subr.bf16.mxu0 %v2504
  %3617 = vmatpush1.bf16.msra.mxu0 %v2503
  %3618 = vmatprep.subr.bf16.mxu0 %v2496
  %3619 = vmatpush1.bf16.msra.mxu0 %v2495
  %3620 = vmatprep.subr.bf16.mxu0 %v2616
  %3621 = vmatpush2.bf16.msra.mxu0 %v2615
  %3622 = vmatprep.subr.bf16.mxu0 %v2608
  %3623 = vmatpush2.bf16.msra.mxu0 %v2607
  %3624 = vmatprep.subr.bf16.mxu0 %v2600
  %3625 = vmatpush2.bf16.msra.mxu0 %v2599
  %3626 = vmatprep.subr.bf16.mxu0 %v2592
  %3627 = vmatpush2.bf16.msra.mxu0 %v2591
  %3628 = vmatprep.subr.bf16.mxu0 %v2584
  %3629 = vmatpush2.bf16.msra.mxu0 %v2583
  %3630 = vmatprep.subr.bf16.mxu0 %v2576
  %3631 = vmatpush2.bf16.msra.mxu0 %v2575
  %3632 = vmatprep.subr.bf16.mxu0 %v2568
  %3633 = vmatpush2.bf16.msra.mxu0 %v2567
  %3634 = vmatprep.subr.bf16.mxu0 %v2560
  %3635 = vmatpush2.bf16.msra.mxu0 %v2559
  %3636 = vmatprep.mubr.bf16.mxu0 %v562
  %3637 = vmatmul.mubr.bf16.gmra.mxu0 %v561
  %v3638 = vpop.f32.mrf.mxu0
  %v3639 = vadd.f32 %v3596, %v3638
  %v3640 = vpop.f32.mrf.mxu0
  %v3641 = vadd.f32 %v3598, %v3640
  %v3642 = vpop.f32.mrf.mxu0
  %v3643 = vadd.f32 %v3600, %v3642
  %v3644 = vpop.f32.mrf.mxu0
  %v3645 = vadd.f32 %v3602, %v3644
  %3646 = vdwg.mxu0
  %3647 = vmatprep.subr.bf16.mxu0 %v2170
  %3648 = vmatpush1.bf16.msra.mxu0 %v2169
  %3649 = vmatprep.subr.bf16.mxu0 %v2162
  %3650 = vmatpush1.bf16.msra.mxu0 %v2161
  %3651 = vmatprep.subr.bf16.mxu0 %v2154
  %3652 = vmatpush1.bf16.msra.mxu0 %v2153
  %3653 = vmatprep.subr.bf16.mxu0 %v2146
  %3654 = vmatpush1.bf16.msra.mxu0 %v2145
  %3655 = vmatprep.subr.bf16.mxu0 %v2138
  %3656 = vmatpush1.bf16.msra.mxu0 %v2137
  %3657 = vmatprep.subr.bf16.mxu0 %v2130
  %3658 = vmatpush1.bf16.msra.mxu0 %v2129
  %3659 = vmatprep.subr.bf16.mxu0 %v2122
  %3660 = vmatpush1.bf16.msra.mxu0 %v2121
  %3661 = vmatprep.subr.bf16.mxu0 %v2114
  %3662 = vmatpush1.bf16.msra.mxu0 %v2113
  %3663 = vmatprep.subr.bf16.mxu0 %v2234
  %3664 = vmatpush2.bf16.msra.mxu0 %v2233
  %3665 = vmatprep.subr.bf16.mxu0 %v2226
  %3666 = vmatpush2.bf16.msra.mxu0 %v2225
  %3667 = vmatprep.subr.bf16.mxu0 %v2218
  %3668 = vmatpush2.bf16.msra.mxu0 %v2217
  %3669 = vmatprep.subr.bf16.mxu0 %v2210
  %3670 = vmatpush2.bf16.msra.mxu0 %v2209
  %3671 = vmatprep.subr.bf16.mxu0 %v2202
  %3672 = vmatpush2.bf16.msra.mxu0 %v2201
  %3673 = vmatprep.subr.bf16.mxu0 %v2194
  %3674 = vmatpush2.bf16.msra.mxu0 %v2193
  %3675 = vmatprep.subr.bf16.mxu0 %v2186
  %3676 = vmatpush2.bf16.msra.mxu0 %v2185
  %3677 = vmatprep.subr.bf16.mxu0 %v2178
  %3678 = vmatpush2.bf16.msra.mxu0 %v2177
  %3679 = vmatprep.mubr.bf16.mxu0 %v556
  %3680 = vmatmul.mubr.bf16.gmra.mxu0 %v555
  %v3681 = vpop.f32.mrf.mxu0
  %v3682 = vadd.f32 0.0, %v3681
  %v3683 = vpop.f32.mrf.mxu0
  %v3684 = vadd.f32 0.0, %v3683
  %v3685 = vpop.f32.mrf.mxu0
  %v3686 = vadd.f32 0.0, %v3685
  %v3687 = vpop.f32.mrf.mxu0
  %v3688 = vadd.f32 0.0, %v3687
  %3689 = vdwg.mxu0
  %3690 = vmatprep.subr.bf16.mxu0 %v2298
  %3691 = vmatpush1.bf16.msra.mxu0 %v2297
  %3692 = vmatprep.subr.bf16.mxu0 %v2290
  %3693 = vmatpush1.bf16.msra.mxu0 %v2289
  %3694 = vmatprep.subr.bf16.mxu0 %v2282
  %3695 = vmatpush1.bf16.msra.mxu0 %v2281
  %3696 = vmatprep.subr.bf16.mxu0 %v2274
  %3697 = vmatpush1.bf16.msra.mxu0 %v2273
  %3698 = vmatprep.subr.bf16.mxu0 %v2266
  %3699 = vmatpush1.bf16.msra.mxu0 %v2265
  %3700 = vmatprep.subr.bf16.mxu0 %v2258
  %3701 = vmatpush1.bf16.msra.mxu0 %v2257
  %3702 = vmatprep.subr.bf16.mxu0 %v2250
  %3703 = vmatpush1.bf16.msra.mxu0 %v2249
  %3704 = vmatprep.subr.bf16.mxu0 %v2242
  %3705 = vmatpush1.bf16.msra.mxu0 %v2241
  %3706 = vmatprep.subr.bf16.mxu0 %v2362
  %3707 = vmatpush2.bf16.msra.mxu0 %v2361
  %3708 = vmatprep.subr.bf16.mxu0 %v2354
  %3709 = vmatpush2.bf16.msra.mxu0 %v2353
  %3710 = vmatprep.subr.bf16.mxu0 %v2346
  %3711 = vmatpush2.bf16.msra.mxu0 %v2345
  %3712 = vmatprep.subr.bf16.mxu0 %v2338
  %3713 = vmatpush2.bf16.msra.mxu0 %v2337
  %3714 = vmatprep.subr.bf16.mxu0 %v2330
  %3715 = vmatpush2.bf16.msra.mxu0 %v2329
  %3716 = vmatprep.subr.bf16.mxu0 %v2322
  %3717 = vmatpush2.bf16.msra.mxu0 %v2321
  %3718 = vmatprep.subr.bf16.mxu0 %v2314
  %3719 = vmatpush2.bf16.msra.mxu0 %v2313
  %3720 = vmatprep.subr.bf16.mxu0 %v2306
  %3721 = vmatpush2.bf16.msra.mxu0 %v2305
  %3722 = vmatprep.mubr.bf16.mxu0 %v558
  %3723 = vmatmul.mubr.bf16.gmra.mxu0 %v557
  %v3724 = vpop.f32.mrf.mxu0
  %v3725 = vadd.f32 %v3682, %v3724
  %v3726 = vpop.f32.mrf.mxu0
  %v3727 = vadd.f32 %v3684, %v3726
  %v3728 = vpop.f32.mrf.mxu0
  %v3729 = vadd.f32 %v3686, %v3728
  %v3730 = vpop.f32.mrf.mxu0
  %v3731 = vadd.f32 %v3688, %v3730
  %3732 = vdwg.mxu0
  %3733 = vmatprep.subr.bf16.mxu0 %v2426
  %3734 = vmatpush1.bf16.msra.mxu0 %v2425
  %3735 = vmatprep.subr.bf16.mxu0 %v2418
  %3736 = vmatpush1.bf16.msra.mxu0 %v2417
  %3737 = vmatprep.subr.bf16.mxu0 %v2410
  %3738 = vmatpush1.bf16.msra.mxu0 %v2409
  %3739 = vmatprep.subr.bf16.mxu0 %v2402
  %3740 = vmatpush1.bf16.msra.mxu0 %v2401
  %3741 = vmatprep.subr.bf16.mxu0 %v2394
  %3742 = vmatpush1.bf16.msra.mxu0 %v2393
  %3743 = vmatprep.subr.bf16.mxu0 %v2386
  %3744 = vmatpush1.bf16.msra.mxu0 %v2385
  %3745 = vmatprep.subr.bf16.mxu0 %v2378
  %3746 = vmatpush1.bf16.msra.mxu0 %v2377
  %3747 = vmatprep.subr.bf16.mxu0 %v2370
  %3748 = vmatpush1.bf16.msra.mxu0 %v2369
  %3749 = vmatprep.subr.bf16.mxu0 %v2490
  %3750 = vmatpush2.bf16.msra.mxu0 %v2489
  %3751 = vmatprep.subr.bf16.mxu0 %v2482
  %3752 = vmatpush2.bf16.msra.mxu0 %v2481
  %3753 = vmatprep.subr.bf16.mxu0 %v2474
  %3754 = vmatpush2.bf16.msra.mxu0 %v2473
  %3755 = vmatprep.subr.bf16.mxu0 %v2466
  %3756 = vmatpush2.bf16.msra.mxu0 %v2465
  %3757 = vmatprep.subr.bf16.mxu0 %v2458
  %3758 = vmatpush2.bf16.msra.mxu0 %v2457
  %3759 = vmatprep.subr.bf16.mxu0 %v2450
  %3760 = vmatpush2.bf16.msra.mxu0 %v2449
  %3761 = vmatprep.subr.bf16.mxu0 %v2442
  %3762 = vmatpush2.bf16.msra.mxu0 %v2441
  %3763 = vmatprep.subr.bf16.mxu0 %v2434
  %3764 = vmatpush2.bf16.msra.mxu0 %v2433
  %3765 = vmatprep.mubr.bf16.mxu0 %v560
  %3766 = vmatmul.mubr.bf16.gmra.mxu0 %v559
  %v3767 = vpop.f32.mrf.mxu0
  %v3768 = vadd.f32 %v3725, %v3767
  %v3769 = vpop.f32.mrf.mxu0
  %v3770 = vadd.f32 %v3727, %v3769
  %v3771 = vpop.f32.mrf.mxu0
  %v3772 = vadd.f32 %v3729, %v3771
  %v3773 = vpop.f32.mrf.mxu0
  %v3774 = vadd.f32 %v3731, %v3773
  %3775 = vdwg.mxu0
  %3776 = vmatprep.subr.bf16.mxu0 %v2554
  %3777 = vmatpush1.bf16.msra.mxu0 %v2553
  %3778 = vmatprep.subr.bf16.mxu0 %v2546
  %3779 = vmatpush1.bf16.msra.mxu0 %v2545
  %3780 = vmatprep.subr.bf16.mxu0 %v2538
  %3781 = vmatpush1.bf16.msra.mxu0 %v2537
  %3782 = vmatprep.subr.bf16.mxu0 %v2530
  %3783 = vmatpush1.bf16.msra.mxu0 %v2529
  %3784 = vmatprep.subr.bf16.mxu0 %v2522
  %3785 = vmatpush1.bf16.msra.mxu0 %v2521
  %3786 = vmatprep.subr.bf16.mxu0 %v2514
  %3787 = vmatpush1.bf16.msra.mxu0 %v2513
  %3788 = vmatprep.subr.bf16.mxu0 %v2506
  %3789 = vmatpush1.bf16.msra.mxu0 %v2505
  %3790 = vmatprep.subr.bf16.mxu0 %v2498
  %3791 = vmatpush1.bf16.msra.mxu0 %v2497
  %3792 = vmatprep.subr.bf16.mxu0 %v2618
  %3793 = vmatpush2.bf16.msra.mxu0 %v2617
  %3794 = vmatprep.subr.bf16.mxu0 %v2610
  %3795 = vmatpush2.bf16.msra.mxu0 %v2609
  %3796 = vmatprep.subr.bf16.mxu0 %v2602
  %3797 = vmatpush2.bf16.msra.mxu0 %v2601
  %3798 = vmatprep.subr.bf16.mxu0 %v2594
  %3799 = vmatpush2.bf16.msra.mxu0 %v2593
  %3800 = vmatprep.subr.bf16.mxu0 %v2586
  %3801 = vmatpush2.bf16.msra.mxu0 %v2585
  %3802 = vmatprep.subr.bf16.mxu0 %v2578
  %3803 = vmatpush2.bf16.msra.mxu0 %v2577
  %3804 = vmatprep.subr.bf16.mxu0 %v2570
  %3805 = vmatpush2.bf16.msra.mxu0 %v2569
  %3806 = vmatprep.subr.bf16.mxu0 %v2562
  %3807 = vmatpush2.bf16.msra.mxu0 %v2561
  %3808 = vmatprep.mubr.bf16.mxu0 %v562
  %3809 = vmatmul.mubr.bf16.gmra.mxu0 %v561
  %v3810 = vpop.f32.mrf.mxu0
  %v3811 = vadd.f32 %v3768, %v3810
  %v3812 = vpop.f32.mrf.mxu0
  %v3813 = vadd.f32 %v3770, %v3812
  %v3814 = vpop.f32.mrf.mxu0
  %v3815 = vadd.f32 %v3772, %v3814
  %v3816 = vpop.f32.mrf.mxu0
  %v3817 = vadd.f32 %v3774, %v3816
  %3818 = vdwg.mxu0
  %v3819 = vpack.c.bf16 %v3299, %v3295
  %v3820 = vpack.c.bf16 %v3301, %v3297
  %v3821 = vpack.c.bf16 %v3471, %v3467
  %v3822 = vpack.c.bf16 %v3473, %v3469
  %v3823 = vpack.c.bf16 %v3643, %v3639
  %v3824 = vpack.c.bf16 %v3645, %v3641
  %v3825 = vpack.c.bf16 %v3815, %v3811
  %v3826 = vpack.c.bf16 %v3817, %v3813
  %v3835 = vunpack.c.l.b16 %v3819
  %v3836 = vunpack.c.l.b16 %v3820
  %v3837 = vunpack.c.l.b16 %v3821
  %v3838 = vunpack.c.l.b16 %v3822
  %v3839 = vunpack.c.l.b16 %v3823
  %v3840 = vunpack.c.l.b16 %v3824
  %v3841 = vunpack.c.l.b16 %v3825
  %v3842 = vunpack.c.l.b16 %v3826
  %v3843 = vunpack.c.h.b16 %v3819
  %v3844 = vunpack.c.h.b16 %v3820
  %v3845 = vunpack.c.h.b16 %v3821
  %v3846 = vunpack.c.h.b16 %v3822
  %v3847 = vunpack.c.h.b16 %v3823
  %v3848 = vunpack.c.h.b16 %v3824
  %v3849 = vunpack.c.h.b16 %v3825
  %v3850 = vunpack.c.h.b16 %v3826
  %v3851 = vpack.c.b16 %v3836, %v3835
  %v3852 = vpack.c.b16 %v3838, %v3837
  %v3853 = vpack.c.b16 %v3840, %v3839
  %v3854 = vpack.c.b16 %v3842, %v3841
  %v3855 = vpack.c.b16 %v3844, %v3843
  %v3856 = vpack.c.b16 %v3846, %v3845
  %v3857 = vpack.c.b16 %v3848, %v3847
  %v3858 = vpack.c.b16 %v3850, %v3849
  %3867 = vst [vmem:[%s2] sm:$0xff] %v3851
  %3868 = vst [vmem:[%s2 + $0x8] sm:$0xff] %v3852
  %3869 = vst [vmem:[%s2 + $0x10] sm:$0xff] %v3853
  %3870 = vst [vmem:[%s2 + $0x18] sm:$0xff] %v3854
  %3871 = vst [vmem:[%s2 + $0x20] sm:$0xff] %v3855
  %3872 = vst [vmem:[%s2 + $0x28] sm:$0xff] %v3856
  %3873 = vst [vmem:[%s2 + $0x30] sm:$0xff] %v3857
  %3874 = vst [vmem:[%s2 + $0x38] sm:$0xff] %v3858
  // Predicated region
  $region10: #{sequence_model.2} parent=0 // pred_check
    _
  $region11: #{sequence_model.2} parent=0 // pred_check_branch
    %3876 = sbr.rel (0) target = $region13
  $region12: #{sequence_model.2} parent=0 // pred_region
    _
  $region13: #{sequence_model.2} parent=0 // pred_fallthru
    _
  // Predicated region
  $region14: #{sequence_model.2} parent=0 // pred_check
    _
  $region15: #{sequence_model.2} parent=0 // pred_check_branch
    %3878 = sbr.rel (0) target = $region17
  $region16: #{sequence_model.2} parent=0 // pred_region
    _
  $region17: #{sequence_model.2} parent=0 // pred_fallthru
    _

// kernel: sequence_model.3
$region0: #{sequence_model.3}
  #allocation0 [shape = 'u32[]', space=smem, size = 0x4, offset = 0x4, fixed_abs, tag = 'smem constant byte address 0x4 - core index']
  #allocation1 [shape = 'u32[144,128]{1,0:T(1,128)}', space=vmem, size = 0x12000, scoped, tag = 'internal scratch']
  #allocation2 [shape = 'f32[2,256]{1,0:T(2,128)}', space=vmem, size = 0x800, scoped, tag = 'scratch operand']
  #allocation3 [shape = 'f32[2,256]{1,0:T(2,128)}', space=vmem, size = 0x800, scoped, tag = 'scratch operand']
  %s0 = inlined_call_operand.vmem [shape: bf16[2,8,1024], index: 0, kind: input, shape index: {}]
  %s1 = inlined_call_operand.vmem [shape: bf16[256,1024], index: 1, kind: input, shape index: {}]
  %s2 = inlined_call_operand.vmem [shape: f32[1,1024], index: 2, kind: input, shape index: {}]
  %s3 = inlined_call_operand.vmem [shape: f32[1,256], index: 3, kind: input, shape index: {}]
  %s4 = inlined_call_operand.vmem [shape: f32[1,256], index: 4, kind: input, shape index: {}]
  %s5 = inlined_call_operand.vmem [shape: bf16[256,64], index: 5, kind: input, shape index: {}]
  %s6 = inlined_call_operand.vmem [shape: f32[1,64], index: 6, kind: input, shape index: {}]
  %s7 = inlined_call_operand.vmem [shape: f32[1,64], index: 7, kind: input, shape index: {}]
  %s8 = inlined_call_operand.vmem [shape: f32[1,64], index: 8, kind: input, shape index: {}]
  %s9 = inlined_call_operand.vmem [shape: bf16[64,128], index: 9, kind: input, shape index: {}]
  %s10 = inlined_call_operand.vmem [shape: f32[1,128], index: 10, kind: input, shape index: {}]
  %s11 = inlined_call_operand.hbm [shape: f32[2,8,128], index: 11, kind: output, shape index: {}]
  %s12 = sld [smem:[#allocation0]]
  $region58: #{sequence_model.3} parent=0
    _
  %s14 = ssub.s32 1, %s12
  %s15 = scalar_select 0, %s14, %s12
  $region1: #{sequence_model.3} parent=0
    #allocation4 [shape = 'u8[8192]{0}', space=vmem, size = 0x2000, scoped, tag = 'output window, operand 0, single buffered']
    #allocation5 [shape = 's32[1]{0}', space=sflag, size = 0x4, scoped, tag = 'scoped memory for sequence_model.3']
    %16 = vsyncpa [#allocation5], 0
    // Predicated region
    $region2: #{sequence_model.3} parent=1 // pred_check
      _
    $region3: #{sequence_model.3} parent=1 // pred_check_branch
      %18 = sbr.rel (0) target = $region5
    $region4: #{sequence_model.3} parent=1 // pred_region
      _
    $region5: #{sequence_model.3} parent=1 // pred_fallthru
      _
    // Predicated region
    $region6: #{sequence_model.3} parent=1 // pred_check
      _
    $region7: #{sequence_model.3} parent=1 // pred_check_branch
      %20 = sbr.rel (0) target = $region9
    $region8: #{sequence_model.3} parent=1 // pred_region
      _
    $region9: #{sequence_model.3} parent=1 // pred_fallthru
      _
    // Predicated region
    $region10: #{sequence_model.3} parent=1 // pred_check
      _
    $region11: #{sequence_model.3} parent=1 // pred_check_branch
      %22 = sbr.rel (0) target = $region13
    $region12: #{sequence_model.3} parent=1 // pred_region
      _
    $region13: #{sequence_model.3} parent=1 // pred_fallthru
      _
    // Predicated region
    $region14: #{sequence_model.3} parent=1 // pred_check
      _
    $region15: #{sequence_model.3} parent=1 // pred_check_branch
      %24 = sbr.rel (0) target = $region17
    $region16: #{sequence_model.3} parent=1 // pred_region
      _
    $region17: #{sequence_model.3} parent=1 // pred_fallthru
      _
    // Predicated region
    $region18: #{sequence_model.3} parent=1 // pred_check
      _
    $region19: #{sequence_model.3} parent=1 // pred_check_branch
      %26 = sbr.rel (0) target = $region21
    $region20: #{sequence_model.3} parent=1 // pred_region
      _
    $region21: #{sequence_model.3} parent=1 // pred_fallthru
      _
    // Predicated region
    $region22: #{sequence_model.3} parent=1 // pred_check
      _
    $region23: #{sequence_model.3} parent=1 // pred_check_branch
      %28 = sbr.rel (0) target = $region25
    $region24: #{sequence_model.3} parent=1 // pred_region
      _
    $region25: #{sequence_model.3} parent=1 // pred_fallthru
      _
    // Predicated region
    $region26: #{sequence_model.3} parent=1 // pred_check
      _
    $region27: #{sequence_model.3} parent=1 // pred_check_branch
      %30 = sbr.rel (0) target = $region29
    $region28: #{sequence_model.3} parent=1 // pred_region
      _
    $region29: #{sequence_model.3} parent=1 // pred_fallthru
      _
    // Predicated region
    $region30: #{sequence_model.3} parent=1 // pred_check
      _
    $region31: #{sequence_model.3} parent=1 // pred_check_branch
      %32 = sbr.rel (0) target = $region33
    $region32: #{sequence_model.3} parent=1 // pred_region
      _
    $region33: #{sequence_model.3} parent=1 // pred_fallthru
      _
    // Predicated region
    $region34: #{sequence_model.3} parent=1 // pred_check
      _
    $region35: #{sequence_model.3} parent=1 // pred_check_branch
      %34 = sbr.rel (0) target = $region37
    $region36: #{sequence_model.3} parent=1 // pred_region
      _
    $region37: #{sequence_model.3} parent=1 // pred_fallthru
      _
    // Predicated region
    $region38: #{sequence_model.3} parent=1 // pred_check
      _
    $region39: #{sequence_model.3} parent=1 // pred_check_branch
      %36 = sbr.rel (0) target = $region41
    $region40: #{sequence_model.3} parent=1 // pred_region
      _
    $region41: #{sequence_model.3} parent=1 // pred_fallthru
      _
    // Predicated region
    $region42: #{sequence_model.3} parent=1 // pred_check
      _
    $region43: #{sequence_model.3} parent=1 // pred_check_branch
      %38 = sbr.rel (0) target = $region45
    $region44: #{sequence_model.3} parent=1 // pred_region
      _
    $region45: #{sequence_model.3} parent=1 // pred_fallthru
      _
    %p40 = scmp.eq.s32.totalorder 0, 0
    // Predicated region
    $region46: #{sequence_model.3} parent=1 // pred_check
      %p41 = pneg %p40
    $region47: #{sequence_model.3} parent=1 // pred_check_branch
      %43 = sbr.rel (%p41) target = $region49
    $region48: #{sequence_model.3} parent=1 // pred_region
      %44 = vst [vmem:[#allocation2] sm:$0xf] 0.0
      %45 = vst [vmem:[#allocation3] sm:$0xf] 0.0
    $region49: #{sequence_model.3} parent=1 // pred_fallthru
      _
    %v46 = vld [vmem:[%s1] sm:$0xff]
    %v47 = vld [vmem:[%s1 + $0x8] sm:$0xff]
    %v48 = vld [vmem:[%s1 + $0x10] sm:$0xff]
    %v49 = vld [vmem:[%s1 + $0x18] sm:$0xff]
    %v50 = vld [vmem:[%s1 + $0x20] sm:$0xff]
    %v51 = vld [vmem:[%s1 + $0x28] sm:$0xff]
    %v52 = vld [vmem:[%s1 + $0x30] sm:$0xff]
    %v53 = vld [vmem:[%s1 + $0x38] sm:$0xff]
    %v54 = vld [vmem:[%s1 + $0x40] sm:$0xff]
    %v55 = vld [vmem:[%s1 + $0x48] sm:$0xff]
    %v56 = vld [vmem:[%s1 + $0x50] sm:$0xff]
    %v57 = vld [vmem:[%s1 + $0x58] sm:$0xff]
    %v58 = vld [vmem:[%s1 + $0x60] sm:$0xff]
    %v59 = vld [vmem:[%s1 + $0x68] sm:$0xff]
    %v60 = vld [vmem:[%s1 + $0x70] sm:$0xff]
    %v61 = vld [vmem:[%s1 + $0x78] sm:$0xff]
    %v62 = vld [vmem:[%s1 + $0x80] sm:$0xff]
    %v63 = vld [vmem:[%s1 + $0x88] sm:$0xff]
    %v64 = vld [vmem:[%s1 + $0x90] sm:$0xff]
    %v65 = vld [vmem:[%s1 + $0x98] sm:$0xff]
    %v66 = vld [vmem:[%s1 + $0xa0] sm:$0xff]
    %v67 = vld [vmem:[%s1 + $0xa8] sm:$0xff]
    %v68 = vld [vmem:[%s1 + $0xb0] sm:$0xff]
    %v69 = vld [vmem:[%s1 + $0xb8] sm:$0xff]
    %v70 = vld [vmem:[%s1 + $0xc0] sm:$0xff]
    %v71 = vld [vmem:[%s1 + $0xc8] sm:$0xff]
    %v72 = vld [vmem:[%s1 + $0xd0] sm:$0xff]
    %v73 = vld [vmem:[%s1 + $0xd8] sm:$0xff]
    %v74 = vld [vmem:[%s1 + $0xe0] sm:$0xff]
    %v75 = vld [vmem:[%s1 + $0xe8] sm:$0xff]
    %v76 = vld [vmem:[%s1 + $0xf0] sm:$0xff]
    %v77 = vld [vmem:[%s1 + $0xf8] sm:$0xff]
    %v78 = vld [vmem:[%s1 + $0x100] sm:$0xff]
    %v79 = vld [vmem:[%s1 + $0x108] sm:$0xff]
    %v80 = vld [vmem:[%s1 + $0x110] sm:$0xff]
    %v81 = vld [vmem:[%s1 + $0x118] sm:$0xff]
    %v82 = vld [vmem:[%s1 + $0x120] sm:$0xff]
    %v83 = vld [vmem:[%s1 + $0x128] sm:$0xff]
    %v84 = vld [vmem:[%s1 + $0x130] sm:$0xff]
    %v85 = vld [vmem:[%s1 + $0x138] sm:$0xff]
    %v86 = vld [vmem:[%s1 + $0x140] sm:$0xff]
    %v87 = vld [vmem:[%s1 + $0x148] sm:$0xff]
    %v88 = vld [vmem:[%s1 + $0x150] sm:$0xff]
    %v89 = vld [vmem:[%s1 + $0x158] sm:$0xff]
    %v90 = vld [vmem:[%s1 + $0x160] sm:$0xff]
    %v91 = vld [vmem:[%s1 + $0x168] sm:$0xff]
    %v92 = vld [vmem:[%s1 + $0x170] sm:$0xff]
    %v93 = vld [vmem:[%s1 + $0x178] sm:$0xff]
    %v94 = vld [vmem:[%s1 + $0x180] sm:$0xff]
    %v95 = vld [vmem:[%s1 + $0x188] sm:$0xff]
    %v96 = vld [vmem:[%s1 + $0x190] sm:$0xff]
    %v97 = vld [vmem:[%s1 + $0x198] sm:$0xff]
    %v98 = vld [vmem:[%s1 + $0x1a0] sm:$0xff]
    %v99 = vld [vmem:[%s1 + $0x1a8] sm:$0xff]
    %v100 = vld [vmem:[%s1 + $0x1b0] sm:$0xff]
    %v101 = vld [vmem:[%s1 + $0x1b8] sm:$0xff]
    %v102 = vld [vmem:[%s1 + $0x1c0] sm:$0xff]
    %v103 = vld [vmem:[%s1 + $0x1c8] sm:$0xff]
    %v104 = vld [vmem:[%s1 + $0x1d0] sm:$0xff]
    %v105 = vld [vmem:[%s1 + $0x1d8] sm:$0xff]
    %v106 = vld [vmem:[%s1 + $0x1e0] sm:$0xff]
    %v107 = vld [vmem:[%s1 + $0x1e8] sm:$0xff]
    %v108 = vld [vmem:[%s1 + $0x1f0] sm:$0xff]
    %v109 = vld [vmem:[%s1 + $0x1f8] sm:$0xff]
    %v110 = vld [vmem:[%s1 + $0x200] sm:$0xff]
    %v111 = vld [vmem:[%s1 + $0x208] sm:$0xff]
    %v112 = vld [vmem:[%s1 + $0x210] sm:$0xff]
    %v113 = vld [vmem:[%s1 + $0x218] sm:$0xff]
    %v114 = vld [vmem:[%s1 + $0x220] sm:$0xff]
    %v115 = vld [vmem:[%s1 + $0x228] sm:$0xff]
    %v116 = vld [vmem:[%s1 + $0x230] sm:$0xff]
    %v117 = vld [vmem:[%s1 + $0x238] sm:$0xff]
    %v118 = vld [vmem:[%s1 + $0x240] sm:$0xff]
    %v119 = vld [vmem:[%s1 + $0x248] sm:$0xff]
    %v120 = vld [vmem:[%s1 + $0x250] sm:$0xff]
    %v121 = vld [vmem:[%s1 + $0x258] sm:$0xff]
    %v122 = vld [vmem:[%s1 + $0x260] sm:$0xff]
    %v123 = vld [vmem:[%s1 + $0x268] sm:$0xff]
    %v124 = vld [vmem:[%s1 + $0x270] sm:$0xff]
    %v125 = vld [vmem:[%s1 + $0x278] sm:$0xff]
    %v126 = vld [vmem:[%s1 + $0x280] sm:$0xff]
    %v127 = vld [vmem:[%s1 + $0x288] sm:$0xff]
    %v128 = vld [vmem:[%s1 + $0x290] sm:$0xff]
    %v129 = vld [vmem:[%s1 + $0x298] sm:$0xff]
    %v130 = vld [vmem:[%s1 + $0x2a0] sm:$0xff]
    %v131 = vld [vmem:[%s1 + $0x2a8] sm:$0xff]
    %v132 = vld [vmem:[%s1 + $0x2b0] sm:$0xff]
    %v133 = vld [vmem:[%s1 + $0x2b8] sm:$0xff]
    %v134 = vld [vmem:[%s1 + $0x2c0] sm:$0xff]
    %v135 = vld [vmem:[%s1 + $0x2c8] sm:$0xff]
    %v136 = vld [vmem:[%s1 + $0x2d0] sm:$0xff]
    %v137 = vld [vmem:[%s1 + $0x2d8] sm:$0xff]
    %v138 = vld [vmem:[%s1 + $0x2e0] sm:$0xff]
    %v139 = vld [vmem:[%s1 + $0x2e8] sm:$0xff]
    %v140 = vld [vmem:[%s1 + $0x2f0] sm:$0xff]
    %v141 = vld [vmem:[%s1 + $0x2f8] sm:$0xff]
    %v142 = vld [vmem:[%s1 + $0x300] sm:$0xff]
    %v143 = vld [vmem:[%s1 + $0x308] sm:$0xff]
    %v144 = vld [vmem:[%s1 + $0x310] sm:$0xff]
    %v145 = vld [vmem:[%s1 + $0x318] sm:$0xff]
    %v146 = vld [vmem:[%s1 + $0x320] sm:$0xff]
    %v147 = vld [vmem:[%s1 + $0x328] sm:$0xff]
    %v148 = vld [vmem:[%s1 + $0x330] sm:$0xff]
    %v149 = vld [vmem:[%s1 + $0x338] sm:$0xff]
    %v150 = vld [vmem:[%s1 + $0x340] sm:$0xff]
    %v151 = vld [vmem:[%s1 + $0x348] sm:$0xff]
    %v152 = vld [vmem:[%s1 + $0x350] sm:$0xff]
    %v153 = vld [vmem:[%s1 + $0x358] sm:$0xff]
    %v154 = vld [vmem:[%s1 + $0x360] sm:$0xff]
    %v155 = vld [vmem:[%s1 + $0x368] sm:$0xff]
    %v156 = vld [vmem:[%s1 + $0x370] sm:$0xff]
    %v157 = vld [vmem:[%s1 + $0x378] sm:$0xff]
    %v158 = vld [vmem:[%s1 + $0x380] sm:$0xff]
    %v159 = vld [vmem:[%s1 + $0x388] sm:$0xff]
    %v160 = vld [vmem:[%s1 + $0x390] sm:$0xff]
    %v161 = vld [vmem:[%s1 + $0x398] sm:$0xff]
    %v162 = vld [vmem:[%s1 + $0x3a0] sm:$0xff]
    %v163 = vld [vmem:[%s1 + $0x3a8] sm:$0xff]
    %v164 = vld [vmem:[%s1 + $0x3b0] sm:$0xff]
    %v165 = vld [vmem:[%s1 + $0x3b8] sm:$0xff]
    %v166 = vld [vmem:[%s1 + $0x3c0] sm:$0xff]
    %v167 = vld [vmem:[%s1 + $0x3c8] sm:$0xff]
    %v168 = vld [vmem:[%s1 + $0x3d0] sm:$0xff]
    %v169 = vld [vmem:[%s1 + $0x3d8] sm:$0xff]
    %v170 = vld [vmem:[%s1 + $0x3e0] sm:$0xff]
    %v171 = vld [vmem:[%s1 + $0x3e8] sm:$0xff]
    %v172 = vld [vmem:[%s1 + $0x3f0] sm:$0xff]
    %v173 = vld [vmem:[%s1 + $0x3f8] sm:$0xff]
    %v174 = vld [vmem:[%s2] sm:$0xff]
    %v175 = vld [vmem:[%s3] sm:$0x3]
    %v176 = vld [vmem:[%s4] sm:$0x3]
    %v177 = vld [vmem:[%s5] sm:$0xf]
    %v178 = vld [vmem:[%s5 + $0x4] sm:$0xf]
    %v179 = vld [vmem:[%s5 + $0x8] sm:$0xf]
    %v180 = vld [vmem:[%s5 + $0xc] sm:$0xf]
    %v181 = vld [vmem:[%s5 + $0x10] sm:$0xf]
    %v182 = vld [vmem:[%s5 + $0x14] sm:$0xf]
    %v183 = vld [vmem:[%s5 + $0x18] sm:$0xf]
    %v184 = vld [vmem:[%s5 + $0x1c] sm:$0xf]
    %v185 = vld [vmem:[%s5 + $0x20] sm:$0xf]
    %v186 = vld [vmem:[%s5 + $0x24] sm:$0xf]
    %v187 = vld [vmem:[%s5 + $0x28] sm:$0xf]
    %v188 = vld [vmem:[%s5 + $0x2c] sm:$0xf]
    %v189 = vld [vmem:[%s5 + $0x30] sm:$0xf]
    %v190 = vld [vmem:[%s5 + $0x34] sm:$0xf]
    %v191 = vld [vmem:[%s5 + $0x38] sm:$0xf]
    %v192 = vld [vmem:[%s5 + $0x3c] sm:$0xf]
    %v193 = vld [vmem:[%s5 + $0x40] sm:$0xf]
    %v194 = vld [vmem:[%s5 + $0x44] sm:$0xf]
    %v195 = vld [vmem:[%s5 + $0x48] sm:$0xf]
    %v196 = vld [vmem:[%s5 + $0x4c] sm:$0xf]
    %v197 = vld [vmem:[%s5 + $0x50] sm:$0xf]
    %v198 = vld [vmem:[%s5 + $0x54] sm:$0xf]
    %v199 = vld [vmem:[%s5 + $0x58] sm:$0xf]
    %v200 = vld [vmem:[%s5 + $0x5c] sm:$0xf]
    %v201 = vld [vmem:[%s5 + $0x60] sm:$0xf]
    %v202 = vld [vmem:[%s5 + $0x64] sm:$0xf]
    %v203 = vld [vmem:[%s5 + $0x68] sm:$0xf]
    %v204 = vld [vmem:[%s5 + $0x6c] sm:$0xf]
    %v205 = vld [vmem:[%s5 + $0x70] sm:$0xf]
    %v206 = vld [vmem:[%s5 + $0x74] sm:$0xf]
    %v207 = vld [vmem:[%s5 + $0x78] sm:$0xf]
    %v208 = vld [vmem:[%s5 + $0x7c] sm:$0xf]
    %v209 = vld [vmem:[%s6] sm:$0x1]
    %v210 = vld [vmem:[%s7] sm:$0x1]
    %v211 = vld [vmem:[%s8] sm:$0x1]
    %v212 = vld [vmem:[%s9] sm:$0xf]
    %v213 = vld [vmem:[%s9 + $0x4] sm:$0xf]
    %v214 = vld [vmem:[%s9 + $0x8] sm:$0xf]
    %v215 = vld [vmem:[%s9 + $0xc] sm:$0xf]
    %v216 = vld [vmem:[%s9 + $0x10] sm:$0xf]
    %v217 = vld [vmem:[%s9 + $0x14] sm:$0xf]
    %v218 = vld [vmem:[%s9 + $0x18] sm:$0xf]
    %v219 = vld [vmem:[%s9 + $0x1c] sm:$0xf]
    %v220 = vld [vmem:[%s10] sm:$0x1]
    %v221 = vld [vmem:[#allocation2] sm:$0xf]
    %v222 = vld [vmem:[#allocation3] sm:$0xf]
    %v223 = vld [vmem:[%s0] sm:$0x11]
    %v224 = vld [vmem:[%s0 + $0x8] sm:$0x11]
    %v225 = vld [vmem:[%s0 + $0x10] sm:$0x11]
    %v226 = vld [vmem:[%s0 + $0x18] sm:$0x11]
    %v227 = vld [vmem:[%s0 + $0x20] sm:$0x11]
    %v228 = vld [vmem:[%s0 + $0x28] sm:$0x11]
    %v229 = vld [vmem:[%s0 + $0x30] sm:$0x11]
    %v230 = vld [vmem:[%s0 + $0x38] sm:$0x11]
    %v231 = vunpack.c.l.bf16 %v223
    %v232 = vunpack.c.h.bf16 %v223
    %v233 = vunpack.c.l.bf16 %v224
    %v234 = vunpack.c.h.bf16 %v224
    %v235 = vunpack.c.l.bf16 %v225
    %v236 = vunpack.c.h.bf16 %v225
    %v237 = vunpack.c.l.bf16 %v226
    %v238 = vunpack.c.h.bf16 %v226
    %v239 = vunpack.c.l.bf16 %v227
    %v240 = vunpack.c.h.bf16 %v227
    %v241 = vunpack.c.l.bf16 %v228
    %v242 = vunpack.c.h.bf16 %v228
    %v243 = vunpack.c.l.bf16 %v229
    %v244 = vunpack.c.h.bf16 %v229
    %v245 = vunpack.c.l.bf16 %v230
    %v246 = vunpack.c.h.bf16 %v230
    %v248 = vlaneseq
    %v249 = vshrl.u32 %v248, 7
    %v250 = vsub.s32 0, %v249
    %v251 = vrot.slane %v174, %v250
    %v252 = vlaneseq
    %v253 = vshrl.u32 %v252, 7
    %v254 = vsub.s32 1, %v253
    %v255 = vrot.slane %v174, %v254
    %v256 = vlaneseq
    %v257 = vshrl.u32 %v256, 7
    %v258 = vsub.s32 2, %v257
    %v259 = vrot.slane %v174, %v258
    %v260 = vlaneseq
    %v261 = vshrl.u32 %v260, 7
    %v262 = vsub.s32 3, %v261
    %v263 = vrot.slane %v174, %v262
    %v264 = vlaneseq
    %v265 = vshrl.u32 %v264, 7
    %v266 = vsub.s32 4, %v265
    %v267 = vrot.slane %v174, %v266
    %v268 = vlaneseq
    %v269 = vshrl.u32 %v268, 7
    %v270 = vsub.s32 5, %v269
    %v271 = vrot.slane %v174, %v270
    %v272 = vlaneseq
    %v273 = vshrl.u32 %v272, 7
    %v274 = vsub.s32 6, %v273
    %v275 = vrot.slane %v174, %v274
    %v276 = vlaneseq
    %v277 = vshrl.u32 %v276, 7
    %v278 = vsub.s32 7, %v277
    %v279 = vrot.slane %v174, %v278
    %v288 = vadd.f32 %v231, %v251
    %v289 = vadd.f32 %v232, %v255
    %v290 = vadd.f32 %v233, %v259
    %v291 = vadd.f32 %v234, %v263
    %v292 = vadd.f32 %v235, %v267
    %v293 = vadd.f32 %v236, %v271
    %v294 = vadd.f32 %v237, %v275
    %v295 = vadd.f32 %v238, %v279
    %v296 = vadd.f32 %v239, %v251
    %v297 = vadd.f32 %v240, %v255
    %v298 = vadd.f32 %v241, %v259
    %v299 = vadd.f32 %v242, %v263
    %v300 = vadd.f32 %v243, %v267
    %v301 = vadd.f32 %v244, %v271
    %v302 = vadd.f32 %v245, %v275
    %v303 = vadd.f32 %v246, %v279
    %v306 = vunpack.c.l.s4 1983009808
    %v307 = vunpack.c.0.s8 %v306
    %v308 = vlaneseq
    %v309 = vshrl.u32 %v308, 7
    %v310 = vsub.s32 %v307, %v309
    %v311 = vrot.slane %v221, %v310
    %v312 = vcombine.high %v311, %v311
    %v315 = vpack.c.bf16 %v311, %v311
    %v316 = vpack.c.bf16 %v312, %v312
    %v445 = vunpack.c.l.b16 %v46
    %v446 = vunpack.c.h.b16 %v46
    %v447 = vunpack.c.l.b16 %v47
    %v448 = vunpack.c.h.b16 %v47
    %v449 = vunpack.c.l.b16 %v48
    %v450 = vunpack.c.h.b16 %v48
    %v451 = vunpack.c.l.b16 %v49
    %v452 = vunpack.c.h.b16 %v49
    %v453 = vunpack.c.l.b16 %v50
    %v454 = vunpack.c.h.b16 %v50
    %v455 = vunpack.c.l.b16 %v51
    %v456 = vunpack.c.h.b16 %v51
    %v457 = vunpack.c.l.b16 %v52
    %v458 = vunpack.c.h.b16 %v52
    %v459 = vunpack.c.l.b16 %v53
    %v460 = vunpack.c.h.b16 %v53
    %v461 = vunpack.c.l.b16 %v54
    %v462 = vunpack.c.h.b16 %v54
    %v463 = vunpack.c.l.b16 %v55
    %v464 = vunpack.c.h.b16 %v55
    %v465 = vunpack.c.l.b16 %v56
    %v466 = vunpack.c.h.b16 %v56
    %v467 = vunpack.c.l.b16 %v57
    %v468 = vunpack.c.h.b16 %v57
    %v469 = vunpack.c.l.b16 %v58
    %v470 = vunpack.c.h.b16 %v58
    %v471 = vunpack.c.l.b16 %v59
    %v472 = vunpack.c.h.b16 %v59
    %v473 = vunpack.c.l.b16 %v60
    %v474 = vunpack.c.h.b16 %v60
    %v475 = vunpack.c.l.b16 %v61
    %v476 = vunpack.c.h.b16 %v61
    %v477 = vunpack.c.l.b16 %v62
    %v478 = vunpack.c.h.b16 %v62
    %v479 = vunpack.c.l.b16 %v63
    %v480 = vunpack.c.h.b16 %v63
    %v481 = vunpack.c.l.b16 %v64
    %v482 = vunpack.c.h.b16 %v64
    %v483 = vunpack.c.l.b16 %v65
    %v484 = vunpack.c.h.b16 %v65
    %v485 = vunpack.c.l.b16 %v66
    %v486 = vunpack.c.h.b16 %v66
    %v487 = vunpack.c.l.b16 %v67
    %v488 = vunpack.c.h.b16 %v67
    %v489 = vunpack.c.l.b16 %v68
    %v490 = vunpack.c.h.b16 %v68
    %v491 = vunpack.c.l.b16 %v69
    %v492 = vunpack.c.h.b16 %v69
    %v493 = vunpack.c.l.b16 %v70
    %v494 = vunpack.c.h.b16 %v70
    %v495 = vunpack.c.l.b16 %v71
    %v496 = vunpack.c.h.b16 %v71
    %v497 = vunpack.c.l.b16 %v72
    %v498 = vunpack.c.h.b16 %v72
    %v499 = vunpack.c.l.b16 %v73
    %v500 = vunpack.c.h.b16 %v73
    %v501 = vunpack.c.l.b16 %v74
    %v502 = vunpack.c.h.b16 %v74
    %v503 = vunpack.c.l.b16 %v75
    %v504 = vunpack.c.h.b16 %v75
    %v505 = vunpack.c.l.b16 %v76
    %v506 = vunpack.c.h.b16 %v76
    %v507 = vunpack.c.l.b16 %v77
    %v508 = vunpack.c.h.b16 %v77
    %v509 = vunpack.c.l.b16 %v78
    %v510 = vunpack.c.h.b16 %v78
    %v511 = vunpack.c.l.b16 %v79
    %v512 = vunpack.c.h.b16 %v79
    %v513 = vunpack.c.l.b16 %v80
    %v514 = vunpack.c.h.b16 %v80
    %v515 = vunpack.c.l.b16 %v81
    %v516 = vunpack.c.h.b16 %v81
    %v517 = vunpack.c.l.b16 %v82
    %v518 = vunpack.c.h.b16 %v82
    %v519 = vunpack.c.l.b16 %v83
    %v520 = vunpack.c.h.b16 %v83
    %v521 = vunpack.c.l.b16 %v84
    %v522 = vunpack.c.h.b16 %v84
    %v523 = vunpack.c.l.b16 %v85
    %v524 = vunpack.c.h.b16 %v85
    %v525 = vunpack.c.l.b16 %v86
    %v526 = vunpack.c.h.b16 %v86
    %v527 = vunpack.c.l.b16 %v87
    %v528 = vunpack.c.h.b16 %v87
    %v529 = vunpack.c.l.b16 %v88
    %v530 = vunpack.c.h.b16 %v88
    %v531 = vunpack.c.l.b16 %v89
    %v532 = vunpack.c.h.b16 %v89
    %v533 = vunpack.c.l.b16 %v90
    %v534 = vunpack.c.h.b16 %v90
    %v535 = vunpack.c.l.b16 %v91
    %v536 = vunpack.c.h.b16 %v91
    %v537 = vunpack.c.l.b16 %v92
    %v538 = vunpack.c.h.b16 %v92
    %v539 = vunpack.c.l.b16 %v93
    %v540 = vunpack.c.h.b16 %v93
    %v541 = vunpack.c.l.b16 %v94
    %v542 = vunpack.c.h.b16 %v94
    %v543 = vunpack.c.l.b16 %v95
    %v544 = vunpack.c.h.b16 %v95
    %v545 = vunpack.c.l.b16 %v96
    %v546 = vunpack.c.h.b16 %v96
    %v547 = vunpack.c.l.b16 %v97
    %v548 = vunpack.c.h.b16 %v97
    %v549 = vunpack.c.l.b16 %v98
    %v550 = vunpack.c.h.b16 %v98
    %v551 = vunpack.c.l.b16 %v99
    %v552 = vunpack.c.h.b16 %v99
    %v553 = vunpack.c.l.b16 %v100
    %v554 = vunpack.c.h.b16 %v100
    %v555 = vunpack.c.l.b16 %v101
    %v556 = vunpack.c.h.b16 %v101
    %v557 = vunpack.c.l.b16 %v102
    %v558 = vunpack.c.h.b16 %v102
    %v559 = vunpack.c.l.b16 %v103
    %v560 = vunpack.c.h.b16 %v103
    %v561 = vunpack.c.l.b16 %v104
    %v562 = vunpack.c.h.b16 %v104
    %v563 = vunpack.c.l.b16 %v105
    %v564 = vunpack.c.h.b16 %v105
    %v565 = vunpack.c.l.b16 %v106
    %v566 = vunpack.c.h.b16 %v106
    %v567 = vunpack.c.l.b16 %v107
    %v568 = vunpack.c.h.b16 %v107
    %v569 = vunpack.c.l.b16 %v108
    %v570 = vunpack.c.h.b16 %v108
    %v571 = vunpack.c.l.b16 %v109
    %v572 = vunpack.c.h.b16 %v109
    %v573 = vunpack.c.l.b16 %v110
    %v574 = vunpack.c.h.b16 %v110
    %v575 = vunpack.c.l.b16 %v111
    %v576 = vunpack.c.h.b16 %v111
    %v577 = vunpack.c.l.b16 %v112
    %v578 = vunpack.c.h.b16 %v112
    %v579 = vunpack.c.l.b16 %v113
    %v580 = vunpack.c.h.b16 %v113
    %v581 = vunpack.c.l.b16 %v114
    %v582 = vunpack.c.h.b16 %v114
    %v583 = vunpack.c.l.b16 %v115
    %v584 = vunpack.c.h.b16 %v115
    %v585 = vunpack.c.l.b16 %v116
    %v586 = vunpack.c.h.b16 %v116
    %v587 = vunpack.c.l.b16 %v117
    %v588 = vunpack.c.h.b16 %v117
    %v589 = vunpack.c.l.b16 %v118
    %v590 = vunpack.c.h.b16 %v118
    %v591 = vunpack.c.l.b16 %v119
    %v592 = vunpack.c.h.b16 %v119
    %v593 = vunpack.c.l.b16 %v120
    %v594 = vunpack.c.h.b16 %v120
    %v595 = vunpack.c.l.b16 %v121
    %v596 = vunpack.c.h.b16 %v121
    %v597 = vunpack.c.l.b16 %v122
    %v598 = vunpack.c.h.b16 %v122
    %v599 = vunpack.c.l.b16 %v123
    %v600 = vunpack.c.h.b16 %v123
    %v601 = vunpack.c.l.b16 %v124
    %v602 = vunpack.c.h.b16 %v124
    %v603 = vunpack.c.l.b16 %v125
    %v604 = vunpack.c.h.b16 %v125
    %v605 = vunpack.c.l.b16 %v126
    %v606 = vunpack.c.h.b16 %v126
    %v607 = vunpack.c.l.b16 %v127
    %v608 = vunpack.c.h.b16 %v127
    %v609 = vunpack.c.l.b16 %v128
    %v610 = vunpack.c.h.b16 %v128
    %v611 = vunpack.c.l.b16 %v129
    %v612 = vunpack.c.h.b16 %v129
    %v613 = vunpack.c.l.b16 %v130
    %v614 = vunpack.c.h.b16 %v130
    %v615 = vunpack.c.l.b16 %v131
    %v616 = vunpack.c.h.b16 %v131
    %v617 = vunpack.c.l.b16 %v132
    %v618 = vunpack.c.h.b16 %v132
    %v619 = vunpack.c.l.b16 %v133
    %v620 = vunpack.c.h.b16 %v133
    %v621 = vunpack.c.l.b16 %v134
    %v622 = vunpack.c.h.b16 %v134
    %v623 = vunpack.c.l.b16 %v135
    %v624 = vunpack.c.h.b16 %v135
    %v625 = vunpack.c.l.b16 %v136
    %v626 = vunpack.c.h.b16 %v136
    %v627 = vunpack.c.l.b16 %v137
    %v628 = vunpack.c.h.b16 %v137
    %v629 = vunpack.c.l.b16 %v138
    %v630 = vunpack.c.h.b16 %v138
    %v631 = vunpack.c.l.b16 %v139
    %v632 = vunpack.c.h.b16 %v139
    %v633 = vunpack.c.l.b16 %v140
    %v634 = vunpack.c.h.b16 %v140
    %v635 = vunpack.c.l.b16 %v141
    %v636 = vunpack.c.h.b16 %v141
    %v637 = vunpack.c.l.b16 %v142
    %v638 = vunpack.c.h.b16 %v142
    %v639 = vunpack.c.l.b16 %v143
    %v640 = vunpack.c.h.b16 %v143
    %v641 = vunpack.c.l.b16 %v144
    %v642 = vunpack.c.h.b16 %v144
    %v643 = vunpack.c.l.b16 %v145
    %v644 = vunpack.c.h.b16 %v145
    %v645 = vunpack.c.l.b16 %v146
    %v646 = vunpack.c.h.b16 %v146
    %v647 = vunpack.c.l.b16 %v147
    %v648 = vunpack.c.h.b16 %v147
    %v649 = vunpack.c.l.b16 %v148
    %v650 = vunpack.c.h.b16 %v148
    %v651 = vunpack.c.l.b16 %v149
    %v652 = vunpack.c.h.b16 %v149
    %v653 = vunpack.c.l.b16 %v150
    %v654 = vunpack.c.h.b16 %v150
    %v655 = vunpack.c.l.b16 %v151
    %v656 = vunpack.c.h.b16 %v151
    %v657 = vunpack.c.l.b16 %v152
    %v658 = vunpack.c.h.b16 %v152
    %v659 = vunpack.c.l.b16 %v153
    %v660 = vunpack.c.h.b16 %v153
    %v661 = vunpack.c.l.b16 %v154
    %v662 = vunpack.c.h.b16 %v154
    %v663 = vunpack.c.l.b16 %v155
    %v664 = vunpack.c.h.b16 %v155
    %v665 = vunpack.c.l.b16 %v156
    %v666 = vunpack.c.h.b16 %v156
    %v667 = vunpack.c.l.b16 %v157
    %v668 = vunpack.c.h.b16 %v157
    %v669 = vunpack.c.l.b16 %v158
    %v670 = vunpack.c.h.b16 %v158
    %v671 = vunpack.c.l.b16 %v159
    %v672 = vunpack.c.h.b16 %v159
    %v673 = vunpack.c.l.b16 %v160
    %v674 = vunpack.c.h.b16 %v160
    %v675 = vunpack.c.l.b16 %v161
    %v676 = vunpack.c.h.b16 %v161
    %v677 = vunpack.c.l.b16 %v162
    %v678 = vunpack.c.h.b16 %v162
    %v679 = vunpack.c.l.b16 %v163
    %v680 = vunpack.c.h.b16 %v163
    %v681 = vunpack.c.l.b16 %v164
    %v682 = vunpack.c.h.b16 %v164
    %v683 = vunpack.c.l.b16 %v165
    %v684 = vunpack.c.h.b16 %v165
    %v685 = vunpack.c.l.b16 %v166
    %v686 = vunpack.c.h.b16 %v166
    %v687 = vunpack.c.l.b16 %v167
    %v688 = vunpack.c.h.b16 %v167
    %v689 = vunpack.c.l.b16 %v168
    %v690 = vunpack.c.h.b16 %v168
    %v691 = vunpack.c.l.b16 %v169
    %v692 = vunpack.c.h.b16 %v169
    %v693 = vunpack.c.l.b16 %v170
    %v694 = vunpack.c.h.b16 %v170
    %v695 = vunpack.c.l.b16 %v171
    %v696 = vunpack.c.h.b16 %v171
    %v697 = vunpack.c.l.b16 %v172
    %v698 = vunpack.c.h.b16 %v172
    %v699 = vunpack.c.l.b16 %v173
    %v700 = vunpack.c.h.b16 %v173
    %v701 = vpack.c.b16 %v453, %v445
    %v702 = vpack.c.b16 %v454, %v446
    %v703 = vpack.c.b16 %v455, %v447
    %v704 = vpack.c.b16 %v456, %v448
    %v705 = vpack.c.b16 %v457, %v449
    %v706 = vpack.c.b16 %v458, %v450
    %v707 = vpack.c.b16 %v459, %v451
    %v708 = vpack.c.b16 %v460, %v452
    %v709 = vpack.c.b16 %v469, %v461
    %v710 = vpack.c.b16 %v470, %v462
    %v711 = vpack.c.b16 %v471, %v463
    %v712 = vpack.c.b16 %v472, %v464
    %v713 = vpack.c.b16 %v473, %v465
    %v714 = vpack.c.b16 %v474, %v466
    %v715 = vpack.c.b16 %v475, %v467
    %v716 = vpack.c.b16 %v476, %v468
    %v717 = vpack.c.b16 %v485, %v477
    %v718 = vpack.c.b16 %v486, %v478
    %v719 = vpack.c.b16 %v487, %v479
    %v720 = vpack.c.b16 %v488, %v480
    %v721 = vpack.c.b16 %v489, %v481
    %v722 = vpack.c.b16 %v490, %v482
    %v723 = vpack.c.b16 %v491, %v483
    %v724 = vpack.c.b16 %v492, %v484
    %v725 = vpack.c.b16 %v501, %v493
    %v726 = vpack.c.b16 %v502, %v494
    %v727 = vpack.c.b16 %v503, %v495
    %v728 = vpack.c.b16 %v504, %v496
    %v729 = vpack.c.b16 %v505, %v497
    %v730 = vpack.c.b16 %v506, %v498
    %v731 = vpack.c.b16 %v507, %v499
    %v732 = vpack.c.b16 %v508, %v500
    %v733 = vpack.c.b16 %v517, %v509
    %v734 = vpack.c.b16 %v518, %v510
    %v735 = vpack.c.b16 %v519, %v511
    %v736 = vpack.c.b16 %v520, %v512
    %v737 = vpack.c.b16 %v521, %v513
    %v738 = vpack.c.b16 %v522, %v514
    %v739 = vpack.c.b16 %v523, %v515
    %v740 = vpack.c.b16 %v524, %v516
    %v741 = vpack.c.b16 %v533, %v525
    %v742 = vpack.c.b16 %v534, %v526
    %v743 = vpack.c.b16 %v535, %v527
    %v744 = vpack.c.b16 %v536, %v528
    %v745 = vpack.c.b16 %v537, %v529
    %v746 = vpack.c.b16 %v538, %v530
    %v747 = vpack.c.b16 %v539, %v531
    %v748 = vpack.c.b16 %v540, %v532
    %v749 = vpack.c.b16 %v549, %v541
    %v750 = vpack.c.b16 %v550, %v542
    %v751 = vpack.c.b16 %v551, %v543
    %v752 = vpack.c.b16 %v552, %v544
    %v753 = vpack.c.b16 %v553, %v545
    %v754 = vpack.c.b16 %v554, %v546
    %v755 = vpack.c.b16 %v555, %v547
    %v756 = vpack.c.b16 %v556, %v548
    %v757 = vpack.c.b16 %v565, %v557
    %v758 = vpack.c.b16 %v566, %v558
    %v759 = vpack.c.b16 %v567, %v559
    %v760 = vpack.c.b16 %v568, %v560
    %v761 = vpack.c.b16 %v569, %v561
    %v762 = vpack.c.b16 %v570, %v562
    %v763 = vpack.c.b16 %v571, %v563
    %v764 = vpack.c.b16 %v572, %v564
    %v765 = vpack.c.b16 %v581, %v573
    %v766 = vpack.c.b16 %v582, %v574
    %v767 = vpack.c.b16 %v583, %v575
    %v768 = vpack.c.b16 %v584, %v576
    %v769 = vpack.c.b16 %v585, %v577
    %v770 = vpack.c.b16 %v586, %v578
    %v771 = vpack.c.b16 %v587, %v579
    %v772 = vpack.c.b16 %v588, %v580
    %v773 = vpack.c.b16 %v597, %v589
    %v774 = vpack.c.b16 %v598, %v590
    %v775 = vpack.c.b16 %v599, %v591
    %v776 = vpack.c.b16 %v600, %v592
    %v777 = vpack.c.b16 %v601, %v593
    %v778 = vpack.c.b16 %v602, %v594
    %v779 = vpack.c.b16 %v603, %v595
    %v780 = vpack.c.b16 %v604, %v596
    %v781 = vpack.c.b16 %v613, %v605
    %v782 = vpack.c.b16 %v614, %v606
    %v783 = vpack.c.b16 %v615, %v607
    %v784 = vpack.c.b16 %v616, %v608
    %v785 = vpack.c.b16 %v617, %v609
    %v786 = vpack.c.b16 %v618, %v610
    %v787 = vpack.c.b16 %v619, %v611
    %v788 = vpack.c.b16 %v620, %v612
    %v789 = vpack.c.b16 %v629, %v621
    %v790 = vpack.c.b16 %v630, %v622
    %v791 = vpack.c.b16 %v631, %v623
    %v792 = vpack.c.b16 %v632, %v624
    %v793 = vpack.c.b16 %v633, %v625
    %v794 = vpack.c.b16 %v634, %v626
    %v795 = vpack.c.b16 %v635, %v627
    %v796 = vpack.c.b16 %v636, %v628
    %v797 = vpack.c.b16 %v645, %v637
    %v798 = vpack.c.b16 %v646, %v638
    %v799 = vpack.c.b16 %v647, %v639
    %v800 = vpack.c.b16 %v648, %v640
    %v801 = vpack.c.b16 %v649, %v641
    %v802 = vpack.c.b16 %v650, %v642
    %v803 = vpack.c.b16 %v651, %v643
    %v804 = vpack.c.b16 %v652, %v644
    %v805 = vpack.c.b16 %v661, %v653
    %v806 = vpack.c.b16 %v662, %v654
    %v807 = vpack.c.b16 %v663, %v655
    %v808 = vpack.c.b16 %v664, %v656
    %v809 = vpack.c.b16 %v665, %v657
    %v810 = vpack.c.b16 %v666, %v658
    %v811 = vpack.c.b16 %v667, %v659
    %v812 = vpack.c.b16 %v668, %v660
    %v813 = vpack.c.b16 %v677, %v669
    %v814 = vpack.c.b16 %v678, %v670
    %v815 = vpack.c.b16 %v679, %v671
    %v816 = vpack.c.b16 %v680, %v672
    %v817 = vpack.c.b16 %v681, %v673
    %v818 = vpack.c.b16 %v682, %v674
    %v819 = vpack.c.b16 %v683, %v675
    %v820 = vpack.c.b16 %v684, %v676
    %v821 = vpack.c.b16 %v693, %v685
    %v822 = vpack.c.b16 %v694, %v686
    %v823 = vpack.c.b16 %v695, %v687
    %v824 = vpack.c.b16 %v696, %v688
    %v825 = vpack.c.b16 %v697, %v689
    %v826 = vpack.c.b16 %v698, %v690
    %v827 = vpack.c.b16 %v699, %v691
    %v828 = vpack.c.b16 %v700, %v692
    %957 = vmatprep.subr.bf16.mxu0 %v758
    %958 = vmatpush1.bf16.msra.mxu0 %v757
    %959 = vmatprep.subr.bf16.mxu0 %v750
    %960 = vmatpush1.bf16.msra.mxu0 %v749
    %961 = vmatprep.subr.bf16.mxu0 %v742
    %962 = vmatpush1.bf16.msra.mxu0 %v741
    %963 = vmatprep.subr.bf16.mxu0 %v734
    %964 = vmatpush1.bf16.msra.mxu0 %v733
    %965 = vmatprep.subr.bf16.mxu0 %v726
    %966 = vmatpush1.bf16.msra.mxu0 %v725
    %967 = vmatprep.subr.bf16.mxu0 %v718
    %968 = vmatpush1.bf16.msra.mxu0 %v717
    %969 = vmatprep.subr.bf16.mxu0 %v710
    %970 = vmatpush1.bf16.msra.mxu0 %v709
    %971 = vmatprep.subr.bf16.mxu0 %v702
    %972 = vmatpush1.bf16.msra.mxu0 %v701
    %973 = vmatprep.subr.bf16.mxu0 %v822
    %974 = vmatpush2.bf16.msra.mxu0 %v821
    %975 = vmatprep.subr.bf16.mxu0 %v814
    %976 = vmatpush2.bf16.msra.mxu0 %v813
    %977 = vmatprep.subr.bf16.mxu0 %v806
    %978 = vmatpush2.bf16.msra.mxu0 %v805
    %979 = vmatprep.subr.bf16.mxu0 %v798
    %980 = vmatpush2.bf16.msra.mxu0 %v797
    %981 = vmatprep.subr.bf16.mxu0 %v790
    %982 = vmatpush2.bf16.msra.mxu0 %v789
    %983 = vmatprep.subr.bf16.mxu0 %v782
    %984 = vmatpush2.bf16.msra.mxu0 %v781
    %985 = vmatprep.subr.bf16.mxu0 %v774
    %986 = vmatpush2.bf16.msra.mxu0 %v773
    %987 = vmatprep.subr.bf16.mxu0 %v766
    %988 = vmatpush2.bf16.msra.mxu0 %v765
    %989 = vmatprep.mubr.bf16.mxu0 %v316
    %990 = vmatmul.mubr.bf16.gmra.mxu0 %v315
    %v991 = vpop.f32.mrf.mxu0
    %v992 = vadd.f32 0.0, %v991
    %v993 = vpop.f32.mrf.mxu0
    %v994 = vadd.f32 0.0, %v993
    %v995 = vpop.f32.mrf.mxu0
    %v996 = vpop.f32.mrf.mxu0
    %997 = vdwg.mxu0
    %998 = vmatprep.subr.bf16.mxu0 %v760
    %999 = vmatpush1.bf16.msra.mxu0 %v759
    %1000 = vmatprep.subr.bf16.mxu0 %v752
    %1001 = vmatpush1.bf16.msra.mxu0 %v751
    %1002 = vmatprep.subr.bf16.mxu0 %v744
    %1003 = vmatpush1.bf16.msra.mxu0 %v743
    %1004 = vmatprep.subr.bf16.mxu0 %v736
    %1005 = vmatpush1.bf16.msra.mxu0 %v735
    %1006 = vmatprep.subr.bf16.mxu0 %v728
    %1007 = vmatpush1.bf16.msra.mxu0 %v727
    %1008 = vmatprep.subr.bf16.mxu0 %v720
    %1009 = vmatpush1.bf16.msra.mxu0 %v719
    %1010 = vmatprep.subr.bf16.mxu0 %v712
    %1011 = vmatpush1.bf16.msra.mxu0 %v711
    %1012 = vmatprep.subr.bf16.mxu0 %v704
    %1013 = vmatpush1.bf16.msra.mxu0 %v703
    %1014 = vmatprep.subr.bf16.mxu0 %v824
    %1015 = vmatpush2.bf16.msra.mxu0 %v823
    %1016 = vmatprep.subr.bf16.mxu0 %v816
    %1017 = vmatpush2.bf16.msra.mxu0 %v815
    %1018 = vmatprep.subr.bf16.mxu0 %v808
    %1019 = vmatpush2.bf16.msra.mxu0 %v807
    %1020 = vmatprep.subr.bf16.mxu0 %v800
    %1021 = vmatpush2.bf16.msra.mxu0 %v799
    %1022 = vmatprep.subr.bf16.mxu0 %v792
    %1023 = vmatpush2.bf16.msra.mxu0 %v791
    %1024 = vmatprep.subr.bf16.mxu0 %v784
    %1025 = vmatpush2.bf16.msra.mxu0 %v783
    %1026 = vmatprep.subr.bf16.mxu0 %v776
    %1027 = vmatpush2.bf16.msra.mxu0 %v775
    %1028 = vmatprep.subr.bf16.mxu0 %v768
    %1029 = vmatpush2.bf16.msra.mxu0 %v767
    %1030 = vmatprep.mubr.bf16.mxu0 %v316
    %1031 = vmatmul.mubr.bf16.gmra.mxu0 %v315
    %v1032 = vpop.f32.mrf.mxu0
    %v1033 = vadd.f32 0.0, %v1032
    %v1034 = vpop.f32.mrf.mxu0
    %v1035 = vadd.f32 0.0, %v1034
    %v1036 = vpop.f32.mrf.mxu0
    %v1037 = vpop.f32.mrf.mxu0
    %1038 = vdwg.mxu0
    %1039 = vmatprep.subr.bf16.mxu0 %v762
    %1040 = vmatpush1.bf16.msra.mxu0 %v761
    %1041 = vmatprep.subr.bf16.mxu0 %v754
    %1042 = vmatpush1.bf16.msra.mxu0 %v753
    %1043 = vmatprep.subr.bf16.mxu0 %v746
    %1044 = vmatpush1.bf16.msra.mxu0 %v745
    %1045 = vmatprep.subr.bf16.mxu0 %v738
    %1046 = vmatpush1.bf16.msra.mxu0 %v737
    %1047 = vmatprep.subr.bf16.mxu0 %v730
    %1048 = vmatpush1.bf16.msra.mxu0 %v729
    %1049 = vmatprep.subr.bf16.mxu0 %v722
    %1050 = vmatpush1.bf16.msra.mxu0 %v721
    %1051 = vmatprep.subr.bf16.mxu0 %v714
    %1052 = vmatpush1.bf16.msra.mxu0 %v713
    %1053 = vmatprep.subr.bf16.mxu0 %v706
    %1054 = vmatpush1.bf16.msra.mxu0 %v705
    %1055 = vmatprep.subr.bf16.mxu0 %v826
    %1056 = vmatpush2.bf16.msra.mxu0 %v825
    %1057 = vmatprep.subr.bf16.mxu0 %v818
    %1058 = vmatpush2.bf16.msra.mxu0 %v817
    %1059 = vmatprep.subr.bf16.mxu0 %v810
    %1060 = vmatpush2.bf16.msra.mxu0 %v809
    %1061 = vmatprep.subr.bf16.mxu0 %v802
    %1062 = vmatpush2.bf16.msra.mxu0 %v801
    %1063 = vmatprep.subr.bf16.mxu0 %v794
    %1064 = vmatpush2.bf16.msra.mxu0 %v793
    %1065 = vmatprep.subr.bf16.mxu0 %v786
    %1066 = vmatpush2.bf16.msra.mxu0 %v785
    %1067 = vmatprep.subr.bf16.mxu0 %v778
    %1068 = vmatpush2.bf16.msra.mxu0 %v777
    %1069 = vmatprep.subr.bf16.mxu0 %v770
    %1070 = vmatpush2.bf16.msra.mxu0 %v769
    %1071 = vmatprep.mubr.bf16.mxu0 %v316
    %1072 = vmatmul.mubr.bf16.gmra.mxu0 %v315
    %v1073 = vpop.f32.mrf.mxu0
    %v1074 = vadd.f32 0.0, %v1073
    %v1075 = vpop.f32.mrf.mxu0
    %v1076 = vadd.f32 0.0, %v1075
    %v1077 = vpop.f32.mrf.mxu0
    %v1078 = vpop.f32.mrf.mxu0
    %1079 = vdwg.mxu0
    %1080 = vmatprep.subr.bf16.mxu0 %v764
    %1081 = vmatpush1.bf16.msra.mxu0 %v763
    %1082 = vmatprep.subr.bf16.mxu0 %v756
    %1083 = vmatpush1.bf16.msra.mxu0 %v755
    %1084 = vmatprep.subr.bf16.mxu0 %v748
    %1085 = vmatpush1.bf16.msra.mxu0 %v747
    %1086 = vmatprep.subr.bf16.mxu0 %v740
    %1087 = vmatpush1.bf16.msra.mxu0 %v739
    %1088 = vmatprep.subr.bf16.mxu0 %v732
    %1089 = vmatpush1.bf16.msra.mxu0 %v731
    %1090 = vmatprep.subr.bf16.mxu0 %v724
    %1091 = vmatpush1.bf16.msra.mxu0 %v723
    %1092 = vmatprep.subr.bf16.mxu0 %v716
    %1093 = vmatpush1.bf16.msra.mxu0 %v715
    %1094 = vmatprep.subr.bf16.mxu0 %v708
    %1095 = vmatpush1.bf16.msra.mxu0 %v707
    %1096 = vmatprep.subr.bf16.mxu0 %v828
    %1097 = vmatpush2.bf16.msra.mxu0 %v827
    %1098 = vmatprep.subr.bf16.mxu0 %v820
    %1099 = vmatpush2.bf16.msra.mxu0 %v819
    %1100 = vmatprep.subr.bf16.mxu0 %v812
    %1101 = vmatpush2.bf16.msra.mxu0 %v811
    %1102 = vmatprep.subr.bf16.mxu0 %v804
    %1103 = vmatpush2.bf16.msra.mxu0 %v803
    %1104 = vmatprep.subr.bf16.mxu0 %v796
    %1105 = vmatpush2.bf16.msra.mxu0 %v795
    %1106 = vmatprep.subr.bf16.mxu0 %v788
    %1107 = vmatpush2.bf16.msra.mxu0 %v787
    %1108 = vmatprep.subr.bf16.mxu0 %v780
    %1109 = vmatpush2.bf16.msra.mxu0 %v779
    %1110 = vmatprep.subr.bf16.mxu0 %v772
    %1111 = vmatpush2.bf16.msra.mxu0 %v771
    %1112 = vmatprep.mubr.bf16.mxu0 %v316
    %1113 = vmatmul.mubr.bf16.gmra.mxu0 %v315
    %v1114 = vpop.f32.mrf.mxu0
    %v1115 = vadd.f32 0.0, %v1114
    %v1116 = vpop.f32.mrf.mxu0
    %v1117 = vadd.f32 0.0, %v1116
    %v1118 = vpop.f32.mrf.mxu0
    %v1119 = vpop.f32.mrf.mxu0
    %1120 = vdwg.mxu0
    %v1129 = vrot.slane %v992, 1
    %v1130 = vrot.slane %v994, 1
    %v1131 = vrot.slane %v1033, 1
    %v1132 = vrot.slane %v1035, 1
    %v1133 = vrot.slane %v1074, 1
    %v1134 = vrot.slane %v1076, 1
    %v1135 = vrot.slane %v1115, 1
    %v1136 = vrot.slane %v1117, 1
    %v1153 = vadd.f32 %v288, %v992
    %v1154 = vadd.f32 %v289, %v994
    %v1155 = vadd.f32 %v290, %v1033
    %v1156 = vadd.f32 %v291, %v1035
    %v1157 = vadd.f32 %v292, %v1074
    %v1158 = vadd.f32 %v293, %v1076
    %v1159 = vadd.f32 %v294, %v1115
    %v1160 = vadd.f32 %v295, %v1117
    %v1161 = vadd.f32 %v296, %v1129
    %v1162 = vadd.f32 %v297, %v1130
    %v1163 = vadd.f32 %v298, %v1131
    %v1164 = vadd.f32 %v299, %v1132
    %v1165 = vadd.f32 %v300, %v1133
    %v1166 = vadd.f32 %v301, %v1134
    %v1167 = vadd.f32 %v302, %v1135
    %v1168 = vadd.f32 %v303, %v1136
    %v1169 = vxor.u32 %v1153, 2147483648
    %v1170 = vxor.u32 %v1154, 2147483648
    %v1171 = vxor.u32 %v1161, 2147483648
    %v1172 = vxor.u32 %v1162, 2147483648
    %v1173 = vmul.f32 %v1169, 1.442695
    %v1174 = vpow.pop %v1173
    %v1175 = vmul.f32 %v1170, 1.442695
    %v1176 = vpow.pop %v1175
    %v1177 = vmul.f32 %v1171, 1.442695
    %v1178 = vpow.pop %v1177
    %v1179 = vmul.f32 %v1172, 1.442695
    %v1180 = vpow.pop %v1179
    %v1181 = vadd.f32 %v1174, 1.0
    %v1182 = vadd.f32 %v1176, 1.0
    %v1183 = vadd.f32 %v1178, 1.0
    %v1184 = vadd.f32 %v1180, 1.0
    %v1185 = vrcp.pop %v1181
    %v1186 = vmul.f32 1.0, %v1185
    %v1187 = vrcp.pop %v1182
    %v1188 = vmul.f32 1.0, %v1187
    %v1189 = vrcp.pop %v1183
    %v1190 = vmul.f32 1.0, %v1189
    %v1191 = vrcp.pop %v1184
    %v1192 = vmul.f32 1.0, %v1191
    %v1193 = vxor.u32 %v1155, 2147483648
    %v1194 = vxor.u32 %v1156, 2147483648
    %v1195 = vxor.u32 %v1163, 2147483648
    %v1196 = vxor.u32 %v1164, 2147483648
    %v1197 = vmul.f32 %v1193, 1.442695
    %v1198 = vpow.pop %v1197
    %v1199 = vmul.f32 %v1194, 1.442695
    %v1200 = vpow.pop %v1199
    %v1201 = vmul.f32 %v1195, 1.442695
    %v1202 = vpow.pop %v1201
    %v1203 = vmul.f32 %v1196, 1.442695
    %v1204 = vpow.pop %v1203
    %v1205 = vadd.f32 %v1198, 1.0
    %v1206 = vadd.f32 %v1200, 1.0
    %v1207 = vadd.f32 %v1202, 1.0
    %v1208 = vadd.f32 %v1204, 1.0
    %v1209 = vrcp.pop %v1205
    %v1210 = vmul.f32 1.0, %v1209
    %v1211 = vrcp.pop %v1206
    %v1212 = vmul.f32 1.0, %v1211
    %v1213 = vrcp.pop %v1207
    %v1214 = vmul.f32 1.0, %v1213
    %v1215 = vrcp.pop %v1208
    %v1216 = vmul.f32 1.0, %v1215
    %v1217 = vtanh.pop %v1157
    %v1218 = vtanh.pop %v1158
    %v1219 = vtanh.pop %v1165
    %v1220 = vtanh.pop %v1166
    %v1221 = vxor.u32 %v1159, 2147483648
    %v1222 = vxor.u32 %v1160, 2147483648
    %v1223 = vxor.u32 %v1167, 2147483648
    %v1224 = vxor.u32 %v1168, 2147483648
    %v1225 = vmul.f32 %v1221, 1.442695
    %v1226 = vpow.pop %v1225
    %v1227 = vmul.f32 %v1222, 1.442695
    %v1228 = vpow.pop %v1227
    %v1229 = vmul.f32 %v1223, 1.442695
    %v1230 = vpow.pop %v1229
    %v1231 = vmul.f32 %v1224, 1.442695
    %v1232 = vpow.pop %v1231
    %v1233 = vadd.f32 %v1226, 1.0
    %v1234 = vadd.f32 %v1228, 1.0
    %v1235 = vadd.f32 %v1230, 1.0
    %v1236 = vadd.f32 %v1232, 1.0
    %v1237 = vrcp.pop %v1233
    %v1238 = vmul.f32 1.0, %v1237
    %v1239 = vrcp.pop %v1234
    %v1240 = vmul.f32 1.0, %v1239
    %v1241 = vrcp.pop %v1235
    %v1242 = vmul.f32 1.0, %v1241
    %v1243 = vrcp.pop %v1236
    %v1244 = vmul.f32 1.0, %v1243
    %v1247 = vunpack.c.l.s4 1983009808
    %v1248 = vunpack.c.0.s8 %v1247
    %v1249 = vlaneseq
    %v1250 = vshrl.u32 %v1249, 7
    %v1251 = vsub.s32 %v1248, %v1250
    %v1252 = vrot.slane %v222, %v1251
    %v1253 = vcombine.high %v1252, %v1252
    %v1254 = vrot.slane %v1252, 1
    %v1255 = vrot.slane %v1253, 1
    %v1260 = vmul.f32 %v1210, %v1252
    %v1261 = vmul.f32 %v1212, %v1253
    %v1262 = vmul.f32 %v1214, %v1254
    %v1263 = vmul.f32 %v1216, %v1255
    %v1264 = vmul.f32 %v1186, %v1217
    %v1265 = vmul.f32 %v1188, %v1218
    %v1266 = vmul.f32 %v1190, %v1219
    %v1267 = vmul.f32 %v1192, %v1220
    %v1268 = vadd.f32 %v1260, %v1264
    %v1269 = vadd.f32 %v1261, %v1265
    %v1270 = vadd.f32 %v1262, %v1266
    %v1271 = vadd.f32 %v1263, %v1267
    %v1272 = vtanh.pop %v1268
    %v1273 = vtanh.pop %v1269
    %v1274 = vtanh.pop %v1270
    %v1275 = vtanh.pop %v1271
    %v1276 = vmul.f32 %v1238, %v1272
    %v1277 = vmul.f32 %v1240, %v1273
    %v1278 = vmul.f32 %v1242, %v1274
    %v1279 = vmul.f32 %v1244, %v1275
    %v1284 = vrot.slane %v1278, 7
    %vm1285 = vcmask 1041409
    %v1286 = vsel %vm1285, %v1284, %v1276
    %v1287 = vrot.slane %v1279, 7
    %v1288 = vsel %vm1285, %v1287, %v1277
    %vm1291 = vcmask 1041408
    %v1292 = vsel %vm1291, %v1286, 0.0
    %v1293 = vsel %vm1291, %v1288, 0.0
    %v1294 = vadd.f32 %v1292, %v1293
    %1295 = vadd.xlane.f32.xlu0 %v1294
    %v1296 = vpop.xlane.xlu0 %1295
    %v1297 = vrcp.pop 256.0
    %v1298 = vmul.f32 %v1296, %v1297
    %v1300 = vrot.slane %v1298, 1
    %v1303 = vsub.f32 %v1276, %v1298
    %v1304 = vsub.f32 %v1277, %v1298
    %v1305 = vsub.f32 %v1278, %v1300
    %v1306 = vsub.f32 %v1279, %v1300
    %v1307 = vmul.f32 %v1303, %v1303
    %v1308 = vmul.f32 %v1304, %v1304
    %v1309 = vmul.f32 %v1305, %v1305
    %v1310 = vmul.f32 %v1306, %v1306
    %v1315 = vrot.slane %v1309, 7
    %v1316 = vsel %vm1285, %v1315, %v1307
    %v1317 = vrot.slane %v1310, 7
    %v1318 = vsel %vm1285, %v1317, %v1308
    %v1321 = vsel %vm1291, %v1316, 0.0
    %v1322 = vsel %vm1291, %v1318, 0.0
    %v1323 = vadd.f32 %v1321, %v1322
    %1324 = vadd.xlane.f32.xlu0 %v1323
    %v1325 = vpop.xlane.xlu0 %1324
    %v1326 = vmul.f32 %v1325, %v1297
    %v1327 = vadd.f32 %v1326, 1e-05
    %v1328 = vrsqrt.pop %v1327
    %v1330 = vrot.slane %v1328, 1
    %v1333 = vmul.f32 %v1303, %v1328
    %v1334 = vmul.f32 %v1304, %v1328
    %v1335 = vmul.f32 %v1305, %v1330
    %v1336 = vmul.f32 %v1306, %v1330
    %v1338 = vlaneseq
    %v1339 = vshrl.u32 %v1338, 7
    %v1340 = vsub.s32 0, %v1339
    %v1341 = vrot.slane %v175, %v1340
    %v1342 = vlaneseq
    %v1343 = vshrl.u32 %v1342, 7
    %v1344 = vsub.s32 1, %v1343
    %v1345 = vrot.slane %v175, %v1344
    %v1348 = vmul.f32 %v1333, %v1341
    %v1349 = vmul.f32 %v1334, %v1345
    %v1350 = vmul.f32 %v1335, %v1341
    %v1351 = vmul.f32 %v1336, %v1345
    %v1353 = vlaneseq
    %v1354 = vshrl.u32 %v1353, 7
    %v1355 = vsub.s32 0, %v1354
    %v1356 = vrot.slane %v176, %v1355
    %v1357 = vlaneseq
    %v1358 = vshrl.u32 %v1357, 7
    %v1359 = vsub.s32 1, %v1358
    %v1360 = vrot.slane %v176, %v1359
    %v1363 = vadd.f32 %v1348, %v1356
    %v1364 = vadd.f32 %v1349, %v1360
    %v1365 = vadd.f32 %v1350, %v1356
    %v1366 = vadd.f32 %v1351, %v1360
    %v1367 = vpack.c.bf16 %v1363, %v1363
    %v1368 = vpack.c.bf16 %v1364, %v1364
    %v1369 = vpack.c.bf16 %v1365, %v1365
    %v1370 = vpack.c.bf16 %v1366, %v1366
    %v1372 = vlaneseq
    %v1373 = vshrl.u32 %v1372, 7
    %v1374 = vsub.s32 0, %v1373
    %v1375 = vrot.slane %v209, %v1374
    %v1381 = vunpack.c.l.b16 %v1367
    %v1382 = vunpack.c.l.b16 %v1368
    %v1383 = vunpack.c.l.b16 %v1369
    %v1384 = vunpack.c.l.b16 %v1370
    %v1385 = vrot.slane %v1383, 7
    %v1386 = vsel %vm1285, %v1385, %v1381
    %v1387 = vrot.slane %v1384, 7
    %v1388 = vsel %vm1285, %v1387, %v1382
    %v1389 = vpack.c.b16 %v1386, %v1386
    %v1390 = vpack.c.b16 %v1388, %v1388
    %v1425 = vunpack.c.l.b16 %v177
    %v1426 = vunpack.c.l.b16 %v178
    %v1427 = vunpack.c.l.b16 %v179
    %v1428 = vunpack.c.l.b16 %v180
    %v1429 = vunpack.c.l.b16 %v181
    %v1430 = vunpack.c.l.b16 %v182
    %v1431 = vunpack.c.l.b16 %v183
    %v1432 = vunpack.c.l.b16 %v184
    %v1433 = vunpack.c.l.b16 %v185
    %v1434 = vunpack.c.l.b16 %v186
    %v1435 = vunpack.c.l.b16 %v187
    %v1436 = vunpack.c.l.b16 %v188
    %v1437 = vunpack.c.l.b16 %v189
    %v1438 = vunpack.c.l.b16 %v190
    %v1439 = vunpack.c.l.b16 %v191
    %v1440 = vunpack.c.l.b16 %v192
    %v1441 = vunpack.c.l.b16 %v193
    %v1442 = vunpack.c.l.b16 %v194
    %v1443 = vunpack.c.l.b16 %v195
    %v1444 = vunpack.c.l.b16 %v196
    %v1445 = vunpack.c.l.b16 %v197
    %v1446 = vunpack.c.l.b16 %v198
    %v1447 = vunpack.c.l.b16 %v199
    %v1448 = vunpack.c.l.b16 %v200
    %v1449 = vunpack.c.l.b16 %v201
    %v1450 = vunpack.c.l.b16 %v202
    %v1451 = vunpack.c.l.b16 %v203
    %v1452 = vunpack.c.l.b16 %v204
    %v1453 = vunpack.c.l.b16 %v205
    %v1454 = vunpack.c.l.b16 %v206
    %v1455 = vunpack.c.l.b16 %v207
    %v1456 = vunpack.c.l.b16 %v208
    %v1457 = vpack.c.b16 %v1426, %v1425
    %v1458 = vpack.c.b16 %v1428, %v1427
    %v1459 = vpack.c.b16 %v1430, %v1429
    %v1460 = vpack.c.b16 %v1432, %v1431
    %v1461 = vpack.c.b16 %v1434, %v1433
    %v1462 = vpack.c.b16 %v1436, %v1435
    %v1463 = vpack.c.b16 %v1438, %v1437
    %v1464 = vpack.c.b16 %v1440, %v1439
    %v1465 = vpack.c.b16 %v1442, %v1441
    %v1466 = vpack.c.b16 %v1444, %v1443
    %v1467 = vpack.c.b16 %v1446, %v1445
    %v1468 = vpack.c.b16 %v1448, %v1447
    %v1469 = vpack.c.b16 %v1450, %v1449
    %v1470 = vpack.c.b16 %v1452, %v1451
    %v1471 = vpack.c.b16 %v1454, %v1453
    %v1472 = vpack.c.b16 %v1456, %v1455
    %1489 = vmatprep.subr.bf16.mxu0 0
    %1490 = vmatpush1.bf16.msra.mxu0 %v1464
    %1491 = vmatprep.subr.bf16.mxu0 0
    %1492 = vmatpush1.bf16.msra.mxu0 %v1463
    %1493 = vmatprep.subr.bf16.mxu0 0
    %1494 = vmatpush1.bf16.msra.mxu0 %v1462
    %1495 = vmatprep.subr.bf16.mxu0 0
    %1496 = vmatpush1.bf16.msra.mxu0 %v1461
    %1497 = vmatprep.subr.bf16.mxu0 0
    %1498 = vmatpush1.bf16.msra.mxu0 %v1460
    %1499 = vmatprep.subr.bf16.mxu0 0
    %1500 = vmatpush1.bf16.msra.mxu0 %v1459
    %1501 = vmatprep.subr.bf16.mxu0 0
    %1502 = vmatpush1.bf16.msra.mxu0 %v1458
    %1503 = vmatprep.subr.bf16.mxu0 0
    %1504 = vmatpush1.bf16.msra.mxu0 %v1457
    %1505 = vmatprep.subr.bf16.mxu0 0
    %1506 = vmatpush2.bf16.msra.mxu0 %v1472
    %1507 = vmatprep.subr.bf16.mxu0 0
    %1508 = vmatpush2.bf16.msra.mxu0 %v1471
    %1509 = vmatprep.subr.bf16.mxu0 0
    %1510 = vmatpush2.bf16.msra.mxu0 %v1470
    %1511 = vmatprep.subr.bf16.mxu0 0
    %1512 = vmatpush2.bf16.msra.mxu0 %v1469
    %1513 = vmatprep.subr.bf16.mxu0 0
    %1514 = vmatpush2.bf16.msra.mxu0 %v1468
    %1515 = vmatprep.subr.bf16.mxu0 0
    %1516 = vmatpush2.bf16.msra.mxu0 %v1467
    %1517 = vmatprep.subr.bf16.mxu0 0
    %1518 = vmatpush2.bf16.msra.mxu0 %v1466
    %1519 = vmatprep.subr.bf16.mxu0 0
    %1520 = vmatpush2.bf16.msra.mxu0 %v1465
    %1521 = vmatprep.mubr.bf16.mxu0 %v1390
    %1522 = vmatmul.mubr.bf16.gmra.mxu0 %v1389
    %v1523 = vpop.f32.mrf.mxu0
    %v1524 = vadd.f32 %v1375, %v1523
    %v1525 = vpop.f32.mrf.mxu0
    %v1526 = vpop.f32.mrf.mxu0
    %v1527 = vpop.f32.mrf.mxu0
    %1528 = vdwg.mxu0
    %vm1529 = vcmask 517120
    %v1530 = vsel %vm1529, %v1524, 0.0
    %1531 = vadd.xlane.f32.xlu0 %v1530
    %v1532 = vpop.xlane.xlu0 %1531
    %v1533 = vrcp.pop 64.0
    %v1534 = vmul.f32 %v1532, %v1533
    %v1535 = vsub.f32 %v1524, %v1534
    %v1536 = vmul.f32 %v1535, %v1535
    %v1537 = vsel %vm1529, %v1536, 0.0
    %1538 = vadd.xlane.f32.xlu0 %v1537
    %v1539 = vpop.xlane.xlu0 %1538
    %v1540 = vmul.f32 %v1539, %v1533
    %v1541 = vadd.f32 %v1540, 1e-05
    %v1542 = vrsqrt.pop %v1541
    %v1543 = vmul.f32 %v1535, %v1542
    %v1545 = vlaneseq
    %v1546 = vshrl.u32 %v1545, 7
    %v1547 = vsub.s32 0, %v1546
    %v1548 = vrot.slane %v210, %v1547
    %v1550 = vmul.f32 %v1543, %v1548
    %v1552 = vlaneseq
    %v1553 = vshrl.u32 %v1552, 7
    %v1554 = vsub.s32 0, %v1553
    %v1555 = vrot.slane %v211, %v1554
    %v1557 = vadd.f32 %v1550, %v1555
    %v1558 = vmax.f32 %v1557, 0.0
    %v1559 = vpack.c.bf16 %v1558, %v1558
    %v1561 = vlaneseq
    %v1562 = vshrl.u32 %v1561, 7
    %v1563 = vsub.s32 0, %v1562
    %v1564 = vrot.slane %v220, %v1563
    %v1574 = vunpack.c.l.b16 %v212
    %v1575 = vunpack.c.l.b16 %v213
    %v1576 = vunpack.c.l.b16 %v214
    %v1577 = vunpack.c.l.b16 %v215
    %v1578 = vunpack.c.l.b16 %v216
    %v1579 = vunpack.c.l.b16 %v217
    %v1580 = vunpack.c.l.b16 %v218
    %v1581 = vunpack.c.l.b16 %v219
    %v1582 = vpack.c.b16 %v1575, %v1574
    %v1583 = vpack.c.b16 %v1577, %v1576
    %v1584 = vpack.c.b16 %v1579, %v1578
    %v1585 = vpack.c.b16 %v1581, %v1580
    %vm1590 = vcmask 523264
    %v1592 = vsel %vm1590, %v1559, 0
    %1594 = vmatprep.subr.bf16.mxu0 0
    %1595 = vmatpush1.bf16.msra.mxu0 0
    %1596 = vmatprep.subr.bf16.mxu0 0
    %1597 = vmatpush1.bf16.msra.mxu0 0
    %1598 = vmatprep.subr.bf16.mxu0 0
    %1599 = vmatpush1.bf16.msra.mxu0 0
    %1600 = vmatprep.subr.bf16.mxu0 0
    %1601 = vmatpush1.bf16.msra.mxu0 0
    %1602 = vmatprep.subr.bf16.mxu0 0
    %1603 = vmatpush1.bf16.msra.mxu0 %v1585
    %1604 = vmatprep.subr.bf16.mxu0 0
    %1605 = vmatpush1.bf16.msra.mxu0 %v1584
    %1606 = vmatprep.subr.bf16.mxu0 0
    %1607 = vmatpush1.bf16.msra.mxu0 %v1583
    %1608 = vmatprep.subr.bf16.mxu0 0
    %1609 = vmatpush1.bf16.msra.mxu0 %v1582
    %1610 = vmatprep.subr.bf16.mxu0 0
    %1611 = vmatpush2.bf16.msra.mxu0 0
    %1612 = vmatprep.subr.bf16.mxu0 0
    %1613 = vmatpush2.bf16.msra.mxu0 0
    %1614 = vmatprep.subr.bf16.mxu0 0
    %1615 = vmatpush2.bf16.msra.mxu0 0
    %1616 = vmatprep.subr.bf16.mxu0 0
    %1617 = vmatpush2.bf16.msra.mxu0 0
    %1618 = vmatprep.subr.bf16.mxu0 0
    %1619 = vmatpush2.bf16.msra.mxu0 0
    %1620 = vmatprep.subr.bf16.mxu0 0
    %1621 = vmatpush2.bf16.msra.mxu0 0
    %1622 = vmatprep.subr.bf16.mxu0 0
    %1623 = vmatpush2.bf16.msra.mxu0 0
    %1624 = vmatprep.subr.bf16.mxu0 0
    %1625 = vmatpush2.bf16.msra.mxu0 0
    %1626 = vmatprep.mubr.bf16.mxu0 0
    %1627 = vmatmul.mubr.bf16.gmra.mxu0 %v1592
    %v1628 = vpop.f32.mrf.mxu0
    %v1629 = vadd.f32 %v1564, %v1628
    %v1630 = vpop.f32.mrf.mxu0
    %v1631 = vpop.f32.mrf.mxu0
    %v1632 = vpop.f32.mrf.mxu0
    %1633 = vdwg.mxu0
    %v1636 = vunpack.c.l.s4 1966171168
    %v1637 = vunpack.c.0.s8 %v1636
    %v1638 = vlaneseq
    %v1639 = vshrl.u32 %v1638, 7
    %v1640 = vsub.s32 %v1637, %v1639
    %v1641 = vrot.slane %v1629, %v1640
    %v1642 = vcombine.high %v1641, %v1641
    %v1644 = vunpack.c.l.s4 1966171168
    %v1645 = vunpack.c.0.s8 %v1644
    %v1646 = vlaneseq
    %v1647 = vshrl.u32 %v1646, 7
    %v1648 = vsub.s32 %v1645, %v1647
    %v1649 = vrot.slane %v1641, %v1648
    %v1651 = vunpack.c.l.s4 1966171168
    %v1652 = vunpack.c.0.s8 %v1651
    %v1653 = vlaneseq
    %v1654 = vshrl.u32 %v1653, 7
    %v1655 = vsub.s32 %v1652, %v1654
    %v1656 = vrot.slane %v1642, %v1655
    %1659 = vst [vmem:[#allocation4] sm:$0x1] %v1649
    %1660 = vst [vmem:[#allocation4 + $0x8] sm:$0x1] %v1656
    %v1661 = vld [vmem:[%s0] sm:$0x11]
    %v1662 = vld [vmem:[%s0 + $0x8] sm:$0x11]
    %v1663 = vld [vmem:[%s0 + $0x10] sm:$0x11]
    %v1664 = vld [vmem:[%s0 + $0x18] sm:$0x11]
    %v1665 = vld [vmem:[%s0 + $0x20] sm:$0x11]
    %v1666 = vld [vmem:[%s0 + $0x28] sm:$0x11]
    %v1667 = vld [vmem:[%s0 + $0x30] sm:$0x11]
    %v1668 = vld [vmem:[%s0 + $0x38] sm:$0x11]
    %v1669 = vunpack.c.l.bf16 %v1661
    %v1670 = vunpack.c.h.bf16 %v1661
    %v1671 = vunpack.c.l.bf16 %v1662
    %v1672 = vunpack.c.h.bf16 %v1662
    %v1673 = vunpack.c.l.bf16 %v1663
    %v1674 = vunpack.c.h.bf16 %v1663
    %v1675 = vunpack.c.l.bf16 %v1664
    %v1676 = vunpack.c.h.bf16 %v1664
    %v1677 = vunpack.c.l.bf16 %v1665
    %v1678 = vunpack.c.h.bf16 %v1665
    %v1679 = vunpack.c.l.bf16 %v1666
    %v1680 = vunpack.c.h.bf16 %v1666
    %v1681 = vunpack.c.l.bf16 %v1667
    %v1682 = vunpack.c.h.bf16 %v1667
    %v1683 = vunpack.c.l.bf16 %v1668
    %v1684 = vunpack.c.h.bf16 %v1668
    %v1685 = vadd.f32 %v1669, %v251
    %v1686 = vadd.f32 %v1670, %v255
    %v1687 = vadd.f32 %v1671, %v259
    %v1688 = vadd.f32 %v1672, %v263
    %v1689 = vadd.f32 %v1673, %v267
    %v1690 = vadd.f32 %v1674, %v271
    %v1691 = vadd.f32 %v1675, %v275
    %v1692 = vadd.f32 %v1676, %v279
    %v1693 = vadd.f32 %v1677, %v251
    %v1694 = vadd.f32 %v1678, %v255
    %v1695 = vadd.f32 %v1679, %v259
    %v1696 = vadd.f32 %v1680, %v263
    %v1697 = vadd.f32 %v1681, %v267
    %v1698 = vadd.f32 %v1682, %v271
    %v1699 = vadd.f32 %v1683, %v275
    %v1700 = vadd.f32 %v1684, %v279
    %v1701 = vpack.c.bf16 %v1276, %v1276
    %v1702 = vpack.c.bf16 %v1277, %v1277
    %v1703 = vpack.c.bf16 %v1278, %v1278
    %v1704 = vpack.c.bf16 %v1279, %v1279
    %v1709 = vunpack.c.l.b16 %v1701
    %v1710 = vunpack.c.l.b16 %v1702
    %v1711 = vunpack.c.l.b16 %v1703
    %v1712 = vunpack.c.l.b16 %v1704
    %v1713 = vrot.slane %v1711, 7
    %v1714 = vsel %vm1285, %v1713, %v1709
    %v1715 = vrot.slane %v1712, 7
    %v1716 = vsel %vm1285, %v1715, %v1710
    %v1717 = vpack.c.b16 %v1714, %v1714
    %v1718 = vpack.c.b16 %v1716, %v1716
    %1721 = vmatprep.subr.bf16.mxu0 %v758
    %1722 = vmatpush1.bf16.msra.mxu0 %v757
    %1723 = vmatprep.subr.bf16.mxu0 %v750
    %1724 = vmatpush1.bf16.msra.mxu0 %v749
    %1725 = vmatprep.subr.bf16.mxu0 %v742
    %1726 = vmatpush1.bf16.msra.mxu0 %v741
    %1727 = vmatprep.subr.bf16.mxu0 %v734
    %1728 = vmatpush1.bf16.msra.mxu0 %v733
    %1729 = vmatprep.subr.bf16.mxu0 %v726
    %1730 = vmatpush1.bf16.msra.mxu0 %v725
    %1731 = vmatprep.subr.bf16.mxu0 %v718
    %1732 = vmatpush1.bf16.msra.mxu0 %v717
    %1733 = vmatprep.subr.bf16.mxu0 %v710
    %1734 = vmatpush1.bf16.msra.mxu0 %v709
    %1735 = vmatprep.subr.bf16.mxu0 %v702
    %1736 = vmatpush1.bf16.msra.mxu0 %v701
    %1737 = vmatprep.subr.bf16.mxu0 %v822
    %1738 = vmatpush2.bf16.msra.mxu0 %v821
    %1739 = vmatprep.subr.bf16.mxu0 %v814
    %1740 = vmatpush2.bf16.msra.mxu0 %v813
    %1741 = vmatprep.subr.bf16.mxu0 %v806
    %1742 = vmatpush2.bf16.msra.mxu0 %v805
    %1743 = vmatprep.subr.bf16.mxu0 %v798
    %1744 = vmatpush2.bf16.msra.mxu0 %v797
    %1745 = vmatprep.subr.bf16.mxu0 %v790
    %1746 = vmatpush2.bf16.msra.mxu0 %v789
    %1747 = vmatprep.subr.bf16.mxu0 %v782
    %1748 = vmatpush2.bf16.msra.mxu0 %v781
    %1749 = vmatprep.subr.bf16.mxu0 %v774
    %1750 = vmatpush2.bf16.msra.mxu0 %v773
    %1751 = vmatprep.subr.bf16.mxu0 %v766
    %1752 = vmatpush2.bf16.msra.mxu0 %v765
    %1753 = vmatprep.mubr.bf16.mxu0 %v1718
    %1754 = vmatmul.mubr.bf16.gmra.mxu0 %v1717
    %v1755 = vpop.f32.mrf.mxu0
    %v1756 = vadd.f32 0.0, %v1755
    %v1757 = vpop.f32.mrf.mxu0
    %v1758 = vadd.f32 0.0, %v1757
    %v1759 = vpop.f32.mrf.mxu0
    %v1760 = vpop.f32.mrf.mxu0
    %1761 = vdwg.mxu0
    %1762 = vmatprep.subr.bf16.mxu0 %v760
    %1763 = vmatpush1.bf16.msra.mxu0 %v759
    %1764 = vmatprep.subr.bf16.mxu0 %v752
    %1765 = vmatpush1.bf16.msra.mxu0 %v751
    %1766 = vmatprep.subr.bf16.mxu0 %v744
    %1767 = vmatpush1.bf16.msra.mxu0 %v743
    %1768 = vmatprep.subr.bf16.mxu0 %v736
    %1769 = vmatpush1.bf16.msra.mxu0 %v735
    %1770 = vmatprep.subr.bf16.mxu0 %v728
    %1771 = vmatpush1.bf16.msra.mxu0 %v727
    %1772 = vmatprep.subr.bf16.mxu0 %v720
    %1773 = vmatpush1.bf16.msra.mxu0 %v719
    %1774 = vmatprep.subr.bf16.mxu0 %v712
    %1775 = vmatpush1.bf16.msra.mxu0 %v711
    %1776 = vmatprep.subr.bf16.mxu0 %v704
    %1777 = vmatpush1.bf16.msra.mxu0 %v703
    %1778 = vmatprep.subr.bf16.mxu0 %v824
    %1779 = vmatpush2.bf16.msra.mxu0 %v823
    %1780 = vmatprep.subr.bf16.mxu0 %v816
    %1781 = vmatpush2.bf16.msra.mxu0 %v815
    %1782 = vmatprep.subr.bf16.mxu0 %v808
    %1783 = vmatpush2.bf16.msra.mxu0 %v807
    %1784 = vmatprep.subr.bf16.mxu0 %v800
    %1785 = vmatpush2.bf16.msra.mxu0 %v799
    %1786 = vmatprep.subr.bf16.mxu0 %v792
    %1787 = vmatpush2.bf16.msra.mxu0 %v791
    %1788 = vmatprep.subr.bf16.mxu0 %v784
    %1789 = vmatpush2.bf16.msra.mxu0 %v783
    %1790 = vmatprep.subr.bf16.mxu0 %v776
    %1791 = vmatpush2.bf16.msra.mxu0 %v775
    %1792 = vmatprep.subr.bf16.mxu0 %v768
    %1793 = vmatpush2.bf16.msra.mxu0 %v767
    %1794 = vmatprep.mubr.bf16.mxu0 %v1718
    %1795 = vmatmul.mubr.bf16.gmra.mxu0 %v1717
    %v1796 = vpop.f32.mrf.mxu0
    %v1797 = vadd.f32 0.0, %v1796
    %v1798 = vpop.f32.mrf.mxu0
    %v1799 = vadd.f32 0.0, %v1798
    %v1800 = vpop.f32.mrf.mxu0
    %v1801 = vpop.f32.mrf.mxu0
    %1802 = vdwg.mxu0
    %1803 = vmatprep.subr.bf16.mxu0 %v762
    %1804 = vmatpush1.bf16.msra.mxu0 %v761
    %1805 = vmatprep.subr.bf16.mxu0 %v754
    %1806 = vmatpush1.bf16.msra.mxu0 %v753
    %1807 = vmatprep.subr.bf16.mxu0 %v746
    %1808 = vmatpush1.bf16.msra.mxu0 %v745
    %1809 = vmatprep.subr.bf16.mxu0 %v738
    %1810 = vmatpush1.bf16.msra.mxu0 %v737
    %1811 = vmatprep.subr.bf16.mxu0 %v730
    %1812 = vmatpush1.bf16.msra.mxu0 %v729
    %1813 = vmatprep.subr.bf16.mxu0 %v722
    %1814 = vmatpush1.bf16.msra.mxu0 %v721
    %1815 = vmatprep.subr.bf16.mxu0 %v714
    %1816 = vmatpush1.bf16.msra.mxu0 %v713
    %1817 = vmatprep.subr.bf16.mxu0 %v706
    %1818 = vmatpush1.bf16.msra.mxu0 %v705
    %1819 = vmatprep.subr.bf16.mxu0 %v826
    %1820 = vmatpush2.bf16.msra.mxu0 %v825
    %1821 = vmatprep.subr.bf16.mxu0 %v818
    %1822 = vmatpush2.bf16.msra.mxu0 %v817
    %1823 = vmatprep.subr.bf16.mxu0 %v810
    %1824 = vmatpush2.bf16.msra.mxu0 %v809
    %1825 = vmatprep.subr.bf16.mxu0 %v802
    %1826 = vmatpush2.bf16.msra.mxu0 %v801
    %1827 = vmatprep.subr.bf16.mxu0 %v794
    %1828 = vmatpush2.bf16.msra.mxu0 %v793
    %1829 = vmatprep.subr.bf16.mxu0 %v786
    %1830 = vmatpush2.bf16.msra.mxu0 %v785
    %1831 = vmatprep.subr.bf16.mxu0 %v778
    %1832 = vmatpush2.bf16.msra.mxu0 %v777
    %1833 = vmatprep.subr.bf16.mxu0 %v770
    %1834 = vmatpush2.bf16.msra.mxu0 %v769
    %1835 = vmatprep.mubr.bf16.mxu0 %v1718
    %1836 = vmatmul.mubr.bf16.gmra.mxu0 %v1717
    %v1837 = vpop.f32.mrf.mxu0
    %v1838 = vadd.f32 0.0, %v1837
    %v1839 = vpop.f32.mrf.mxu0
    %v1840 = vadd.f32 0.0, %v1839
    %v1841 = vpop.f32.mrf.mxu0
    %v1842 = vpop.f32.mrf.mxu0
    %1843 = vdwg.mxu0
    %1844 = vmatprep.subr.bf16.mxu0 %v764
    %1845 = vmatpush1.bf16.msra.mxu0 %v763
    %1846 = vmatprep.subr.bf16.mxu0 %v756
    %1847 = vmatpush1.bf16.msra.mxu0 %v755
    %1848 = vmatprep.subr.bf16.mxu0 %v748
    %1849 = vmatpush1.bf16.msra.mxu0 %v747
    %1850 = vmatprep.subr.bf16.mxu0 %v740
    %1851 = vmatpush1.bf16.msra.mxu0 %v739
    %1852 = vmatprep.subr.bf16.mxu0 %v732
    %1853 = vmatpush1.bf16.msra.mxu0 %v731
    %1854 = vmatprep.subr.bf16.mxu0 %v724
    %1855 = vmatpush1.bf16.msra.mxu0 %v723
    %1856 = vmatprep.subr.bf16.mxu0 %v716
    %1857 = vmatpush1.bf16.msra.mxu0 %v715
    %1858 = vmatprep.subr.bf16.mxu0 %v708
    %1859 = vmatpush1.bf16.msra.mxu0 %v707
    %1860 = vmatprep.subr.bf16.mxu0 %v828
    %1861 = vmatpush2.bf16.msra.mxu0 %v827
    %1862 = vmatprep.subr.bf16.mxu0 %v820
    %1863 = vmatpush2.bf16.msra.mxu0 %v819
    %1864 = vmatprep.subr.bf16.mxu0 %v812
    %1865 = vmatpush2.bf16.msra.mxu0 %v811
    %1866 = vmatprep.subr.bf16.mxu0 %v804
    %1867 = vmatpush2.bf16.msra.mxu0 %v803
    %1868 = vmatprep.subr.bf16.mxu0 %v796
    %1869 = vmatpush2.bf16.msra.mxu0 %v795
    %1870 = vmatprep.subr.bf16.mxu0 %v788
    %1871 = vmatpush2.bf16.msra.mxu0 %v787
    %1872 = vmatprep.subr.bf16.mxu0 %v780
    %1873 = vmatpush2.bf16.msra.mxu0 %v779
    %1874 = vmatprep.subr.bf16.mxu0 %v772
    %1875 = vmatpush2.bf16.msra.mxu0 %v771
    %1876 = vmatprep.mubr.bf16.mxu0 %v1718
    %1877 = vmatmul.mubr.bf16.gmra.mxu0 %v1717
    %v1878 = vpop.f32.mrf.mxu0
    %v1879 = vadd.f32 0.0, %v1878
    %v1880 = vpop.f32.mrf.mxu0
    %v1881 = vadd.f32 0.0, %v1880
    %v1882 = vpop.f32.mrf.mxu0
    %v1883 = vpop.f32.mrf.mxu0
    %1884 = vdwg.mxu0
    %v1893 = vrot.slane %v1756, 7
    %v1894 = vrot.slane %v1758, 7
    %v1895 = vrot.slane %v1797, 7
    %v1896 = vrot.slane %v1799, 7
    %v1897 = vrot.slane %v1838, 7
    %v1898 = vrot.slane %v1840, 7
    %v1899 = vrot.slane %v1879, 7
    %v1900 = vrot.slane %v1881, 7
    %v1917 = vadd.f32 %v1685, %v1893
    %v1918 = vadd.f32 %v1686, %v1894
    %v1919 = vadd.f32 %v1687, %v1895
    %v1920 = vadd.f32 %v1688, %v1896
    %v1921 = vadd.f32 %v1689, %v1897
    %v1922 = vadd.f32 %v1690, %v1898
    %v1923 = vadd.f32 %v1691, %v1899
    %v1924 = vadd.f32 %v1692, %v1900
    %v1925 = vadd.f32 %v1693, %v1756
    %v1926 = vadd.f32 %v1694, %v1758
    %v1927 = vadd.f32 %v1695, %v1797
    %v1928 = vadd.f32 %v1696, %v1799
    %v1929 = vadd.f32 %v1697, %v1838
    %v1930 = vadd.f32 %v1698, %v1840
    %v1931 = vadd.f32 %v1699, %v1879
    %v1932 = vadd.f32 %v1700, %v1881
    %v1933 = vxor.u32 %v1917, 2147483648
    %v1934 = vxor.u32 %v1918, 2147483648
    %v1935 = vxor.u32 %v1925, 2147483648
    %v1936 = vxor.u32 %v1926, 2147483648
    %v1937 = vmul.f32 %v1933, 1.442695
    %v1938 = vpow.pop %v1937
    %v1939 = vmul.f32 %v1934, 1.442695
    %v1940 = vpow.pop %v1939
    %v1941 = vmul.f32 %v1935, 1.442695
    %v1942 = vpow.pop %v1941
    %v1943 = vmul.f32 %v1936, 1.442695
    %v1944 = vpow.pop %v1943
    %v1945 = vadd.f32 %v1938, 1.0
    %v1946 = vadd.f32 %v1940, 1.0
    %v1947 = vadd.f32 %v1942, 1.0
    %v1948 = vadd.f32 %v1944, 1.0
    %v1949 = vrcp.pop %v1945
    %v1950 = vmul.f32 1.0, %v1949
    %v1951 = vrcp.pop %v1946
    %v1952 = vmul.f32 1.0, %v1951
    %v1953 = vrcp.pop %v1947
    %v1954 = vmul.f32 1.0, %v1953
    %v1955 = vrcp.pop %v1948
    %v1956 = vmul.f32 1.0, %v1955
    %v1957 = vxor.u32 %v1919, 2147483648
    %v1958 = vxor.u32 %v1920, 2147483648
    %v1959 = vxor.u32 %v1927, 2147483648
    %v1960 = vxor.u32 %v1928, 2147483648
    %v1961 = vmul.f32 %v1957, 1.442695
    %v1962 = vpow.pop %v1961
    %v1963 = vmul.f32 %v1958, 1.442695
    %v1964 = vpow.pop %v1963
    %v1965 = vmul.f32 %v1959, 1.442695
    %v1966 = vpow.pop %v1965
    %v1967 = vmul.f32 %v1960, 1.442695
    %v1968 = vpow.pop %v1967
    %v1969 = vadd.f32 %v1962, 1.0
    %v1970 = vadd.f32 %v1964, 1.0
    %v1971 = vadd.f32 %v1966, 1.0
    %v1972 = vadd.f32 %v1968, 1.0
    %v1973 = vrcp.pop %v1969
    %v1974 = vmul.f32 1.0, %v1973
    %v1975 = vrcp.pop %v1970
    %v1976 = vmul.f32 1.0, %v1975
    %v1977 = vrcp.pop %v1971
    %v1978 = vmul.f32 1.0, %v1977
    %v1979 = vrcp.pop %v1972
    %v1980 = vmul.f32 1.0, %v1979
    %v1981 = vtanh.pop %v1921
    %v1982 = vtanh.pop %v1922
    %v1983 = vtanh.pop %v1929
    %v1984 = vtanh.pop %v1930
    %v1985 = vxor.u32 %v1923, 2147483648
    %v1986 = vxor.u32 %v1924, 2147483648
    %v1987 = vxor.u32 %v1931, 2147483648
    %v1988 = vxor.u32 %v1932, 2147483648
    %v1989 = vmul.f32 %v1985, 1.442695
    %v1990 = vpow.pop %v1989
    %v1991 = vmul.f32 %v1986, 1.442695
    %v1992 = vpow.pop %v1991
    %v1993 = vmul.f32 %v1987, 1.442695
    %v1994 = vpow.pop %v1993
    %v1995 = vmul.f32 %v1988, 1.442695
    %v1996 = vpow.pop %v1995
    %v1997 = vadd.f32 %v1990, 1.0
    %v1998 = vadd.f32 %v1992, 1.0
    %v1999 = vadd.f32 %v1994, 1.0
    %v2000 = vadd.f32 %v1996, 1.0
    %v2001 = vrcp.pop %v1997
    %v2002 = vmul.f32 1.0, %v2001
    %v2003 = vrcp.pop %v1998
    %v2004 = vmul.f32 1.0, %v2003
    %v2005 = vrcp.pop %v1999
    %v2006 = vmul.f32 1.0, %v2005
    %v2007 = vrcp.pop %v2000
    %v2008 = vmul.f32 1.0, %v2007
    %v2013 = vrot.slane %v1268, 7
    %v2014 = vrot.slane %v1269, 7
    %v2015 = vrot.slane %v1270, 7
    %v2016 = vrot.slane %v1271, 7
    %v2021 = vmul.f32 %v1974, %v2013
    %v2022 = vmul.f32 %v1976, %v2014
    %v2023 = vmul.f32 %v1978, %v2015
    %v2024 = vmul.f32 %v1980, %v2016
    %v2025 = vmul.f32 %v1950, %v1981
    %v2026 = vmul.f32 %v1952, %v1982
    %v2027 = vmul.f32 %v1954, %v1983
    %v2028 = vmul.f32 %v1956, %v1984
    %v2029 = vadd.f32 %v2021, %v2025
    %v2030 = vadd.f32 %v2022, %v2026
    %v2031 = vadd.f32 %v2023, %v2027
    %v2032 = vadd.f32 %v2024, %v2028
    %v2033 = vtanh.pop %v2029
    %v2034 = vtanh.pop %v2030
    %v2035 = vtanh.pop %v2031
    %v2036 = vtanh.pop %v2032
    %v2037 = vmul.f32 %v2002, %v2033
    %v2038 = vmul.f32 %v2004, %v2034
    %v2039 = vmul.f32 %v2006, %v2035
    %v2040 = vmul.f32 %v2008, %v2036
    %v2045 = vrot.slane %v2039, 7
    %vm2046 = vcmask 1042434
    %v2047 = vsel %vm2046, %v2045, %v2037
    %v2048 = vrot.slane %v2040, 7
    %v2049 = vsel %vm2046, %v2048, %v2038
    %vm2052 = vcmask 1042433
    %v2053 = vsel %vm2052, %v2047, 0.0
    %v2054 = vsel %vm2052, %v2049, 0.0
    %v2055 = vadd.f32 %v2053, %v2054
    %2056 = vadd.xlane.f32.xlu0 %v2055
    %v2057 = vpop.xlane.xlu0 %2056
    %v2058 = vmul.f32 %v2057, %v1297
    %v2060 = vrot.slane %v2058, 1
    %v2063 = vsub.f32 %v2037, %v2058
    %v2064 = vsub.f32 %v2038, %v2058
    %v2065 = vsub.f32 %v2039, %v2060
    %v2066 = vsub.f32 %v2040, %v2060
    %v2067 = vmul.f32 %v2063, %v2063
    %v2068 = vmul.f32 %v2064, %v2064
    %v2069 = vmul.f32 %v2065, %v2065
    %v2070 = vmul.f32 %v2066, %v2066
    %v2075 = vrot.slane %v2069, 7
    %v2076 = vsel %vm2046, %v2075, %v2067
    %v2077 = vrot.slane %v2070, 7
    %v2078 = vsel %vm2046, %v2077, %v2068
    %v2081 = vsel %vm2052, %v2076, 0.0
    %v2082 = vsel %vm2052, %v2078, 0.0
    %v2083 = vadd.f32 %v2081, %v2082
    %2084 = vadd.xlane.f32.xlu0 %v2083
    %v2085 = vpop.xlane.xlu0 %2084
    %v2086 = vmul.f32 %v2085, %v1297
    %v2087 = vadd.f32 %v2086, 1e-05
    %v2088 = vrsqrt.pop %v2087
    %v2090 = vrot.slane %v2088, 1
    %v2093 = vmul.f32 %v2063, %v2088
    %v2094 = vmul.f32 %v2064, %v2088
    %v2095 = vmul.f32 %v2065, %v2090
    %v2096 = vmul.f32 %v2066, %v2090
    %v2097 = vmul.f32 %v2093, %v1341
    %v2098 = vmul.f32 %v2094, %v1345
    %v2099 = vmul.f32 %v2095, %v1341
    %v2100 = vmul.f32 %v2096, %v1345
    %v2101 = vadd.f32 %v2097, %v1356
    %v2102 = vadd.f32 %v2098, %v1360
    %v2103 = vadd.f32 %v2099, %v1356
    %v2104 = vadd.f32 %v2100, %v1360
    %v2105 = vpack.c.bf16 %v2101, %v2101
    %v2106 = vpack.c.bf16 %v2102, %v2102
    %v2107 = vpack.c.bf16 %v2103, %v2103
    %v2108 = vpack.c.bf16 %v2104, %v2104
    %v2113 = vunpack.c.l.b16 %v2105
    %v2114 = vunpack.c.l.b16 %v2106
    %v2115 = vunpack.c.l.b16 %v2107
    %v2116 = vunpack.c.l.b16 %v2108
    %v2117 = vrot.slane %v2113, 1
    %v2118 = vsel %vm1285, %v2115, %v2117
    %v2119 = vrot.slane %v2114, 1
    %v2120 = vsel %vm1285, %v2116, %v2119
    %v2121 = vpack.c.b16 %v2118, %v2118
    %v2122 = vpack.c.b16 %v2120, %v2120
    %2125 = vmatprep.subr.bf16.mxu0 0
    %2126 = vmatpush1.bf16.msra.mxu0 %v1464
    %2127 = vmatprep.subr.bf16.mxu0 0
    %2128 = vmatpush1.bf16.msra.mxu0 %v1463
    %2129 = vmatprep.subr.bf16.mxu0 0
    %2130 = vmatpush1.bf16.msra.mxu0 %v1462
    %2131 = vmatprep.subr.bf16.mxu0 0
    %2132 = vmatpush1.bf16.msra.mxu0 %v1461
    %2133 = vmatprep.subr.bf16.mxu0 0
    %2134 = vmatpush1.bf16.msra.mxu0 %v1460
    %2135 = vmatprep.subr.bf16.mxu0 0
    %2136 = vmatpush1.bf16.msra.mxu0 %v1459
    %2137 = vmatprep.subr.bf16.mxu0 0
    %2138 = vmatpush1.bf16.msra.mxu0 %v1458
    %2139 = vmatprep.subr.bf16.mxu0 0
    %2140 = vmatpush1.bf16.msra.mxu0 %v1457
    %2141 = vmatprep.subr.bf16.mxu0 0
    %2142 = vmatpush2.bf16.msra.mxu0 %v1472
    %2143 = vmatprep.subr.bf16.mxu0 0
    %2144 = vmatpush2.bf16.msra.mxu0 %v1471
    %2145 = vmatprep.subr.bf16.mxu0 0
    %2146 = vmatpush2.bf16.msra.mxu0 %v1470
    %2147 = vmatprep.subr.bf16.mxu0 0
    %2148 = vmatpush2.bf16.msra.mxu0 %v1469
    %2149 = vmatprep.subr.bf16.mxu0 0
    %2150 = vmatpush2.bf16.msra.mxu0 %v1468
    %2151 = vmatprep.subr.bf16.mxu0 0
    %2152 = vmatpush2.bf16.msra.mxu0 %v1467
    %2153 = vmatprep.subr.bf16.mxu0 0
    %2154 = vmatpush2.bf16.msra.mxu0 %v1466
    %2155 = vmatprep.subr.bf16.mxu0 0
    %2156 = vmatpush2.bf16.msra.mxu0 %v1465
    %2157 = vmatprep.mubr.bf16.mxu0 %v2122
    %2158 = vmatmul.mubr.bf16.gmra.mxu0 %v2121
    %v2159 = vpop.f32.mrf.mxu0
    %v2160 = vadd.f32 %v1375, %v2159
    %v2161 = vpop.f32.mrf.mxu0
    %v2162 = vpop.f32.mrf.mxu0
    %v2163 = vpop.f32.mrf.mxu0
    %2164 = vdwg.mxu0
    %v2165 = vsel %vm1529, %v2160, 0.0
    %2166 = vadd.xlane.f32.xlu0 %v2165
    %v2167 = vpop.xlane.xlu0 %2166
    %v2168 = vmul.f32 %v2167, %v1533
    %v2169 = vsub.f32 %v2160, %v2168
    %v2170 = vmul.f32 %v2169, %v2169
    %v2171 = vsel %vm1529, %v2170, 0.0
    %2172 = vadd.xlane.f32.xlu0 %v2171
    %v2173 = vpop.xlane.xlu0 %2172
    %v2174 = vmul.f32 %v2173, %v1533
    %v2175 = vadd.f32 %v2174, 1e-05
    %v2176 = vrsqrt.pop %v2175
    %v2177 = vmul.f32 %v2169, %v2176
    %v2178 = vmul.f32 %v2177, %v1548
    %v2179 = vadd.f32 %v2178, %v1555
    %v2180 = vmax.f32 %v2179, 0.0
    %v2181 = vpack.c.bf16 %v2180, %v2180
    %v2183 = vsel %vm1590, %v2181, 0
    %2185 = vmatprep.subr.bf16.mxu0 0
    %2186 = vmatpush1.bf16.msra.mxu0 0
    %2187 = vmatprep.subr.bf16.mxu0 0
    %2188 = vmatpush1.bf16.msra.mxu0 0
    %2189 = vmatprep.subr.bf16.mxu0 0
    %2190 = vmatpush1.bf16.msra.mxu0 0
    %2191 = vmatprep.subr.bf16.mxu0 0
    %2192 = vmatpush1.bf16.msra.mxu0 0
    %2193 = vmatprep.subr.bf16.mxu0 0
    %2194 = vmatpush1.bf16.msra.mxu0 %v1585
    %2195 = vmatprep.subr.bf16.mxu0 0
    %2196 = vmatpush1.bf16.msra.mxu0 %v1584
    %2197 = vmatprep.subr.bf16.mxu0 0
    %2198 = vmatpush1.bf16.msra.mxu0 %v1583
    %2199 = vmatprep.subr.bf16.mxu0 0
    %2200 = vmatpush1.bf16.msra.mxu0 %v1582
    %2201 = vmatprep.subr.bf16.mxu0 0
    %2202 = vmatpush2.bf16.msra.mxu0 0
    %2203 = vmatprep.subr.bf16.mxu0 0
    %2204 = vmatpush2.bf16.msra.mxu0 0
    %2205 = vmatprep.subr.bf16.mxu0 0
    %2206 = vmatpush2.bf16.msra.mxu0 0
    %2207 = vmatprep.subr.bf16.mxu0 0
    %2208 = vmatpush2.bf16.msra.mxu0 0
    %2209 = vmatprep.subr.bf16.mxu0 0
    %2210 = vmatpush2.bf16.msra.mxu0 0
    %2211 = vmatprep.subr.bf16.mxu0 0
    %2212 = vmatpush2.bf16.msra.mxu0 0
    %2213 = vmatprep.subr.bf16.mxu0 0
    %2214 = vmatpush2.bf16.msra.mxu0 0
    %2215 = vmatprep.subr.bf16.mxu0 0
    %2216 = vmatpush2.bf16.msra.mxu0 0
    %2217 = vmatprep.mubr.bf16.mxu0 0
    %2218 = vmatmul.mubr.bf16.gmra.mxu0 %v2183
    %v2219 = vpop.f32.mrf.mxu0
    %v2220 = vadd.f32 %v1564, %v2219
    %v2221 = vpop.f32.mrf.mxu0
    %v2222 = vpop.f32.mrf.mxu0
    %v2223 = vpop.f32.mrf.mxu0
    %2224 = vdwg.mxu0
    %v2227 = vunpack.c.l.s4 1966171168
    %v2228 = vunpack.c.0.s8 %v2227
    %v2229 = vlaneseq
    %v2230 = vshrl.u32 %v2229, 7
    %v2231 = vsub.s32 %v2228, %v2230
    %v2232 = vrot.slane %v2220, %v2231
    %v2233 = vcombine.high %v2232, %v2232
    %v2235 = vunpack.c.l.s4 1966171168
    %v2236 = vunpack.c.0.s8 %v2235
    %v2237 = vlaneseq
    %v2238 = vshrl.u32 %v2237, 7
    %v2239 = vsub.s32 %v2236, %v2238
    %v2240 = vrot.slane %v2232, %v2239
    %v2242 = vunpack.c.l.s4 1966171168
    %v2243 = vunpack.c.0.s8 %v2242
    %v2244 = vlaneseq
    %v2245 = vshrl.u32 %v2244, 7
    %v2246 = vsub.s32 %v2243, %v2245
    %v2247 = vrot.slane %v2233, %v2246
    %2250 = vst [vmem:[#allocation4 + $0x1] sm:$0x1] %v2240
    %2251 = vst [vmem:[#allocation4 + $0x9] sm:$0x1] %v2247
    %v2252 = vld [vmem:[%s0] sm:$0x22]
    %v2253 = vld [vmem:[%s0 + $0x8] sm:$0x22]
    %v2254 = vld [vmem:[%s0 + $0x10] sm:$0x22]
    %v2255 = vld [vmem:[%s0 + $0x18] sm:$0x22]
    %v2256 = vld [vmem:[%s0 + $0x20] sm:$0x22]
    %v2257 = vld [vmem:[%s0 + $0x28] sm:$0x22]
    %v2258 = vld [vmem:[%s0 + $0x30] sm:$0x22]
    %v2259 = vld [vmem:[%s0 + $0x38] sm:$0x22]
    %v2260 = vunpack.c.l.bf16 %v2252
    %v2261 = vunpack.c.h.bf16 %v2252
    %v2262 = vunpack.c.l.bf16 %v2253
    %v2263 = vunpack.c.h.bf16 %v2253
    %v2264 = vunpack.c.l.bf16 %v2254
    %v2265 = vunpack.c.h.bf16 %v2254
    %v2266 = vunpack.c.l.bf16 %v2255
    %v2267 = vunpack.c.h.bf16 %v2255
    %v2268 = vunpack.c.l.bf16 %v2256
    %v2269 = vunpack.c.h.bf16 %v2256
    %v2270 = vunpack.c.l.bf16 %v2257
    %v2271 = vunpack.c.h.bf16 %v2257
    %v2272 = vunpack.c.l.bf16 %v2258
    %v2273 = vunpack.c.h.bf16 %v2258
    %v2274 = vunpack.c.l.bf16 %v2259
    %v2275 = vunpack.c.h.bf16 %v2259
    %v2276 = vadd.f32 %v2260, %v251
    %v2277 = vadd.f32 %v2261, %v255
    %v2278 = vadd.f32 %v2262, %v259
    %v2279 = vadd.f32 %v2263, %v263
    %v2280 = vadd.f32 %v2264, %v267
    %v2281 = vadd.f32 %v2265, %v271
    %v2282 = vadd.f32 %v2266, %v275
    %v2283 = vadd.f32 %v2267, %v279
    %v2284 = vadd.f32 %v2268, %v251
    %v2285 = vadd.f32 %v2269, %v255
    %v2286 = vadd.f32 %v2270, %v259
    %v2287 = vadd.f32 %v2271, %v263
    %v2288 = vadd.f32 %v2272, %v267
    %v2289 = vadd.f32 %v2273, %v271
    %v2290 = vadd.f32 %v2274, %v275
    %v2291 = vadd.f32 %v2275, %v279
    %v2292 = vpack.c.bf16 %v2037, %v2037
    %v2293 = vpack.c.bf16 %v2038, %v2038
    %v2294 = vpack.c.bf16 %v2039, %v2039
    %v2295 = vpack.c.bf16 %v2040, %v2040
    %v2300 = vunpack.c.l.b16 %v2292
    %v2301 = vunpack.c.l.b16 %v2293
    %v2302 = vunpack.c.l.b16 %v2294
    %v2303 = vunpack.c.l.b16 %v2295
    %v2304 = vrot.slane %v2300, 1
    %v2305 = vsel %vm1285, %v2302, %v2304
    %v2306 = vrot.slane %v2301, 1
    %v2307 = vsel %vm1285, %v2303, %v2306
    %v2308 = vpack.c.b16 %v2305, %v2305
    %v2309 = vpack.c.b16 %v2307, %v2307
    %2312 = vmatprep.subr.bf16.mxu0 %v758
    %2313 = vmatpush1.bf16.msra.mxu0 %v757
    %2314 = vmatprep.subr.bf16.mxu0 %v750
    %2315 = vmatpush1.bf16.msra.mxu0 %v749
    %2316 = vmatprep.subr.bf16.mxu0 %v742
    %2317 = vmatpush1.bf16.msra.mxu0 %v741
    %2318 = vmatprep.subr.bf16.mxu0 %v734
    %2319 = vmatpush1.bf16.msra.mxu0 %v733
    %2320 = vmatprep.subr.bf16.mxu0 %v726
    %2321 = vmatpush1.bf16.msra.mxu0 %v725
    %2322 = vmatprep.subr.bf16.mxu0 %v718
    %2323 = vmatpush1.bf16.msra.mxu0 %v717
    %2324 = vmatprep.subr.bf16.mxu0 %v710
    %2325 = vmatpush1.bf16.msra.mxu0 %v709
    %2326 = vmatprep.subr.bf16.mxu0 %v702
    %2327 = vmatpush1.bf16.msra.mxu0 %v701
    %2328 = vmatprep.subr.bf16.mxu0 %v822
    %2329 = vmatpush2.bf16.msra.mxu0 %v821
    %2330 = vmatprep.subr.bf16.mxu0 %v814
    %2331 = vmatpush2.bf16.msra.mxu0 %v813
    %2332 = vmatprep.subr.bf16.mxu0 %v806
    %2333 = vmatpush2.bf16.msra.mxu0 %v805
    %2334 = vmatprep.subr.bf16.mxu0 %v798
    %2335 = vmatpush2.bf16.msra.mxu0 %v797
    %2336 = vmatprep.subr.bf16.mxu0 %v790
    %2337 = vmatpush2.bf16.msra.mxu0 %v789
    %2338 = vmatprep.subr.bf16.mxu0 %v782
    %2339 = vmatpush2.bf16.msra.mxu0 %v781
    %2340 = vmatprep.subr.bf16.mxu0 %v774
    %2341 = vmatpush2.bf16.msra.mxu0 %v773
    %2342 = vmatprep.subr.bf16.mxu0 %v766
    %2343 = vmatpush2.bf16.msra.mxu0 %v765
    %2344 = vmatprep.mubr.bf16.mxu0 %v2309
    %2345 = vmatmul.mubr.bf16.gmra.mxu0 %v2308
    %v2346 = vpop.f32.mrf.mxu0
    %v2347 = vadd.f32 0.0, %v2346
    %v2348 = vpop.f32.mrf.mxu0
    %v2349 = vadd.f32 0.0, %v2348
    %v2350 = vpop.f32.mrf.mxu0
    %v2351 = vpop.f32.mrf.mxu0
    %2352 = vdwg.mxu0
    %2353 = vmatprep.subr.bf16.mxu0 %v760
    %2354 = vmatpush1.bf16.msra.mxu0 %v759
    %2355 = vmatprep.subr.bf16.mxu0 %v752
    %2356 = vmatpush1.bf16.msra.mxu0 %v751
    %2357 = vmatprep.subr.bf16.mxu0 %v744
    %2358 = vmatpush1.bf16.msra.mxu0 %v743
    %2359 = vmatprep.subr.bf16.mxu0 %v736
    %2360 = vmatpush1.bf16.msra.mxu0 %v735
    %2361 = vmatprep.subr.bf16.mxu0 %v728
    %2362 = vmatpush1.bf16.msra.mxu0 %v727
    %2363 = vmatprep.subr.bf16.mxu0 %v720
    %2364 = vmatpush1.bf16.msra.mxu0 %v719
    %2365 = vmatprep.subr.bf16.mxu0 %v712
    %2366 = vmatpush1.bf16.msra.mxu0 %v711
    %2367 = vmatprep.subr.bf16.mxu0 %v704
    %2368 = vmatpush1.bf16.msra.mxu0 %v703
    %2369 = vmatprep.subr.bf16.mxu0 %v824
    %2370 = vmatpush2.bf16.msra.mxu0 %v823
    %2371 = vmatprep.subr.bf16.mxu0 %v816
    %2372 = vmatpush2.bf16.msra.mxu0 %v815
    %2373 = vmatprep.subr.bf16.mxu0 %v808
    %2374 = vmatpush2.bf16.msra.mxu0 %v807
    %2375 = vmatprep.subr.bf16.mxu0 %v800
    %2376 = vmatpush2.bf16.msra.mxu0 %v799
    %2377 = vmatprep.subr.bf16.mxu0 %v792
    %2378 = vmatpush2.bf16.msra.mxu0 %v791
    %2379 = vmatprep.subr.bf16.mxu0 %v784
    %2380 = vmatpush2.bf16.msra.mxu0 %v783
    %2381 = vmatprep.subr.bf16.mxu0 %v776
    %2382 = vmatpush2.bf16.msra.mxu0 %v775
    %2383 = vmatprep.subr.bf16.mxu0 %v768
    %2384 = vmatpush2.bf16.msra.mxu0 %v767
    %2385 = vmatprep.mubr.bf16.mxu0 %v2309
    %2386 = vmatmul.mubr.bf16.gmra.mxu0 %v2308
    %v2387 = vpop.f32.mrf.mxu0
    %v2388 = vadd.f32 0.0, %v2387
    %v2389 = vpop.f32.mrf.mxu0
    %v2390 = vadd.f32 0.0, %v2389
    %v2391 = vpop.f32.mrf.mxu0
    %v2392 = vpop.f32.mrf.mxu0
    %2393 = vdwg.mxu0
    %2394 = vmatprep.subr.bf16.mxu0 %v762
    %2395 = vmatpush1.bf16.msra.mxu0 %v761
    %2396 = vmatprep.subr.bf16.mxu0 %v754
    %2397 = vmatpush1.bf16.msra.mxu0 %v753
    %2398 = vmatprep.subr.bf16.mxu0 %v746
    %2399 = vmatpush1.bf16.msra.mxu0 %v745
    %2400 = vmatprep.subr.bf16.mxu0 %v738
    %2401 = vmatpush1.bf16.msra.mxu0 %v737
    %2402 = vmatprep.subr.bf16.mxu0 %v730
    %2403 = vmatpush1.bf16.msra.mxu0 %v729
    %2404 = vmatprep.subr.bf16.mxu0 %v722
    %2405 = vmatpush1.bf16.msra.mxu0 %v721
    %2406 = vmatprep.subr.bf16.mxu0 %v714
    %2407 = vmatpush1.bf16.msra.mxu0 %v713
    %2408 = vmatprep.subr.bf16.mxu0 %v706
    %2409 = vmatpush1.bf16.msra.mxu0 %v705
    %2410 = vmatprep.subr.bf16.mxu0 %v826
    %2411 = vmatpush2.bf16.msra.mxu0 %v825
    %2412 = vmatprep.subr.bf16.mxu0 %v818
    %2413 = vmatpush2.bf16.msra.mxu0 %v817
    %2414 = vmatprep.subr.bf16.mxu0 %v810
    %2415 = vmatpush2.bf16.msra.mxu0 %v809
    %2416 = vmatprep.subr.bf16.mxu0 %v802
    %2417 = vmatpush2.bf16.msra.mxu0 %v801
    %2418 = vmatprep.subr.bf16.mxu0 %v794
    %2419 = vmatpush2.bf16.msra.mxu0 %v793
    %2420 = vmatprep.subr.bf16.mxu0 %v786
    %2421 = vmatpush2.bf16.msra.mxu0 %v785
    %2422 = vmatprep.subr.bf16.mxu0 %v778
    %2423 = vmatpush2.bf16.msra.mxu0 %v777
    %2424 = vmatprep.subr.bf16.mxu0 %v770
    %2425 = vmatpush2.bf16.msra.mxu0 %v769
    %2426 = vmatprep.mubr.bf16.mxu0 %v2309
    %2427 = vmatmul.mubr.bf16.gmra.mxu0 %v2308
    %v2428 = vpop.f32.mrf.mxu0
    %v2429 = vadd.f32 0.0, %v2428
    %v2430 = vpop.f32.mrf.mxu0
    %v2431 = vadd.f32 0.0, %v2430
    %v2432 = vpop.f32.mrf.mxu0
    %v2433 = vpop.f32.mrf.mxu0
    %2434 = vdwg.mxu0
    %2435 = vmatprep.subr.bf16.mxu0 %v764
    %2436 = vmatpush1.bf16.msra.mxu0 %v763
    %2437 = vmatprep.subr.bf16.mxu0 %v756
    %2438 = vmatpush1.bf16.msra.mxu0 %v755
    %2439 = vmatprep.subr.bf16.mxu0 %v748
    %2440 = vmatpush1.bf16.msra.mxu0 %v747
    %2441 = vmatprep.subr.bf16.mxu0 %v740
    %2442 = vmatpush1.bf16.msra.mxu0 %v739
    %2443 = vmatprep.subr.bf16.mxu0 %v732
    %2444 = vmatpush1.bf16.msra.mxu0 %v731
    %2445 = vmatprep.subr.bf16.mxu0 %v724
    %2446 = vmatpush1.bf16.msra.mxu0 %v723
    %2447 = vmatprep.subr.bf16.mxu0 %v716
    %2448 = vmatpush1.bf16.msra.mxu0 %v715
    %2449 = vmatprep.subr.bf16.mxu0 %v708
    %2450 = vmatpush1.bf16.msra.mxu0 %v707
    %2451 = vmatprep.subr.bf16.mxu0 %v828
    %2452 = vmatpush2.bf16.msra.mxu0 %v827
    %2453 = vmatprep.subr.bf16.mxu0 %v820
    %2454 = vmatpush2.bf16.msra.mxu0 %v819
    %2455 = vmatprep.subr.bf16.mxu0 %v812
    %2456 = vmatpush2.bf16.msra.mxu0 %v811
    %2457 = vmatprep.subr.bf16.mxu0 %v804
    %2458 = vmatpush2.bf16.msra.mxu0 %v803
    %2459 = vmatprep.subr.bf16.mxu0 %v796
    %2460 = vmatpush2.bf16.msra.mxu0 %v795
    %2461 = vmatprep.subr.bf16.mxu0 %v788
    %2462 = vmatpush2.bf16.msra.mxu0 %v787
    %2463 = vmatprep.subr.bf16.mxu0 %v780
    %2464 = vmatpush2.bf16.msra.mxu0 %v779
    %2465 = vmatprep.subr.bf16.mxu0 %v772
    %2466 = vmatpush2.bf16.msra.mxu0 %v771
    %2467 = vmatprep.mubr.bf16.mxu0 %v2309
    %2468 = vmatmul.mubr.bf16.gmra.mxu0 %v2308
    %v2469 = vpop.f32.mrf.mxu0
    %v2470 = vadd.f32 0.0, %v2469
    %v2471 = vpop.f32.mrf.mxu0
    %v2472 = vadd.f32 0.0, %v2471
    %v2473 = vpop.f32.mrf.mxu0
    %v2474 = vpop.f32.mrf.mxu0
    %2475 = vdwg.mxu0
    %v2484 = vrot.slane %v2347, 6
    %v2485 = vrot.slane %v2349, 6
    %v2486 = vrot.slane %v2388, 6
    %v2487 = vrot.slane %v2390, 6
    %v2488 = vrot.slane %v2429, 6
    %v2489 = vrot.slane %v2431, 6
    %v2490 = vrot.slane %v2470, 6
    %v2491 = vrot.slane %v2472, 6
    %v2492 = vrot.slane %v2347, 7
    %v2493 = vrot.slane %v2349, 7
    %v2494 = vrot.slane %v2388, 7
    %v2495 = vrot.slane %v2390, 7
    %v2496 = vrot.slane %v2429, 7
    %v2497 = vrot.slane %v2431, 7
    %v2498 = vrot.slane %v2470, 7
    %v2499 = vrot.slane %v2472, 7
    %v2516 = vadd.f32 %v2276, %v2484
    %v2517 = vadd.f32 %v2277, %v2485
    %v2518 = vadd.f32 %v2278, %v2486
    %v2519 = vadd.f32 %v2279, %v2487
    %v2520 = vadd.f32 %v2280, %v2488
    %v2521 = vadd.f32 %v2281, %v2489
    %v2522 = vadd.f32 %v2282, %v2490
    %v2523 = vadd.f32 %v2283, %v2491
    %v2524 = vadd.f32 %v2284, %v2492
    %v2525 = vadd.f32 %v2285, %v2493
    %v2526 = vadd.f32 %v2286, %v2494
    %v2527 = vadd.f32 %v2287, %v2495
    %v2528 = vadd.f32 %v2288, %v2496
    %v2529 = vadd.f32 %v2289, %v2497
    %v2530 = vadd.f32 %v2290, %v2498
    %v2531 = vadd.f32 %v2291, %v2499
    %v2532 = vxor.u32 %v2516, 2147483648
    %v2533 = vxor.u32 %v2517, 2147483648
    %v2534 = vxor.u32 %v2524, 2147483648
    %v2535 = vxor.u32 %v2525, 2147483648
    %v2536 = vmul.f32 %v2532, 1.442695
    %v2537 = vpow.pop %v2536
    %v2538 = vmul.f32 %v2533, 1.442695
    %v2539 = vpow.pop %v2538
    %v2540 = vmul.f32 %v2534, 1.442695
    %v2541 = vpow.pop %v2540
    %v2542 = vmul.f32 %v2535, 1.442695
    %v2543 = vpow.pop %v2542
    %v2544 = vadd.f32 %v2537, 1.0
    %v2545 = vadd.f32 %v2539, 1.0
    %v2546 = vadd.f32 %v2541, 1.0
    %v2547 = vadd.f32 %v2543, 1.0
    %v2548 = vrcp.pop %v2544
    %v2549 = vmul.f32 1.0, %v2548
    %v2550 = vrcp.pop %v2545
    %v2551 = vmul.f32 1.0, %v2550
    %v2552 = vrcp.pop %v2546
    %v2553 = vmul.f32 1.0, %v2552
    %v2554 = vrcp.pop %v2547
    %v2555 = vmul.f32 1.0, %v2554
    %v2556 = vxor.u32 %v2518, 2147483648
    %v2557 = vxor.u32 %v2519, 2147483648
    %v2558 = vxor.u32 %v2526, 2147483648
    %v2559 = vxor.u32 %v2527, 2147483648
    %v2560 = vmul.f32 %v2556, 1.442695
    %v2561 = vpow.pop %v2560
    %v2562 = vmul.f32 %v2557, 1.442695
    %v2563 = vpow.pop %v2562
    %v2564 = vmul.f32 %v2558, 1.442695
    %v2565 = vpow.pop %v2564
    %v2566 = vmul.f32 %v2559, 1.442695
    %v2567 = vpow.pop %v2566
    %v2568 = vadd.f32 %v2561, 1.0
    %v2569 = vadd.f32 %v2563, 1.0
    %v2570 = vadd.f32 %v2565, 1.0
    %v2571 = vadd.f32 %v2567, 1.0
    %v2572 = vrcp.pop %v2568
    %v2573 = vmul.f32 1.0, %v2572
    %v2574 = vrcp.pop %v2569
    %v2575 = vmul.f32 1.0, %v2574
    %v2576 = vrcp.pop %v2570
    %v2577 = vmul.f32 1.0, %v2576
    %v2578 = vrcp.pop %v2571
    %v2579 = vmul.f32 1.0, %v2578
    %v2580 = vtanh.pop %v2520
    %v2581 = vtanh.pop %v2521
    %v2582 = vtanh.pop %v2528
    %v2583 = vtanh.pop %v2529
    %v2584 = vxor.u32 %v2522, 2147483648
    %v2585 = vxor.u32 %v2523, 2147483648
    %v2586 = vxor.u32 %v2530, 2147483648
    %v2587 = vxor.u32 %v2531, 2147483648
    %v2588 = vmul.f32 %v2584, 1.442695
    %v2589 = vpow.pop %v2588
    %v2590 = vmul.f32 %v2585, 1.442695
    %v2591 = vpow.pop %v2590
    %v2592 = vmul.f32 %v2586, 1.442695
    %v2593 = vpow.pop %v2592
    %v2594 = vmul.f32 %v2587, 1.442695
    %v2595 = vpow.pop %v2594
    %v2596 = vadd.f32 %v2589, 1.0
    %v2597 = vadd.f32 %v2591, 1.0
    %v2598 = vadd.f32 %v2593, 1.0
    %v2599 = vadd.f32 %v2595, 1.0
    %v2600 = vrcp.pop %v2596
    %v2601 = vmul.f32 1.0, %v2600
    %v2602 = vrcp.pop %v2597
    %v2603 = vmul.f32 1.0, %v2602
    %v2604 = vrcp.pop %v2598
    %v2605 = vmul.f32 1.0, %v2604
    %v2606 = vrcp.pop %v2599
    %v2607 = vmul.f32 1.0, %v2606
    %v2612 = vrot.slane %v2029, 7
    %v2613 = vrot.slane %v2030, 7
    %v2614 = vrot.slane %v2031, 7
    %v2615 = vrot.slane %v2032, 7
    %v2620 = vmul.f32 %v2573, %v2612
    %v2621 = vmul.f32 %v2575, %v2613
    %v2622 = vmul.f32 %v2577, %v2614
    %v2623 = vmul.f32 %v2579, %v2615
    %v2624 = vmul.f32 %v2549, %v2580
    %v2625 = vmul.f32 %v2551, %v2581
    %v2626 = vmul.f32 %v2553, %v2582
    %v2627 = vmul.f32 %v2555, %v2583
    %v2628 = vadd.f32 %v2620, %v2624
    %v2629 = vadd.f32 %v2621, %v2625
    %v2630 = vadd.f32 %v2622, %v2626
    %v2631 = vadd.f32 %v2623, %v2627
    %v2632 = vtanh.pop %v2628
    %v2633 = vtanh.pop %v2629
    %v2634 = vtanh.pop %v2630
    %v2635 = vtanh.pop %v2631
    %v2636 = vmul.f32 %v2601, %v2632
    %v2637 = vmul.f32 %v2603, %v2633
    %v2638 = vmul.f32 %v2605, %v2634
    %v2639 = vmul.f32 %v2607, %v2635
    %v2644 = vrot.slane %v2638, 7
    %vm2645 = vcmask 1043459
    %v2646 = vsel %vm2645, %v2644, %v2636
    %v2647 = vrot.slane %v2639, 7
    %v2648 = vsel %vm2645, %v2647, %v2637
    %vm2651 = vcmask 1043458
    %v2652 = vsel %vm2651, %v2646, 0.0
    %v2653 = vsel %vm2651, %v2648, 0.0
    %v2654 = vadd.f32 %v2652, %v2653
    %2655 = vadd.xlane.f32.xlu0 %v2654
    %v2656 = vpop.xlane.xlu0 %2655
    %v2657 = vmul.f32 %v2656, %v1297
    %v2659 = vrot.slane %v2657, 1
    %v2662 = vsub.f32 %v2636, %v2657
    %v2663 = vsub.f32 %v2637, %v2657
    %v2664 = vsub.f32 %v2638, %v2659
    %v2665 = vsub.f32 %v2639, %v2659
    %v2666 = vmul.f32 %v2662, %v2662
    %v2667 = vmul.f32 %v2663, %v2663
    %v2668 = vmul.f32 %v2664, %v2664
    %v2669 = vmul.f32 %v2665, %v2665
    %v2674 = vrot.slane %v2668, 7
    %v2675 = vsel %vm2645, %v2674, %v2666
    %v2676 = vrot.slane %v2669, 7
    %v2677 = vsel %vm2645, %v2676, %v2667
    %v2680 = vsel %vm2651, %v2675, 0.0
    %v2681 = vsel %vm2651, %v2677, 0.0
    %v2682 = vadd.f32 %v2680, %v2681
    %2683 = vadd.xlane.f32.xlu0 %v2682
    %v2684 = vpop.xlane.xlu0 %2683
    %v2685 = vmul.f32 %v2684, %v1297
    %v2686 = vadd.f32 %v2685, 1e-05
    %v2687 = vrsqrt.pop %v2686
    %v2689 = vrot.slane %v2687, 1
    %v2692 = vmul.f32 %v2662, %v2687
    %v2693 = vmul.f32 %v2663, %v2687
    %v2694 = vmul.f32 %v2664, %v2689
    %v2695 = vmul.f32 %v2665, %v2689
    %v2696 = vmul.f32 %v2692, %v1341
    %v2697 = vmul.f32 %v2693, %v1345
    %v2698 = vmul.f32 %v2694, %v1341
    %v2699 = vmul.f32 %v2695, %v1345
    %v2700 = vadd.f32 %v2696, %v1356
    %v2701 = vadd.f32 %v2697, %v1360
    %v2702 = vadd.f32 %v2698, %v1356
    %v2703 = vadd.f32 %v2699, %v1360
    %v2704 = vpack.c.bf16 %v2700, %v2700
    %v2705 = vpack.c.bf16 %v2701, %v2701
    %v2706 = vpack.c.bf16 %v2702, %v2702
    %v2707 = vpack.c.bf16 %v2703, %v2703
    %v2712 = vunpack.c.l.b16 %v2704
    %v2713 = vunpack.c.l.b16 %v2705
    %v2714 = vunpack.c.l.b16 %v2706
    %v2715 = vunpack.c.l.b16 %v2707
    %v2716 = vrot.slane %v2712, 2
    %v2717 = vrot.slane %v2714, 1
    %v2718 = vsel %vm1285, %v2717, %v2716
    %v2719 = vrot.slane %v2713, 2
    %v2720 = vrot.slane %v2715, 1
    %v2721 = vsel %vm1285, %v2720, %v2719
    %v2722 = vpack.c.b16 %v2718, %v2718
    %v2723 = vpack.c.b16 %v2721, %v2721
    %2726 = vmatprep.subr.bf16.mxu0 0
    %2727 = vmatpush1.bf16.msra.mxu0 %v1464
    %2728 = vmatprep.subr.bf16.mxu0 0
    %2729 = vmatpush1.bf16.msra.mxu0 %v1463
    %2730 = vmatprep.subr.bf16.mxu0 0
    %2731 = vmatpush1.bf16.msra.mxu0 %v1462
    %2732 = vmatprep.subr.bf16.mxu0 0
    %2733 = vmatpush1.bf16.msra.mxu0 %v1461
    %2734 = vmatprep.subr.bf16.mxu0 0
    %2735 = vmatpush1.bf16.msra.mxu0 %v1460
    %2736 = vmatprep.subr.bf16.mxu0 0
    %2737 = vmatpush1.bf16.msra.mxu0 %v1459
    %2738 = vmatprep.subr.bf16.mxu0 0
    %2739 = vmatpush1.bf16.msra.mxu0 %v1458
    %2740 = vmatprep.subr.bf16.mxu0 0
    %2741 = vmatpush1.bf16.msra.mxu0 %v1457
    %2742 = vmatprep.subr.bf16.mxu0 0
    %2743 = vmatpush2.bf16.msra.mxu0 %v1472
    %2744 = vmatprep.subr.bf16.mxu0 0
    %2745 = vmatpush2.bf16.msra.mxu0 %v1471
    %2746 = vmatprep.subr.bf16.mxu0 0
    %2747 = vmatpush2.bf16.msra.mxu0 %v1470
    %2748 = vmatprep.subr.bf16.mxu0 0
    %2749 = vmatpush2.bf16.msra.mxu0 %v1469
    %2750 = vmatprep.subr.bf16.mxu0 0
    %2751 = vmatpush2.bf16.msra.mxu0 %v1468
    %2752 = vmatprep.subr.bf16.mxu0 0
    %2753 = vmatpush2.bf16.msra.mxu0 %v1467
    %2754 = vmatprep.subr.bf16.mxu0 0
    %2755 = vmatpush2.bf16.msra.mxu0 %v1466
    %2756 = vmatprep.subr.bf16.mxu0 0
    %2757 = vmatpush2.bf16.msra.mxu0 %v1465
    %2758 = vmatprep.mubr.bf16.mxu0 %v2723
    %2759 = vmatmul.mubr.bf16.gmra.mxu0 %v2722
    %v2760 = vpop.f32.mrf.mxu0
    %v2761 = vadd.f32 %v1375, %v2760
    %v2762 = vpop.f32.mrf.mxu0
    %v2763 = vpop.f32.mrf.mxu0
    %v2764 = vpop.f32.mrf.mxu0
    %2765 = vdwg.mxu0
    %v2766 = vsel %vm1529, %v2761, 0.0
    %2767 = vadd.xlane.f32.xlu0 %v2766
    %v2768 = vpop.xlane.xlu0 %2767
    %v2769 = vmul.f32 %v2768, %v1533
    %v2770 = vsub.f32 %v2761, %v2769
    %v2771 = vmul.f32 %v2770, %v2770
    %v2772 = vsel %vm1529, %v2771, 0.0
    %2773 = vadd.xlane.f32.xlu0 %v2772
    %v2774 = vpop.xlane.xlu0 %2773
    %v2775 = vmul.f32 %v2774, %v1533
    %v2776 = vadd.f32 %v2775, 1e-05
    %v2777 = vrsqrt.pop %v2776
    %v2778 = vmul.f32 %v2770, %v2777
    %v2779 = vmul.f32 %v2778, %v1548
    %v2780 = vadd.f32 %v2779, %v1555
    %v2781 = vmax.f32 %v2780, 0.0
    %v2782 = vpack.c.bf16 %v2781, %v2781
    %v2784 = vsel %vm1590, %v2782, 0
    %2786 = vmatprep.subr.bf16.mxu0 0
    %2787 = vmatpush1.bf16.msra.mxu0 0
    %2788 = vmatprep.subr.bf16.mxu0 0
    %2789 = vmatpush1.bf16.msra.mxu0 0
    %2790 = vmatprep.subr.bf16.mxu0 0
    %2791 = vmatpush1.bf16.msra.mxu0 0
    %2792 = vmatprep.subr.bf16.mxu0 0
    %2793 = vmatpush1.bf16.msra.mxu0 0
    %2794 = vmatprep.subr.bf16.mxu0 0
    %2795 = vmatpush1.bf16.msra.mxu0 %v1585
    %2796 = vmatprep.subr.bf16.mxu0 0
    %2797 = vmatpush1.bf16.msra.mxu0 %v1584
    %2798 = vmatprep.subr.bf16.mxu0 0
    %2799 = vmatpush1.bf16.msra.mxu0 %v1583
    %2800 = vmatprep.subr.bf16.mxu0 0
    %2801 = vmatpush1.bf16.msra.mxu0 %v1582
    %2802 = vmatprep.subr.bf16.mxu0 0
    %2803 = vmatpush2.bf16.msra.mxu0 0
    %2804 = vmatprep.subr.bf16.mxu0 0
    %2805 = vmatpush2.bf16.msra.mxu0 0
    %2806 = vmatprep.subr.bf16.mxu0 0
    %2807 = vmatpush2.bf16.msra.mxu0 0
    %2808 = vmatprep.subr.bf16.mxu0 0
    %2809 = vmatpush2.bf16.msra.mxu0 0
    %2810 = vmatprep.subr.bf16.mxu0 0
    %2811 = vmatpush2.bf16.msra.mxu0 0
    %2812 = vmatprep.subr.bf16.mxu0 0
    %2813 = vmatpush2.bf16.msra.mxu0 0
    %2814 = vmatprep.subr.bf16.mxu0 0
    %2815 = vmatpush2.bf16.msra.mxu0 0
    %2816 = vmatprep.subr.bf16.mxu0 0
    %2817 = vmatpush2.bf16.msra.mxu0 0
    %2818 = vmatprep.mubr.bf16.mxu0 0
    %2819 = vmatmul.mubr.bf16.gmra.mxu0 %v2784
    %v2820 = vpop.f32.mrf.mxu0
    %v2821 = vadd.f32 %v1564, %v2820
    %v2822 = vpop.f32.mrf.mxu0
    %v2823 = vpop.f32.mrf.mxu0
    %v2824 = vpop.f32.mrf.mxu0
    %2825 = vdwg.mxu0
    %v2828 = vunpack.c.l.s4 1966171168
    %v2829 = vunpack.c.0.s8 %v2828
    %v2830 = vlaneseq
    %v2831 = vshrl.u32 %v2830, 7
    %v2832 = vsub.s32 %v2829, %v2831
    %v2833 = vrot.slane %v2821, %v2832
    %v2834 = vcombine.high %v2833, %v2833
    %v2836 = vunpack.c.l.s4 1966171168
    %v2837 = vunpack.c.0.s8 %v2836
    %v2838 = vlaneseq
    %v2839 = vshrl.u32 %v2838, 7
    %v2840 = vsub.s32 %v2837, %v2839
    %v2841 = vrot.slane %v2833, %v2840
    %v2843 = vunpack.c.l.s4 1966171168
    %v2844 = vunpack.c.0.s8 %v2843
    %v2845 = vlaneseq
    %v2846 = vshrl.u32 %v2845, 7
    %v2847 = vsub.s32 %v2844, %v2846
    %v2848 = vrot.slane %v2834, %v2847
    %2851 = vst [vmem:[#allocation4 + $0x2] sm:$0x1] %v2841
    %2852 = vst [vmem:[#allocation4 + $0xa] sm:$0x1] %v2848
    %v2853 = vld [vmem:[%s0] sm:$0x22]
    %v2854 = vld [vmem:[%s0 + $0x8] sm:$0x22]
    %v2855 = vld [vmem:[%s0 + $0x10] sm:$0x22]
    %v2856 = vld [vmem:[%s0 + $0x18] sm:$0x22]
    %v2857 = vld [vmem:[%s0 + $0x20] sm:$0x22]
    %v2858 = vld [vmem:[%s0 + $0x28] sm:$0x22]
    %v2859 = vld [vmem:[%s0 + $0x30] sm:$0x22]
    %v2860 = vld [vmem:[%s0 + $0x38] sm:$0x22]
    %v2861 = vunpack.c.l.bf16 %v2853
    %v2862 = vunpack.c.h.bf16 %v2853
    %v2863 = vunpack.c.l.bf16 %v2854
    %v2864 = vunpack.c.h.bf16 %v2854
    %v2865 = vunpack.c.l.bf16 %v2855
    %v2866 = vunpack.c.h.bf16 %v2855
    %v2867 = vunpack.c.l.bf16 %v2856
    %v2868 = vunpack.c.h.bf16 %v2856
    %v2869 = vunpack.c.l.bf16 %v2857
    %v2870 = vunpack.c.h.bf16 %v2857
    %v2871 = vunpack.c.l.bf16 %v2858
    %v2872 = vunpack.c.h.bf16 %v2858
    %v2873 = vunpack.c.l.bf16 %v2859
    %v2874 = vunpack.c.h.bf16 %v2859
    %v2875 = vunpack.c.l.bf16 %v2860
    %v2876 = vunpack.c.h.bf16 %v2860
    %v2877 = vadd.f32 %v2861, %v251
    %v2878 = vadd.f32 %v2862, %v255
    %v2879 = vadd.f32 %v2863, %v259
    %v2880 = vadd.f32 %v2864, %v263
    %v2881 = vadd.f32 %v2865, %v267
    %v2882 = vadd.f32 %v2866, %v271
    %v2883 = vadd.f32 %v2867, %v275
    %v2884 = vadd.f32 %v2868, %v279
    %v2885 = vadd.f32 %v2869, %v251
    %v2886 = vadd.f32 %v2870, %v255
    %v2887 = vadd.f32 %v2871, %v259
    %v2888 = vadd.f32 %v2872, %v263
    %v2889 = vadd.f32 %v2873, %v267
    %v2890 = vadd.f32 %v2874, %v271
    %v2891 = vadd.f32 %v2875, %v275
    %v2892 = vadd.f32 %v2876, %v279
    %v2893 = vpack.c.bf16 %v2636, %v2636
    %v2894 = vpack.c.bf16 %v2637, %v2637
    %v2895 = vpack.c.bf16 %v2638, %v2638
    %v2896 = vpack.c.bf16 %v2639, %v2639
    %v2901 = vunpack.c.l.b16 %v2893
    %v2902 = vunpack.c.l.b16 %v2894
    %v2903 = vunpack.c.l.b16 %v2895
    %v2904 = vunpack.c.l.b16 %v2896
    %v2905 = vrot.slane %v2901, 2
    %v2906 = vrot.slane %v2903, 1
    %v2907 = vsel %vm1285, %v2906, %v2905
    %v2908 = vrot.slane %v2902, 2
    %v2909 = vrot.slane %v2904, 1
    %v2910 = vsel %vm1285, %v2909, %v2908
    %v2911 = vpack.c.b16 %v2907, %v2907
    %v2912 = vpack.c.b16 %v2910, %v2910
    %2915 = vmatprep.subr.bf16.mxu0 %v758
    %2916 = vmatpush1.bf16.msra.mxu0 %v757
    %2917 = vmatprep.subr.bf16.mxu0 %v750
    %2918 = vmatpush1.bf16.msra.mxu0 %v749
    %2919 = vmatprep.subr.bf16.mxu0 %v742
    %2920 = vmatpush1.bf16.msra.mxu0 %v741
    %2921 = vmatprep.subr.bf16.mxu0 %v734
    %2922 = vmatpush1.bf16.msra.mxu0 %v733
    %2923 = vmatprep.subr.bf16.mxu0 %v726
    %2924 = vmatpush1.bf16.msra.mxu0 %v725
    %2925 = vmatprep.subr.bf16.mxu0 %v718
    %2926 = vmatpush1.bf16.msra.mxu0 %v717
    %2927 = vmatprep.subr.bf16.mxu0 %v710
    %2928 = vmatpush1.bf16.msra.mxu0 %v709
    %2929 = vmatprep.subr.bf16.mxu0 %v702
    %2930 = vmatpush1.bf16.msra.mxu0 %v701
    %2931 = vmatprep.subr.bf16.mxu0 %v822
    %2932 = vmatpush2.bf16.msra.mxu0 %v821
    %2933 = vmatprep.subr.bf16.mxu0 %v814
    %2934 = vmatpush2.bf16.msra.mxu0 %v813
    %2935 = vmatprep.subr.bf16.mxu0 %v806
    %2936 = vmatpush2.bf16.msra.mxu0 %v805
    %2937 = vmatprep.subr.bf16.mxu0 %v798
    %2938 = vmatpush2.bf16.msra.mxu0 %v797
    %2939 = vmatprep.subr.bf16.mxu0 %v790
    %2940 = vmatpush2.bf16.msra.mxu0 %v789
    %2941 = vmatprep.subr.bf16.mxu0 %v782
    %2942 = vmatpush2.bf16.msra.mxu0 %v781
    %2943 = vmatprep.subr.bf16.mxu0 %v774
    %2944 = vmatpush2.bf16.msra.mxu0 %v773
    %2945 = vmatprep.subr.bf16.mxu0 %v766
    %2946 = vmatpush2.bf16.msra.mxu0 %v765
    %2947 = vmatprep.mubr.bf16.mxu0 %v2912
    %2948 = vmatmul.mubr.bf16.gmra.mxu0 %v2911
    %v2949 = vpop.f32.mrf.mxu0
    %v2950 = vadd.f32 0.0, %v2949
    %v2951 = vpop.f32.mrf.mxu0
    %v2952 = vadd.f32 0.0, %v2951
    %v2953 = vpop.f32.mrf.mxu0
    %v2954 = vpop.f32.mrf.mxu0
    %2955 = vdwg.mxu0
    %2956 = vmatprep.subr.bf16.mxu0 %v760
    %2957 = vmatpush1.bf16.msra.mxu0 %v759
    %2958 = vmatprep.subr.bf16.mxu0 %v752
    %2959 = vmatpush1.bf16.msra.mxu0 %v751
    %2960 = vmatprep.subr.bf16.mxu0 %v744
    %2961 = vmatpush1.bf16.msra.mxu0 %v743
    %2962 = vmatprep.subr.bf16.mxu0 %v736
    %2963 = vmatpush1.bf16.msra.mxu0 %v735
    %2964 = vmatprep.subr.bf16.mxu0 %v728
    %2965 = vmatpush1.bf16.msra.mxu0 %v727
    %2966 = vmatprep.subr.bf16.mxu0 %v720
    %2967 = vmatpush1.bf16.msra.mxu0 %v719
    %2968 = vmatprep.subr.bf16.mxu0 %v712
    %2969 = vmatpush1.bf16.msra.mxu0 %v711
    %2970 = vmatprep.subr.bf16.mxu0 %v704
    %2971 = vmatpush1.bf16.msra.mxu0 %v703
    %2972 = vmatprep.subr.bf16.mxu0 %v824
    %2973 = vmatpush2.bf16.msra.mxu0 %v823
    %2974 = vmatprep.subr.bf16.mxu0 %v816
    %2975 = vmatpush2.bf16.msra.mxu0 %v815
    %2976 = vmatprep.subr.bf16.mxu0 %v808
    %2977 = vmatpush2.bf16.msra.mxu0 %v807
    %2978 = vmatprep.subr.bf16.mxu0 %v800
    %2979 = vmatpush2.bf16.msra.mxu0 %v799
    %2980 = vmatprep.subr.bf16.mxu0 %v792
    %2981 = vmatpush2.bf16.msra.mxu0 %v791
    %2982 = vmatprep.subr.bf16.mxu0 %v784
    %2983 = vmatpush2.bf16.msra.mxu0 %v783
    %2984 = vmatprep.subr.bf16.mxu0 %v776
    %2985 = vmatpush2.bf16.msra.mxu0 %v775
    %2986 = vmatprep.subr.bf16.mxu0 %v768
    %2987 = vmatpush2.bf16.msra.mxu0 %v767
    %2988 = vmatprep.mubr.bf16.mxu0 %v2912
    %2989 = vmatmul.mubr.bf16.gmra.mxu0 %v2911
    %v2990 = vpop.f32.mrf.mxu0
    %v2991 = vadd.f32 0.0, %v2990
    %v2992 = vpop.f32.mrf.mxu0
    %v2993 = vadd.f32 0.0, %v2992
    %v2994 = vpop.f32.mrf.mxu0
    %v2995 = vpop.f32.mrf.mxu0
    %2996 = vdwg.mxu0
    %2997 = vmatprep.subr.bf16.mxu0 %v762
    %2998 = vmatpush1.bf16.msra.mxu0 %v761
    %2999 = vmatprep.subr.bf16.mxu0 %v754
    %3000 = vmatpush1.bf16.msra.mxu0 %v753
    %3001 = vmatprep.subr.bf16.mxu0 %v746
    %3002 = vmatpush1.bf16.msra.mxu0 %v745
    %3003 = vmatprep.subr.bf16.mxu0 %v738
    %3004 = vmatpush1.bf16.msra.mxu0 %v737
    %3005 = vmatprep.subr.bf16.mxu0 %v730
    %3006 = vmatpush1.bf16.msra.mxu0 %v729
    %3007 = vmatprep.subr.bf16.mxu0 %v722
    %3008 = vmatpush1.bf16.msra.mxu0 %v721
    %3009 = vmatprep.subr.bf16.mxu0 %v714
    %3010 = vmatpush1.bf16.msra.mxu0 %v713
    %3011 = vmatprep.subr.bf16.mxu0 %v706
    %3012 = vmatpush1.bf16.msra.mxu0 %v705
    %3013 = vmatprep.subr.bf16.mxu0 %v826
    %3014 = vmatpush2.bf16.msra.mxu0 %v825
    %3015 = vmatprep.subr.bf16.mxu0 %v818
    %3016 = vmatpush2.bf16.msra.mxu0 %v817
    %3017 = vmatprep.subr.bf16.mxu0 %v810
    %3018 = vmatpush2.bf16.msra.mxu0 %v809
    %3019 = vmatprep.subr.bf16.mxu0 %v802
    %3020 = vmatpush2.bf16.msra.mxu0 %v801
    %3021 = vmatprep.subr.bf16.mxu0 %v794
    %3022 = vmatpush2.bf16.msra.mxu0 %v793
    %3023 = vmatprep.subr.bf16.mxu0 %v786
    %3024 = vmatpush2.bf16.msra.mxu0 %v785
    %3025 = vmatprep.subr.bf16.mxu0 %v778
    %3026 = vmatpush2.bf16.msra.mxu0 %v777
    %3027 = vmatprep.subr.bf16.mxu0 %v770
    %3028 = vmatpush2.bf16.msra.mxu0 %v769
    %3029 = vmatprep.mubr.bf16.mxu0 %v2912
    %3030 = vmatmul.mubr.bf16.gmra.mxu0 %v2911
    %v3031 = vpop.f32.mrf.mxu0
    %v3032 = vadd.f32 0.0, %v3031
    %v3033 = vpop.f32.mrf.mxu0
    %v3034 = vadd.f32 0.0, %v3033
    %v3035 = vpop.f32.mrf.mxu0
    %v3036 = vpop.f32.mrf.mxu0
    %3037 = vdwg.mxu0
    %3038 = vmatprep.subr.bf16.mxu0 %v764
    %3039 = vmatpush1.bf16.msra.mxu0 %v763
    %3040 = vmatprep.subr.bf16.mxu0 %v756
    %3041 = vmatpush1.bf16.msra.mxu0 %v755
    %3042 = vmatprep.subr.bf16.mxu0 %v748
    %3043 = vmatpush1.bf16.msra.mxu0 %v747
    %3044 = vmatprep.subr.bf16.mxu0 %v740
    %3045 = vmatpush1.bf16.msra.mxu0 %v739
    %3046 = vmatprep.subr.bf16.mxu0 %v732
    %3047 = vmatpush1.bf16.msra.mxu0 %v731
    %3048 = vmatprep.subr.bf16.mxu0 %v724
    %3049 = vmatpush1.bf16.msra.mxu0 %v723
    %3050 = vmatprep.subr.bf16.mxu0 %v716
    %3051 = vmatpush1.bf16.msra.mxu0 %v715
    %3052 = vmatprep.subr.bf16.mxu0 %v708
    %3053 = vmatpush1.bf16.msra.mxu0 %v707
    %3054 = vmatprep.subr.bf16.mxu0 %v828
    %3055 = vmatpush2.bf16.msra.mxu0 %v827
    %3056 = vmatprep.subr.bf16.mxu0 %v820
    %3057 = vmatpush2.bf16.msra.mxu0 %v819
    %3058 = vmatprep.subr.bf16.mxu0 %v812
    %3059 = vmatpush2.bf16.msra.mxu0 %v811
    %3060 = vmatprep.subr.bf16.mxu0 %v804
    %3061 = vmatpush2.bf16.msra.mxu0 %v803
    %3062 = vmatprep.subr.bf16.mxu0 %v796
    %3063 = vmatpush2.bf16.msra.mxu0 %v795
    %3064 = vmatprep.subr.bf16.mxu0 %v788
    %3065 = vmatpush2.bf16.msra.mxu0 %v787
    %3066 = vmatprep.subr.bf16.mxu0 %v780
    %3067 = vmatpush2.bf16.msra.mxu0 %v779
    %3068 = vmatprep.subr.bf16.mxu0 %v772
    %3069 = vmatpush2.bf16.msra.mxu0 %v771
    %3070 = vmatprep.mubr.bf16.mxu0 %v2912
    %3071 = vmatmul.mubr.bf16.gmra.mxu0 %v2911
    %v3072 = vpop.f32.mrf.mxu0
    %v3073 = vadd.f32 0.0, %v3072
    %v3074 = vpop.f32.mrf.mxu0
    %v3075 = vadd.f32 0.0, %v3074
    %v3076 = vpop.f32.mrf.mxu0
    %v3077 = vpop.f32.mrf.mxu0
    %3078 = vdwg.mxu0
    %v3087 = vrot.slane %v2950, 5
    %v3088 = vrot.slane %v2952, 5
    %v3089 = vrot.slane %v2991, 5
    %v3090 = vrot.slane %v2993, 5
    %v3091 = vrot.slane %v3032, 5
    %v3092 = vrot.slane %v3034, 5
    %v3093 = vrot.slane %v3073, 5
    %v3094 = vrot.slane %v3075, 5
    %v3095 = vrot.slane %v2950, 6
    %v3096 = vrot.slane %v2952, 6
    %v3097 = vrot.slane %v2991, 6
    %v3098 = vrot.slane %v2993, 6
    %v3099 = vrot.slane %v3032, 6
    %v3100 = vrot.slane %v3034, 6
    %v3101 = vrot.slane %v3073, 6
    %v3102 = vrot.slane %v3075, 6
    %v3119 = vadd.f32 %v2877, %v3087
    %v3120 = vadd.f32 %v2878, %v3088
    %v3121 = vadd.f32 %v2879, %v3089
    %v3122 = vadd.f32 %v2880, %v3090
    %v3123 = vadd.f32 %v2881, %v3091
    %v3124 = vadd.f32 %v2882, %v3092
    %v3125 = vadd.f32 %v2883, %v3093
    %v3126 = vadd.f32 %v2884, %v3094
    %v3127 = vadd.f32 %v2885, %v3095
    %v3128 = vadd.f32 %v2886, %v3096
    %v3129 = vadd.f32 %v2887, %v3097
    %v3130 = vadd.f32 %v2888, %v3098
    %v3131 = vadd.f32 %v2889, %v3099
    %v3132 = vadd.f32 %v2890, %v3100
    %v3133 = vadd.f32 %v2891, %v3101
    %v3134 = vadd.f32 %v2892, %v3102
    %v3135 = vxor.u32 %v3119, 2147483648
    %v3136 = vxor.u32 %v3120, 2147483648
    %v3137 = vxor.u32 %v3127, 2147483648
    %v3138 = vxor.u32 %v3128, 2147483648
    %v3139 = vmul.f32 %v3135, 1.442695
    %v3140 = vpow.pop %v3139
    %v3141 = vmul.f32 %v3136, 1.442695
    %v3142 = vpow.pop %v3141
    %v3143 = vmul.f32 %v3137, 1.442695
    %v3144 = vpow.pop %v3143
    %v3145 = vmul.f32 %v3138, 1.442695
    %v3146 = vpow.pop %v3145
    %v3147 = vadd.f32 %v3140, 1.0
    %v3148 = vadd.f32 %v3142, 1.0
    %v3149 = vadd.f32 %v3144, 1.0
    %v3150 = vadd.f32 %v3146, 1.0
    %v3151 = vrcp.pop %v3147
    %v3152 = vmul.f32 1.0, %v3151
    %v3153 = vrcp.pop %v3148
    %v3154 = vmul.f32 1.0, %v3153
    %v3155 = vrcp.pop %v3149
    %v3156 = vmul.f32 1.0, %v3155
    %v3157 = vrcp.pop %v3150
    %v3158 = vmul.f32 1.0, %v3157
    %v3159 = vxor.u32 %v3121, 2147483648
    %v3160 = vxor.u32 %v3122, 2147483648
    %v3161 = vxor.u32 %v3129, 2147483648
    %v3162 = vxor.u32 %v3130, 2147483648
    %v3163 = vmul.f32 %v3159, 1.442695
    %v3164 = vpow.pop %v3163
    %v3165 = vmul.f32 %v3160, 1.442695
    %v3166 = vpow.pop %v3165
    %v3167 = vmul.f32 %v3161, 1.442695
    %v3168 = vpow.pop %v3167
    %v3169 = vmul.f32 %v3162, 1.442695
    %v3170 = vpow.pop %v3169
    %v3171 = vadd.f32 %v3164, 1.0
    %v3172 = vadd.f32 %v3166, 1.0
    %v3173 = vadd.f32 %v3168, 1.0
    %v3174 = vadd.f32 %v3170, 1.0
    %v3175 = vrcp.pop %v3171
    %v3176 = vmul.f32 1.0, %v3175
    %v3177 = vrcp.pop %v3172
    %v3178 = vmul.f32 1.0, %v3177
    %v3179 = vrcp.pop %v3173
    %v3180 = vmul.f32 1.0, %v3179
    %v3181 = vrcp.pop %v3174
    %v3182 = vmul.f32 1.0, %v3181
    %v3183 = vtanh.pop %v3123
    %v3184 = vtanh.pop %v3124
    %v3185 = vtanh.pop %v3131
    %v3186 = vtanh.pop %v3132
    %v3187 = vxor.u32 %v3125, 2147483648
    %v3188 = vxor.u32 %v3126, 2147483648
    %v3189 = vxor.u32 %v3133, 2147483648
    %v3190 = vxor.u32 %v3134, 2147483648
    %v3191 = vmul.f32 %v3187, 1.442695
    %v3192 = vpow.pop %v3191
    %v3193 = vmul.f32 %v3188, 1.442695
    %v3194 = vpow.pop %v3193
    %v3195 = vmul.f32 %v3189, 1.442695
    %v3196 = vpow.pop %v3195
    %v3197 = vmul.f32 %v3190, 1.442695
    %v3198 = vpow.pop %v3197
    %v3199 = vadd.f32 %v3192, 1.0
    %v3200 = vadd.f32 %v3194, 1.0
    %v3201 = vadd.f32 %v3196, 1.0
    %v3202 = vadd.f32 %v3198, 1.0
    %v3203 = vrcp.pop %v3199
    %v3204 = vmul.f32 1.0, %v3203
    %v3205 = vrcp.pop %v3200
    %v3206 = vmul.f32 1.0, %v3205
    %v3207 = vrcp.pop %v3201
    %v3208 = vmul.f32 1.0, %v3207
    %v3209 = vrcp.pop %v3202
    %v3210 = vmul.f32 1.0, %v3209
    %v3215 = vrot.slane %v2628, 7
    %v3216 = vrot.slane %v2629, 7
    %v3217 = vrot.slane %v2630, 7
    %v3218 = vrot.slane %v2631, 7
    %v3223 = vmul.f32 %v3176, %v3215
    %v3224 = vmul.f32 %v3178, %v3216
    %v3225 = vmul.f32 %v3180, %v3217
    %v3226 = vmul.f32 %v3182, %v3218
    %v3227 = vmul.f32 %v3152, %v3183
    %v3228 = vmul.f32 %v3154, %v3184
    %v3229 = vmul.f32 %v3156, %v3185
    %v3230 = vmul.f32 %v3158, %v3186
    %v3231 = vadd.f32 %v3223, %v3227
    %v3232 = vadd.f32 %v3224, %v3228
    %v3233 = vadd.f32 %v3225, %v3229
    %v3234 = vadd.f32 %v3226, %v3230
    %v3235 = vtanh.pop %v3231
    %v3236 = vtanh.pop %v3232
    %v3237 = vtanh.pop %v3233
    %v3238 = vtanh.pop %v3234
    %v3239 = vmul.f32 %v3204, %v3235
    %v3240 = vmul.f32 %v3206, %v3236
    %v3241 = vmul.f32 %v3208, %v3237
    %v3242 = vmul.f32 %v3210, %v3238
    %v3247 = vrot.slane %v3241, 7
    %vm3248 = vcmask 1044484
    %v3249 = vsel %vm3248, %v3247, %v3239
    %v3250 = vrot.slane %v3242, 7
    %v3251 = vsel %vm3248, %v3250, %v3240
    %vm3254 = vcmask 1044483
    %v3255 = vsel %vm3254, %v3249, 0.0
    %v3256 = vsel %vm3254, %v3251, 0.0
    %v3257 = vadd.f32 %v3255, %v3256
    %3258 = vadd.xlane.f32.xlu0 %v3257
    %v3259 = vpop.xlane.xlu0 %3258
    %v3260 = vmul.f32 %v3259, %v1297
    %v3262 = vrot.slane %v3260, 1
    %v3265 = vsub.f32 %v3239, %v3260
    %v3266 = vsub.f32 %v3240, %v3260
    %v3267 = vsub.f32 %v3241, %v3262
    %v3268 = vsub.f32 %v3242, %v3262
    %v3269 = vmul.f32 %v3265, %v3265
    %v3270 = vmul.f32 %v3266, %v3266
    %v3271 = vmul.f32 %v3267, %v3267
    %v3272 = vmul.f32 %v3268, %v3268
    %v3277 = vrot.slane %v3271, 7
    %v3278 = vsel %vm3248, %v3277, %v3269
    %v3279 = vrot.slane %v3272, 7
    %v3280 = vsel %vm3248, %v3279, %v3270
    %v3283 = vsel %vm3254, %v3278, 0.0
    %v3284 = vsel %vm3254, %v3280, 0.0
    %v3285 = vadd.f32 %v3283, %v3284
    %3286 = vadd.xlane.f32.xlu0 %v3285
    %v3287 = vpop.xlane.xlu0 %3286
    %v3288 = vmul.f32 %v3287, %v1297
    %v3289 = vadd.f32 %v3288, 1e-05
    %v3290 = vrsqrt.pop %v3289
    %v3292 = vrot.slane %v3290, 1
    %v3295 = vmul.f32 %v3265, %v3290
    %v3296 = vmul.f32 %v3266, %v3290
    %v3297 = vmul.f32 %v3267, %v3292
    %v3298 = vmul.f32 %v3268, %v3292
    %v3299 = vmul.f32 %v3295, %v1341
    %v3300 = vmul.f32 %v3296, %v1345
    %v3301 = vmul.f32 %v3297, %v1341
    %v3302 = vmul.f32 %v3298, %v1345
    %v3303 = vadd.f32 %v3299, %v1356
    %v3304 = vadd.f32 %v3300, %v1360
    %v3305 = vadd.f32 %v3301, %v1356
    %v3306 = vadd.f32 %v3302, %v1360
    %v3307 = vpack.c.bf16 %v3303, %v3303
    %v3308 = vpack.c.bf16 %v3304, %v3304
    %v3309 = vpack.c.bf16 %v3305, %v3305
    %v3310 = vpack.c.bf16 %v3306, %v3306
    %v3315 = vunpack.c.l.b16 %v3307
    %v3316 = vunpack.c.l.b16 %v3308
    %v3317 = vunpack.c.l.b16 %v3309
    %v3318 = vunpack.c.l.b16 %v3310
    %v3319 = vrot.slane %v3315, 3
    %v3320 = vrot.slane %v3317, 2
    %v3321 = vsel %vm1285, %v3320, %v3319
    %v3322 = vrot.slane %v3316, 3
    %v3323 = vrot.slane %v3318, 2
    %v3324 = vsel %vm1285, %v3323, %v3322
    %v3325 = vpack.c.b16 %v3321, %v3321
    %v3326 = vpack.c.b16 %v3324, %v3324
    %3329 = vmatprep.subr.bf16.mxu0 0
    %3330 = vmatpush1.bf16.msra.mxu0 %v1464
    %3331 = vmatprep.subr.bf16.mxu0 0
    %3332 = vmatpush1.bf16.msra.mxu0 %v1463
    %3333 = vmatprep.subr.bf16.mxu0 0
    %3334 = vmatpush1.bf16.msra.mxu0 %v1462
    %3335 = vmatprep.subr.bf16.mxu0 0
    %3336 = vmatpush1.bf16.msra.mxu0 %v1461
    %3337 = vmatprep.subr.bf16.mxu0 0
    %3338 = vmatpush1.bf16.msra.mxu0 %v1460
    %3339 = vmatprep.subr.bf16.mxu0 0
    %3340 = vmatpush1.bf16.msra.mxu0 %v1459
    %3341 = vmatprep.subr.bf16.mxu0 0
    %3342 = vmatpush1.bf16.msra.mxu0 %v1458
    %3343 = vmatprep.subr.bf16.mxu0 0
    %3344 = vmatpush1.bf16.msra.mxu0 %v1457
    %3345 = vmatprep.subr.bf16.mxu0 0
    %3346 = vmatpush2.bf16.msra.mxu0 %v1472
    %3347 = vmatprep.subr.bf16.mxu0 0
    %3348 = vmatpush2.bf16.msra.mxu0 %v1471
    %3349 = vmatprep.subr.bf16.mxu0 0
    %3350 = vmatpush2.bf16.msra.mxu0 %v1470
    %3351 = vmatprep.subr.bf16.mxu0 0
    %3352 = vmatpush2.bf16.msra.mxu0 %v1469
    %3353 = vmatprep.subr.bf16.mxu0 0
    %3354 = vmatpush2.bf16.msra.mxu0 %v1468
    %3355 = vmatprep.subr.bf16.mxu0 0
    %3356 = vmatpush2.bf16.msra.mxu0 %v1467
    %3357 = vmatprep.subr.bf16.mxu0 0
    %3358 = vmatpush2.bf16.msra.mxu0 %v1466
    %3359 = vmatprep.subr.bf16.mxu0 0
    %3360 = vmatpush2.bf16.msra.mxu0 %v1465
    %3361 = vmatprep.mubr.bf16.mxu0 %v3326
    %3362 = vmatmul.mubr.bf16.gmra.mxu0 %v3325
    %v3363 = vpop.f32.mrf.mxu0
    %v3364 = vadd.f32 %v1375, %v3363
    %v3365 = vpop.f32.mrf.mxu0
    %v3366 = vpop.f32.mrf.mxu0
    %v3367 = vpop.f32.mrf.mxu0
    %3368 = vdwg.mxu0
    %v3369 = vsel %vm1529, %v3364, 0.0
    %3370 = vadd.xlane.f32.xlu0 %v3369
    %v3371 = vpop.xlane.xlu0 %3370
    %v3372 = vmul.f32 %v3371, %v1533
    %v3373 = vsub.f32 %v3364, %v3372
    %v3374 = vmul.f32 %v3373, %v3373
    %v3375 = vsel %vm1529, %v3374, 0.0
    %3376 = vadd.xlane.f32.xlu0 %v3375
    %v3377 = vpop.xlane.xlu0 %3376
    %v3378 = vmul.f32 %v3377, %v1533
    %v3379 = vadd.f32 %v3378, 1e-05
    %v3380 = vrsqrt.pop %v3379
    %v3381 = vmul.f32 %v3373, %v3380
    %v3382 = vmul.f32 %v3381, %v1548
    %v3383 = vadd.f32 %v3382, %v1555
    %v3384 = vmax.f32 %v3383, 0.0
    %v3385 = vpack.c.bf16 %v3384, %v3384
    %v3387 = vsel %vm1590, %v3385, 0
    %3389 = vmatprep.subr.bf16.mxu0 0
    %3390 = vmatpush1.bf16.msra.mxu0 0
    %3391 = vmatprep.subr.bf16.mxu0 0
    %3392 = vmatpush1.bf16.msra.mxu0 0
    %3393 = vmatprep.subr.bf16.mxu0 0
    %3394 = vmatpush1.bf16.msra.mxu0 0
    %3395 = vmatprep.subr.bf16.mxu0 0
    %3396 = vmatpush1.bf16.msra.mxu0 0
    %3397 = vmatprep.subr.bf16.mxu0 0
    %3398 = vmatpush1.bf16.msra.mxu0 %v1585
    %3399 = vmatprep.subr.bf16.mxu0 0
    %3400 = vmatpush1.bf16.msra.mxu0 %v1584
    %3401 = vmatprep.subr.bf16.mxu0 0
    %3402 = vmatpush1.bf16.msra.mxu0 %v1583
    %3403 = vmatprep.subr.bf16.mxu0 0
    %3404 = vmatpush1.bf16.msra.mxu0 %v1582
    %3405 = vmatprep.subr.bf16.mxu0 0
    %3406 = vmatpush2.bf16.msra.mxu0 0
    %3407 = vmatprep.subr.bf16.mxu0 0
    %3408 = vmatpush2.bf16.msra.mxu0 0
    %3409 = vmatprep.subr.bf16.mxu0 0
    %3410 = vmatpush2.bf16.msra.mxu0 0
    %3411 = vmatprep.subr.bf16.mxu0 0
    %3412 = vmatpush2.bf16.msra.mxu0 0
    %3413 = vmatprep.subr.bf16.mxu0 0
    %3414 = vmatpush2.bf16.msra.mxu0 0
    %3415 = vmatprep.subr.bf16.mxu0 0
    %3416 = vmatpush2.bf16.msra.mxu0 0
    %3417 = vmatprep.subr.bf16.mxu0 0
    %3418 = vmatpush2.bf16.msra.mxu0 0
    %3419 = vmatprep.subr.bf16.mxu0 0
    %3420 = vmatpush2.bf16.msra.mxu0 0
    %3421 = vmatprep.mubr.bf16.mxu0 0
    %3422 = vmatmul.mubr.bf16.gmra.mxu0 %v3387
    %v3423 = vpop.f32.mrf.mxu0
    %v3424 = vadd.f32 %v1564, %v3423
    %v3425 = vpop.f32.mrf.mxu0
    %v3426 = vpop.f32.mrf.mxu0
    %v3427 = vpop.f32.mrf.mxu0
    %3428 = vdwg.mxu0
    %v3431 = vunpack.c.l.s4 1966171168
    %v3432 = vunpack.c.0.s8 %v3431
    %v3433 = vlaneseq
    %v3434 = vshrl.u32 %v3433, 7
    %v3435 = vsub.s32 %v3432, %v3434
    %v3436 = vrot.slane %v3424, %v3435
    %v3437 = vcombine.high %v3436, %v3436
    %v3439 = vunpack.c.l.s4 1966171168
    %v3440 = vunpack.c.0.s8 %v3439
    %v3441 = vlaneseq
    %v3442 = vshrl.u32 %v3441, 7
    %v3443 = vsub.s32 %v3440, %v3442
    %v3444 = vrot.slane %v3436, %v3443
    %v3446 = vunpack.c.l.s4 1966171168
    %v3447 = vunpack.c.0.s8 %v3446
    %v3448 = vlaneseq
    %v3449 = vshrl.u32 %v3448, 7
    %v3450 = vsub.s32 %v3447, %v3449
    %v3451 = vrot.slane %v3437, %v3450
    %3454 = vst [vmem:[#allocation4 + $0x3] sm:$0x1] %v3444
    %3455 = vst [vmem:[#allocation4 + $0xb] sm:$0x1] %v3451
    %v3456 = vld [vmem:[%s0] sm:$0x44]
    %v3457 = vld [vmem:[%s0 + $0x8] sm:$0x44]
    %v3458 = vld [vmem:[%s0 + $0x10] sm:$0x44]
    %v3459 = vld [vmem:[%s0 + $0x18] sm:$0x44]
    %v3460 = vld [vmem:[%s0 + $0x20] sm:$0x44]
    %v3461 = vld [vmem:[%s0 + $0x28] sm:$0x44]
    %v3462 = vld [vmem:[%s0 + $0x30] sm:$0x44]
    %v3463 = vld [vmem:[%s0 + $0x38] sm:$0x44]
    %v3464 = vunpack.c.l.bf16 %v3456
    %v3465 = vunpack.c.h.bf16 %v3456
    %v3466 = vunpack.c.l.bf16 %v3457
    %v3467 = vunpack.c.h.bf16 %v3457
    %v3468 = vunpack.c.l.bf16 %v3458
    %v3469 = vunpack.c.h.bf16 %v3458
    %v3470 = vunpack.c.l.bf16 %v3459
    %v3471 = vunpack.c.h.bf16 %v3459
    %v3472 = vunpack.c.l.bf16 %v3460
    %v3473 = vunpack.c.h.bf16 %v3460
    %v3474 = vunpack.c.l.bf16 %v3461
    %v3475 = vunpack.c.h.bf16 %v3461
    %v3476 = vunpack.c.l.bf16 %v3462
    %v3477 = vunpack.c.h.bf16 %v3462
    %v3478 = vunpack.c.l.bf16 %v3463
    %v3479 = vunpack.c.h.bf16 %v3463
    %v3480 = vadd.f32 %v3464, %v251
    %v3481 = vadd.f32 %v3465, %v255
    %v3482 = vadd.f32 %v3466, %v259
    %v3483 = vadd.f32 %v3467, %v263
    %v3484 = vadd.f32 %v3468, %v267
    %v3485 = vadd.f32 %v3469, %v271
    %v3486 = vadd.f32 %v3470, %v275
    %v3487 = vadd.f32 %v3471, %v279
    %v3488 = vadd.f32 %v3472, %v251
    %v3489 = vadd.f32 %v3473, %v255
    %v3490 = vadd.f32 %v3474, %v259
    %v3491 = vadd.f32 %v3475, %v263
    %v3492 = vadd.f32 %v3476, %v267
    %v3493 = vadd.f32 %v3477, %v271
    %v3494 = vadd.f32 %v3478, %v275
    %v3495 = vadd.f32 %v3479, %v279
    %v3496 = vpack.c.bf16 %v3239, %v3239
    %v3497 = vpack.c.bf16 %v3240, %v3240
    %v3498 = vpack.c.bf16 %v3241, %v3241
    %v3499 = vpack.c.bf16 %v3242, %v3242
    %v3504 = vunpack.c.l.b16 %v3496
    %v3505 = vunpack.c.l.b16 %v3497
    %v3506 = vunpack.c.l.b16 %v3498
    %v3507 = vunpack.c.l.b16 %v3499
    %v3508 = vrot.slane %v3504, 3
    %v3509 = vrot.slane %v3506, 2
    %v3510 = vsel %vm1285, %v3509, %v3508
    %v3511 = vrot.slane %v3505, 3
    %v3512 = vrot.slane %v3507, 2
    %v3513 = vsel %vm1285, %v3512, %v3511
    %v3514 = vpack.c.b16 %v3510, %v3510
    %v3515 = vpack.c.b16 %v3513, %v3513
    %3518 = vmatprep.subr.bf16.mxu0 %v758
    %3519 = vmatpush1.bf16.msra.mxu0 %v757
    %3520 = vmatprep.subr.bf16.mxu0 %v750
    %3521 = vmatpush1.bf16.msra.mxu0 %v749
    %3522 = vmatprep.subr.bf16.mxu0 %v742
    %3523 = vmatpush1.bf16.msra.mxu0 %v741
    %3524 = vmatprep.subr.bf16.mxu0 %v734
    %3525 = vmatpush1.bf16.msra.mxu0 %v733
    %3526 = vmatprep.subr.bf16.mxu0 %v726
    %3527 = vmatpush1.bf16.msra.mxu0 %v725
    %3528 = vmatprep.subr.bf16.mxu0 %v718
    %3529 = vmatpush1.bf16.msra.mxu0 %v717
    %3530 = vmatprep.subr.bf16.mxu0 %v710
    %3531 = vmatpush1.bf16.msra.mxu0 %v709
    %3532 = vmatprep.subr.bf16.mxu0 %v702
    %3533 = vmatpush1.bf16.msra.mxu0 %v701
    %3534 = vmatprep.subr.bf16.mxu0 %v822
    %3535 = vmatpush2.bf16.msra.mxu0 %v821
    %3536 = vmatprep.subr.bf16.mxu0 %v814
    %3537 = vmatpush2.bf16.msra.mxu0 %v813
    %3538 = vmatprep.subr.bf16.mxu0 %v806
    %3539 = vmatpush2.bf16.msra.mxu0 %v805
    %3540 = vmatprep.subr.bf16.mxu0 %v798
    %3541 = vmatpush2.bf16.msra.mxu0 %v797
    %3542 = vmatprep.subr.bf16.mxu0 %v790
    %3543 = vmatpush2.bf16.msra.mxu0 %v789
    %3544 = vmatprep.subr.bf16.mxu0 %v782
    %3545 = vmatpush2.bf16.msra.mxu0 %v781
    %3546 = vmatprep.subr.bf16.mxu0 %v774
    %3547 = vmatpush2.bf16.msra.mxu0 %v773
    %3548 = vmatprep.subr.bf16.mxu0 %v766
    %3549 = vmatpush2.bf16.msra.mxu0 %v765
    %3550 = vmatprep.mubr.bf16.mxu0 %v3515
    %3551 = vmatmul.mubr.bf16.gmra.mxu0 %v3514
    %v3552 = vpop.f32.mrf.mxu0
    %v3553 = vadd.f32 0.0, %v3552
    %v3554 = vpop.f32.mrf.mxu0
    %v3555 = vadd.f32 0.0, %v3554
    %v3556 = vpop.f32.mrf.mxu0
    %v3557 = vpop.f32.mrf.mxu0
    %3558 = vdwg.mxu0
    %3559 = vmatprep.subr.bf16.mxu0 %v760
    %3560 = vmatpush1.bf16.msra.mxu0 %v759
    %3561 = vmatprep.subr.bf16.mxu0 %v752
    %3562 = vmatpush1.bf16.msra.mxu0 %v751
    %3563 = vmatprep.subr.bf16.mxu0 %v744
    %3564 = vmatpush1.bf16.msra.mxu0 %v743
    %3565 = vmatprep.subr.bf16.mxu0 %v736
    %3566 = vmatpush1.bf16.msra.mxu0 %v735
    %3567 = vmatprep.subr.bf16.mxu0 %v728
    %3568 = vmatpush1.bf16.msra.mxu0 %v727
    %3569 = vmatprep.subr.bf16.mxu0 %v720
    %3570 = vmatpush1.bf16.msra.mxu0 %v719
    %3571 = vmatprep.subr.bf16.mxu0 %v712
    %3572 = vmatpush1.bf16.msra.mxu0 %v711
    %3573 = vmatprep.subr.bf16.mxu0 %v704
    %3574 = vmatpush1.bf16.msra.mxu0 %v703
    %3575 = vmatprep.subr.bf16.mxu0 %v824
    %3576 = vmatpush2.bf16.msra.mxu0 %v823
    %3577 = vmatprep.subr.bf16.mxu0 %v816
    %3578 = vmatpush2.bf16.msra.mxu0 %v815
    %3579 = vmatprep.subr.bf16.mxu0 %v808
    %3580 = vmatpush2.bf16.msra.mxu0 %v807
    %3581 = vmatprep.subr.bf16.mxu0 %v800
    %3582 = vmatpush2.bf16.msra.mxu0 %v799
    %3583 = vmatprep.subr.bf16.mxu0 %v792
    %3584 = vmatpush2.bf16.msra.mxu0 %v791
    %3585 = vmatprep.subr.bf16.mxu0 %v784
    %3586 = vmatpush2.bf16.msra.mxu0 %v783
    %3587 = vmatprep.subr.bf16.mxu0 %v776
    %3588 = vmatpush2.bf16.msra.mxu0 %v775
    %3589 = vmatprep.subr.bf16.mxu0 %v768
    %3590 = vmatpush2.bf16.msra.mxu0 %v767
    %3591 = vmatprep.mubr.bf16.mxu0 %v3515
    %3592 = vmatmul.mubr.bf16.gmra.mxu0 %v3514
    %v3593 = vpop.f32.mrf.mxu0
    %v3594 = vadd.f32 0.0, %v3593
    %v3595 = vpop.f32.mrf.mxu0
    %v3596 = vadd.f32 0.0, %v3595
    %v3597 = vpop.f32.mrf.mxu0
    %v3598 = vpop.f32.mrf.mxu0
    %3599 = vdwg.mxu0
    %3600 = vmatprep.subr.bf16.mxu0 %v762
    %3601 = vmatpush1.bf16.msra.mxu0 %v761
    %3602 = vmatprep.subr.bf16.mxu0 %v754
    %3603 = vmatpush1.bf16.msra.mxu0 %v753
    %3604 = vmatprep.subr.bf16.mxu0 %v746
    %3605 = vmatpush1.bf16.msra.mxu0 %v745
    %3606 = vmatprep.subr.bf16.mxu0 %v738
    %3607 = vmatpush1.bf16.msra.mxu0 %v737
    %3608 = vmatprep.subr.bf16.mxu0 %v730
    %3609 = vmatpush1.bf16.msra.mxu0 %v729
    %3610 = vmatprep.subr.bf16.mxu0 %v722
    %3611 = vmatpush1.bf16.msra.mxu0 %v721
    %3612 = vmatprep.subr.bf16.mxu0 %v714
    %3613 = vmatpush1.bf16.msra.mxu0 %v713
    %3614 = vmatprep.subr.bf16.mxu0 %v706
    %3615 = vmatpush1.bf16.msra.mxu0 %v705
    %3616 = vmatprep.subr.bf16.mxu0 %v826
    %3617 = vmatpush2.bf16.msra.mxu0 %v825
    %3618 = vmatprep.subr.bf16.mxu0 %v818
    %3619 = vmatpush2.bf16.msra.mxu0 %v817
    %3620 = vmatprep.subr.bf16.mxu0 %v810
    %3621 = vmatpush2.bf16.msra.mxu0 %v809
    %3622 = vmatprep.subr.bf16.mxu0 %v802
    %3623 = vmatpush2.bf16.msra.mxu0 %v801
    %3624 = vmatprep.subr.bf16.mxu0 %v794
    %3625 = vmatpush2.bf16.msra.mxu0 %v793
    %3626 = vmatprep.subr.bf16.mxu0 %v786
    %3627 = vmatpush2.bf16.msra.mxu0 %v785
    %3628 = vmatprep.subr.bf16.mxu0 %v778
    %3629 = vmatpush2.bf16.msra.mxu0 %v777
    %3630 = vmatprep.subr.bf16.mxu0 %v770
    %3631 = vmatpush2.bf16.msra.mxu0 %v769
    %3632 = vmatprep.mubr.bf16.mxu0 %v3515
    %3633 = vmatmul.mubr.bf16.gmra.mxu0 %v3514
    %v3634 = vpop.f32.mrf.mxu0
    %v3635 = vadd.f32 0.0, %v3634
    %v3636 = vpop.f32.mrf.mxu0
    %v3637 = vadd.f32 0.0, %v3636
    %v3638 = vpop.f32.mrf.mxu0
    %v3639 = vpop.f32.mrf.mxu0
    %3640 = vdwg.mxu0
    %3641 = vmatprep.subr.bf16.mxu0 %v764
    %3642 = vmatpush1.bf16.msra.mxu0 %v763
    %3643 = vmatprep.subr.bf16.mxu0 %v756
    %3644 = vmatpush1.bf16.msra.mxu0 %v755
    %3645 = vmatprep.subr.bf16.mxu0 %v748
    %3646 = vmatpush1.bf16.msra.mxu0 %v747
    %3647 = vmatprep.subr.bf16.mxu0 %v740
    %3648 = vmatpush1.bf16.msra.mxu0 %v739
    %3649 = vmatprep.subr.bf16.mxu0 %v732
    %3650 = vmatpush1.bf16.msra.mxu0 %v731
    %3651 = vmatprep.subr.bf16.mxu0 %v724
    %3652 = vmatpush1.bf16.msra.mxu0 %v723
    %3653 = vmatprep.subr.bf16.mxu0 %v716
    %3654 = vmatpush1.bf16.msra.mxu0 %v715
    %3655 = vmatprep.subr.bf16.mxu0 %v708
    %3656 = vmatpush1.bf16.msra.mxu0 %v707
    %3657 = vmatprep.subr.bf16.mxu0 %v828
    %3658 = vmatpush2.bf16.msra.mxu0 %v827
    %3659 = vmatprep.subr.bf16.mxu0 %v820
    %3660 = vmatpush2.bf16.msra.mxu0 %v819
    %3661 = vmatprep.subr.bf16.mxu0 %v812
    %3662 = vmatpush2.bf16.msra.mxu0 %v811
    %3663 = vmatprep.subr.bf16.mxu0 %v804
    %3664 = vmatpush2.bf16.msra.mxu0 %v803
    %3665 = vmatprep.subr.bf16.mxu0 %v796
    %3666 = vmatpush2.bf16.msra.mxu0 %v795
    %3667 = vmatprep.subr.bf16.mxu0 %v788
    %3668 = vmatpush2.bf16.msra.mxu0 %v787
    %3669 = vmatprep.subr.bf16.mxu0 %v780
    %3670 = vmatpush2.bf16.msra.mxu0 %v779
    %3671 = vmatprep.subr.bf16.mxu0 %v772
    %3672 = vmatpush2.bf16.msra.mxu0 %v771
    %3673 = vmatprep.mubr.bf16.mxu0 %v3515
    %3674 = vmatmul.mubr.bf16.gmra.mxu0 %v3514
    %v3675 = vpop.f32.mrf.mxu0
    %v3676 = vadd.f32 0.0, %v3675
    %v3677 = vpop.f32.mrf.mxu0
    %v3678 = vadd.f32 0.0, %v3677
    %v3679 = vpop.f32.mrf.mxu0
    %v3680 = vpop.f32.mrf.mxu0
    %3681 = vdwg.mxu0
    %v3690 = vrot.slane %v3553, 4
    %v3691 = vrot.slane %v3555, 4
    %v3692 = vrot.slane %v3594, 4
    %v3693 = vrot.slane %v3596, 4
    %v3694 = vrot.slane %v3635, 4
    %v3695 = vrot.slane %v3637, 4
    %v3696 = vrot.slane %v3676, 4
    %v3697 = vrot.slane %v3678, 4
    %v3698 = vrot.slane %v3553, 5
    %v3699 = vrot.slane %v3555, 5
    %v3700 = vrot.slane %v3594, 5
    %v3701 = vrot.slane %v3596, 5
    %v3702 = vrot.slane %v3635, 5
    %v3703 = vrot.slane %v3637, 5
    %v3704 = vrot.slane %v3676, 5
    %v3705 = vrot.slane %v3678, 5
    %v3722 = vadd.f32 %v3480, %v3690
    %v3723 = vadd.f32 %v3481, %v3691
    %v3724 = vadd.f32 %v3482, %v3692
    %v3725 = vadd.f32 %v3483, %v3693
    %v3726 = vadd.f32 %v3484, %v3694
    %v3727 = vadd.f32 %v3485, %v3695
    %v3728 = vadd.f32 %v3486, %v3696
    %v3729 = vadd.f32 %v3487, %v3697
    %v3730 = vadd.f32 %v3488, %v3698
    %v3731 = vadd.f32 %v3489, %v3699
    %v3732 = vadd.f32 %v3490, %v3700
    %v3733 = vadd.f32 %v3491, %v3701
    %v3734 = vadd.f32 %v3492, %v3702
    %v3735 = vadd.f32 %v3493, %v3703
    %v3736 = vadd.f32 %v3494, %v3704
    %v3737 = vadd.f32 %v3495, %v3705
    %v3738 = vxor.u32 %v3722, 2147483648
    %v3739 = vxor.u32 %v3723, 2147483648
    %v3740 = vxor.u32 %v3730, 2147483648
    %v3741 = vxor.u32 %v3731, 2147483648
    %v3742 = vmul.f32 %v3738, 1.442695
    %v3743 = vpow.pop %v3742
    %v3744 = vmul.f32 %v3739, 1.442695
    %v3745 = vpow.pop %v3744
    %v3746 = vmul.f32 %v3740, 1.442695
    %v3747 = vpow.pop %v3746
    %v3748 = vmul.f32 %v3741, 1.442695
    %v3749 = vpow.pop %v3748
    %v3750 = vadd.f32 %v3743, 1.0
    %v3751 = vadd.f32 %v3745, 1.0
    %v3752 = vadd.f32 %v3747, 1.0
    %v3753 = vadd.f32 %v3749, 1.0
    %v3754 = vrcp.pop %v3750
    %v3755 = vmul.f32 1.0, %v3754
    %v3756 = vrcp.pop %v3751
    %v3757 = vmul.f32 1.0, %v3756
    %v3758 = vrcp.pop %v3752
    %v3759 = vmul.f32 1.0, %v3758
    %v3760 = vrcp.pop %v3753
    %v3761 = vmul.f32 1.0, %v3760
    %v3762 = vxor.u32 %v3724, 2147483648
    %v3763 = vxor.u32 %v3725, 2147483648
    %v3764 = vxor.u32 %v3732, 2147483648
    %v3765 = vxor.u32 %v3733, 2147483648
    %v3766 = vmul.f32 %v3762, 1.442695
    %v3767 = vpow.pop %v3766
    %v3768 = vmul.f32 %v3763, 1.442695
    %v3769 = vpow.pop %v3768
    %v3770 = vmul.f32 %v3764, 1.442695
    %v3771 = vpow.pop %v3770
    %v3772 = vmul.f32 %v3765, 1.442695
    %v3773 = vpow.pop %v3772
    %v3774 = vadd.f32 %v3767, 1.0
    %v3775 = vadd.f32 %v3769, 1.0
    %v3776 = vadd.f32 %v3771, 1.0
    %v3777 = vadd.f32 %v3773, 1.0
    %v3778 = vrcp.pop %v3774
    %v3779 = vmul.f32 1.0, %v3778
    %v3780 = vrcp.pop %v3775
    %v3781 = vmul.f32 1.0, %v3780
    %v3782 = vrcp.pop %v3776
    %v3783 = vmul.f32 1.0, %v3782
    %v3784 = vrcp.pop %v3777
    %v3785 = vmul.f32 1.0, %v3784
    %v3786 = vtanh.pop %v3726
    %v3787 = vtanh.pop %v3727
    %v3788 = vtanh.pop %v3734
    %v3789 = vtanh.pop %v3735
    %v3790 = vxor.u32 %v3728, 2147483648
    %v3791 = vxor.u32 %v3729, 2147483648
    %v3792 = vxor.u32 %v3736, 2147483648
    %v3793 = vxor.u32 %v3737, 2147483648
    %v3794 = vmul.f32 %v3790, 1.442695
    %v3795 = vpow.pop %v3794
    %v3796 = vmul.f32 %v3791, 1.442695
    %v3797 = vpow.pop %v3796
    %v3798 = vmul.f32 %v3792, 1.442695
    %v3799 = vpow.pop %v3798
    %v3800 = vmul.f32 %v3793, 1.442695
    %v3801 = vpow.pop %v3800
    %v3802 = vadd.f32 %v3795, 1.0
    %v3803 = vadd.f32 %v3797, 1.0
    %v3804 = vadd.f32 %v3799, 1.0
    %v3805 = vadd.f32 %v3801, 1.0
    %v3806 = vrcp.pop %v3802
    %v3807 = vmul.f32 1.0, %v3806
    %v3808 = vrcp.pop %v3803
    %v3809 = vmul.f32 1.0, %v3808
    %v3810 = vrcp.pop %v3804
    %v3811 = vmul.f32 1.0, %v3810
    %v3812 = vrcp.pop %v3805
    %v3813 = vmul.f32 1.0, %v3812
    %v3818 = vrot.slane %v3231, 7
    %v3819 = vrot.slane %v3232, 7
    %v3820 = vrot.slane %v3233, 7
    %v3821 = vrot.slane %v3234, 7
    %v3826 = vmul.f32 %v3779, %v3818
    %v3827 = vmul.f32 %v3781, %v3819
    %v3828 = vmul.f32 %v3783, %v3820
    %v3829 = vmul.f32 %v3785, %v3821
    %v3830 = vmul.f32 %v3755, %v3786
    %v3831 = vmul.f32 %v3757, %v3787
    %v3832 = vmul.f32 %v3759, %v3788
    %v3833 = vmul.f32 %v3761, %v3789
    %v3834 = vadd.f32 %v3826, %v3830
    %v3835 = vadd.f32 %v3827, %v3831
    %v3836 = vadd.f32 %v3828, %v3832
    %v3837 = vadd.f32 %v3829, %v3833
    %v3838 = vtanh.pop %v3834
    %v3839 = vtanh.pop %v3835
    %v3840 = vtanh.pop %v3836
    %v3841 = vtanh.pop %v3837
    %v3842 = vmul.f32 %v3807, %v3838
    %v3843 = vmul.f32 %v3809, %v3839
    %v3844 = vmul.f32 %v3811, %v3840
    %v3845 = vmul.f32 %v3813, %v3841
    %v3850 = vrot.slane %v3844, 7
    %vm3851 = vcmask 1045509
    %v3852 = vsel %vm3851, %v3850, %v3842
    %v3853 = vrot.slane %v3845, 7
    %v3854 = vsel %vm3851, %v3853, %v3843
    %vm3857 = vcmask 1045508
    %v3858 = vsel %vm3857, %v3852, 0.0
    %v3859 = vsel %vm3857, %v3854, 0.0
    %v3860 = vadd.f32 %v3858, %v3859
    %3861 = vadd.xlane.f32.xlu0 %v3860
    %v3862 = vpop.xlane.xlu0 %3861
    %v3863 = vmul.f32 %v3862, %v1297
    %v3865 = vrot.slane %v3863, 1
    %v3868 = vsub.f32 %v3842, %v3863
    %v3869 = vsub.f32 %v3843, %v3863
    %v3870 = vsub.f32 %v3844, %v3865
    %v3871 = vsub.f32 %v3845, %v3865
    %v3872 = vmul.f32 %v3868, %v3868
    %v3873 = vmul.f32 %v3869, %v3869
    %v3874 = vmul.f32 %v3870, %v3870
    %v3875 = vmul.f32 %v3871, %v3871
    %v3880 = vrot.slane %v3874, 7
    %v3881 = vsel %vm3851, %v3880, %v3872
    %v3882 = vrot.slane %v3875, 7
    %v3883 = vsel %vm3851, %v3882, %v3873
    %v3886 = vsel %vm3857, %v3881, 0.0
    %v3887 = vsel %vm3857, %v3883, 0.0
    %v3888 = vadd.f32 %v3886, %v3887
    %3889 = vadd.xlane.f32.xlu0 %v3888
    %v3890 = vpop.xlane.xlu0 %3889
    %v3891 = vmul.f32 %v3890, %v1297
    %v3892 = vadd.f32 %v3891, 1e-05
    %v3893 = vrsqrt.pop %v3892
    %v3895 = vrot.slane %v3893, 1
    %v3898 = vmul.f32 %v3868, %v3893
    %v3899 = vmul.f32 %v3869, %v3893
    %v3900 = vmul.f32 %v3870, %v3895
    %v3901 = vmul.f32 %v3871, %v3895
    %v3902 = vmul.f32 %v3898, %v1341
    %v3903 = vmul.f32 %v3899, %v1345
    %v3904 = vmul.f32 %v3900, %v1341
    %v3905 = vmul.f32 %v3901, %v1345
    %v3906 = vadd.f32 %v3902, %v1356
    %v3907 = vadd.f32 %v3903, %v1360
    %v3908 = vadd.f32 %v3904, %v1356
    %v3909 = vadd.f32 %v3905, %v1360
    %v3910 = vpack.c.bf16 %v3906, %v3906
    %v3911 = vpack.c.bf16 %v3907, %v3907
    %v3912 = vpack.c.bf16 %v3908, %v3908
    %v3913 = vpack.c.bf16 %v3909, %v3909
    %v3918 = vunpack.c.l.b16 %v3910
    %v3919 = vunpack.c.l.b16 %v3911
    %v3920 = vunpack.c.l.b16 %v3912
    %v3921 = vunpack.c.l.b16 %v3913
    %v3922 = vrot.slane %v3918, 4
    %v3923 = vrot.slane %v3920, 3
    %v3924 = vsel %vm1285, %v3923, %v3922
    %v3925 = vrot.slane %v3919, 4
    %v3926 = vrot.slane %v3921, 3
    %v3927 = vsel %vm1285, %v3926, %v3925
    %v3928 = vpack.c.b16 %v3924, %v3924
    %v3929 = vpack.c.b16 %v3927, %v3927
    %3932 = vmatprep.subr.bf16.mxu0 0
    %3933 = vmatpush1.bf16.msra.mxu0 %v1464
    %3934 = vmatprep.subr.bf16.mxu0 0
    %3935 = vmatpush1.bf16.msra.mxu0 %v1463
    %3936 = vmatprep.subr.bf16.mxu0 0
    %3937 = vmatpush1.bf16.msra.mxu0 %v1462
    %3938 = vmatprep.subr.bf16.mxu0 0
    %3939 = vmatpush1.bf16.msra.mxu0 %v1461
    %3940 = vmatprep.subr.bf16.mxu0 0
    %3941 = vmatpush1.bf16.msra.mxu0 %v1460
    %3942 = vmatprep.subr.bf16.mxu0 0
    %3943 = vmatpush1.bf16.msra.mxu0 %v1459
    %3944 = vmatprep.subr.bf16.mxu0 0
    %3945 = vmatpush1.bf16.msra.mxu0 %v1458
    %3946 = vmatprep.subr.bf16.mxu0 0
    %3947 = vmatpush1.bf16.msra.mxu0 %v1457
    %3948 = vmatprep.subr.bf16.mxu0 0
    %3949 = vmatpush2.bf16.msra.mxu0 %v1472
    %3950 = vmatprep.subr.bf16.mxu0 0
    %3951 = vmatpush2.bf16.msra.mxu0 %v1471
    %3952 = vmatprep.subr.bf16.mxu0 0
    %3953 = vmatpush2.bf16.msra.mxu0 %v1470
    %3954 = vmatprep.subr.bf16.mxu0 0
    %3955 = vmatpush2.bf16.msra.mxu0 %v1469
    %3956 = vmatprep.subr.bf16.mxu0 0
    %3957 = vmatpush2.bf16.msra.mxu0 %v1468
    %3958 = vmatprep.subr.bf16.mxu0 0
    %3959 = vmatpush2.bf16.msra.mxu0 %v1467
    %3960 = vmatprep.subr.bf16.mxu0 0
    %3961 = vmatpush2.bf16.msra.mxu0 %v1466
    %3962 = vmatprep.subr.bf16.mxu0 0
    %3963 = vmatpush2.bf16.msra.mxu0 %v1465
    %3964 = vmatprep.mubr.bf16.mxu0 %v3929
    %3965 = vmatmul.mubr.bf16.gmra.mxu0 %v3928
    %v3966 = vpop.f32.mrf.mxu0
    %v3967 = vadd.f32 %v1375, %v3966
    %v3968 = vpop.f32.mrf.mxu0
    %v3969 = vpop.f32.mrf.mxu0
    %v3970 = vpop.f32.mrf.mxu0
    %3971 = vdwg.mxu0
    %v3972 = vsel %vm1529, %v3967, 0.0
    %3973 = vadd.xlane.f32.xlu0 %v3972
    %v3974 = vpop.xlane.xlu0 %3973
    %v3975 = vmul.f32 %v3974, %v1533
    %v3976 = vsub.f32 %v3967, %v3975
    %v3977 = vmul.f32 %v3976, %v3976
    %v3978 = vsel %vm1529, %v3977, 0.0
    %3979 = vadd.xlane.f32.xlu0 %v3978
    %v3980 = vpop.xlane.xlu0 %3979
    %v3981 = vmul.f32 %v3980, %v1533
    %v3982 = vadd.f32 %v3981, 1e-05
    %v3983 = vrsqrt.pop %v3982
    %v3984 = vmul.f32 %v3976, %v3983
    %v3985 = vmul.f32 %v3984, %v1548
    %v3986 = vadd.f32 %v3985, %v1555
    %v3987 = vmax.f32 %v3986, 0.0
    %v3988 = vpack.c.bf16 %v3987, %v3987
    %v3990 = vsel %vm1590, %v3988, 0
    %3992 = vmatprep.subr.bf16.mxu0 0
    %3993 = vmatpush1.bf16.msra.mxu0 0
    %3994 = vmatprep.subr.bf16.mxu0 0
    %3995 = vmatpush1.bf16.msra.mxu0 0
    %3996 = vmatprep.subr.bf16.mxu0 0
    %3997 = vmatpush1.bf16.msra.mxu0 0
    %3998 = vmatprep.subr.bf16.mxu0 0
    %3999 = vmatpush1.bf16.msra.mxu0 0
    %4000 = vmatprep.subr.bf16.mxu0 0
    %4001 = vmatpush1.bf16.msra.mxu0 %v1585
    %4002 = vmatprep.subr.bf16.mxu0 0
    %4003 = vmatpush1.bf16.msra.mxu0 %v1584
    %4004 = vmatprep.subr.bf16.mxu0 0
    %4005 = vmatpush1.bf16.msra.mxu0 %v1583
    %4006 = vmatprep.subr.bf16.mxu0 0
    %4007 = vmatpush1.bf16.msra.mxu0 %v1582
    %4008 = vmatprep.subr.bf16.mxu0 0
    %4009 = vmatpush2.bf16.msra.mxu0 0
    %4010 = vmatprep.subr.bf16.mxu0 0
    %4011 = vmatpush2.bf16.msra.mxu0 0
    %4012 = vmatprep.subr.bf16.mxu0 0
    %4013 = vmatpush2.bf16.msra.mxu0 0
    %4014 = vmatprep.subr.bf16.mxu0 0
    %4015 = vmatpush2.bf16.msra.mxu0 0
    %4016 = vmatprep.subr.bf16.mxu0 0
    %4017 = vmatpush2.bf16.msra.mxu0 0
    %4018 = vmatprep.subr.bf16.mxu0 0
    %4019 = vmatpush2.bf16.msra.mxu0 0
    %4020 = vmatprep.subr.bf16.mxu0 0
    %4021 = vmatpush2.bf16.msra.mxu0 0
    %4022 = vmatprep.subr.bf16.mxu0 0
    %4023 = vmatpush2.bf16.msra.mxu0 0
    %4024 = vmatprep.mubr.bf16.mxu0 0
    %4025 = vmatmul.mubr.bf16.gmra.mxu0 %v3990
    %v4026 = vpop.f32.mrf.mxu0
    %v4027 = vadd.f32 %v1564, %v4026
    %v4028 = vpop.f32.mrf.mxu0
    %v4029 = vpop.f32.mrf.mxu0
    %v4030 = vpop.f32.mrf.mxu0
    %4031 = vdwg.mxu0
    %v4034 = vunpack.c.l.s4 1966171168
    %v4035 = vunpack.c.0.s8 %v4034
    %v4036 = vlaneseq
    %v4037 = vshrl.u32 %v4036, 7
    %v4038 = vsub.s32 %v4035, %v4037
    %v4039 = vrot.slane %v4027, %v4038
    %v4040 = vcombine.high %v4039, %v4039
    %v4042 = vunpack.c.l.s4 1966171168
    %v4043 = vunpack.c.0.s8 %v4042
    %v4044 = vlaneseq
    %v4045 = vshrl.u32 %v4044, 7
    %v4046 = vsub.s32 %v4043, %v4045
    %v4047 = vrot.slane %v4039, %v4046
    %v4049 = vunpack.c.l.s4 1966171168
    %v4050 = vunpack.c.0.s8 %v4049
    %v4051 = vlaneseq
    %v4052 = vshrl.u32 %v4051, 7
    %v4053 = vsub.s32 %v4050, %v4052
    %v4054 = vrot.slane %v4040, %v4053
    %4057 = vst [vmem:[#allocation4 + $0x4] sm:$0x1] %v4047
    %4058 = vst [vmem:[#allocation4 + $0xc] sm:$0x1] %v4054
    %v4059 = vld [vmem:[%s0] sm:$0x44]
    %v4060 = vld [vmem:[%s0 + $0x8] sm:$0x44]
    %v4061 = vld [vmem:[%s0 + $0x10] sm:$0x44]
    %v4062 = vld [vmem:[%s0 + $0x18] sm:$0x44]
    %v4063 = vld [vmem:[%s0 + $0x20] sm:$0x44]
    %v4064 = vld [vmem:[%s0 + $0x28] sm:$0x44]
    %v4065 = vld [vmem:[%s0 + $0x30] sm:$0x44]
    %v4066 = vld [vmem:[%s0 + $0x38] sm:$0x44]
    %v4067 = vunpack.c.l.bf16 %v4059
    %v4068 = vunpack.c.h.bf16 %v4059
    %v4069 = vunpack.c.l.bf16 %v4060
    %v4070 = vunpack.c.h.bf16 %v4060
    %v4071 = vunpack.c.l.bf16 %v4061
    %v4072 = vunpack.c.h.bf16 %v4061
    %v4073 = vunpack.c.l.bf16 %v4062
    %v4074 = vunpack.c.h.bf16 %v4062
    %v4075 = vunpack.c.l.bf16 %v4063
    %v4076 = vunpack.c.h.bf16 %v4063
    %v4077 = vunpack.c.l.bf16 %v4064
    %v4078 = vunpack.c.h.bf16 %v4064
    %v4079 = vunpack.c.l.bf16 %v4065
    %v4080 = vunpack.c.h.bf16 %v4065
    %v4081 = vunpack.c.l.bf16 %v4066
    %v4082 = vunpack.c.h.bf16 %v4066
    %v4083 = vadd.f32 %v4067, %v251
    %v4084 = vadd.f32 %v4068, %v255
    %v4085 = vadd.f32 %v4069, %v259
    %v4086 = vadd.f32 %v4070, %v263
    %v4087 = vadd.f32 %v4071, %v267
    %v4088 = vadd.f32 %v4072, %v271
    %v4089 = vadd.f32 %v4073, %v275
    %v4090 = vadd.f32 %v4074, %v279
    %v4091 = vadd.f32 %v4075, %v251
    %v4092 = vadd.f32 %v4076, %v255
    %v4093 = vadd.f32 %v4077, %v259
    %v4094 = vadd.f32 %v4078, %v263
    %v4095 = vadd.f32 %v4079, %v267
    %v4096 = vadd.f32 %v4080, %v271
    %v4097 = vadd.f32 %v4081, %v275
    %v4098 = vadd.f32 %v4082, %v279
    %v4099 = vpack.c.bf16 %v3842, %v3842
    %v4100 = vpack.c.bf16 %v3843, %v3843
    %v4101 = vpack.c.bf16 %v3844, %v3844
    %v4102 = vpack.c.bf16 %v3845, %v3845
    %v4107 = vunpack.c.l.b16 %v4099
    %v4108 = vunpack.c.l.b16 %v4100
    %v4109 = vunpack.c.l.b16 %v4101
    %v4110 = vunpack.c.l.b16 %v4102
    %v4111 = vrot.slane %v4107, 4
    %v4112 = vrot.slane %v4109, 3
    %v4113 = vsel %vm1285, %v4112, %v4111
    %v4114 = vrot.slane %v4108, 4
    %v4115 = vrot.slane %v4110, 3
    %v4116 = vsel %vm1285, %v4115, %v4114
    %v4117 = vpack.c.b16 %v4113, %v4113
    %v4118 = vpack.c.b16 %v4116, %v4116
    %4121 = vmatprep.subr.bf16.mxu0 %v758
    %4122 = vmatpush1.bf16.msra.mxu0 %v757
    %4123 = vmatprep.subr.bf16.mxu0 %v750
    %4124 = vmatpush1.bf16.msra.mxu0 %v749
    %4125 = vmatprep.subr.bf16.mxu0 %v742
    %4126 = vmatpush1.bf16.msra.mxu0 %v741
    %4127 = vmatprep.subr.bf16.mxu0 %v734
    %4128 = vmatpush1.bf16.msra.mxu0 %v733
    %4129 = vmatprep.subr.bf16.mxu0 %v726
    %4130 = vmatpush1.bf16.msra.mxu0 %v725
    %4131 = vmatprep.subr.bf16.mxu0 %v718
    %4132 = vmatpush1.bf16.msra.mxu0 %v717
    %4133 = vmatprep.subr.bf16.mxu0 %v710
    %4134 = vmatpush1.bf16.msra.mxu0 %v709
    %4135 = vmatprep.subr.bf16.mxu0 %v702
    %4136 = vmatpush1.bf16.msra.mxu0 %v701
    %4137 = vmatprep.subr.bf16.mxu0 %v822
    %4138 = vmatpush2.bf16.msra.mxu0 %v821
    %4139 = vmatprep.subr.bf16.mxu0 %v814
    %4140 = vmatpush2.bf16.msra.mxu0 %v813
    %4141 = vmatprep.subr.bf16.mxu0 %v806
    %4142 = vmatpush2.bf16.msra.mxu0 %v805
    %4143 = vmatprep.subr.bf16.mxu0 %v798
    %4144 = vmatpush2.bf16.msra.mxu0 %v797
    %4145 = vmatprep.subr.bf16.mxu0 %v790
    %4146 = vmatpush2.bf16.msra.mxu0 %v789
    %4147 = vmatprep.subr.bf16.mxu0 %v782
    %4148 = vmatpush2.bf16.msra.mxu0 %v781
    %4149 = vmatprep.subr.bf16.mxu0 %v774
    %4150 = vmatpush2.bf16.msra.mxu0 %v773
    %4151 = vmatprep.subr.bf16.mxu0 %v766
    %4152 = vmatpush2.bf16.msra.mxu0 %v765
    %4153 = vmatprep.mubr.bf16.mxu0 %v4118
    %4154 = vmatmul.mubr.bf16.gmra.mxu0 %v4117
    %v4155 = vpop.f32.mrf.mxu0
    %v4156 = vadd.f32 0.0, %v4155
    %v4157 = vpop.f32.mrf.mxu0
    %v4158 = vadd.f32 0.0, %v4157
    %v4159 = vpop.f32.mrf.mxu0
    %v4160 = vpop.f32.mrf.mxu0
    %4161 = vdwg.mxu0
    %4162 = vmatprep.subr.bf16.mxu0 %v760
    %4163 = vmatpush1.bf16.msra.mxu0 %v759
    %4164 = vmatprep.subr.bf16.mxu0 %v752
    %4165 = vmatpush1.bf16.msra.mxu0 %v751
    %4166 = vmatprep.subr.bf16.mxu0 %v744
    %4167 = vmatpush1.bf16.msra.mxu0 %v743
    %4168 = vmatprep.subr.bf16.mxu0 %v736
    %4169 = vmatpush1.bf16.msra.mxu0 %v735
    %4170 = vmatprep.subr.bf16.mxu0 %v728
    %4171 = vmatpush1.bf16.msra.mxu0 %v727
    %4172 = vmatprep.subr.bf16.mxu0 %v720
    %4173 = vmatpush1.bf16.msra.mxu0 %v719
    %4174 = vmatprep.subr.bf16.mxu0 %v712
    %4175 = vmatpush1.bf16.msra.mxu0 %v711
    %4176 = vmatprep.subr.bf16.mxu0 %v704
    %4177 = vmatpush1.bf16.msra.mxu0 %v703
    %4178 = vmatprep.subr.bf16.mxu0 %v824
    %4179 = vmatpush2.bf16.msra.mxu0 %v823
    %4180 = vmatprep.subr.bf16.mxu0 %v816
    %4181 = vmatpush2.bf16.msra.mxu0 %v815
    %4182 = vmatprep.subr.bf16.mxu0 %v808
    %4183 = vmatpush2.bf16.msra.mxu0 %v807
    %4184 = vmatprep.subr.bf16.mxu0 %v800
    %4185 = vmatpush2.bf16.msra.mxu0 %v799
    %4186 = vmatprep.subr.bf16.mxu0 %v792
    %4187 = vmatpush2.bf16.msra.mxu0 %v791
    %4188 = vmatprep.subr.bf16.mxu0 %v784
    %4189 = vmatpush2.bf16.msra.mxu0 %v783
    %4190 = vmatprep.subr.bf16.mxu0 %v776
    %4191 = vmatpush2.bf16.msra.mxu0 %v775
    %4192 = vmatprep.subr.bf16.mxu0 %v768
    %4193 = vmatpush2.bf16.msra.mxu0 %v767
    %4194 = vmatprep.mubr.bf16.mxu0 %v4118
    %4195 = vmatmul.mubr.bf16.gmra.mxu0 %v4117
    %v4196 = vpop.f32.mrf.mxu0
    %v4197 = vadd.f32 0.0, %v4196
    %v4198 = vpop.f32.mrf.mxu0
    %v4199 = vadd.f32 0.0, %v4198
    %v4200 = vpop.f32.mrf.mxu0
    %v4201 = vpop.f32.mrf.mxu0
    %4202 = vdwg.mxu0
    %4203 = vmatprep.subr.bf16.mxu0 %v762
    %4204 = vmatpush1.bf16.msra.mxu0 %v761
    %4205 = vmatprep.subr.bf16.mxu0 %v754
    %4206 = vmatpush1.bf16.msra.mxu0 %v753
    %4207 = vmatprep.subr.bf16.mxu0 %v746
    %4208 = vmatpush1.bf16.msra.mxu0 %v745
    %4209 = vmatprep.subr.bf16.mxu0 %v738
    %4210 = vmatpush1.bf16.msra.mxu0 %v737
    %4211 = vmatprep.subr.bf16.mxu0 %v730
    %4212 = vmatpush1.bf16.msra.mxu0 %v729
    %4213 = vmatprep.subr.bf16.mxu0 %v722
    %4214 = vmatpush1.bf16.msra.mxu0 %v721
    %4215 = vmatprep.subr.bf16.mxu0 %v714
    %4216 = vmatpush1.bf16.msra.mxu0 %v713
    %4217 = vmatprep.subr.bf16.mxu0 %v706
    %4218 = vmatpush1.bf16.msra.mxu0 %v705
    %4219 = vmatprep.subr.bf16.mxu0 %v826
    %4220 = vmatpush2.bf16.msra.mxu0 %v825
    %4221 = vmatprep.subr.bf16.mxu0 %v818
    %4222 = vmatpush2.bf16.msra.mxu0 %v817
    %4223 = vmatprep.subr.bf16.mxu0 %v810
    %4224 = vmatpush2.bf16.msra.mxu0 %v809
    %4225 = vmatprep.subr.bf16.mxu0 %v802
    %4226 = vmatpush2.bf16.msra.mxu0 %v801
    %4227 = vmatprep.subr.bf16.mxu0 %v794
    %4228 = vmatpush2.bf16.msra.mxu0 %v793
    %4229 = vmatprep.subr.bf16.mxu0 %v786
    %4230 = vmatpush2.bf16.msra.mxu0 %v785
    %4231 = vmatprep.subr.bf16.mxu0 %v778
    %4232 = vmatpush2.bf16.msra.mxu0 %v777
    %4233 = vmatprep.subr.bf16.mxu0 %v770
    %4234 = vmatpush2.bf16.msra.mxu0 %v769
    %4235 = vmatprep.mubr.bf16.mxu0 %v4118
    %4236 = vmatmul.mubr.bf16.gmra.mxu0 %v4117
    %v4237 = vpop.f32.mrf.mxu0
    %v4238 = vadd.f32 0.0, %v4237
    %v4239 = vpop.f32.mrf.mxu0
    %v4240 = vadd.f32 0.0, %v4239
    %v4241 = vpop.f32.mrf.mxu0
    %v4242 = vpop.f32.mrf.mxu0
    %4243 = vdwg.mxu0
    %4244 = vmatprep.subr.bf16.mxu0 %v764
    %4245 = vmatpush1.bf16.msra.mxu0 %v763
    %4246 = vmatprep.subr.bf16.mxu0 %v756
    %4247 = vmatpush1.bf16.msra.mxu0 %v755
    %4248 = vmatprep.subr.bf16.mxu0 %v748
    %4249 = vmatpush1.bf16.msra.mxu0 %v747
    %4250 = vmatprep.subr.bf16.mxu0 %v740
    %4251 = vmatpush1.bf16.msra.mxu0 %v739
    %4252 = vmatprep.subr.bf16.mxu0 %v732
    %4253 = vmatpush1.bf16.msra.mxu0 %v731
    %4254 = vmatprep.subr.bf16.mxu0 %v724
    %4255 = vmatpush1.bf16.msra.mxu0 %v723
    %4256 = vmatprep.subr.bf16.mxu0 %v716
    %4257 = vmatpush1.bf16.msra.mxu0 %v715
    %4258 = vmatprep.subr.bf16.mxu0 %v708
    %4259 = vmatpush1.bf16.msra.mxu0 %v707
    %4260 = vmatprep.subr.bf16.mxu0 %v828
    %4261 = vmatpush2.bf16.msra.mxu0 %v827
    %4262 = vmatprep.subr.bf16.mxu0 %v820
    %4263 = vmatpush2.bf16.msra.mxu0 %v819
    %4264 = vmatprep.subr.bf16.mxu0 %v812
    %4265 = vmatpush2.bf16.msra.mxu0 %v811
    %4266 = vmatprep.subr.bf16.mxu0 %v804
    %4267 = vmatpush2.bf16.msra.mxu0 %v803
    %4268 = vmatprep.subr.bf16.mxu0 %v796
    %4269 = vmatpush2.bf16.msra.mxu0 %v795
    %4270 = vmatprep.subr.bf16.mxu0 %v788
    %4271 = vmatpush2.bf16.msra.mxu0 %v787
    %4272 = vmatprep.subr.bf16.mxu0 %v780
    %4273 = vmatpush2.bf16.msra.mxu0 %v779
    %4274 = vmatprep.subr.bf16.mxu0 %v772
    %4275 = vmatpush2.bf16.msra.mxu0 %v771
    %4276 = vmatprep.mubr.bf16.mxu0 %v4118
    %4277 = vmatmul.mubr.bf16.gmra.mxu0 %v4117
    %v4278 = vpop.f32.mrf.mxu0
    %v4279 = vadd.f32 0.0, %v4278
    %v4280 = vpop.f32.mrf.mxu0
    %v4281 = vadd.f32 0.0, %v4280
    %v4282 = vpop.f32.mrf.mxu0
    %v4283 = vpop.f32.mrf.mxu0
    %4284 = vdwg.mxu0
    %v4293 = vrot.slane %v4156, 3
    %v4294 = vrot.slane %v4158, 3
    %v4295 = vrot.slane %v4197, 3
    %v4296 = vrot.slane %v4199, 3
    %v4297 = vrot.slane %v4238, 3
    %v4298 = vrot.slane %v4240, 3
    %v4299 = vrot.slane %v4279, 3
    %v4300 = vrot.slane %v4281, 3
    %v4301 = vrot.slane %v4156, 4
    %v4302 = vrot.slane %v4158, 4
    %v4303 = vrot.slane %v4197, 4
    %v4304 = vrot.slane %v4199, 4
    %v4305 = vrot.slane %v4238, 4
    %v4306 = vrot.slane %v4240, 4
    %v4307 = vrot.slane %v4279, 4
    %v4308 = vrot.slane %v4281, 4
    %v4325 = vadd.f32 %v4083, %v4293
    %v4326 = vadd.f32 %v4084, %v4294
    %v4327 = vadd.f32 %v4085, %v4295
    %v4328 = vadd.f32 %v4086, %v4296
    %v4329 = vadd.f32 %v4087, %v4297
    %v4330 = vadd.f32 %v4088, %v4298
    %v4331 = vadd.f32 %v4089, %v4299
    %v4332 = vadd.f32 %v4090, %v4300
    %v4333 = vadd.f32 %v4091, %v4301
    %v4334 = vadd.f32 %v4092, %v4302
    %v4335 = vadd.f32 %v4093, %v4303
    %v4336 = vadd.f32 %v4094, %v4304
    %v4337 = vadd.f32 %v4095, %v4305
    %v4338 = vadd.f32 %v4096, %v4306
    %v4339 = vadd.f32 %v4097, %v4307
    %v4340 = vadd.f32 %v4098, %v4308
    %v4341 = vxor.u32 %v4325, 2147483648
    %v4342 = vxor.u32 %v4326, 2147483648
    %v4343 = vxor.u32 %v4333, 2147483648
    %v4344 = vxor.u32 %v4334, 2147483648
    %v4345 = vmul.f32 %v4341, 1.442695
    %v4346 = vpow.pop %v4345
    %v4347 = vmul.f32 %v4342, 1.442695
    %v4348 = vpow.pop %v4347
    %v4349 = vmul.f32 %v4343, 1.442695
    %v4350 = vpow.pop %v4349
    %v4351 = vmul.f32 %v4344, 1.442695
    %v4352 = vpow.pop %v4351
    %v4353 = vadd.f32 %v4346, 1.0
    %v4354 = vadd.f32 %v4348, 1.0
    %v4355 = vadd.f32 %v4350, 1.0
    %v4356 = vadd.f32 %v4352, 1.0
    %v4357 = vrcp.pop %v4353
    %v4358 = vmul.f32 1.0, %v4357
    %v4359 = vrcp.pop %v4354
    %v4360 = vmul.f32 1.0, %v4359
    %v4361 = vrcp.pop %v4355
    %v4362 = vmul.f32 1.0, %v4361
    %v4363 = vrcp.pop %v4356
    %v4364 = vmul.f32 1.0, %v4363
    %v4365 = vxor.u32 %v4327, 2147483648
    %v4366 = vxor.u32 %v4328, 2147483648
    %v4367 = vxor.u32 %v4335, 2147483648
    %v4368 = vxor.u32 %v4336, 2147483648
    %v4369 = vmul.f32 %v4365, 1.442695
    %v4370 = vpow.pop %v4369
    %v4371 = vmul.f32 %v4366, 1.442695
    %v4372 = vpow.pop %v4371
    %v4373 = vmul.f32 %v4367, 1.442695
    %v4374 = vpow.pop %v4373
    %v4375 = vmul.f32 %v4368, 1.442695
    %v4376 = vpow.pop %v4375
    %v4377 = vadd.f32 %v4370, 1.0
    %v4378 = vadd.f32 %v4372, 1.0
    %v4379 = vadd.f32 %v4374, 1.0
    %v4380 = vadd.f32 %v4376, 1.0
    %v4381 = vrcp.pop %v4377
    %v4382 = vmul.f32 1.0, %v4381
    %v4383 = vrcp.pop %v4378
    %v4384 = vmul.f32 1.0, %v4383
    %v4385 = vrcp.pop %v4379
    %v4386 = vmul.f32 1.0, %v4385
    %v4387 = vrcp.pop %v4380
    %v4388 = vmul.f32 1.0, %v4387
    %v4389 = vtanh.pop %v4329
    %v4390 = vtanh.pop %v4330
    %v4391 = vtanh.pop %v4337
    %v4392 = vtanh.pop %v4338
    %v4393 = vxor.u32 %v4331, 2147483648
    %v4394 = vxor.u32 %v4332, 2147483648
    %v4395 = vxor.u32 %v4339, 2147483648
    %v4396 = vxor.u32 %v4340, 2147483648
    %v4397 = vmul.f32 %v4393, 1.442695
    %v4398 = vpow.pop %v4397
    %v4399 = vmul.f32 %v4394, 1.442695
    %v4400 = vpow.pop %v4399
    %v4401 = vmul.f32 %v4395, 1.442695
    %v4402 = vpow.pop %v4401
    %v4403 = vmul.f32 %v4396, 1.442695
    %v4404 = vpow.pop %v4403
    %v4405 = vadd.f32 %v4398, 1.0
    %v4406 = vadd.f32 %v4400, 1.0
    %v4407 = vadd.f32 %v4402, 1.0
    %v4408 = vadd.f32 %v4404, 1.0
    %v4409 = vrcp.pop %v4405
    %v4410 = vmul.f32 1.0, %v4409
    %v4411 = vrcp.pop %v4406
    %v4412 = vmul.f32 1.0, %v4411
    %v4413 = vrcp.pop %v4407
    %v4414 = vmul.f32 1.0, %v4413
    %v4415 = vrcp.pop %v4408
    %v4416 = vmul.f32 1.0, %v4415
    %v4421 = vrot.slane %v3834, 7
    %v4422 = vrot.slane %v3835, 7
    %v4423 = vrot.slane %v3836, 7
    %v4424 = vrot.slane %v3837, 7
    %v4429 = vmul.f32 %v4382, %v4421
    %v4430 = vmul.f32 %v4384, %v4422
    %v4431 = vmul.f32 %v4386, %v4423
    %v4432 = vmul.f32 %v4388, %v4424
    %v4433 = vmul.f32 %v4358, %v4389
    %v4434 = vmul.f32 %v4360, %v4390
    %v4435 = vmul.f32 %v4362, %v4391
    %v4436 = vmul.f32 %v4364, %v4392
    %v4437 = vadd.f32 %v4429, %v4433
    %v4438 = vadd.f32 %v4430, %v4434
    %v4439 = vadd.f32 %v4431, %v4435
    %v4440 = vadd.f32 %v4432, %v4436
    %v4441 = vtanh.pop %v4437
    %v4442 = vtanh.pop %v4438
    %v4443 = vtanh.pop %v4439
    %v4444 = vtanh.pop %v4440
    %v4445 = vmul.f32 %v4410, %v4441
    %v4446 = vmul.f32 %v4412, %v4442
    %v4447 = vmul.f32 %v4414, %v4443
    %v4448 = vmul.f32 %v4416, %v4444
    %v4453 = vrot.slane %v4447, 7
    %vm4454 = vcmask 1046534
    %v4455 = vsel %vm4454, %v4453, %v4445
    %v4456 = vrot.slane %v4448, 7
    %v4457 = vsel %vm4454, %v4456, %v4446
    %vm4460 = vcmask 1046533
    %v4461 = vsel %vm4460, %v4455, 0.0
    %v4462 = vsel %vm4460, %v4457, 0.0
    %v4463 = vadd.f32 %v4461, %v4462
    %4464 = vadd.xlane.f32.xlu0 %v4463
    %v4465 = vpop.xlane.xlu0 %4464
    %v4466 = vmul.f32 %v4465, %v1297
    %v4468 = vrot.slane %v4466, 1
    %v4471 = vsub.f32 %v4445, %v4466
    %v4472 = vsub.f32 %v4446, %v4466
    %v4473 = vsub.f32 %v4447, %v4468
    %v4474 = vsub.f32 %v4448, %v4468
    %v4475 = vmul.f32 %v4471, %v4471
    %v4476 = vmul.f32 %v4472, %v4472
    %v4477 = vmul.f32 %v4473, %v4473
    %v4478 = vmul.f32 %v4474, %v4474
    %v4483 = vrot.slane %v4477, 7
    %v4484 = vsel %vm4454, %v4483, %v4475
    %v4485 = vrot.slane %v4478, 7
    %v4486 = vsel %vm4454, %v4485, %v4476
    %v4489 = vsel %vm4460, %v4484, 0.0
    %v4490 = vsel %vm4460, %v4486, 0.0
    %v4491 = vadd.f32 %v4489, %v4490
    %4492 = vadd.xlane.f32.xlu0 %v4491
    %v4493 = vpop.xlane.xlu0 %4492
    %v4494 = vmul.f32 %v4493, %v1297
    %v4495 = vadd.f32 %v4494, 1e-05
    %v4496 = vrsqrt.pop %v4495
    %v4498 = vrot.slane %v4496, 1
    %v4501 = vmul.f32 %v4471, %v4496
    %v4502 = vmul.f32 %v4472, %v4496
    %v4503 = vmul.f32 %v4473, %v4498
    %v4504 = vmul.f32 %v4474, %v4498
    %v4505 = vmul.f32 %v4501, %v1341
    %v4506 = vmul.f32 %v4502, %v1345
    %v4507 = vmul.f32 %v4503, %v1341
    %v4508 = vmul.f32 %v4504, %v1345
    %v4509 = vadd.f32 %v4505, %v1356
    %v4510 = vadd.f32 %v4506, %v1360
    %v4511 = vadd.f32 %v4507, %v1356
    %v4512 = vadd.f32 %v4508, %v1360
    %v4513 = vpack.c.bf16 %v4509, %v4509
    %v4514 = vpack.c.bf16 %v4510, %v4510
    %v4515 = vpack.c.bf16 %v4511, %v4511
    %v4516 = vpack.c.bf16 %v4512, %v4512
    %v4521 = vunpack.c.l.b16 %v4513
    %v4522 = vunpack.c.l.b16 %v4514
    %v4523 = vunpack.c.l.b16 %v4515
    %v4524 = vunpack.c.l.b16 %v4516
    %v4525 = vrot.slane %v4521, 5
    %v4526 = vrot.slane %v4523, 4
    %v4527 = vsel %vm1285, %v4526, %v4525
    %v4528 = vrot.slane %v4522, 5
    %v4529 = vrot.slane %v4524, 4
    %v4530 = vsel %vm1285, %v4529, %v4528
    %v4531 = vpack.c.b16 %v4527, %v4527
    %v4532 = vpack.c.b16 %v4530, %v4530
    %4535 = vmatprep.subr.bf16.mxu0 0
    %4536 = vmatpush1.bf16.msra.mxu0 %v1464
    %4537 = vmatprep.subr.bf16.mxu0 0
    %4538 = vmatpush1.bf16.msra.mxu0 %v1463
    %4539 = vmatprep.subr.bf16.mxu0 0
    %4540 = vmatpush1.bf16.msra.mxu0 %v1462
    %4541 = vmatprep.subr.bf16.mxu0 0
    %4542 = vmatpush1.bf16.msra.mxu0 %v1461
    %4543 = vmatprep.subr.bf16.mxu0 0
    %4544 = vmatpush1.bf16.msra.mxu0 %v1460
    %4545 = vmatprep.subr.bf16.mxu0 0
    %4546 = vmatpush1.bf16.msra.mxu0 %v1459
    %4547 = vmatprep.subr.bf16.mxu0 0
    %4548 = vmatpush1.bf16.msra.mxu0 %v1458
    %4549 = vmatprep.subr.bf16.mxu0 0
    %4550 = vmatpush1.bf16.msra.mxu0 %v1457
    %4551 = vmatprep.subr.bf16.mxu0 0
    %4552 = vmatpush2.bf16.msra.mxu0 %v1472
    %4553 = vmatprep.subr.bf16.mxu0 0
    %4554 = vmatpush2.bf16.msra.mxu0 %v1471
    %4555 = vmatprep.subr.bf16.mxu0 0
    %4556 = vmatpush2.bf16.msra.mxu0 %v1470
    %4557 = vmatprep.subr.bf16.mxu0 0
    %4558 = vmatpush2.bf16.msra.mxu0 %v1469
    %4559 = vmatprep.subr.bf16.mxu0 0
    %4560 = vmatpush2.bf16.msra.mxu0 %v1468
    %4561 = vmatprep.subr.bf16.mxu0 0
    %4562 = vmatpush2.bf16.msra.mxu0 %v1467
    %4563 = vmatprep.subr.bf16.mxu0 0
    %4564 = vmatpush2.bf16.msra.mxu0 %v1466
    %4565 = vmatprep.subr.bf16.mxu0 0
    %4566 = vmatpush2.bf16.msra.mxu0 %v1465
    %4567 = vmatprep.mubr.bf16.mxu0 %v4532
    %4568 = vmatmul.mubr.bf16.gmra.mxu0 %v4531
    %v4569 = vpop.f32.mrf.mxu0
    %v4570 = vadd.f32 %v1375, %v4569
    %v4571 = vpop.f32.mrf.mxu0
    %v4572 = vpop.f32.mrf.mxu0
    %v4573 = vpop.f32.mrf.mxu0
    %4574 = vdwg.mxu0
    %v4575 = vsel %vm1529, %v4570, 0.0
    %4576 = vadd.xlane.f32.xlu0 %v4575
    %v4577 = vpop.xlane.xlu0 %4576
    %v4578 = vmul.f32 %v4577, %v1533
    %v4579 = vsub.f32 %v4570, %v4578
    %v4580 = vmul.f32 %v4579, %v4579
    %v4581 = vsel %vm1529, %v4580, 0.0
    %4582 = vadd.xlane.f32.xlu0 %v4581
    %v4583 = vpop.xlane.xlu0 %4582
    %v4584 = vmul.f32 %v4583, %v1533
    %v4585 = vadd.f32 %v4584, 1e-05
    %v4586 = vrsqrt.pop %v4585
    %v4587 = vmul.f32 %v4579, %v4586
    %v4588 = vmul.f32 %v4587, %v1548
    %v4589 = vadd.f32 %v4588, %v1555
    %v4590 = vmax.f32 %v4589, 0.0
    %v4591 = vpack.c.bf16 %v4590, %v4590
    %v4593 = vsel %vm1590, %v4591, 0
    %4595 = vmatprep.subr.bf16.mxu0 0
    %4596 = vmatpush1.bf16.msra.mxu0 0
    %4597 = vmatprep.subr.bf16.mxu0 0
    %4598 = vmatpush1.bf16.msra.mxu0 0
    %4599 = vmatprep.subr.bf16.mxu0 0
    %4600 = vmatpush1.bf16.msra.mxu0 0
    %4601 = vmatprep.subr.bf16.mxu0 0
    %4602 = vmatpush1.bf16.msra.mxu0 0
    %4603 = vmatprep.subr.bf16.mxu0 0
    %4604 = vmatpush1.bf16.msra.mxu0 %v1585
    %4605 = vmatprep.subr.bf16.mxu0 0
    %4606 = vmatpush1.bf16.msra.mxu0 %v1584
    %4607 = vmatprep.subr.bf16.mxu0 0
    %4608 = vmatpush1.bf16.msra.mxu0 %v1583
    %4609 = vmatprep.subr.bf16.mxu0 0
    %4610 = vmatpush1.bf16.msra.mxu0 %v1582
    %4611 = vmatprep.subr.bf16.mxu0 0
    %4612 = vmatpush2.bf16.msra.mxu0 0
    %4613 = vmatprep.subr.bf16.mxu0 0
    %4614 = vmatpush2.bf16.msra.mxu0 0
    %4615 = vmatprep.subr.bf16.mxu0 0
    %4616 = vmatpush2.bf16.msra.mxu0 0
    %4617 = vmatprep.subr.bf16.mxu0 0
    %4618 = vmatpush2.bf16.msra.mxu0 0
    %4619 = vmatprep.subr.bf16.mxu0 0
    %4620 = vmatpush2.bf16.msra.mxu0 0
    %4621 = vmatprep.subr.bf16.mxu0 0
    %4622 = vmatpush2.bf16.msra.mxu0 0
    %4623 = vmatprep.subr.bf16.mxu0 0
    %4624 = vmatpush2.bf16.msra.mxu0 0
    %4625 = vmatprep.subr.bf16.mxu0 0
    %4626 = vmatpush2.bf16.msra.mxu0 0
    %4627 = vmatprep.mubr.bf16.mxu0 0
    %4628 = vmatmul.mubr.bf16.gmra.mxu0 %v4593
    %v4629 = vpop.f32.mrf.mxu0
    %v4630 = vadd.f32 %v1564, %v4629
    %v4631 = vpop.f32.mrf.mxu0
    %v4632 = vpop.f32.mrf.mxu0
    %v4633 = vpop.f32.mrf.mxu0
    %4634 = vdwg.mxu0
    %v4637 = vunpack.c.l.s4 1966171168
    %v4638 = vunpack.c.0.s8 %v4637
    %v4639 = vlaneseq
    %v4640 = vshrl.u32 %v4639, 7
    %v4641 = vsub.s32 %v4638, %v4640
    %v4642 = vrot.slane %v4630, %v4641
    %v4643 = vcombine.high %v4642, %v4642
    %v4645 = vunpack.c.l.s4 1966171168
    %v4646 = vunpack.c.0.s8 %v4645
    %v4647 = vlaneseq
    %v4648 = vshrl.u32 %v4647, 7
    %v4649 = vsub.s32 %v4646, %v4648
    %v4650 = vrot.slane %v4642, %v4649
    %v4652 = vunpack.c.l.s4 1966171168
    %v4653 = vunpack.c.0.s8 %v4652
    %v4654 = vlaneseq
    %v4655 = vshrl.u32 %v4654, 7
    %v4656 = vsub.s32 %v4653, %v4655
    %v4657 = vrot.slane %v4643, %v4656
    %4660 = vst [vmem:[#allocation4 + $0x5] sm:$0x1] %v4650
    %4661 = vst [vmem:[#allocation4 + $0xd] sm:$0x1] %v4657
    %v4662 = vld [vmem:[%s0] sm:$0x88]
    %v4663 = vld [vmem:[%s0 + $0x8] sm:$0x88]
    %v4664 = vld [vmem:[%s0 + $0x10] sm:$0x88]
    %v4665 = vld [vmem:[%s0 + $0x18] sm:$0x88]
    %v4666 = vld [vmem:[%s0 + $0x20] sm:$0x88]
    %v4667 = vld [vmem:[%s0 + $0x28] sm:$0x88]
    %v4668 = vld [vmem:[%s0 + $0x30] sm:$0x88]
    %v4669 = vld [vmem:[%s0 + $0x38] sm:$0x88]
    %v4670 = vunpack.c.l.bf16 %v4662
    %v4671 = vunpack.c.h.bf16 %v4662
    %v4672 = vunpack.c.l.bf16 %v4663
    %v4673 = vunpack.c.h.bf16 %v4663
    %v4674 = vunpack.c.l.bf16 %v4664
    %v4675 = vunpack.c.h.bf16 %v4664
    %v4676 = vunpack.c.l.bf16 %v4665
    %v4677 = vunpack.c.h.bf16 %v4665
    %v4678 = vunpack.c.l.bf16 %v4666
    %v4679 = vunpack.c.h.bf16 %v4666
    %v4680 = vunpack.c.l.bf16 %v4667
    %v4681 = vunpack.c.h.bf16 %v4667
    %v4682 = vunpack.c.l.bf16 %v4668
    %v4683 = vunpack.c.h.bf16 %v4668
    %v4684 = vunpack.c.l.bf16 %v4669
    %v4685 = vunpack.c.h.bf16 %v4669
    %v4686 = vadd.f32 %v4670, %v251
    %v4687 = vadd.f32 %v4671, %v255
    %v4688 = vadd.f32 %v4672, %v259
    %v4689 = vadd.f32 %v4673, %v263
    %v4690 = vadd.f32 %v4674, %v267
    %v4691 = vadd.f32 %v4675, %v271
    %v4692 = vadd.f32 %v4676, %v275
    %v4693 = vadd.f32 %v4677, %v279
    %v4694 = vadd.f32 %v4678, %v251
    %v4695 = vadd.f32 %v4679, %v255
    %v4696 = vadd.f32 %v4680, %v259
    %v4697 = vadd.f32 %v4681, %v263
    %v4698 = vadd.f32 %v4682, %v267
    %v4699 = vadd.f32 %v4683, %v271
    %v4700 = vadd.f32 %v4684, %v275
    %v4701 = vadd.f32 %v4685, %v279
    %v4702 = vpack.c.bf16 %v4445, %v4445
    %v4703 = vpack.c.bf16 %v4446, %v4446
    %v4704 = vpack.c.bf16 %v4447, %v4447
    %v4705 = vpack.c.bf16 %v4448, %v4448
    %v4710 = vunpack.c.l.b16 %v4702
    %v4711 = vunpack.c.l.b16 %v4703
    %v4712 = vunpack.c.l.b16 %v4704
    %v4713 = vunpack.c.l.b16 %v4705
    %v4714 = vrot.slane %v4710, 5
    %v4715 = vrot.slane %v4712, 4
    %v4716 = vsel %vm1285, %v4715, %v4714
    %v4717 = vrot.slane %v4711, 5
    %v4718 = vrot.slane %v4713, 4
    %v4719 = vsel %vm1285, %v4718, %v4717
    %v4720 = vpack.c.b16 %v4716, %v4716
    %v4721 = vpack.c.b16 %v4719, %v4719
    %4724 = vmatprep.subr.bf16.mxu0 %v758
    %4725 = vmatpush1.bf16.msra.mxu0 %v757
    %4726 = vmatprep.subr.bf16.mxu0 %v750
    %4727 = vmatpush1.bf16.msra.mxu0 %v749
    %4728 = vmatprep.subr.bf16.mxu0 %v742
    %4729 = vmatpush1.bf16.msra.mxu0 %v741
    %4730 = vmatprep.subr.bf16.mxu0 %v734
    %4731 = vmatpush1.bf16.msra.mxu0 %v733
    %4732 = vmatprep.subr.bf16.mxu0 %v726
    %4733 = vmatpush1.bf16.msra.mxu0 %v725
    %4734 = vmatprep.subr.bf16.mxu0 %v718
    %4735 = vmatpush1.bf16.msra.mxu0 %v717
    %4736 = vmatprep.subr.bf16.mxu0 %v710
    %4737 = vmatpush1.bf16.msra.mxu0 %v709
    %4738 = vmatprep.subr.bf16.mxu0 %v702
    %4739 = vmatpush1.bf16.msra.mxu0 %v701
    %4740 = vmatprep.subr.bf16.mxu0 %v822
    %4741 = vmatpush2.bf16.msra.mxu0 %v821
    %4742 = vmatprep.subr.bf16.mxu0 %v814
    %4743 = vmatpush2.bf16.msra.mxu0 %v813
    %4744 = vmatprep.subr.bf16.mxu0 %v806
    %4745 = vmatpush2.bf16.msra.mxu0 %v805
    %4746 = vmatprep.subr.bf16.mxu0 %v798
    %4747 = vmatpush2.bf16.msra.mxu0 %v797
    %4748 = vmatprep.subr.bf16.mxu0 %v790
    %4749 = vmatpush2.bf16.msra.mxu0 %v789
    %4750 = vmatprep.subr.bf16.mxu0 %v782
    %4751 = vmatpush2.bf16.msra.mxu0 %v781
    %4752 = vmatprep.subr.bf16.mxu0 %v774
    %4753 = vmatpush2.bf16.msra.mxu0 %v773
    %4754 = vmatprep.subr.bf16.mxu0 %v766
    %4755 = vmatpush2.bf16.msra.mxu0 %v765
    %4756 = vmatprep.mubr.bf16.mxu0 %v4721
    %4757 = vmatmul.mubr.bf16.gmra.mxu0 %v4720
    %v4758 = vpop.f32.mrf.mxu0
    %v4759 = vadd.f32 0.0, %v4758
    %v4760 = vpop.f32.mrf.mxu0
    %v4761 = vadd.f32 0.0, %v4760
    %v4762 = vpop.f32.mrf.mxu0
    %v4763 = vpop.f32.mrf.mxu0
    %4764 = vdwg.mxu0
    %4765 = vmatprep.subr.bf16.mxu0 %v760
    %4766 = vmatpush1.bf16.msra.mxu0 %v759
    %4767 = vmatprep.subr.bf16.mxu0 %v752
    %4768 = vmatpush1.bf16.msra.mxu0 %v751
    %4769 = vmatprep.subr.bf16.mxu0 %v744
    %4770 = vmatpush1.bf16.msra.mxu0 %v743
    %4771 = vmatprep.subr.bf16.mxu0 %v736
    %4772 = vmatpush1.bf16.msra.mxu0 %v735
    %4773 = vmatprep.subr.bf16.mxu0 %v728
    %4774 = vmatpush1.bf16.msra.mxu0 %v727
    %4775 = vmatprep.subr.bf16.mxu0 %v720
    %4776 = vmatpush1.bf16.msra.mxu0 %v719
    %4777 = vmatprep.subr.bf16.mxu0 %v712
    %4778 = vmatpush1.bf16.msra.mxu0 %v711
    %4779 = vmatprep.subr.bf16.mxu0 %v704
    %4780 = vmatpush1.bf16.msra.mxu0 %v703
    %4781 = vmatprep.subr.bf16.mxu0 %v824
    %4782 = vmatpush2.bf16.msra.mxu0 %v823
    %4783 = vmatprep.subr.bf16.mxu0 %v816
    %4784 = vmatpush2.bf16.msra.mxu0 %v815
    %4785 = vmatprep.subr.bf16.mxu0 %v808
    %4786 = vmatpush2.bf16.msra.mxu0 %v807
    %4787 = vmatprep.subr.bf16.mxu0 %v800
    %4788 = vmatpush2.bf16.msra.mxu0 %v799
    %4789 = vmatprep.subr.bf16.mxu0 %v792
    %4790 = vmatpush2.bf16.msra.mxu0 %v791
    %4791 = vmatprep.subr.bf16.mxu0 %v784
    %4792 = vmatpush2.bf16.msra.mxu0 %v783
    %4793 = vmatprep.subr.bf16.mxu0 %v776
    %4794 = vmatpush2.bf16.msra.mxu0 %v775
    %4795 = vmatprep.subr.bf16.mxu0 %v768
    %4796 = vmatpush2.bf16.msra.mxu0 %v767
    %4797 = vmatprep.mubr.bf16.mxu0 %v4721
    %4798 = vmatmul.mubr.bf16.gmra.mxu0 %v4720
    %v4799 = vpop.f32.mrf.mxu0
    %v4800 = vadd.f32 0.0, %v4799
    %v4801 = vpop.f32.mrf.mxu0
    %v4802 = vadd.f32 0.0, %v4801
    %v4803 = vpop.f32.mrf.mxu0
    %v4804 = vpop.f32.mrf.mxu0
    %4805 = vdwg.mxu0
    %4806 = vmatprep.subr.bf16.mxu0 %v762
    %4807 = vmatpush1.bf16.msra.mxu0 %v761
    %4808 = vmatprep.subr.bf16.mxu0 %v754
    %4809 = vmatpush1.bf16.msra.mxu0 %v753
    %4810 = vmatprep.subr.bf16.mxu0 %v746
    %4811 = vmatpush1.bf16.msra.mxu0 %v745
    %4812 = vmatprep.subr.bf16.mxu0 %v738
    %4813 = vmatpush1.bf16.msra.mxu0 %v737
    %4814 = vmatprep.subr.bf16.mxu0 %v730
    %4815 = vmatpush1.bf16.msra.mxu0 %v729
    %4816 = vmatprep.subr.bf16.mxu0 %v722
    %4817 = vmatpush1.bf16.msra.mxu0 %v721
    %4818 = vmatprep.subr.bf16.mxu0 %v714
    %4819 = vmatpush1.bf16.msra.mxu0 %v713
    %4820 = vmatprep.subr.bf16.mxu0 %v706
    %4821 = vmatpush1.bf16.msra.mxu0 %v705
    %4822 = vmatprep.subr.bf16.mxu0 %v826
    %4823 = vmatpush2.bf16.msra.mxu0 %v825
    %4824 = vmatprep.subr.bf16.mxu0 %v818
    %4825 = vmatpush2.bf16.msra.mxu0 %v817
    %4826 = vmatprep.subr.bf16.mxu0 %v810
    %4827 = vmatpush2.bf16.msra.mxu0 %v809
    %4828 = vmatprep.subr.bf16.mxu0 %v802
    %4829 = vmatpush2.bf16.msra.mxu0 %v801
    %4830 = vmatprep.subr.bf16.mxu0 %v794
    %4831 = vmatpush2.bf16.msra.mxu0 %v793
    %4832 = vmatprep.subr.bf16.mxu0 %v786
    %4833 = vmatpush2.bf16.msra.mxu0 %v785
    %4834 = vmatprep.subr.bf16.mxu0 %v778
    %4835 = vmatpush2.bf16.msra.mxu0 %v777
    %4836 = vmatprep.subr.bf16.mxu0 %v770
    %4837 = vmatpush2.bf16.msra.mxu0 %v769
    %4838 = vmatprep.mubr.bf16.mxu0 %v4721
    %4839 = vmatmul.mubr.bf16.gmra.mxu0 %v4720
    %v4840 = vpop.f32.mrf.mxu0
    %v4841 = vadd.f32 0.0, %v4840
    %v4842 = vpop.f32.mrf.mxu0
    %v4843 = vadd.f32 0.0, %v4842
    %v4844 = vpop.f32.mrf.mxu0
    %v4845 = vpop.f32.mrf.mxu0
    %4846 = vdwg.mxu0
    %4847 = vmatprep.subr.bf16.mxu0 %v764
    %4848 = vmatpush1.bf16.msra.mxu0 %v763
    %4849 = vmatprep.subr.bf16.mxu0 %v756
    %4850 = vmatpush1.bf16.msra.mxu0 %v755
    %4851 = vmatprep.subr.bf16.mxu0 %v748
    %4852 = vmatpush1.bf16.msra.mxu0 %v747
    %4853 = vmatprep.subr.bf16.mxu0 %v740
    %4854 = vmatpush1.bf16.msra.mxu0 %v739
    %4855 = vmatprep.subr.bf16.mxu0 %v732
    %4856 = vmatpush1.bf16.msra.mxu0 %v731
    %4857 = vmatprep.subr.bf16.mxu0 %v724
    %4858 = vmatpush1.bf16.msra.mxu0 %v723
    %4859 = vmatprep.subr.bf16.mxu0 %v716
    %4860 = vmatpush1.bf16.msra.mxu0 %v715
    %4861 = vmatprep.subr.bf16.mxu0 %v708
    %4862 = vmatpush1.bf16.msra.mxu0 %v707
    %4863 = vmatprep.subr.bf16.mxu0 %v828
    %4864 = vmatpush2.bf16.msra.mxu0 %v827
    %4865 = vmatprep.subr.bf16.mxu0 %v820
    %4866 = vmatpush2.bf16.msra.mxu0 %v819
    %4867 = vmatprep.subr.bf16.mxu0 %v812
    %4868 = vmatpush2.bf16.msra.mxu0 %v811
    %4869 = vmatprep.subr.bf16.mxu0 %v804
    %4870 = vmatpush2.bf16.msra.mxu0 %v803
    %4871 = vmatprep.subr.bf16.mxu0 %v796
    %4872 = vmatpush2.bf16.msra.mxu0 %v795
    %4873 = vmatprep.subr.bf16.mxu0 %v788
    %4874 = vmatpush2.bf16.msra.mxu0 %v787
    %4875 = vmatprep.subr.bf16.mxu0 %v780
    %4876 = vmatpush2.bf16.msra.mxu0 %v779
    %4877 = vmatprep.subr.bf16.mxu0 %v772
    %4878 = vmatpush2.bf16.msra.mxu0 %v771
    %4879 = vmatprep.mubr.bf16.mxu0 %v4721
    %4880 = vmatmul.mubr.bf16.gmra.mxu0 %v4720
    %v4881 = vpop.f32.mrf.mxu0
    %v4882 = vadd.f32 0.0, %v4881
    %v4883 = vpop.f32.mrf.mxu0
    %v4884 = vadd.f32 0.0, %v4883
    %v4885 = vpop.f32.mrf.mxu0
    %v4886 = vpop.f32.mrf.mxu0
    %4887 = vdwg.mxu0
    %v4896 = vrot.slane %v4759, 2
    %v4897 = vrot.slane %v4761, 2
    %v4898 = vrot.slane %v4800, 2
    %v4899 = vrot.slane %v4802, 2
    %v4900 = vrot.slane %v4841, 2
    %v4901 = vrot.slane %v4843, 2
    %v4902 = vrot.slane %v4882, 2
    %v4903 = vrot.slane %v4884, 2
    %v4904 = vrot.slane %v4759, 3
    %v4905 = vrot.slane %v4761, 3
    %v4906 = vrot.slane %v4800, 3
    %v4907 = vrot.slane %v4802, 3
    %v4908 = vrot.slane %v4841, 3
    %v4909 = vrot.slane %v4843, 3
    %v4910 = vrot.slane %v4882, 3
    %v4911 = vrot.slane %v4884, 3
    %v4928 = vadd.f32 %v4686, %v4896
    %v4929 = vadd.f32 %v4687, %v4897
    %v4930 = vadd.f32 %v4688, %v4898
    %v4931 = vadd.f32 %v4689, %v4899
    %v4932 = vadd.f32 %v4690, %v4900
    %v4933 = vadd.f32 %v4691, %v4901
    %v4934 = vadd.f32 %v4692, %v4902
    %v4935 = vadd.f32 %v4693, %v4903
    %v4936 = vadd.f32 %v4694, %v4904
    %v4937 = vadd.f32 %v4695, %v4905
    %v4938 = vadd.f32 %v4696, %v4906
    %v4939 = vadd.f32 %v4697, %v4907
    %v4940 = vadd.f32 %v4698, %v4908
    %v4941 = vadd.f32 %v4699, %v4909
    %v4942 = vadd.f32 %v4700, %v4910
    %v4943 = vadd.f32 %v4701, %v4911
    %v4944 = vxor.u32 %v4928, 2147483648
    %v4945 = vxor.u32 %v4929, 2147483648
    %v4946 = vxor.u32 %v4936, 2147483648
    %v4947 = vxor.u32 %v4937, 2147483648
    %v4948 = vmul.f32 %v4944, 1.442695
    %v4949 = vpow.pop %v4948
    %v4950 = vmul.f32 %v4945, 1.442695
    %v4951 = vpow.pop %v4950
    %v4952 = vmul.f32 %v4946, 1.442695
    %v4953 = vpow.pop %v4952
    %v4954 = vmul.f32 %v4947, 1.442695
    %v4955 = vpow.pop %v4954
    %v4956 = vadd.f32 %v4949, 1.0
    %v4957 = vadd.f32 %v4951, 1.0
    %v4958 = vadd.f32 %v4953, 1.0
    %v4959 = vadd.f32 %v4955, 1.0
    %v4960 = vrcp.pop %v4956
    %v4961 = vmul.f32 1.0, %v4960
    %v4962 = vrcp.pop %v4957
    %v4963 = vmul.f32 1.0, %v4962
    %v4964 = vrcp.pop %v4958
    %v4965 = vmul.f32 1.0, %v4964
    %v4966 = vrcp.pop %v4959
    %v4967 = vmul.f32 1.0, %v4966
    %v4968 = vxor.u32 %v4930, 2147483648
    %v4969 = vxor.u32 %v4931, 2147483648
    %v4970 = vxor.u32 %v4938, 2147483648
    %v4971 = vxor.u32 %v4939, 2147483648
    %v4972 = vmul.f32 %v4968, 1.442695
    %v4973 = vpow.pop %v4972
    %v4974 = vmul.f32 %v4969, 1.442695
    %v4975 = vpow.pop %v4974
    %v4976 = vmul.f32 %v4970, 1.442695
    %v4977 = vpow.pop %v4976
    %v4978 = vmul.f32 %v4971, 1.442695
    %v4979 = vpow.pop %v4978
    %v4980 = vadd.f32 %v4973, 1.0
    %v4981 = vadd.f32 %v4975, 1.0
    %v4982 = vadd.f32 %v4977, 1.0
    %v4983 = vadd.f32 %v4979, 1.0
    %v4984 = vrcp.pop %v4980
    %v4985 = vmul.f32 1.0, %v4984
    %v4986 = vrcp.pop %v4981
    %v4987 = vmul.f32 1.0, %v4986
    %v4988 = vrcp.pop %v4982
    %v4989 = vmul.f32 1.0, %v4988
    %v4990 = vrcp.pop %v4983
    %v4991 = vmul.f32 1.0, %v4990
    %v4992 = vtanh.pop %v4932
    %v4993 = vtanh.pop %v4933
    %v4994 = vtanh.pop %v4940
    %v4995 = vtanh.pop %v4941
    %v4996 = vxor.u32 %v4934, 2147483648
    %v4997 = vxor.u32 %v4935, 2147483648
    %v4998 = vxor.u32 %v4942, 2147483648
    %v4999 = vxor.u32 %v4943, 2147483648
    %v5000 = vmul.f32 %v4996, 1.442695
    %v5001 = vpow.pop %v5000
    %v5002 = vmul.f32 %v4997, 1.442695
    %v5003 = vpow.pop %v5002
    %v5004 = vmul.f32 %v4998, 1.442695
    %v5005 = vpow.pop %v5004
    %v5006 = vmul.f32 %v4999, 1.442695
    %v5007 = vpow.pop %v5006
    %v5008 = vadd.f32 %v5001, 1.0
    %v5009 = vadd.f32 %v5003, 1.0
    %v5010 = vadd.f32 %v5005, 1.0
    %v5011 = vadd.f32 %v5007, 1.0
    %v5012 = vrcp.pop %v5008
    %v5013 = vmul.f32 1.0, %v5012
    %v5014 = vrcp.pop %v5009
    %v5015 = vmul.f32 1.0, %v5014
    %v5016 = vrcp.pop %v5010
    %v5017 = vmul.f32 1.0, %v5016
    %v5018 = vrcp.pop %v5011
    %v5019 = vmul.f32 1.0, %v5018
    %v5024 = vrot.slane %v4437, 7
    %v5025 = vrot.slane %v4438, 7
    %v5026 = vrot.slane %v4439, 7
    %v5027 = vrot.slane %v4440, 7
    %v5032 = vmul.f32 %v4985, %v5024
    %v5033 = vmul.f32 %v4987, %v5025
    %v5034 = vmul.f32 %v4989, %v5026
    %v5035 = vmul.f32 %v4991, %v5027
    %v5036 = vmul.f32 %v4961, %v4992
    %v5037 = vmul.f32 %v4963, %v4993
    %v5038 = vmul.f32 %v4965, %v4994
    %v5039 = vmul.f32 %v4967, %v4995
    %v5040 = vadd.f32 %v5032, %v5036
    %v5041 = vadd.f32 %v5033, %v5037
    %v5042 = vadd.f32 %v5034, %v5038
    %v5043 = vadd.f32 %v5035, %v5039
    %v5044 = vtanh.pop %v5040
    %v5045 = vtanh.pop %v5041
    %v5046 = vtanh.pop %v5042
    %v5047 = vtanh.pop %v5043
    %v5048 = vmul.f32 %v5013, %v5044
    %v5049 = vmul.f32 %v5015, %v5045
    %v5050 = vmul.f32 %v5017, %v5046
    %v5051 = vmul.f32 %v5019, %v5047
    %v5056 = vrot.slane %v5050, 7
    %vm5057 = vcmask 1047559
    %v5058 = vsel %vm5057, %v5056, %v5048
    %v5059 = vrot.slane %v5051, 7
    %v5060 = vsel %vm5057, %v5059, %v5049
    %vm5063 = vcmask 1047558
    %v5064 = vsel %vm5063, %v5058, 0.0
    %v5065 = vsel %vm5063, %v5060, 0.0
    %v5066 = vadd.f32 %v5064, %v5065
    %5067 = vadd.xlane.f32.xlu0 %v5066
    %v5068 = vpop.xlane.xlu0 %5067
    %v5069 = vmul.f32 %v5068, %v1297
    %v5071 = vrot.slane %v5069, 1
    %v5074 = vsub.f32 %v5048, %v5069
    %v5075 = vsub.f32 %v5049, %v5069
    %v5076 = vsub.f32 %v5050, %v5071
    %v5077 = vsub.f32 %v5051, %v5071
    %v5078 = vmul.f32 %v5074, %v5074
    %v5079 = vmul.f32 %v5075, %v5075
    %v5080 = vmul.f32 %v5076, %v5076
    %v5081 = vmul.f32 %v5077, %v5077
    %v5086 = vrot.slane %v5080, 7
    %v5087 = vsel %vm5057, %v5086, %v5078
    %v5088 = vrot.slane %v5081, 7
    %v5089 = vsel %vm5057, %v5088, %v5079
    %v5092 = vsel %vm5063, %v5087, 0.0
    %v5093 = vsel %vm5063, %v5089, 0.0
    %v5094 = vadd.f32 %v5092, %v5093
    %5095 = vadd.xlane.f32.xlu0 %v5094
    %v5096 = vpop.xlane.xlu0 %5095
    %v5097 = vmul.f32 %v5096, %v1297
    %v5098 = vadd.f32 %v5097, 1e-05
    %v5099 = vrsqrt.pop %v5098
    %v5101 = vrot.slane %v5099, 1
    %v5104 = vmul.f32 %v5074, %v5099
    %v5105 = vmul.f32 %v5075, %v5099
    %v5106 = vmul.f32 %v5076, %v5101
    %v5107 = vmul.f32 %v5077, %v5101
    %v5108 = vmul.f32 %v5104, %v1341
    %v5109 = vmul.f32 %v5105, %v1345
    %v5110 = vmul.f32 %v5106, %v1341
    %v5111 = vmul.f32 %v5107, %v1345
    %v5112 = vadd.f32 %v5108, %v1356
    %v5113 = vadd.f32 %v5109, %v1360
    %v5114 = vadd.f32 %v5110, %v1356
    %v5115 = vadd.f32 %v5111, %v1360
    %v5116 = vpack.c.bf16 %v5112, %v5112
    %v5117 = vpack.c.bf16 %v5113, %v5113
    %v5118 = vpack.c.bf16 %v5114, %v5114
    %v5119 = vpack.c.bf16 %v5115, %v5115
    %v5124 = vunpack.c.l.b16 %v5116
    %v5125 = vunpack.c.l.b16 %v5117
    %v5126 = vunpack.c.l.b16 %v5118
    %v5127 = vunpack.c.l.b16 %v5119
    %v5128 = vrot.slane %v5124, 6
    %v5129 = vrot.slane %v5126, 5
    %v5130 = vsel %vm1285, %v5129, %v5128
    %v5131 = vrot.slane %v5125, 6
    %v5132 = vrot.slane %v5127, 5
    %v5133 = vsel %vm1285, %v5132, %v5131
    %v5134 = vpack.c.b16 %v5130, %v5130
    %v5135 = vpack.c.b16 %v5133, %v5133
    %5138 = vmatprep.subr.bf16.mxu0 0
    %5139 = vmatpush1.bf16.msra.mxu0 %v1464
    %5140 = vmatprep.subr.bf16.mxu0 0
    %5141 = vmatpush1.bf16.msra.mxu0 %v1463
    %5142 = vmatprep.subr.bf16.mxu0 0
    %5143 = vmatpush1.bf16.msra.mxu0 %v1462
    %5144 = vmatprep.subr.bf16.mxu0 0
    %5145 = vmatpush1.bf16.msra.mxu0 %v1461
    %5146 = vmatprep.subr.bf16.mxu0 0
    %5147 = vmatpush1.bf16.msra.mxu0 %v1460
    %5148 = vmatprep.subr.bf16.mxu0 0
    %5149 = vmatpush1.bf16.msra.mxu0 %v1459
    %5150 = vmatprep.subr.bf16.mxu0 0
    %5151 = vmatpush1.bf16.msra.mxu0 %v1458
    %5152 = vmatprep.subr.bf16.mxu0 0
    %5153 = vmatpush1.bf16.msra.mxu0 %v1457
    %5154 = vmatprep.subr.bf16.mxu0 0
    %5155 = vmatpush2.bf16.msra.mxu0 %v1472
    %5156 = vmatprep.subr.bf16.mxu0 0
    %5157 = vmatpush2.bf16.msra.mxu0 %v1471
    %5158 = vmatprep.subr.bf16.mxu0 0
    %5159 = vmatpush2.bf16.msra.mxu0 %v1470
    %5160 = vmatprep.subr.bf16.mxu0 0
    %5161 = vmatpush2.bf16.msra.mxu0 %v1469
    %5162 = vmatprep.subr.bf16.mxu0 0
    %5163 = vmatpush2.bf16.msra.mxu0 %v1468
    %5164 = vmatprep.subr.bf16.mxu0 0
    %5165 = vmatpush2.bf16.msra.mxu0 %v1467
    %5166 = vmatprep.subr.bf16.mxu0 0
    %5167 = vmatpush2.bf16.msra.mxu0 %v1466
    %5168 = vmatprep.subr.bf16.mxu0 0
    %5169 = vmatpush2.bf16.msra.mxu0 %v1465
    %5170 = vmatprep.mubr.bf16.mxu0 %v5135
    %5171 = vmatmul.mubr.bf16.gmra.mxu0 %v5134
    %v5172 = vpop.f32.mrf.mxu0
    %v5173 = vadd.f32 %v1375, %v5172
    %v5174 = vpop.f32.mrf.mxu0
    %v5175 = vpop.f32.mrf.mxu0
    %v5176 = vpop.f32.mrf.mxu0
    %5177 = vdwg.mxu0
    %v5178 = vsel %vm1529, %v5173, 0.0
    %5179 = vadd.xlane.f32.xlu0 %v5178
    %v5180 = vpop.xlane.xlu0 %5179
    %v5181 = vmul.f32 %v5180, %v1533
    %v5182 = vsub.f32 %v5173, %v5181
    %v5183 = vmul.f32 %v5182, %v5182
    %v5184 = vsel %vm1529, %v5183, 0.0
    %5185 = vadd.xlane.f32.xlu0 %v5184
    %v5186 = vpop.xlane.xlu0 %5185
    %v5187 = vmul.f32 %v5186, %v1533
    %v5188 = vadd.f32 %v5187, 1e-05
    %v5189 = vrsqrt.pop %v5188
    %v5190 = vmul.f32 %v5182, %v5189
    %v5191 = vmul.f32 %v5190, %v1548
    %v5192 = vadd.f32 %v5191, %v1555
    %v5193 = vmax.f32 %v5192, 0.0
    %v5194 = vpack.c.bf16 %v5193, %v5193
    %v5196 = vsel %vm1590, %v5194, 0
    %5198 = vmatprep.subr.bf16.mxu0 0
    %5199 = vmatpush1.bf16.msra.mxu0 0
    %5200 = vmatprep.subr.bf16.mxu0 0
    %5201 = vmatpush1.bf16.msra.mxu0 0
    %5202 = vmatprep.subr.bf16.mxu0 0
    %5203 = vmatpush1.bf16.msra.mxu0 0
    %5204 = vmatprep.subr.bf16.mxu0 0
    %5205 = vmatpush1.bf16.msra.mxu0 0
    %5206 = vmatprep.subr.bf16.mxu0 0
    %5207 = vmatpush1.bf16.msra.mxu0 %v1585
    %5208 = vmatprep.subr.bf16.mxu0 0
    %5209 = vmatpush1.bf16.msra.mxu0 %v1584
    %5210 = vmatprep.subr.bf16.mxu0 0
    %5211 = vmatpush1.bf16.msra.mxu0 %v1583
    %5212 = vmatprep.subr.bf16.mxu0 0
    %5213 = vmatpush1.bf16.msra.mxu0 %v1582
    %5214 = vmatprep.subr.bf16.mxu0 0
    %5215 = vmatpush2.bf16.msra.mxu0 0
    %5216 = vmatprep.subr.bf16.mxu0 0
    %5217 = vmatpush2.bf16.msra.mxu0 0
    %5218 = vmatprep.subr.bf16.mxu0 0
    %5219 = vmatpush2.bf16.msra.mxu0 0
    %5220 = vmatprep.subr.bf16.mxu0 0
    %5221 = vmatpush2.bf16.msra.mxu0 0
    %5222 = vmatprep.subr.bf16.mxu0 0
    %5223 = vmatpush2.bf16.msra.mxu0 0
    %5224 = vmatprep.subr.bf16.mxu0 0
    %5225 = vmatpush2.bf16.msra.mxu0 0
    %5226 = vmatprep.subr.bf16.mxu0 0
    %5227 = vmatpush2.bf16.msra.mxu0 0
    %5228 = vmatprep.subr.bf16.mxu0 0
    %5229 = vmatpush2.bf16.msra.mxu0 0
    %5230 = vmatprep.mubr.bf16.mxu0 0
    %5231 = vmatmul.mubr.bf16.gmra.mxu0 %v5196
    %v5232 = vpop.f32.mrf.mxu0
    %v5233 = vadd.f32 %v1564, %v5232
    %v5234 = vpop.f32.mrf.mxu0
    %v5235 = vpop.f32.mrf.mxu0
    %v5236 = vpop.f32.mrf.mxu0
    %5237 = vdwg.mxu0
    %v5240 = vunpack.c.l.s4 1966171168
    %v5241 = vunpack.c.0.s8 %v5240
    %v5242 = vlaneseq
    %v5243 = vshrl.u32 %v5242, 7
    %v5244 = vsub.s32 %v5241, %v5243
    %v5245 = vrot.slane %v5233, %v5244
    %v5246 = vcombine.high %v5245, %v5245
    %v5248 = vunpack.c.l.s4 1966171168
    %v5249 = vunpack.c.0.s8 %v5248
    %v5250 = vlaneseq
    %v5251 = vshrl.u32 %v5250, 7
    %v5252 = vsub.s32 %v5249, %v5251
    %v5253 = vrot.slane %v5245, %v5252
    %v5255 = vunpack.c.l.s4 1966171168
    %v5256 = vunpack.c.0.s8 %v5255
    %v5257 = vlaneseq
    %v5258 = vshrl.u32 %v5257, 7
    %v5259 = vsub.s32 %v5256, %v5258
    %v5260 = vrot.slane %v5246, %v5259
    %5263 = vst [vmem:[#allocation4 + $0x6] sm:$0x1] %v5253
    %5264 = vst [vmem:[#allocation4 + $0xe] sm:$0x1] %v5260
    %v5265 = vld [vmem:[%s0] sm:$0x88]
    %v5266 = vld [vmem:[%s0 + $0x8] sm:$0x88]
    %v5267 = vld [vmem:[%s0 + $0x10] sm:$0x88]
    %v5268 = vld [vmem:[%s0 + $0x18] sm:$0x88]
    %v5269 = vld [vmem:[%s0 + $0x20] sm:$0x88]
    %v5270 = vld [vmem:[%s0 + $0x28] sm:$0x88]
    %v5271 = vld [vmem:[%s0 + $0x30] sm:$0x88]
    %v5272 = vld [vmem:[%s0 + $0x38] sm:$0x88]
    %v5273 = vunpack.c.l.bf16 %v5265
    %v5274 = vunpack.c.h.bf16 %v5265
    %v5275 = vunpack.c.l.bf16 %v5266
    %v5276 = vunpack.c.h.bf16 %v5266
    %v5277 = vunpack.c.l.bf16 %v5267
    %v5278 = vunpack.c.h.bf16 %v5267
    %v5279 = vunpack.c.l.bf16 %v5268
    %v5280 = vunpack.c.h.bf16 %v5268
    %v5281 = vunpack.c.l.bf16 %v5269
    %v5282 = vunpack.c.h.bf16 %v5269
    %v5283 = vunpack.c.l.bf16 %v5270
    %v5284 = vunpack.c.h.bf16 %v5270
    %v5285 = vunpack.c.l.bf16 %v5271
    %v5286 = vunpack.c.h.bf16 %v5271
    %v5287 = vunpack.c.l.bf16 %v5272
    %v5288 = vunpack.c.h.bf16 %v5272
    %v5289 = vadd.f32 %v5273, %v251
    %v5290 = vadd.f32 %v5274, %v255
    %v5291 = vadd.f32 %v5275, %v259
    %v5292 = vadd.f32 %v5276, %v263
    %v5293 = vadd.f32 %v5277, %v267
    %v5294 = vadd.f32 %v5278, %v271
    %v5295 = vadd.f32 %v5279, %v275
    %v5296 = vadd.f32 %v5280, %v279
    %v5297 = vadd.f32 %v5281, %v251
    %v5298 = vadd.f32 %v5282, %v255
    %v5299 = vadd.f32 %v5283, %v259
    %v5300 = vadd.f32 %v5284, %v263
    %v5301 = vadd.f32 %v5285, %v267
    %v5302 = vadd.f32 %v5286, %v271
    %v5303 = vadd.f32 %v5287, %v275
    %v5304 = vadd.f32 %v5288, %v279
    %v5305 = vpack.c.bf16 %v5048, %v5048
    %v5306 = vpack.c.bf16 %v5049, %v5049
    %v5307 = vpack.c.bf16 %v5050, %v5050
    %v5308 = vpack.c.bf16 %v5051, %v5051
    %v5313 = vunpack.c.l.b16 %v5305
    %v5314 = vunpack.c.l.b16 %v5306
    %v5315 = vunpack.c.l.b16 %v5307
    %v5316 = vunpack.c.l.b16 %v5308
    %v5317 = vrot.slane %v5313, 6
    %v5318 = vrot.slane %v5315, 5
    %v5319 = vsel %vm1285, %v5318, %v5317
    %v5320 = vrot.slane %v5314, 6
    %v5321 = vrot.slane %v5316, 5
    %v5322 = vsel %vm1285, %v5321, %v5320
    %v5323 = vpack.c.b16 %v5319, %v5319
    %v5324 = vpack.c.b16 %v5322, %v5322
    %5327 = vmatprep.subr.bf16.mxu0 %v758
    %5328 = vmatpush1.bf16.msra.mxu0 %v757
    %5329 = vmatprep.subr.bf16.mxu0 %v750
    %5330 = vmatpush1.bf16.msra.mxu0 %v749
    %5331 = vmatprep.subr.bf16.mxu0 %v742
    %5332 = vmatpush1.bf16.msra.mxu0 %v741
    %5333 = vmatprep.subr.bf16.mxu0 %v734
    %5334 = vmatpush1.bf16.msra.mxu0 %v733
    %5335 = vmatprep.subr.bf16.mxu0 %v726
    %5336 = vmatpush1.bf16.msra.mxu0 %v725
    %5337 = vmatprep.subr.bf16.mxu0 %v718
    %5338 = vmatpush1.bf16.msra.mxu0 %v717
    %5339 = vmatprep.subr.bf16.mxu0 %v710
    %5340 = vmatpush1.bf16.msra.mxu0 %v709
    %5341 = vmatprep.subr.bf16.mxu0 %v702
    %5342 = vmatpush1.bf16.msra.mxu0 %v701
    %5343 = vmatprep.subr.bf16.mxu0 %v822
    %5344 = vmatpush2.bf16.msra.mxu0 %v821
    %5345 = vmatprep.subr.bf16.mxu0 %v814
    %5346 = vmatpush2.bf16.msra.mxu0 %v813
    %5347 = vmatprep.subr.bf16.mxu0 %v806
    %5348 = vmatpush2.bf16.msra.mxu0 %v805
    %5349 = vmatprep.subr.bf16.mxu0 %v798
    %5350 = vmatpush2.bf16.msra.mxu0 %v797
    %5351 = vmatprep.subr.bf16.mxu0 %v790
    %5352 = vmatpush2.bf16.msra.mxu0 %v789
    %5353 = vmatprep.subr.bf16.mxu0 %v782
    %5354 = vmatpush2.bf16.msra.mxu0 %v781
    %5355 = vmatprep.subr.bf16.mxu0 %v774
    %5356 = vmatpush2.bf16.msra.mxu0 %v773
    %5357 = vmatprep.subr.bf16.mxu0 %v766
    %5358 = vmatpush2.bf16.msra.mxu0 %v765
    %5359 = vmatprep.mubr.bf16.mxu0 %v5324
    %5360 = vmatmul.mubr.bf16.gmra.mxu0 %v5323
    %v5361 = vpop.f32.mrf.mxu0
    %v5362 = vadd.f32 0.0, %v5361
    %v5363 = vpop.f32.mrf.mxu0
    %v5364 = vadd.f32 0.0, %v5363
    %v5365 = vpop.f32.mrf.mxu0
    %v5366 = vpop.f32.mrf.mxu0
    %5367 = vdwg.mxu0
    %5368 = vmatprep.subr.bf16.mxu0 %v760
    %5369 = vmatpush1.bf16.msra.mxu0 %v759
    %5370 = vmatprep.subr.bf16.mxu0 %v752
    %5371 = vmatpush1.bf16.msra.mxu0 %v751
    %5372 = vmatprep.subr.bf16.mxu0 %v744
    %5373 = vmatpush1.bf16.msra.mxu0 %v743
    %5374 = vmatprep.subr.bf16.mxu0 %v736
    %5375 = vmatpush1.bf16.msra.mxu0 %v735
    %5376 = vmatprep.subr.bf16.mxu0 %v728
    %5377 = vmatpush1.bf16.msra.mxu0 %v727
    %5378 = vmatprep.subr.bf16.mxu0 %v720
    %5379 = vmatpush1.bf16.msra.mxu0 %v719
    %5380 = vmatprep.subr.bf16.mxu0 %v712
    %5381 = vmatpush1.bf16.msra.mxu0 %v711
    %5382 = vmatprep.subr.bf16.mxu0 %v704
    %5383 = vmatpush1.bf16.msra.mxu0 %v703
    %5384 = vmatprep.subr.bf16.mxu0 %v824
    %5385 = vmatpush2.bf16.msra.mxu0 %v823
    %5386 = vmatprep.subr.bf16.mxu0 %v816
    %5387 = vmatpush2.bf16.msra.mxu0 %v815
    %5388 = vmatprep.subr.bf16.mxu0 %v808
    %5389 = vmatpush2.bf16.msra.mxu0 %v807
    %5390 = vmatprep.subr.bf16.mxu0 %v800
    %5391 = vmatpush2.bf16.msra.mxu0 %v799
    %5392 = vmatprep.subr.bf16.mxu0 %v792
    %5393 = vmatpush2.bf16.msra.mxu0 %v791
    %5394 = vmatprep.subr.bf16.mxu0 %v784
    %5395 = vmatpush2.bf16.msra.mxu0 %v783
    %5396 = vmatprep.subr.bf16.mxu0 %v776
    %5397 = vmatpush2.bf16.msra.mxu0 %v775
    %5398 = vmatprep.subr.bf16.mxu0 %v768
    %5399 = vmatpush2.bf16.msra.mxu0 %v767
    %5400 = vmatprep.mubr.bf16.mxu0 %v5324
    %5401 = vmatmul.mubr.bf16.gmra.mxu0 %v5323
    %v5402 = vpop.f32.mrf.mxu0
    %v5403 = vadd.f32 0.0, %v5402
    %v5404 = vpop.f32.mrf.mxu0
    %v5405 = vadd.f32 0.0, %v5404
    %v5406 = vpop.f32.mrf.mxu0
    %v5407 = vpop.f32.mrf.mxu0
    %5408 = vdwg.mxu0
    %5409 = vmatprep.subr.bf16.mxu0 %v762
    %5410 = vmatpush1.bf16.msra.mxu0 %v761
    %5411 = vmatprep.subr.bf16.mxu0 %v754
    %5412 = vmatpush1.bf16.msra.mxu0 %v753
    %5413 = vmatprep.subr.bf16.mxu0 %v746
    %5414 = vmatpush1.bf16.msra.mxu0 %v745
    %5415 = vmatprep.subr.bf16.mxu0 %v738
    %5416 = vmatpush1.bf16.msra.mxu0 %v737
    %5417 = vmatprep.subr.bf16.mxu0 %v730
    %5418 = vmatpush1.bf16.msra.mxu0 %v729
    %5419 = vmatprep.subr.bf16.mxu0 %v722
    %5420 = vmatpush1.bf16.msra.mxu0 %v721
    %5421 = vmatprep.subr.bf16.mxu0 %v714
    %5422 = vmatpush1.bf16.msra.mxu0 %v713
    %5423 = vmatprep.subr.bf16.mxu0 %v706
    %5424 = vmatpush1.bf16.msra.mxu0 %v705
    %5425 = vmatprep.subr.bf16.mxu0 %v826
    %5426 = vmatpush2.bf16.msra.mxu0 %v825
    %5427 = vmatprep.subr.bf16.mxu0 %v818
    %5428 = vmatpush2.bf16.msra.mxu0 %v817
    %5429 = vmatprep.subr.bf16.mxu0 %v810
    %5430 = vmatpush2.bf16.msra.mxu0 %v809
    %5431 = vmatprep.subr.bf16.mxu0 %v802
    %5432 = vmatpush2.bf16.msra.mxu0 %v801
    %5433 = vmatprep.subr.bf16.mxu0 %v794
    %5434 = vmatpush2.bf16.msra.mxu0 %v793
    %5435 = vmatprep.subr.bf16.mxu0 %v786
    %5436 = vmatpush2.bf16.msra.mxu0 %v785
    %5437 = vmatprep.subr.bf16.mxu0 %v778
    %5438 = vmatpush2.bf16.msra.mxu0 %v777
    %5439 = vmatprep.subr.bf16.mxu0 %v770
    %5440 = vmatpush2.bf16.msra.mxu0 %v769
    %5441 = vmatprep.mubr.bf16.mxu0 %v5324
    %5442 = vmatmul.mubr.bf16.gmra.mxu0 %v5323
    %v5443 = vpop.f32.mrf.mxu0
    %v5444 = vadd.f32 0.0, %v5443
    %v5445 = vpop.f32.mrf.mxu0
    %v5446 = vadd.f32 0.0, %v5445
    %v5447 = vpop.f32.mrf.mxu0
    %v5448 = vpop.f32.mrf.mxu0
    %5449 = vdwg.mxu0
    %5450 = vmatprep.subr.bf16.mxu0 %v764
    %5451 = vmatpush1.bf16.msra.mxu0 %v763
    %5452 = vmatprep.subr.bf16.mxu0 %v756
    %5453 = vmatpush1.bf16.msra.mxu0 %v755
    %5454 = vmatprep.subr.bf16.mxu0 %v748
    %5455 = vmatpush1.bf16.msra.mxu0 %v747
    %5456 = vmatprep.subr.bf16.mxu0 %v740
    %5457 = vmatpush1.bf16.msra.mxu0 %v739
    %5458 = vmatprep.subr.bf16.mxu0 %v732
    %5459 = vmatpush1.bf16.msra.mxu0 %v731
    %5460 = vmatprep.subr.bf16.mxu0 %v724
    %5461 = vmatpush1.bf16.msra.mxu0 %v723
    %5462 = vmatprep.subr.bf16.mxu0 %v716
    %5463 = vmatpush1.bf16.msra.mxu0 %v715
    %5464 = vmatprep.subr.bf16.mxu0 %v708
    %5465 = vmatpush1.bf16.msra.mxu0 %v707
    %5466 = vmatprep.subr.bf16.mxu0 %v828
    %5467 = vmatpush2.bf16.msra.mxu0 %v827
    %5468 = vmatprep.subr.bf16.mxu0 %v820
    %5469 = vmatpush2.bf16.msra.mxu0 %v819
    %5470 = vmatprep.subr.bf16.mxu0 %v812
    %5471 = vmatpush2.bf16.msra.mxu0 %v811
    %5472 = vmatprep.subr.bf16.mxu0 %v804
    %5473 = vmatpush2.bf16.msra.mxu0 %v803
    %5474 = vmatprep.subr.bf16.mxu0 %v796
    %5475 = vmatpush2.bf16.msra.mxu0 %v795
    %5476 = vmatprep.subr.bf16.mxu0 %v788
    %5477 = vmatpush2.bf16.msra.mxu0 %v787
    %5478 = vmatprep.subr.bf16.mxu0 %v780
    %5479 = vmatpush2.bf16.msra.mxu0 %v779
    %5480 = vmatprep.subr.bf16.mxu0 %v772
    %5481 = vmatpush2.bf16.msra.mxu0 %v771
    %5482 = vmatprep.mubr.bf16.mxu0 %v5324
    %5483 = vmatmul.mubr.bf16.gmra.mxu0 %v5323
    %v5484 = vpop.f32.mrf.mxu0
    %v5485 = vadd.f32 0.0, %v5484
    %v5486 = vpop.f32.mrf.mxu0
    %v5487 = vadd.f32 0.0, %v5486
    %v5488 = vpop.f32.mrf.mxu0
    %v5489 = vpop.f32.mrf.mxu0
    %5490 = vdwg.mxu0
    %v5499 = vrot.slane %v5362, 1
    %v5500 = vrot.slane %v5364, 1
    %v5501 = vrot.slane %v5403, 1
    %v5502 = vrot.slane %v5405, 1
    %v5503 = vrot.slane %v5444, 1
    %v5504 = vrot.slane %v5446, 1
    %v5505 = vrot.slane %v5485, 1
    %v5506 = vrot.slane %v5487, 1
    %v5507 = vrot.slane %v5362, 2
    %v5508 = vrot.slane %v5364, 2
    %v5509 = vrot.slane %v5403, 2
    %v5510 = vrot.slane %v5405, 2
    %v5511 = vrot.slane %v5444, 2
    %v5512 = vrot.slane %v5446, 2
    %v5513 = vrot.slane %v5485, 2
    %v5514 = vrot.slane %v5487, 2
    %v5531 = vadd.f32 %v5289, %v5499
    %v5532 = vadd.f32 %v5290, %v5500
    %v5533 = vadd.f32 %v5291, %v5501
    %v5534 = vadd.f32 %v5292, %v5502
    %v5535 = vadd.f32 %v5293, %v5503
    %v5536 = vadd.f32 %v5294, %v5504
    %v5537 = vadd.f32 %v5295, %v5505
    %v5538 = vadd.f32 %v5296, %v5506
    %v5539 = vadd.f32 %v5297, %v5507
    %v5540 = vadd.f32 %v5298, %v5508
    %v5541 = vadd.f32 %v5299, %v5509
    %v5542 = vadd.f32 %v5300, %v5510
    %v5543 = vadd.f32 %v5301, %v5511
    %v5544 = vadd.f32 %v5302, %v5512
    %v5545 = vadd.f32 %v5303, %v5513
    %v5546 = vadd.f32 %v5304, %v5514
    %v5547 = vxor.u32 %v5531, 2147483648
    %v5548 = vxor.u32 %v5532, 2147483648
    %v5549 = vxor.u32 %v5539, 2147483648
    %v5550 = vxor.u32 %v5540, 2147483648
    %v5551 = vmul.f32 %v5547, 1.442695
    %v5552 = vpow.pop %v5551
    %v5553 = vmul.f32 %v5548, 1.442695
    %v5554 = vpow.pop %v5553
    %v5555 = vmul.f32 %v5549, 1.442695
    %v5556 = vpow.pop %v5555
    %v5557 = vmul.f32 %v5550, 1.442695
    %v5558 = vpow.pop %v5557
    %v5559 = vadd.f32 %v5552, 1.0
    %v5560 = vadd.f32 %v5554, 1.0
    %v5561 = vadd.f32 %v5556, 1.0
    %v5562 = vadd.f32 %v5558, 1.0
    %v5563 = vrcp.pop %v5559
    %v5564 = vmul.f32 1.0, %v5563
    %v5565 = vrcp.pop %v5560
    %v5566 = vmul.f32 1.0, %v5565
    %v5567 = vrcp.pop %v5561
    %v5568 = vmul.f32 1.0, %v5567
    %v5569 = vrcp.pop %v5562
    %v5570 = vmul.f32 1.0, %v5569
    %v5571 = vxor.u32 %v5533, 2147483648
    %v5572 = vxor.u32 %v5534, 2147483648
    %v5573 = vxor.u32 %v5541, 2147483648
    %v5574 = vxor.u32 %v5542, 2147483648
    %v5575 = vmul.f32 %v5571, 1.442695
    %v5576 = vpow.pop %v5575
    %v5577 = vmul.f32 %v5572, 1.442695
    %v5578 = vpow.pop %v5577
    %v5579 = vmul.f32 %v5573, 1.442695
    %v5580 = vpow.pop %v5579
    %v5581 = vmul.f32 %v5574, 1.442695
    %v5582 = vpow.pop %v5581
    %v5583 = vadd.f32 %v5576, 1.0
    %v5584 = vadd.f32 %v5578, 1.0
    %v5585 = vadd.f32 %v5580, 1.0
    %v5586 = vadd.f32 %v5582, 1.0
    %v5587 = vrcp.pop %v5583
    %v5588 = vmul.f32 1.0, %v5587
    %v5589 = vrcp.pop %v5584
    %v5590 = vmul.f32 1.0, %v5589
    %v5591 = vrcp.pop %v5585
    %v5592 = vmul.f32 1.0, %v5591
    %v5593 = vrcp.pop %v5586
    %v5594 = vmul.f32 1.0, %v5593
    %v5595 = vtanh.pop %v5535
    %v5596 = vtanh.pop %v5536
    %v5597 = vtanh.pop %v5543
    %v5598 = vtanh.pop %v5544
    %v5599 = vxor.u32 %v5537, 2147483648
    %v5600 = vxor.u32 %v5538, 2147483648
    %v5601 = vxor.u32 %v5545, 2147483648
    %v5602 = vxor.u32 %v5546, 2147483648
    %v5603 = vmul.f32 %v5599, 1.442695
    %v5604 = vpow.pop %v5603
    %v5605 = vmul.f32 %v5600, 1.442695
    %v5606 = vpow.pop %v5605
    %v5607 = vmul.f32 %v5601, 1.442695
    %v5608 = vpow.pop %v5607
    %v5609 = vmul.f32 %v5602, 1.442695
    %v5610 = vpow.pop %v5609
    %v5611 = vadd.f32 %v5604, 1.0
    %v5612 = vadd.f32 %v5606, 1.0
    %v5613 = vadd.f32 %v5608, 1.0
    %v5614 = vadd.f32 %v5610, 1.0
    %v5615 = vrcp.pop %v5611
    %v5616 = vmul.f32 1.0, %v5615
    %v5617 = vrcp.pop %v5612
    %v5618 = vmul.f32 1.0, %v5617
    %v5619 = vrcp.pop %v5613
    %v5620 = vmul.f32 1.0, %v5619
    %v5621 = vrcp.pop %v5614
    %v5622 = vmul.f32 1.0, %v5621
    %v5627 = vrot.slane %v5040, 7
    %v5628 = vrot.slane %v5041, 7
    %v5629 = vrot.slane %v5042, 7
    %v5630 = vrot.slane %v5043, 7
    %v5635 = vmul.f32 %v5588, %v5627
    %v5636 = vmul.f32 %v5590, %v5628
    %v5637 = vmul.f32 %v5592, %v5629
    %v5638 = vmul.f32 %v5594, %v5630
    %v5639 = vmul.f32 %v5564, %v5595
    %v5640 = vmul.f32 %v5566, %v5596
    %v5641 = vmul.f32 %v5568, %v5597
    %v5642 = vmul.f32 %v5570, %v5598
    %v5643 = vadd.f32 %v5635, %v5639
    %v5644 = vadd.f32 %v5636, %v5640
    %v5645 = vadd.f32 %v5637, %v5641
    %v5646 = vadd.f32 %v5638, %v5642
    %v5647 = vtanh.pop %v5643
    %v5648 = vtanh.pop %v5644
    %v5649 = vtanh.pop %v5645
    %v5650 = vtanh.pop %v5646
    %v5651 = vmul.f32 %v5616, %v5647
    %v5652 = vmul.f32 %v5618, %v5648
    %v5653 = vmul.f32 %v5620, %v5649
    %v5654 = vmul.f32 %v5622, %v5650
    %v5659 = vrot.slane %v5653, 7
    %v5660 = vrot.slane %v5654, 7
    %v5665 = vsel %vm5057, %v5651, 0.0
    %v5666 = vsel %vm5057, %v5652, 0.0
    %v5667 = vadd.f32 %v5665, %v5666
    %5668 = vadd.xlane.f32.xlu0 %v5667
    %v5669 = vpop.xlane.xlu0 %5668
    %vm5670 = vcmask 1040384
    %v5671 = vsel %vm5670, %v5659, 0.0
    %v5672 = vsel %vm5670, %v5660, 0.0
    %v5673 = vadd.f32 %v5671, %v5672
    %5674 = vadd.xlane.f32.xlu0 %v5673
    %v5675 = vpop.xlane.xlu0 %5674
    %v5676 = vmul.f32 %v5669, %v1297
    %v5677 = vmul.f32 %v5675, %v1297
    %v5680 = vrot.slane %v5677, 1
    %v5683 = vsub.f32 %v5651, %v5676
    %v5684 = vsub.f32 %v5652, %v5676
    %v5685 = vsub.f32 %v5653, %v5680
    %v5686 = vsub.f32 %v5654, %v5680
    %v5687 = vmul.f32 %v5683, %v5683
    %v5688 = vmul.f32 %v5684, %v5684
    %v5689 = vmul.f32 %v5685, %v5685
    %v5690 = vmul.f32 %v5686, %v5686
    %v5695 = vrot.slane %v5689, 7
    %v5696 = vrot.slane %v5690, 7
    %v5701 = vsel %vm5057, %v5687, 0.0
    %v5702 = vsel %vm5057, %v5688, 0.0
    %v5703 = vadd.f32 %v5701, %v5702
    %5704 = vadd.xlane.f32.xlu0 %v5703
    %v5705 = vpop.xlane.xlu0 %5704
    %v5706 = vsel %vm5670, %v5695, 0.0
    %v5707 = vsel %vm5670, %v5696, 0.0
    %v5708 = vadd.f32 %v5706, %v5707
    %5709 = vadd.xlane.f32.xlu0 %v5708
    %v5710 = vpop.xlane.xlu0 %5709
    %v5711 = vmul.f32 %v5705, %v1297
    %v5712 = vmul.f32 %v5710, %v1297
    %v5713 = vadd.f32 %v5711, 1e-05
    %v5714 = vadd.f32 %v5712, 1e-05
    %v5715 = vrsqrt.pop %v5713
    %v5716 = vrsqrt.pop %v5714
    %v5719 = vrot.slane %v5716, 1
    %v5722 = vmul.f32 %v5683, %v5715
    %v5723 = vmul.f32 %v5684, %v5715
    %v5724 = vmul.f32 %v5685, %v5719
    %v5725 = vmul.f32 %v5686, %v5719
    %v5726 = vmul.f32 %v5722, %v1341
    %v5727 = vmul.f32 %v5723, %v1345
    %v5728 = vmul.f32 %v5724, %v1341
    %v5729 = vmul.f32 %v5725, %v1345
    %v5730 = vadd.f32 %v5726, %v1356
    %v5731 = vadd.f32 %v5727, %v1360
    %v5732 = vadd.f32 %v5728, %v1356
    %v5733 = vadd.f32 %v5729, %v1360
    %v5734 = vpack.c.bf16 %v5730, %v5730
    %v5735 = vpack.c.bf16 %v5731, %v5731
    %v5736 = vpack.c.bf16 %v5732, %v5732
    %v5737 = vpack.c.bf16 %v5733, %v5733
    %v5742 = vunpack.c.l.b16 %v5734
    %v5743 = vunpack.c.l.b16 %v5735
    %v5744 = vunpack.c.l.b16 %v5736
    %v5745 = vunpack.c.l.b16 %v5737
    %v5746 = vrot.slane %v5742, 7
    %v5747 = vrot.slane %v5744, 6
    %v5748 = vsel %vm1285, %v5747, %v5746
    %v5749 = vrot.slane %v5743, 7
    %v5750 = vrot.slane %v5745, 6
    %v5751 = vsel %vm1285, %v5750, %v5749
    %v5752 = vpack.c.b16 %v5748, %v5748
    %v5753 = vpack.c.b16 %v5751, %v5751
    %5756 = vmatprep.subr.bf16.mxu0 0
    %5757 = vmatpush1.bf16.msra.mxu0 %v1464
    %5758 = vmatprep.subr.bf16.mxu0 0
    %5759 = vmatpush1.bf16.msra.mxu0 %v1463
    %5760 = vmatprep.subr.bf16.mxu0 0
    %5761 = vmatpush1.bf16.msra.mxu0 %v1462
    %5762 = vmatprep.subr.bf16.mxu0 0
    %5763 = vmatpush1.bf16.msra.mxu0 %v1461
    %5764 = vmatprep.subr.bf16.mxu0 0
    %5765 = vmatpush1.bf16.msra.mxu0 %v1460
    %5766 = vmatprep.subr.bf16.mxu0 0
    %5767 = vmatpush1.bf16.msra.mxu0 %v1459
    %5768 = vmatprep.subr.bf16.mxu0 0
    %5769 = vmatpush1.bf16.msra.mxu0 %v1458
    %5770 = vmatprep.subr.bf16.mxu0 0
    %5771 = vmatpush1.bf16.msra.mxu0 %v1457
    %5772 = vmatprep.subr.bf16.mxu0 0
    %5773 = vmatpush2.bf16.msra.mxu0 %v1472
    %5774 = vmatprep.subr.bf16.mxu0 0
    %5775 = vmatpush2.bf16.msra.mxu0 %v1471
    %5776 = vmatprep.subr.bf16.mxu0 0
    %5777 = vmatpush2.bf16.msra.mxu0 %v1470
    %5778 = vmatprep.subr.bf16.mxu0 0
    %5779 = vmatpush2.bf16.msra.mxu0 %v1469
    %5780 = vmatprep.subr.bf16.mxu0 0
    %5781 = vmatpush2.bf16.msra.mxu0 %v1468
    %5782 = vmatprep.subr.bf16.mxu0 0
    %5783 = vmatpush2.bf16.msra.mxu0 %v1467
    %5784 = vmatprep.subr.bf16.mxu0 0
    %5785 = vmatpush2.bf16.msra.mxu0 %v1466
    %5786 = vmatprep.subr.bf16.mxu0 0
    %5787 = vmatpush2.bf16.msra.mxu0 %v1465
    %5788 = vmatprep.mubr.bf16.mxu0 %v5753
    %5789 = vmatmul.mubr.bf16.gmra.mxu0 %v5752
    %v5790 = vpop.f32.mrf.mxu0
    %v5791 = vadd.f32 %v1375, %v5790
    %v5792 = vpop.f32.mrf.mxu0
    %v5793 = vpop.f32.mrf.mxu0
    %v5794 = vpop.f32.mrf.mxu0
    %5795 = vdwg.mxu0
    %v5796 = vsel %vm1529, %v5791, 0.0
    %5797 = vadd.xlane.f32.xlu0 %v5796
    %v5798 = vpop.xlane.xlu0 %5797
    %v5799 = vmul.f32 %v5798, %v1533
    %v5800 = vsub.f32 %v5791, %v5799
    %v5801 = vmul.f32 %v5800, %v5800
    %v5802 = vsel %vm1529, %v5801, 0.0
    %5803 = vadd.xlane.f32.xlu0 %v5802
    %v5804 = vpop.xlane.xlu0 %5803
    %v5805 = vmul.f32 %v5804, %v1533
    %v5806 = vadd.f32 %v5805, 1e-05
    %v5807 = vrsqrt.pop %v5806
    %v5808 = vmul.f32 %v5800, %v5807
    %v5809 = vmul.f32 %v5808, %v1548
    %v5810 = vadd.f32 %v5809, %v1555
    %v5811 = vmax.f32 %v5810, 0.0
    %v5812 = vpack.c.bf16 %v5811, %v5811
    %v5814 = vsel %vm1590, %v5812, 0
    %5816 = vmatprep.subr.bf16.mxu0 0
    %5817 = vmatpush1.bf16.msra.mxu0 0
    %5818 = vmatprep.subr.bf16.mxu0 0
    %5819 = vmatpush1.bf16.msra.mxu0 0
    %5820 = vmatprep.subr.bf16.mxu0 0
    %5821 = vmatpush1.bf16.msra.mxu0 0
    %5822 = vmatprep.subr.bf16.mxu0 0
    %5823 = vmatpush1.bf16.msra.mxu0 0
    %5824 = vmatprep.subr.bf16.mxu0 0
    %5825 = vmatpush1.bf16.msra.mxu0 %v1585
    %5826 = vmatprep.subr.bf16.mxu0 0
    %5827 = vmatpush1.bf16.msra.mxu0 %v1584
    %5828 = vmatprep.subr.bf16.mxu0 0
    %5829 = vmatpush1.bf16.msra.mxu0 %v1583
    %5830 = vmatprep.subr.bf16.mxu0 0
    %5831 = vmatpush1.bf16.msra.mxu0 %v1582
    %5832 = vmatprep.subr.bf16.mxu0 0
    %5833 = vmatpush2.bf16.msra.mxu0 0
    %5834 = vmatprep.subr.bf16.mxu0 0
    %5835 = vmatpush2.bf16.msra.mxu0 0
    %5836 = vmatprep.subr.bf16.mxu0 0
    %5837 = vmatpush2.bf16.msra.mxu0 0
    %5838 = vmatprep.subr.bf16.mxu0 0
    %5839 = vmatpush2.bf16.msra.mxu0 0
    %5840 = vmatprep.subr.bf16.mxu0 0
    %5841 = vmatpush2.bf16.msra.mxu0 0
    %5842 = vmatprep.subr.bf16.mxu0 0
    %5843 = vmatpush2.bf16.msra.mxu0 0
    %5844 = vmatprep.subr.bf16.mxu0 0
    %5845 = vmatpush2.bf16.msra.mxu0 0
    %5846 = vmatprep.subr.bf16.mxu0 0
    %5847 = vmatpush2.bf16.msra.mxu0 0
    %5848 = vmatprep.mubr.bf16.mxu0 0
    %5849 = vmatmul.mubr.bf16.gmra.mxu0 %v5814
    %v5850 = vpop.f32.mrf.mxu0
    %v5851 = vadd.f32 %v1564, %v5850
    %v5852 = vpop.f32.mrf.mxu0
    %v5853 = vpop.f32.mrf.mxu0
    %v5854 = vpop.f32.mrf.mxu0
    %5855 = vdwg.mxu0
    %v5858 = vunpack.c.l.s4 1966171168
    %v5859 = vunpack.c.0.s8 %v5858
    %v5860 = vlaneseq
    %v5861 = vshrl.u32 %v5860, 7
    %v5862 = vsub.s32 %v5859, %v5861
    %v5863 = vrot.slane %v5851, %v5862
    %v5864 = vcombine.high %v5863, %v5863
    %v5866 = vunpack.c.l.s4 1966171168
    %v5867 = vunpack.c.0.s8 %v5866
    %v5868 = vlaneseq
    %v5869 = vshrl.u32 %v5868, 7
    %v5870 = vsub.s32 %v5867, %v5869
    %v5871 = vrot.slane %v5863, %v5870
    %v5873 = vunpack.c.l.s4 1966171168
    %v5874 = vunpack.c.0.s8 %v5873
    %v5875 = vlaneseq
    %v5876 = vshrl.u32 %v5875, 7
    %v5877 = vsub.s32 %v5874, %v5876
    %v5878 = vrot.slane %v5864, %v5877
    %5881 = vst [vmem:[#allocation4 + $0x7] sm:$0x1] %v5871
    %5882 = vst [vmem:[#allocation4 + $0xf] sm:$0x1] %v5878
    %v5883 = vcombine.high %v5651, %v5652
    %v5885 = vunpack.c.l.s4 1983009808
    %v5886 = vunpack.c.0.s8 %v5885
    %v5887 = vlaneseq
    %v5888 = vshrl.u32 %v5887, 7
    %v5889 = vsub.s32 %v5886, %v5888
    %v5890 = vrot.slane %v5883, %v5889
    %v5891 = vcombine.high %v5890, %v5890
    %v5892 = vcombine.high %v5653, %v5654
    %v5894 = vunpack.c.l.s4 1983009808
    %v5895 = vunpack.c.0.s8 %v5894
    %v5896 = vlaneseq
    %v5897 = vshrl.u32 %v5896, 7
    %v5898 = vsub.s32 %v5895, %v5897
    %v5899 = vrot.slane %v5892, %v5898
    %v5900 = vcombine.high %v5899, %v5899
    %v5901 = vrot.slane %v5891, 1
    %v5902 = vsel %vm3248, %v5901, %v5901
    %v5903 = vsel %vm4454, %v5901, %v5902
    %v5904 = vsel %vm1285, %v5900, %v5903
    %v5905 = vsel %vm2645, %v5900, %v5904
    %v5906 = vsel %vm3851, %v5900, %v5905
    %v5907 = vsel %vm5057, %v5900, %v5906
    %5909 = vst [vmem:[#allocation2] sm:$0xf] %v5907
    %v5914 = vcombine.high %v5643, %v5644
    %v5916 = vunpack.c.l.s4 1983009808
    %v5917 = vunpack.c.0.s8 %v5916
    %v5918 = vlaneseq
    %v5919 = vshrl.u32 %v5918, 7
    %v5920 = vsub.s32 %v5917, %v5919
    %v5921 = vrot.slane %v5914, %v5920
    %v5922 = vcombine.high %v5921, %v5921
    %v5923 = vcombine.high %v5645, %v5646
    %v5925 = vunpack.c.l.s4 1983009808
    %v5926 = vunpack.c.0.s8 %v5925
    %v5927 = vlaneseq
    %v5928 = vshrl.u32 %v5927, 7
    %v5929 = vsub.s32 %v5926, %v5928
    %v5930 = vrot.slane %v5923, %v5929
    %v5931 = vcombine.high %v5930, %v5930
    %v5932 = vrot.slane %v5922, 1
    %v5933 = vsel %vm3248, %v5932, %v5932
    %v5934 = vsel %vm4454, %v5932, %v5933
    %v5935 = vsel %vm1285, %v5931, %v5934
    %v5936 = vsel %vm2645, %v5931, %v5935
    %v5937 = vsel %vm3851, %v5931, %v5936
    %v5938 = vsel %vm5057, %v5931, %v5937
    %5940 = vst [vmem:[#allocation3] sm:$0xf] %v5938
    // Predicated region
    $region50: #{sequence_model.3} parent=1 // pred_check
      _
    $region51: #{sequence_model.3} parent=1 // pred_check_branch
      %5942 = sbr.rel (0) target = $region53
    $region52: #{sequence_model.3} parent=1 // pred_region
      %s5944 = ssub.s32 256, 256
      %5945 = vsyncadd [#allocation5], %s5944
      %s5946 = sshll.u32 [#allocation4], 4
      %s5947 = int_to_ptr.vmem [resolvable:$true] %s5946
      %5952 = dma.vmem_to_hbm [thread:$0]  %s5947, 256, %s11, [#allocation5], 128, 128, 8
    $region53: #{sequence_model.3} parent=1 // pred_fallthru
      _
    // Predicated region
    $region54: #{sequence_model.3} parent=1 // pred_check
      _
    $region55: #{sequence_model.3} parent=1 // pred_check_branch
      %5954 = sbr.rel (0) target = $region57
    $region56: #{sequence_model.3} parent=1 // pred_region
      %5955 = dma.done [#allocation5], 256
    $region57: #{sequence_model.3} parent=1 // pred_fallthru
      _
    %5956 = vsyncpa [#allocation5], 1

</llo_original>
